<compile_context>
chip_gen: v7x
topology: tpu7x:2x2x1
jax: 0.10.0
libtpu: 0.0.40
codegen_flags: <defaults>
</compile_context>

<pallas_src>
import functools

import numpy as np
import jax
import jax.numpy as jnp
from jax import lax
from jax.experimental import pallas as pl
from jax.experimental.pallas import tpu as pltpu


# ----------------------------------------------------------------------------- helpers
def _full_spec(shape):
    nd = len(shape)
    return pl.BlockSpec(shape, lambda i, _nd=nd: (0,) * _nd)


# ----------------------------------------------------------------------------- fused kernel
def _va_fused_kernel(
        patches_ref, state_ref, tp_ref,
        conv_w_ref, conv_b_ref,
        stem_w_ref, stem_b_ref,
        meas_w1_ref, meas_b1_ref, meas_w2_ref, meas_b2_ref,
        spd_w1_ref, spd_b1_ref, spd_w2_ref, spd_b2_ref, spd_w3t_ref, spd_b3_ref,
        join_w1a_ref, join_w1b_ref, join_b1_ref,
        join_w2_ref, join_b2_ref, join_w3_ref, join_b3_ref,
        wih_x_ref, wih_tp_ref, whh_ref, bih_ref, bhh_ref,
        wout_t_ref, bout_ref,
        speed_ref, wp_ref,
        *, batch, hw, pred_len, hidden):
    f32 = jnp.float32

    # ---- perception stub: conv-stem (im2col matmul) + GAP (selector matmul) + fc ----
    conv = jnp.maximum(
        jnp.dot(patches_ref[...], conv_w_ref[...], preferred_element_type=f32)
        + conv_b_ref[...], 0.0)                                     # [B*HW, 16]

    bhw = batch * hw
    row_b = lax.broadcasted_iota(jnp.int32, (batch, bhw), 0)
    col_i = lax.broadcasted_iota(jnp.int32, (batch, bhw), 1)
    sel = jnp.where((col_i >= row_b * hw) & (col_i < (row_b + 1) * hw),
                    jnp.float32(1.0 / hw), jnp.float32(0.0))         # [B, B*HW]
    pooled = jnp.dot(sel, conv, preferred_element_type=f32)          # [B, 16]

    feat = jnp.dot(pooled, stem_w_ref[...],
                   preferred_element_type=f32) + stem_b_ref[...]     # [B, 1024] (1000 + zero pad)

    # ---- measurements MLP: 9(->16 pad) -> 128 -> 128 (ReLU) ----
    m = jnp.maximum(jnp.dot(state_ref[...], meas_w1_ref[...],
                            preferred_element_type=f32) + meas_b1_ref[...], 0.0)
    m = jnp.maximum(jnp.dot(m, meas_w2_ref[...],
                            preferred_element_type=f32) + meas_b2_ref[...], 0.0)

    # ---- speed branch: 1000 -> 256 -> 256 -> 1 (Dropout2d is identity at inference) ----
    s = jnp.maximum(jnp.dot(feat, spd_w1_ref[...],
                            preferred_element_type=f32) + spd_b1_ref[...], 0.0)
    s = jnp.maximum(jnp.dot(s, spd_w2_ref[...],
                            preferred_element_type=f32) + spd_b2_ref[...], 0.0)
    # N=1 output: a lane reduction instead of a wasted MXU pass
    speed = jnp.sum(s * spd_w3t_ref[...], axis=-1, keepdims=True) + spd_b3_ref[...]
    speed_ref[...] = speed.astype(speed_ref.dtype)

    # ---- join MLP (split-K removes the concat): (1000|128) -> 512 -> 512 -> 256 ----
    j = (jnp.dot(feat, join_w1a_ref[...], preferred_element_type=f32)
         + jnp.dot(m, join_w1b_ref[...], preferred_element_type=f32)
         + join_b1_ref[...])
    j = jnp.maximum(j, 0.0)
    j = jnp.maximum(jnp.dot(j, join_w2_ref[...],
                            preferred_element_type=f32) + join_b2_ref[...], 0.0)
    z = jnp.maximum(jnp.dot(j, join_w3_ref[...],
                            preferred_element_type=f32) + join_b3_ref[...], 0.0)  # [B, 256]

    # ---- autoregressive GRUCell decoder (unrolled; pred_len is static) ----
    h = hidden
    tp = tp_ref[...]
    wih_x0 = wih_x_ref[0:1, :]
    wih_x1 = wih_x_ref[1:2, :]
    # target-point + input-bias contribution is constant across steps → hoist
    gi_const = (tp[:, 0:1] * wih_tp_ref[0:1, :]
                + tp[:, 1:2] * wih_tp_ref[1:2, :]
                + bih_ref[...])                                      # [B, 3h]
    whh = whh_ref[...]
    bhh = bhh_ref[...]
    wout0 = wout_t_ref[0:1, :]
    wout1 = wout_t_ref[1:2, :]
    bout0 = bout_ref[:, 0:1]
    bout1 = bout_ref[:, 1:2]

    x0 = jnp.zeros((batch, 1), f32)
    x1 = jnp.zeros((batch, 1), f32)
    for t in range(pred_len):
        # K=2 "matmul" as VPU broadcast-MADs (no MXU weight push on the serial path)
        gi = x0 * wih_x0 + x1 * wih_x1 + gi_const                    # [B, 3h]
        gh = jnp.dot(z, whh, preferred_element_type=f32) + bhh       # [B, 3h]
        r = jax.nn.sigmoid(gi[:, :h] + gh[:, :h])
        u = jax.nn.sigmoid(gi[:, h:2 * h] + gh[:, h:2 * h])
        n = jnp.tanh(gi[:, 2 * h:] + r * gh[:, 2 * h:])
        z = (1.0 - u) * n + u * z
        # N=2 output projection as two lane reductions (XLU slot; MXU stays free)
        x0 = x0 + jnp.sum(z * wout0, axis=-1, keepdims=True) + bout0
        x1 = x1 + jnp.sum(z * wout1, axis=-1, keepdims=True) + bout1
        # stores land in the VMEM-resident output block; HBM writeback happens once
        wp_ref[:, 2 * t:2 * t + 1] = x0.astype(wp_ref.dtype)
        wp_ref[:, 2 * t + 1:2 * t + 2] = x1.astype(wp_ref.dtype)


# ----------------------------------------------------------------------------- params
def _dense_init(key, fan_in, shape_w, shape_b):
    bound = 1.0 / np.sqrt(fan_in)
    kw, kb = jax.random.split(key)
    w = jax.random.uniform(kw, shape_w, jnp.float32, -bound, bound)
    b = jax.random.uniform(kb, shape_b, jnp.float32, -bound, bound)
    return w, b


def init_params(key, hidden=256, feat=1000, feat_pad=1024):
    ks = jax.random.split(key, 16)
    p = {}
    # perception stub: conv 3x3/s2 (3->16), GAP, fc 16->1000 (feature padded to 1024)
    w, b = _dense_init(ks[0], 27, (27, 16), (16,))
    p['conv_w'] = jnp.pad(w, ((0, 32 - 27), (0, 0)))   # K 27 -> 32 (zero rows)
    p['conv_b'] = b
    w, b = _dense_init(ks[1], 16, (16, feat), (feat,))
    p['stem_fc_w'] = jnp.pad(w, ((0, 0), (0, feat_pad - feat)))
    p['stem_fc_b'] = jnp.pad(b, (0, feat_pad - feat))
    # measurements MLP: 9 -> 128 -> 128 (state K padded 9 -> 16)
    w, b = _dense_init(ks[2], 9, (9, 128), (128,))
    p['meas_w1'] = jnp.pad(w, ((0, 16 - 9), (0, 0)))
    p['meas_b1'] = b
    p['meas_w2'], p['meas_b2'] = _dense_init(ks[3], 128, (128, 128), (128,))
    # join_traj: (1000 + 128) -> 512 -> 512 -> 256; first layer split to avoid concat
    w1, b1 = _dense_init(ks[4], feat + 128, (feat + 128, 512), (512,))
    p['join_w1a'] = jnp.pad(w1[:feat], ((0, feat_pad - feat), (0, 0)))
    p['join_w1b'] = w1[feat:]
    p['join_b1'] = b1
    p['join_w2'], p['join_b2'] = _dense_init(ks[5], 512, (512, 512), (512,))
    p['join_w3'], p['join_b3'] = _dense_init(ks[6], 512, (512, 256), (256,))
    # speed branch: 1000 -> 256 -> 256 -> 1
    w, b = _dense_init(ks[7], feat, (feat, 256), (256,))
    p['spd_w1'] = jnp.pad(w, ((0, feat_pad - feat), (0, 0)))
    p['spd_b1'] = b
    p['spd_w2'], p['spd_b2'] = _dense_init(ks[8], 256, (256, 256), (256,))
    w, b = _dense_init(ks[9], 256, (256, 1), (1,))
    p['spd_w3_t'] = w.T                    # [1, 256] for the lane-reduction form
    p['spd_b3'] = b
    # GRUCell(input=4, hidden=256): x@W layout, gate order (r, z, n)
    wih, bih = _dense_init(ks[10], hidden, (4, 3 * hidden), (3 * hidden,))
    p['gru_wih_x'] = wih[:2]               # input order is [x, target_point]
    p['gru_wih_tp'] = wih[2:]
    p['gru_bih'] = bih
    p['gru_whh'], p['gru_bhh'] = _dense_init(ks[11], hidden, (hidden, 3 * hidden), (3 * hidden,))
    # output_traj: 256 -> 2 (transposed for the lane-reduction form)
    w, b = _dense_init(ks[12], hidden, (hidden, 2), (2,))
    p['out_w_t'] = w.T                     # [2, 256]
    p['out_b'] = b
    return p


# ----------------------------------------------------------------------------- forward
def va_forward(params, img, state, target_point, pred_len):
    # TODO(synk): the pretrained ResNet34 backbone is not ported; a representative
    # conv-stem (im2col + matmul) + GAP + fc producing the same [B, 1000] feature_emb
    # is fused into the kernel instead.
    b = img.shape[0]
    x = jnp.transpose(img, (0, 2, 3, 1))                       # NCHW -> NHWC
    patches = lax.conv_general_dilated_patches(
        x, filter_shape=(3, 3), window_strides=(2, 2),
        padding=((1, 1), (1, 1)),
        dimension_numbers=('NHWC', 'HWIO', 'NHWC'))            # [B, HO, WO, 27]
    _, ho, wo, k = patches.shape
    hw = ho * wo
    patches = patches.reshape(b * hw, k)
    patches = jnp.pad(patches, ((0, 0), (0, 32 - k)))          # K 27 -> 32 (8-aligned)
    state_p = jnp.pad(state, ((0, 0), (0, 16 - state.shape[1])))  # K 9 -> 16

    p = params
    inputs = (
        patches, state_p, target_point,
        p['conv_w'], p['conv_b'].reshape(1, -1),
        p['stem_fc_w'], p['stem_fc_b'].reshape(1, -1),
        p['meas_w1'], p['meas_b1'].reshape(1, -1),
        p['meas_w2'], p['meas_b2'].reshape(1, -1),
        p['spd_w1'], p['spd_b1'].reshape(1, -1),
        p['spd_w2'], p['spd_b2'].reshape(1, -1),
        p['spd_w3_t'], p['spd_b3'].reshape(1, -1),
        p['join_w1a'], p['join_w1b'], p['join_b1'].reshape(1, -1),
        p['join_w2'], p['join_b2'].reshape(1, -1),
        p['join_w3'], p['join_b3'].reshape(1, -1),
        p['gru_wih_x'], p['gru_wih_tp'], p['gru_whh'],
        p['gru_bih'].reshape(1, -1), p['gru_bhh'].reshape(1, -1),
        p['out_w_t'], p['out_b'].reshape(1, -1),
    )
    hidden = p['gru_whh'].shape[0]

    kernel = functools.partial(_va_fused_kernel, batch=b, hw=hw,
                               pred_len=pred_len, hidden=hidden)
    speed, wp = pl.pallas_call(
        kernel,
        out_shape=(jax.ShapeDtypeStruct((b, 1), jnp.float32),
                   jax.ShapeDtypeStruct((b, pred_len * 2), jnp.float32)),
        grid=(1,),
        in_specs=[_full_spec(a.shape) for a in inputs],
        out_specs=(_full_spec((b, 1)), _full_spec((b, pred_len * 2))),
        compiler_params=pltpu.CompilerParams(
            dimension_semantics=("arbitrary",),
            vmem_limit_bytes=32 * 1024 * 1024),   # ~6 MB weights, double-buffered: fits v5e/v6e/v7x
    )(*inputs)

    return {'pred_speed': speed,
            'pred_wp': wp.reshape(b, pred_len, 2)}


# ----------------------------------------------------------------------------- main
class Config:
    pred_len = 4


if __name__ == "__main__":
    cfg = Config()
    key = jax.random.PRNGKey(0)
    kp, kimg, kstate, ktp = jax.random.split(key, 4)

    params = init_params(kp)
    img = jax.random.normal(kimg, (2, 3, 16, 16), jnp.float32)       # NCHW, like PyTorch
    state = jax.random.normal(kstate, (2, 1 + 2 + 6), jnp.float32)   # [B, 9]
    target_point = jax.random.normal(ktp, (2, 2), jnp.float32)       # [B, 2]

    fwd = jax.jit(functools.partial(va_forward, pred_len=cfg.pred_len))
    outputs = fwd(params, img, state, target_point)
    outputs = jax.block_until_ready(outputs)

    assert outputs['pred_speed'].shape == (2, 1)
    assert outputs['pred_wp'].shape == (2, cfg.pred_len, 2)
    assert outputs['pred_speed'].dtype == jnp.float32
    assert outputs['pred_wp'].dtype == jnp.float32
    print("KERNEL_OK")
</pallas_src>

<mosaic_0001>
module attributes {stable_mosaic.version = 11 : i64} {
  func.func @_va_fused_kernel(%arg0: i32, %arg1: memref<128x32xf32, #tpu.memory_space<vmem>>, %arg2: memref<2x16xf32, #tpu.memory_space<vmem>>, %arg3: memref<2x2xf32, #tpu.memory_space<vmem>>, %arg4: memref<32x16xf32, #tpu.memory_space<vmem>>, %arg5: memref<1x16xf32, #tpu.memory_space<vmem>>, %arg6: memref<16x1024xf32, #tpu.memory_space<vmem>>, %arg7: memref<1x1024xf32, #tpu.memory_space<vmem>>, %arg8: memref<16x128xf32, #tpu.memory_space<vmem>>, %arg9: memref<1x128xf32, #tpu.memory_space<vmem>>, %arg10: memref<128x128xf32, #tpu.memory_space<vmem>>, %arg11: memref<1x128xf32, #tpu.memory_space<vmem>>, %arg12: memref<1024x256xf32, #tpu.memory_space<vmem>>, %arg13: memref<1x256xf32, #tpu.memory_space<vmem>>, %arg14: memref<256x256xf32, #tpu.memory_space<vmem>>, %arg15: memref<1x256xf32, #tpu.memory_space<vmem>>, %arg16: memref<1x256xf32, #tpu.memory_space<vmem>>, %arg17: memref<1x1xf32, #tpu.memory_space<vmem>>, %arg18: memref<1024x512xf32, #tpu.memory_space<vmem>>, %arg19: memref<128x512xf32, #tpu.memory_space<vmem>>, %arg20: memref<1x512xf32, #tpu.memory_space<vmem>>, %arg21: memref<512x512xf32, #tpu.memory_space<vmem>>, %arg22: memref<1x512xf32, #tpu.memory_space<vmem>>, %arg23: memref<512x256xf32, #tpu.memory_space<vmem>>, %arg24: memref<1x256xf32, #tpu.memory_space<vmem>>, %arg25: memref<2x768xf32, #tpu.memory_space<vmem>>, %arg26: memref<2x768xf32, #tpu.memory_space<vmem>>, %arg27: memref<256x768xf32, #tpu.memory_space<vmem>>, %arg28: memref<1x768xf32, #tpu.memory_space<vmem>>, %arg29: memref<1x768xf32, #tpu.memory_space<vmem>>, %arg30: memref<2x256xf32, #tpu.memory_space<vmem>>, %arg31: memref<1x2xf32, #tpu.memory_space<vmem>>, %arg32: memref<2x1xf32, #tpu.memory_space<vmem>>, %arg33: memref<2x8xf32, #tpu.memory_space<vmem>>) attributes {dimension_semantics = [#tpu.dimension_semantics<arbitrary>], iteration_bounds = array<i64: 1>, scalar_prefetch = 0 : i64, scratch_operands = 0 : i64, tpu.core_type = #tpu.core_type<tc>, window_params = [{pipeline_mode = #tpu.pipeline_mode<synchronous>, transform_indices = @transform_0, window_bounds = array<i64: 128, 32>}, {pipeline_mode = #tpu.pipeline_mode<synchronous>, transform_indices = @transform_1, window_bounds = array<i64: 2, 16>}, {pipeline_mode = #tpu.pipeline_mode<synchronous>, transform_indices = @transform_2, window_bounds = array<i64: 2, 2>}, {pipeline_mode = #tpu.pipeline_mode<synchronous>, transform_indices = @transform_3, window_bounds = array<i64: 32, 16>}, {pipeline_mode = #tpu.pipeline_mode<synchronous>, transform_indices = @transform_4, window_bounds = array<i64: 1, 16>}, {pipeline_mode = #tpu.pipeline_mode<synchronous>, transform_indices = @transform_5, window_bounds = array<i64: 16, 1024>}, {pipeline_mode = #tpu.pipeline_mode<synchronous>, transform_indices = @transform_6, window_bounds = array<i64: 1, 1024>}, {pipeline_mode = #tpu.pipeline_mode<synchronous>, transform_indices = @transform_7, window_bounds = array<i64: 16, 128>}, {pipeline_mode = #tpu.pipeline_mode<synchronous>, transform_indices = @transform_8, window_bounds = array<i64: 1, 128>}, {pipeline_mode = #tpu.pipeline_mode<synchronous>, transform_indices = @transform_9, window_bounds = array<i64: 128, 128>}, {pipeline_mode = #tpu.pipeline_mode<synchronous>, transform_indices = @transform_10, window_bounds = array<i64: 1, 128>}, {pipeline_mode = #tpu.pipeline_mode<synchronous>, transform_indices = @transform_11, window_bounds = array<i64: 1024, 256>}, {pipeline_mode = #tpu.pipeline_mode<synchronous>, transform_indices = @transform_12, window_bounds = array<i64: 1, 256>}, {pipeline_mode = #tpu.pipeline_mode<synchronous>, transform_indices = @transform_13, window_bounds = array<i64: 256, 256>}, {pipeline_mode = #tpu.pipeline_mode<synchronous>, transform_indices = @transform_14, window_bounds = array<i64: 1, 256>}, {pipeline_mode = #tpu.pipeline_mode<synchronous>, transform_indices = @transform_15, window_bounds = array<i64: 1, 256>}, {pipeline_mode = #tpu.pipeline_mode<synchronous>, transform_indices = @transform_16, window_bounds = array<i64: 1, 1>}, {pipeline_mode = #tpu.pipeline_mode<synchronous>, transform_indices = @transform_17, window_bounds = array<i64: 1024, 512>}, {pipeline_mode = #tpu.pipeline_mode<synchronous>, transform_indices = @transform_18, window_bounds = array<i64: 128, 512>}, {pipeline_mode = #tpu.pipeline_mode<synchronous>, transform_indices = @transform_19, window_bounds = array<i64: 1, 512>}, {pipeline_mode = #tpu.pipeline_mode<synchronous>, transform_indices = @transform_20, window_bounds = array<i64: 512, 512>}, {pipeline_mode = #tpu.pipeline_mode<synchronous>, transform_indices = @transform_21, window_bounds = array<i64: 1, 512>}, {pipeline_mode = #tpu.pipeline_mode<synchronous>, transform_indices = @transform_22, window_bounds = array<i64: 512, 256>}, {pipeline_mode = #tpu.pipeline_mode<synchronous>, transform_indices = @transform_23, window_bounds = array<i64: 1, 256>}, {pipeline_mode = #tpu.pipeline_mode<synchronous>, transform_indices = @transform_24, window_bounds = array<i64: 2, 768>}, {pipeline_mode = #tpu.pipeline_mode<synchronous>, transform_indices = @transform_25, window_bounds = array<i64: 2, 768>}, {pipeline_mode = #tpu.pipeline_mode<synchronous>, transform_indices = @transform_26, window_bounds = array<i64: 256, 768>}, {pipeline_mode = #tpu.pipeline_mode<synchronous>, transform_indices = @transform_27, window_bounds = array<i64: 1, 768>}, {pipeline_mode = #tpu.pipeline_mode<synchronous>, transform_indices = @transform_28, window_bounds = array<i64: 1, 768>}, {pipeline_mode = #tpu.pipeline_mode<synchronous>, transform_indices = @transform_29, window_bounds = array<i64: 2, 256>}, {pipeline_mode = #tpu.pipeline_mode<synchronous>, transform_indices = @transform_30, window_bounds = array<i64: 1, 2>}, {pipeline_mode = #tpu.pipeline_mode<synchronous>, transform_indices = @transform_31, window_bounds = array<i64: 2, 1>}, {pipeline_mode = #tpu.pipeline_mode<synchronous>, transform_indices = @transform_32, window_bounds = array<i64: 2, 8>}]} {
    %c0 = arith.constant 0 : index
    %c0_0 = arith.constant 0 : index
    %0 = vector.load %arg1[%c0, %c0_0] : memref<128x32xf32, #tpu.memory_space<vmem>>, vector<128x32xf32>
    %c0_1 = arith.constant 0 : index
    %c0_2 = arith.constant 0 : index
    %1 = vector.load %arg4[%c0_1, %c0_2] : memref<32x16xf32, #tpu.memory_space<vmem>>, vector<32x16xf32>
    %cst = arith.constant dense<0.000000e+00> : vector<128x16xf32>
    %2 = tpu.matmul %0, %1, %cst {dimension_numbers = #tpu.dot_dimension_numbers<[1], [0], [0], [1], [0, 0, 1, 1], [], []>} : vector<128x32xf32>, vector<32x16xf32>, vector<128x16xf32> -> vector<128x16xf32>
    %c0_3 = arith.constant 0 : index
    %c0_4 = arith.constant 0 : index
    %3 = vector.load %arg5[%c0_3, %c0_4] : memref<1x16xf32, #tpu.memory_space<vmem>>, vector<1x16xf32>
    %4 = vector.broadcast %3 : vector<1x16xf32> to vector<128x16xf32>
    %5 = arith.addf %2, %4 : vector<128x16xf32>
    %cst_5 = arith.constant 0.000000e+00 : f32
    %6 = vector.broadcast %cst_5 : f32 to vector<128x16xf32>
    %7 = arith.maximumf %5, %6 : vector<128x16xf32>
    %8 = tpu.iota {dimensions = array<i32: 0>} : vector<2x128xi32>
    %9 = tpu.iota {dimensions = array<i32: 1>} : vector<2x128xi32>
    %c64_i32 = arith.constant 64 : i32
    %10 = vector.broadcast %c64_i32 : i32 to vector<2x128xi32>
    %11 = arith.muli %8, %10 : vector<2x128xi32>
    %12 = arith.cmpi sge, %9, %11 : vector<2x128xi32>
    %c1_i32 = arith.constant 1 : i32
    %13 = vector.broadcast %c1_i32 : i32 to vector<2x128xi32>
    %14 = arith.addi %8, %13 : vector<2x128xi32>
    %c64_i32_6 = arith.constant 64 : i32
    %15 = vector.broadcast %c64_i32_6 : i32 to vector<2x128xi32>
    %16 = arith.muli %14, %15 : vector<2x128xi32>
    %17 = arith.cmpi slt, %9, %16 : vector<2x128xi32>
    %18 = arith.andi %12, %17 : vector<2x128xi1>
    %cst_7 = arith.constant 1.562500e-02 : f32
    %cst_8 = arith.constant 0.000000e+00 : f32
    %19 = vector.broadcast %cst_7 : f32 to vector<2x128xf32>
    %20 = vector.broadcast %cst_8 : f32 to vector<2x128xf32>
    %21 = arith.select %18, %19, %20 : vector<2x128xi1>, vector<2x128xf32>
    %cst_9 = arith.constant dense<0.000000e+00> : vector<2x16xf32>
    %22 = tpu.matmul %21, %7, %cst_9 {dimension_numbers = #tpu.dot_dimension_numbers<[1], [0], [0], [1], [0, 0, 1, 1], [], []>} : vector<2x128xf32>, vector<128x16xf32>, vector<2x16xf32> -> vector<2x16xf32>
    %c0_10 = arith.constant 0 : index
    %c0_11 = arith.constant 0 : index
    %23 = vector.load %arg6[%c0_10, %c0_11] : memref<16x1024xf32, #tpu.memory_space<vmem>>, vector<16x1024xf32>
    %cst_12 = arith.constant dense<0.000000e+00> : vector<2x1024xf32>
    %24 = tpu.matmul %22, %23, %cst_12 {dimension_numbers = #tpu.dot_dimension_numbers<[1], [0], [0], [1], [0, 0, 1, 1], [], []>} : vector<2x16xf32>, vector<16x1024xf32>, vector<2x1024xf32> -> vector<2x1024xf32>
    %c0_13 = arith.constant 0 : index
    %c0_14 = arith.constant 0 : index
    %25 = vector.load %arg7[%c0_13, %c0_14] : memref<1x1024xf32, #tpu.memory_space<vmem>>, vector<1x1024xf32>
    %26 = vector.broadcast %25 : vector<1x1024xf32> to vector<2x1024xf32>
    %27 = arith.addf %24, %26 : vector<2x1024xf32>
    %c0_15 = arith.constant 0 : index
    %c0_16 = arith.constant 0 : index
    %28 = vector.load %arg2[%c0_15, %c0_16] : memref<2x16xf32, #tpu.memory_space<vmem>>, vector<2x16xf32>
    %c0_17 = arith.constant 0 : index
    %c0_18 = arith.constant 0 : index
    %29 = vector.load %arg8[%c0_17, %c0_18] : memref<16x128xf32, #tpu.memory_space<vmem>>, vector<16x128xf32>
    %cst_19 = arith.constant dense<0.000000e+00> : vector<2x128xf32>
    %30 = tpu.matmul %28, %29, %cst_19 {dimension_numbers = #tpu.dot_dimension_numbers<[1], [0], [0], [1], [0, 0, 1, 1], [], []>} : vector<2x16xf32>, vector<16x128xf32>, vector<2x128xf32> -> vector<2x128xf32>
    %c0_20 = arith.constant 0 : index
    %c0_21 = arith.constant 0 : index
    %31 = vector.load %arg9[%c0_20, %c0_21] : memref<1x128xf32, #tpu.memory_space<vmem>>, vector<1x128xf32>
    %32 = vector.broadcast %31 : vector<1x128xf32> to vector<2x128xf32>
    %33 = arith.addf %30, %32 : vector<2x128xf32>
    %cst_22 = arith.constant 0.000000e+00 : f32
    %34 = vector.broadcast %cst_22 : f32 to vector<2x128xf32>
    %35 = arith.maximumf %33, %34 : vector<2x128xf32>
    %c0_23 = arith.constant 0 : index
    %c0_24 = arith.constant 0 : index
    %36 = vector.load %arg10[%c0_23, %c0_24] : memref<128x128xf32, #tpu.memory_space<vmem>>, vector<128x128xf32>
    %cst_25 = arith.constant dense<0.000000e+00> : vector<2x128xf32>
    %37 = tpu.matmul %35, %36, %cst_25 {dimension_numbers = #tpu.dot_dimension_numbers<[1], [0], [0], [1], [0, 0, 1, 1], [], []>} : vector<2x128xf32>, vector<128x128xf32>, vector<2x128xf32> -> vector<2x128xf32>
    %c0_26 = arith.constant 0 : index
    %c0_27 = arith.constant 0 : index
    %38 = vector.load %arg11[%c0_26, %c0_27] : memref<1x128xf32, #tpu.memory_space<vmem>>, vector<1x128xf32>
    %39 = vector.broadcast %38 : vector<1x128xf32> to vector<2x128xf32>
    %40 = arith.addf %37, %39 : vector<2x128xf32>
    %cst_28 = arith.constant 0.000000e+00 : f32
    %41 = vector.broadcast %cst_28 : f32 to vector<2x128xf32>
    %42 = arith.maximumf %40, %41 : vector<2x128xf32>
    %c0_29 = arith.constant 0 : index
    %c0_30 = arith.constant 0 : index
    %43 = vector.load %arg12[%c0_29, %c0_30] : memref<1024x256xf32, #tpu.memory_space<vmem>>, vector<1024x256xf32>
    %cst_31 = arith.constant dense<0.000000e+00> : vector<2x256xf32>
    %44 = tpu.matmul %27, %43, %cst_31 {dimension_numbers = #tpu.dot_dimension_numbers<[1], [0], [0], [1], [0, 0, 1, 1], [], []>} : vector<2x1024xf32>, vector<1024x256xf32>, vector<2x256xf32> -> vector<2x256xf32>
    %c0_32 = arith.constant 0 : index
    %c0_33 = arith.constant 0 : index
    %45 = vector.load %arg13[%c0_32, %c0_33] : memref<1x256xf32, #tpu.memory_space<vmem>>, vector<1x256xf32>
    %46 = vector.broadcast %45 : vector<1x256xf32> to vector<2x256xf32>
    %47 = arith.addf %44, %46 : vector<2x256xf32>
    %cst_34 = arith.constant 0.000000e+00 : f32
    %48 = vector.broadcast %cst_34 : f32 to vector<2x256xf32>
    %49 = arith.maximumf %47, %48 : vector<2x256xf32>
    %c0_35 = arith.constant 0 : index
    %c0_36 = arith.constant 0 : index
    %50 = vector.load %arg14[%c0_35, %c0_36] : memref<256x256xf32, #tpu.memory_space<vmem>>, vector<256x256xf32>
    %cst_37 = arith.constant dense<0.000000e+00> : vector<2x256xf32>
    %51 = tpu.matmul %49, %50, %cst_37 {dimension_numbers = #tpu.dot_dimension_numbers<[1], [0], [0], [1], [0, 0, 1, 1], [], []>} : vector<2x256xf32>, vector<256x256xf32>, vector<2x256xf32> -> vector<2x256xf32>
    %c0_38 = arith.constant 0 : index
    %c0_39 = arith.constant 0 : index
    %52 = vector.load %arg15[%c0_38, %c0_39] : memref<1x256xf32, #tpu.memory_space<vmem>>, vector<1x256xf32>
    %53 = vector.broadcast %52 : vector<1x256xf32> to vector<2x256xf32>
    %54 = arith.addf %51, %53 : vector<2x256xf32>
    %cst_40 = arith.constant 0.000000e+00 : f32
    %55 = vector.broadcast %cst_40 : f32 to vector<2x256xf32>
    %56 = arith.maximumf %54, %55 : vector<2x256xf32>
    %c0_41 = arith.constant 0 : index
    %c0_42 = arith.constant 0 : index
    %57 = vector.load %arg16[%c0_41, %c0_42] : memref<1x256xf32, #tpu.memory_space<vmem>>, vector<1x256xf32>
    %58 = vector.broadcast %57 : vector<1x256xf32> to vector<2x256xf32>
    %59 = arith.mulf %56, %58 : vector<2x256xf32>
    %cst_43 = arith.constant dense<0.000000e+00> : vector<2xf32>
    %60 = vector.multi_reduction <add>, %59, %cst_43 [1] : vector<2x256xf32> to vector<2xf32>
    %61 = vector.shape_cast %60 : vector<2xf32> to vector<2x1xf32>
    %c0_44 = arith.constant 0 : index
    %c0_45 = arith.constant 0 : index
    %62 = vector.load %arg17[%c0_44, %c0_45] : memref<1x1xf32, #tpu.memory_space<vmem>>, vector<1x1xf32>
    %63 = vector.broadcast %62 : vector<1x1xf32> to vector<2x1xf32>
    %64 = arith.addf %61, %63 : vector<2x1xf32>
    %c0_46 = arith.constant 0 : index
    %c0_47 = arith.constant 0 : index
    %65 = vector.load %arg32[%c0_46, %c0_47] : memref<2x1xf32, #tpu.memory_space<vmem>>, vector<2x1xf32>
    tpu.vector_store %arg32[%c0_46, %c0_47], %64 {strides = array<i32>} : memref<2x1xf32, #tpu.memory_space<vmem>>, vector<2x1xf32>,
    %c0_48 = arith.constant 0 : index
    %c0_49 = arith.constant 0 : index
    %66 = vector.load %arg18[%c0_48, %c0_49] : memref<1024x512xf32, #tpu.memory_space<vmem>>, vector<1024x512xf32>
    %cst_50 = arith.constant dense<0.000000e+00> : vector<2x512xf32>
    %67 = tpu.matmul %27, %66, %cst_50 {dimension_numbers = #tpu.dot_dimension_numbers<[1], [0], [0], [1], [0, 0, 1, 1], [], []>} : vector<2x1024xf32>, vector<1024x512xf32>, vector<2x512xf32> -> vector<2x512xf32>
    %c0_51 = arith.constant 0 : index
    %c0_52 = arith.constant 0 : index
    %68 = vector.load %arg19[%c0_51, %c0_52] : memref<128x512xf32, #tpu.memory_space<vmem>>, vector<128x512xf32>
    %cst_53 = arith.constant dense<0.000000e+00> : vector<2x512xf32>
    %69 = tpu.matmul %42, %68, %cst_53 {dimension_numbers = #tpu.dot_dimension_numbers<[1], [0], [0], [1], [0, 0, 1, 1], [], []>} : vector<2x128xf32>, vector<128x512xf32>, vector<2x512xf32> -> vector<2x512xf32>
    %70 = arith.addf %67, %69 : vector<2x512xf32>
    %c0_54 = arith.constant 0 : index
    %c0_55 = arith.constant 0 : index
    %71 = vector.load %arg20[%c0_54, %c0_55] : memref<1x512xf32, #tpu.memory_space<vmem>>, vector<1x512xf32>
    %72 = vector.broadcast %71 : vector<1x512xf32> to vector<2x512xf32>
    %73 = arith.addf %70, %72 : vector<2x512xf32>
    %cst_56 = arith.constant 0.000000e+00 : f32
    %74 = vector.broadcast %cst_56 : f32 to vector<2x512xf32>
    %75 = arith.maximumf %73, %74 : vector<2x512xf32>
    %c0_57 = arith.constant 0 : index
    %c0_58 = arith.constant 0 : index
    %76 = vector.load %arg21[%c0_57, %c0_58] : memref<512x512xf32, #tpu.memory_space<vmem>>, vector<512x512xf32>
    %cst_59 = arith.constant dense<0.000000e+00> : vector<2x512xf32>
    %77 = tpu.matmul %75, %76, %cst_59 {dimension_numbers = #tpu.dot_dimension_numbers<[1], [0], [0], [1], [0, 0, 1, 1], [], []>} : vector<2x512xf32>, vector<512x512xf32>, vector<2x512xf32> -> vector<2x512xf32>
    %c0_60 = arith.constant 0 : index
    %c0_61 = arith.constant 0 : index
    %78 = vector.load %arg22[%c0_60, %c0_61] : memref<1x512xf32, #tpu.memory_space<vmem>>, vector<1x512xf32>
    %79 = vector.broadcast %78 : vector<1x512xf32> to vector<2x512xf32>
    %80 = arith.addf %77, %79 : vector<2x512xf32>
    %cst_62 = arith.constant 0.000000e+00 : f32
    %81 = vector.broadcast %cst_62 : f32 to vector<2x512xf32>
    %82 = arith.maximumf %80, %81 : vector<2x512xf32>
    %c0_63 = arith.constant 0 : index
    %c0_64 = arith.constant 0 : index
    %83 = vector.load %arg23[%c0_63, %c0_64] : memref<512x256xf32, #tpu.memory_space<vmem>>, vector<512x256xf32>
    %cst_65 = arith.constant dense<0.000000e+00> : vector<2x256xf32>
    %84 = tpu.matmul %82, %83, %cst_65 {dimension_numbers = #tpu.dot_dimension_numbers<[1], [0], [0], [1], [0, 0, 1, 1], [], []>} : vector<2x512xf32>, vector<512x256xf32>, vector<2x256xf32> -> vector<2x256xf32>
    %c0_66 = arith.constant 0 : index
    %c0_67 = arith.constant 0 : index
    %85 = vector.load %arg24[%c0_66, %c0_67] : memref<1x256xf32, #tpu.memory_space<vmem>>, vector<1x256xf32>
    %86 = vector.broadcast %85 : vector<1x256xf32> to vector<2x256xf32>
    %87 = arith.addf %84, %86 : vector<2x256xf32>
    %cst_68 = arith.constant 0.000000e+00 : f32
    %88 = vector.broadcast %cst_68 : f32 to vector<2x256xf32>
    %89 = arith.maximumf %87, %88 : vector<2x256xf32>
    %c0_69 = arith.constant 0 : index
    %c0_70 = arith.constant 0 : index
    %90 = vector.load %arg3[%c0_69, %c0_70] : memref<2x2xf32, #tpu.memory_space<vmem>>, vector<2x2xf32>
    %c0_71 = arith.constant 0 : index
    %c0_72 = arith.constant 0 : index
    %91 = vector.load %arg25[%c0_71, %c0_72] : memref<2x768xf32, #tpu.memory_space<vmem>>, vector<1x768xf32>
    %c1 = arith.constant 1 : index
    %c0_73 = arith.constant 0 : index
    %92 = vector.load %arg25[%c1, %c0_73] : memref<2x768xf32, #tpu.memory_space<vmem>>, vector<1x768xf32>
    %93 = vector.extract_strided_slice %90 {offsets = [0, 0], sizes = [2, 1], strides = [1, 1]} : vector<2x2xf32> to vector<2x1xf32>
    %c0_74 = arith.constant 0 : index
    %c0_75 = arith.constant 0 : index
    %94 = vector.load %arg26[%c0_74, %c0_75] : memref<2x768xf32, #tpu.memory_space<vmem>>, vector<1x768xf32>
    %95 = vector.broadcast %93 : vector<2x1xf32> to vector<2x768xf32>
    %96 = vector.broadcast %94 : vector<1x768xf32> to vector<2x768xf32>
    %97 = arith.mulf %95, %96 : vector<2x768xf32>
    %98 = vector.extract_strided_slice %90 {offsets = [0, 1], sizes = [2, 1], strides = [1, 1]} : vector<2x2xf32> to vector<2x1xf32>
    %c1_76 = arith.constant 1 : index
    %c0_77 = arith.constant 0 : index
    %99 = vector.load %arg26[%c1_76, %c0_77] : memref<2x768xf32, #tpu.memory_space<vmem>>, vector<1x768xf32>
    %100 = vector.broadcast %98 : vector<2x1xf32> to vector<2x768xf32>
    %101 = vector.broadcast %99 : vector<1x768xf32> to vector<2x768xf32>
    %102 = arith.mulf %100, %101 : vector<2x768xf32>
    %103 = arith.addf %97, %102 : vector<2x768xf32>
    %c0_78 = arith.constant 0 : index
    %c0_79 = arith.constant 0 : index
    %104 = vector.load %arg28[%c0_78, %c0_79] : memref<1x768xf32, #tpu.memory_space<vmem>>, vector<1x768xf32>
    %105 = vector.broadcast %104 : vector<1x768xf32> to vector<2x768xf32>
    %106 = arith.addf %103, %105 : vector<2x768xf32>
    %c0_80 = arith.constant 0 : index
    %c0_81 = arith.constant 0 : index
    %107 = vector.load %arg27[%c0_80, %c0_81] : memref<256x768xf32, #tpu.memory_space<vmem>>, vector<256x768xf32>
    %c0_82 = arith.constant 0 : index
    %c0_83 = arith.constant 0 : index
    %108 = vector.load %arg29[%c0_82, %c0_83] : memref<1x768xf32, #tpu.memory_space<vmem>>, vector<1x768xf32>
    %c0_84 = arith.constant 0 : index
    %c0_85 = arith.constant 0 : index
    %109 = vector.load %arg30[%c0_84, %c0_85] : memref<2x256xf32, #tpu.memory_space<vmem>>, vector<1x256xf32>
    %c1_86 = arith.constant 1 : index
    %c0_87 = arith.constant 0 : index
    %110 = vector.load %arg30[%c1_86, %c0_87] : memref<2x256xf32, #tpu.memory_space<vmem>>, vector<1x256xf32>
    %c0_88 = arith.constant 0 : index
    %c0_89 = arith.constant 0 : index
    %111 = vector.load %arg31[%c0_88, %c0_89] : memref<1x2xf32, #tpu.memory_space<vmem>>, vector<1x1xf32>
    %c0_90 = arith.constant 0 : index
    %c1_91 = arith.constant 1 : index
    %112 = vector.load %arg31[%c0_90, %c1_91] : memref<1x2xf32, #tpu.memory_space<vmem>>, vector<1x1xf32>
    %cst_92 = arith.constant 0.000000e+00 : f32
    %113 = vector.broadcast %cst_92 : f32 to vector<2x1xf32>
    %cst_93 = arith.constant 0.000000e+00 : f32
    %114 = vector.broadcast %cst_93 : f32 to vector<2x1xf32>
    %115 = vector.broadcast %113 : vector<2x1xf32> to vector<2x768xf32>
    %116 = vector.broadcast %91 : vector<1x768xf32> to vector<2x768xf32>
    %117 = arith.mulf %115, %116 : vector<2x768xf32>
    %118 = vector.broadcast %114 : vector<2x1xf32> to vector<2x768xf32>
    %119 = vector.broadcast %92 : vector<1x768xf32> to vector<2x768xf32>
    %120 = arith.mulf %118, %119 : vector<2x768xf32>
    %121 = arith.addf %117, %120 : vector<2x768xf32>
    %122 = arith.addf %121, %106 : vector<2x768xf32>
    %cst_94 = arith.constant dense<0.000000e+00> : vector<2x768xf32>
    %123 = tpu.matmul %89, %107, %cst_94 {dimension_numbers = #tpu.dot_dimension_numbers<[1], [0], [0], [1], [0, 0, 1, 1], [], []>} : vector<2x256xf32>, vector<256x768xf32>, vector<2x768xf32> -> vector<2x768xf32>
    %124 = vector.broadcast %108 : vector<1x768xf32> to vector<2x768xf32>
    %125 = arith.addf %123, %124 : vector<2x768xf32>
    %126 = vector.extract_strided_slice %122 {offsets = [0, 0], sizes = [2, 256], strides = [1, 1]} : vector<2x768xf32> to vector<2x256xf32>
    %127 = vector.extract_strided_slice %125 {offsets = [0, 0], sizes = [2, 256], strides = [1, 1]} : vector<2x768xf32> to vector<2x256xf32>
    %128 = arith.addf %126, %127 : vector<2x256xf32>
    %129 = arith.negf %128 : vector<2x256xf32>
    %130 = math.exp %129 : vector<2x256xf32>
    %cst_95 = arith.constant 1.000000e+00 : f32
    %131 = vector.broadcast %cst_95 : f32 to vector<2x256xf32>
    %132 = arith.addf %131, %130 : vector<2x256xf32>
    %133 = arith.divf %131, %132 : vector<2x256xf32>
    %134 = vector.extract_strided_slice %122 {offsets = [0, 256], sizes = [2, 256], strides = [1, 1]} : vector<2x768xf32> to vector<2x256xf32>
    %135 = vector.extract_strided_slice %125 {offsets = [0, 256], sizes = [2, 256], strides = [1, 1]} : vector<2x768xf32> to vector<2x256xf32>
    %136 = arith.addf %134, %135 : vector<2x256xf32>
    %137 = arith.negf %136 : vector<2x256xf32>
    %138 = math.exp %137 : vector<2x256xf32>
    %cst_96 = arith.constant 1.000000e+00 : f32
    %139 = vector.broadcast %cst_96 : f32 to vector<2x256xf32>
    %140 = arith.addf %139, %138 : vector<2x256xf32>
    %141 = arith.divf %139, %140 : vector<2x256xf32>
    %142 = vector.extract_strided_slice %122 {offsets = [0, 512], sizes = [2, 256], strides = [1, 1]} : vector<2x768xf32> to vector<2x256xf32>
    %143 = vector.extract_strided_slice %125 {offsets = [0, 512], sizes = [2, 256], strides = [1, 1]} : vector<2x768xf32> to vector<2x256xf32>
    %144 = arith.mulf %133, %143 : vector<2x256xf32>
    %145 = arith.addf %142, %144 : vector<2x256xf32>
    %146 = math.tanh %145 : vector<2x256xf32>
    %cst_97 = arith.constant 1.000000e+00 : f32
    %147 = vector.broadcast %cst_97 : f32 to vector<2x256xf32>
    %148 = arith.subf %147, %141 : vector<2x256xf32>
    %149 = arith.mulf %148, %146 : vector<2x256xf32>
    %150 = arith.mulf %141, %89 : vector<2x256xf32>
    %151 = arith.addf %149, %150 : vector<2x256xf32>
    %152 = vector.broadcast %109 : vector<1x256xf32> to vector<2x256xf32>
    %153 = arith.mulf %151, %152 : vector<2x256xf32>
    %cst_98 = arith.constant dense<0.000000e+00> : vector<2xf32>
    %154 = vector.multi_reduction <add>, %153, %cst_98 [1] : vector<2x256xf32> to vector<2xf32>
    %155 = vector.shape_cast %154 : vector<2xf32> to vector<2x1xf32>
    %156 = arith.addf %113, %155 : vector<2x1xf32>
    %157 = vector.broadcast %111 : vector<1x1xf32> to vector<2x1xf32>
    %158 = arith.addf %156, %157 : vector<2x1xf32>
    %159 = vector.broadcast %110 : vector<1x256xf32> to vector<2x256xf32>
    %160 = arith.mulf %151, %159 : vector<2x256xf32>
    %cst_99 = arith.constant dense<0.000000e+00> : vector<2xf32>
    %161 = vector.multi_reduction <add>, %160, %cst_99 [1] : vector<2x256xf32> to vector<2xf32>
    %162 = vector.shape_cast %161 : vector<2xf32> to vector<2x1xf32>
    %163 = arith.addf %114, %162 : vector<2x1xf32>
    %164 = vector.broadcast %112 : vector<1x1xf32> to vector<2x1xf32>
    %165 = arith.addf %163, %164 : vector<2x1xf32>
    %c0_100 = arith.constant 0 : index
    %c0_101 = arith.constant 0 : index
    %166 = vector.load %arg33[%c0_100, %c0_101] : memref<2x8xf32, #tpu.memory_space<vmem>>, vector<2x1xf32>
    tpu.vector_store %arg33[%c0_100, %c0_101], %158 {strides = array<i32>} : memref<2x8xf32, #tpu.memory_space<vmem>>, vector<2x1xf32>,
    %c0_102 = arith.constant 0 : index
    %c1_103 = arith.constant 1 : index
    %167 = vector.load %arg33[%c0_102, %c1_103] : memref<2x8xf32, #tpu.memory_space<vmem>>, vector<2x1xf32>
    tpu.vector_store %arg33[%c0_102, %c1_103], %165 {strides = array<i32>} : memref<2x8xf32, #tpu.memory_space<vmem>>, vector<2x1xf32>,
    %168 = vector.broadcast %158 : vector<2x1xf32> to vector<2x768xf32>
    %169 = vector.broadcast %91 : vector<1x768xf32> to vector<2x768xf32>
    %170 = arith.mulf %168, %169 : vector<2x768xf32>
    %171 = vector.broadcast %165 : vector<2x1xf32> to vector<2x768xf32>
    %172 = vector.broadcast %92 : vector<1x768xf32> to vector<2x768xf32>
    %173 = arith.mulf %171, %172 : vector<2x768xf32>
    %174 = arith.addf %170, %173 : vector<2x768xf32>
    %175 = arith.addf %174, %106 : vector<2x768xf32>
    %cst_104 = arith.constant dense<0.000000e+00> : vector<2x768xf32>
    %176 = tpu.matmul %151, %107, %cst_104 {dimension_numbers = #tpu.dot_dimension_numbers<[1], [0], [0], [1], [0, 0, 1, 1], [], []>} : vector<2x256xf32>, vector<256x768xf32>, vector<2x768xf32> -> vector<2x768xf32>
    %177 = vector.broadcast %108 : vector<1x768xf32> to vector<2x768xf32>
    %178 = arith.addf %176, %177 : vector<2x768xf32>
    %179 = vector.extract_strided_slice %175 {offsets = [0, 0], sizes = [2, 256], strides = [1, 1]} : vector<2x768xf32> to vector<2x256xf32>
    %180 = vector.extract_strided_slice %178 {offsets = [0, 0], sizes = [2, 256], strides = [1, 1]} : vector<2x768xf32> to vector<2x256xf32>
    %181 = arith.addf %179, %180 : vector<2x256xf32>
    %182 = arith.negf %181 : vector<2x256xf32>
    %183 = math.exp %182 : vector<2x256xf32>
    %cst_105 = arith.constant 1.000000e+00 : f32
    %184 = vector.broadcast %cst_105 : f32 to vector<2x256xf32>
    %185 = arith.addf %184, %183 : vector<2x256xf32>
    %186 = arith.divf %184, %185 : vector<2x256xf32>
    %187 = vector.extract_strided_slice %175 {offsets = [0, 256], sizes = [2, 256], strides = [1, 1]} : vector<2x768xf32> to vector<2x256xf32>
    %188 = vector.extract_strided_slice %178 {offsets = [0, 256], sizes = [2, 256], strides = [1, 1]} : vector<2x768xf32> to vector<2x256xf32>
    %189 = arith.addf %187, %188 : vector<2x256xf32>
    %190 = arith.negf %189 : vector<2x256xf32>
    %191 = math.exp %190 : vector<2x256xf32>
    %cst_106 = arith.constant 1.000000e+00 : f32
    %192 = vector.broadcast %cst_106 : f32 to vector<2x256xf32>
    %193 = arith.addf %192, %191 : vector<2x256xf32>
    %194 = arith.divf %192, %193 : vector<2x256xf32>
    %195 = vector.extract_strided_slice %175 {offsets = [0, 512], sizes = [2, 256], strides = [1, 1]} : vector<2x768xf32> to vector<2x256xf32>
    %196 = vector.extract_strided_slice %178 {offsets = [0, 512], sizes = [2, 256], strides = [1, 1]} : vector<2x768xf32> to vector<2x256xf32>
    %197 = arith.mulf %186, %196 : vector<2x256xf32>
    %198 = arith.addf %195, %197 : vector<2x256xf32>
    %199 = math.tanh %198 : vector<2x256xf32>
    %cst_107 = arith.constant 1.000000e+00 : f32
    %200 = vector.broadcast %cst_107 : f32 to vector<2x256xf32>
    %201 = arith.subf %200, %194 : vector<2x256xf32>
    %202 = arith.mulf %201, %199 : vector<2x256xf32>
    %203 = arith.mulf %194, %151 : vector<2x256xf32>
    %204 = arith.addf %202, %203 : vector<2x256xf32>
    %205 = vector.broadcast %109 : vector<1x256xf32> to vector<2x256xf32>
    %206 = arith.mulf %204, %205 : vector<2x256xf32>
    %cst_108 = arith.constant dense<0.000000e+00> : vector<2xf32>
    %207 = vector.multi_reduction <add>, %206, %cst_108 [1] : vector<2x256xf32> to vector<2xf32>
    %208 = vector.shape_cast %207 : vector<2xf32> to vector<2x1xf32>
    %209 = arith.addf %158, %208 : vector<2x1xf32>
    %210 = vector.broadcast %111 : vector<1x1xf32> to vector<2x1xf32>
    %211 = arith.addf %209, %210 : vector<2x1xf32>
    %212 = vector.broadcast %110 : vector<1x256xf32> to vector<2x256xf32>
    %213 = arith.mulf %204, %212 : vector<2x256xf32>
    %cst_109 = arith.constant dense<0.000000e+00> : vector<2xf32>
    %214 = vector.multi_reduction <add>, %213, %cst_109 [1] : vector<2x256xf32> to vector<2xf32>
    %215 = vector.shape_cast %214 : vector<2xf32> to vector<2x1xf32>
    %216 = arith.addf %165, %215 : vector<2x1xf32>
    %217 = vector.broadcast %112 : vector<1x1xf32> to vector<2x1xf32>
    %218 = arith.addf %216, %217 : vector<2x1xf32>
    %c0_110 = arith.constant 0 : index
    %c2 = arith.constant 2 : index
    %219 = vector.load %arg33[%c0_110, %c2] : memref<2x8xf32, #tpu.memory_space<vmem>>, vector<2x1xf32>
    tpu.vector_store %arg33[%c0_110, %c2], %211 {strides = array<i32>} : memref<2x8xf32, #tpu.memory_space<vmem>>, vector<2x1xf32>,
    %c0_111 = arith.constant 0 : index
    %c3 = arith.constant 3 : index
    %220 = vector.load %arg33[%c0_111, %c3] : memref<2x8xf32, #tpu.memory_space<vmem>>, vector<2x1xf32>
    tpu.vector_store %arg33[%c0_111, %c3], %218 {strides = array<i32>} : memref<2x8xf32, #tpu.memory_space<vmem>>, vector<2x1xf32>,
    %221 = vector.broadcast %211 : vector<2x1xf32> to vector<2x768xf32>
    %222 = vector.broadcast %91 : vector<1x768xf32> to vector<2x768xf32>
    %223 = arith.mulf %221, %222 : vector<2x768xf32>
    %224 = vector.broadcast %218 : vector<2x1xf32> to vector<2x768xf32>
    %225 = vector.broadcast %92 : vector<1x768xf32> to vector<2x768xf32>
    %226 = arith.mulf %224, %225 : vector<2x768xf32>
    %227 = arith.addf %223, %226 : vector<2x768xf32>
    %228 = arith.addf %227, %106 : vector<2x768xf32>
    %cst_112 = arith.constant dense<0.000000e+00> : vector<2x768xf32>
    %229 = tpu.matmul %204, %107, %cst_112 {dimension_numbers = #tpu.dot_dimension_numbers<[1], [0], [0], [1], [0, 0, 1, 1], [], []>} : vector<2x256xf32>, vector<256x768xf32>, vector<2x768xf32> -> vector<2x768xf32>
    %230 = vector.broadcast %108 : vector<1x768xf32> to vector<2x768xf32>
    %231 = arith.addf %229, %230 : vector<2x768xf32>
    %232 = vector.extract_strided_slice %228 {offsets = [0, 0], sizes = [2, 256], strides = [1, 1]} : vector<2x768xf32> to vector<2x256xf32>
    %233 = vector.extract_strided_slice %231 {offsets = [0, 0], sizes = [2, 256], strides = [1, 1]} : vector<2x768xf32> to vector<2x256xf32>
    %234 = arith.addf %232, %233 : vector<2x256xf32>
    %235 = arith.negf %234 : vector<2x256xf32>
    %236 = math.exp %235 : vector<2x256xf32>
    %cst_113 = arith.constant 1.000000e+00 : f32
    %237 = vector.broadcast %cst_113 : f32 to vector<2x256xf32>
    %238 = arith.addf %237, %236 : vector<2x256xf32>
    %239 = arith.divf %237, %238 : vector<2x256xf32>
    %240 = vector.extract_strided_slice %228 {offsets = [0, 256], sizes = [2, 256], strides = [1, 1]} : vector<2x768xf32> to vector<2x256xf32>
    %241 = vector.extract_strided_slice %231 {offsets = [0, 256], sizes = [2, 256], strides = [1, 1]} : vector<2x768xf32> to vector<2x256xf32>
    %242 = arith.addf %240, %241 : vector<2x256xf32>
    %243 = arith.negf %242 : vector<2x256xf32>
    %244 = math.exp %243 : vector<2x256xf32>
    %cst_114 = arith.constant 1.000000e+00 : f32
    %245 = vector.broadcast %cst_114 : f32 to vector<2x256xf32>
    %246 = arith.addf %245, %244 : vector<2x256xf32>
    %247 = arith.divf %245, %246 : vector<2x256xf32>
    %248 = vector.extract_strided_slice %228 {offsets = [0, 512], sizes = [2, 256], strides = [1, 1]} : vector<2x768xf32> to vector<2x256xf32>
    %249 = vector.extract_strided_slice %231 {offsets = [0, 512], sizes = [2, 256], strides = [1, 1]} : vector<2x768xf32> to vector<2x256xf32>
    %250 = arith.mulf %239, %249 : vector<2x256xf32>
    %251 = arith.addf %248, %250 : vector<2x256xf32>
    %252 = math.tanh %251 : vector<2x256xf32>
    %cst_115 = arith.constant 1.000000e+00 : f32
    %253 = vector.broadcast %cst_115 : f32 to vector<2x256xf32>
    %254 = arith.subf %253, %247 : vector<2x256xf32>
    %255 = arith.mulf %254, %252 : vector<2x256xf32>
    %256 = arith.mulf %247, %204 : vector<2x256xf32>
    %257 = arith.addf %255, %256 : vector<2x256xf32>
    %258 = vector.broadcast %109 : vector<1x256xf32> to vector<2x256xf32>
    %259 = arith.mulf %257, %258 : vector<2x256xf32>
    %cst_116 = arith.constant dense<0.000000e+00> : vector<2xf32>
    %260 = vector.multi_reduction <add>, %259, %cst_116 [1] : vector<2x256xf32> to vector<2xf32>
    %261 = vector.shape_cast %260 : vector<2xf32> to vector<2x1xf32>
    %262 = arith.addf %211, %261 : vector<2x1xf32>
    %263 = vector.broadcast %111 : vector<1x1xf32> to vector<2x1xf32>
    %264 = arith.addf %262, %263 : vector<2x1xf32>
    %265 = vector.broadcast %110 : vector<1x256xf32> to vector<2x256xf32>
    %266 = arith.mulf %257, %265 : vector<2x256xf32>
    %cst_117 = arith.constant dense<0.000000e+00> : vector<2xf32>
    %267 = vector.multi_reduction <add>, %266, %cst_117 [1] : vector<2x256xf32> to vector<2xf32>
    %268 = vector.shape_cast %267 : vector<2xf32> to vector<2x1xf32>
    %269 = arith.addf %218, %268 : vector<2x1xf32>
    %270 = vector.broadcast %112 : vector<1x1xf32> to vector<2x1xf32>
    %271 = arith.addf %269, %270 : vector<2x1xf32>
    %c0_118 = arith.constant 0 : index
    %c4 = arith.constant 4 : index
    %272 = vector.load %arg33[%c0_118, %c4] : memref<2x8xf32, #tpu.memory_space<vmem>>, vector<2x1xf32>
    tpu.vector_store %arg33[%c0_118, %c4], %264 {strides = array<i32>} : memref<2x8xf32, #tpu.memory_space<vmem>>, vector<2x1xf32>,
    %c0_119 = arith.constant 0 : index
    %c5 = arith.constant 5 : index
    %273 = vector.load %arg33[%c0_119, %c5] : memref<2x8xf32, #tpu.memory_space<vmem>>, vector<2x1xf32>
    tpu.vector_store %arg33[%c0_119, %c5], %271 {strides = array<i32>} : memref<2x8xf32, #tpu.memory_space<vmem>>, vector<2x1xf32>,
    %274 = vector.broadcast %264 : vector<2x1xf32> to vector<2x768xf32>
    %275 = vector.broadcast %91 : vector<1x768xf32> to vector<2x768xf32>
    %276 = arith.mulf %274, %275 : vector<2x768xf32>
    %277 = vector.broadcast %271 : vector<2x1xf32> to vector<2x768xf32>
    %278 = vector.broadcast %92 : vector<1x768xf32> to vector<2x768xf32>
    %279 = arith.mulf %277, %278 : vector<2x768xf32>
    %280 = arith.addf %276, %279 : vector<2x768xf32>
    %281 = arith.addf %280, %106 : vector<2x768xf32>
    %cst_120 = arith.constant dense<0.000000e+00> : vector<2x768xf32>
    %282 = tpu.matmul %257, %107, %cst_120 {dimension_numbers = #tpu.dot_dimension_numbers<[1], [0], [0], [1], [0, 0, 1, 1], [], []>} : vector<2x256xf32>, vector<256x768xf32>, vector<2x768xf32> -> vector<2x768xf32>
    %283 = vector.broadcast %108 : vector<1x768xf32> to vector<2x768xf32>
    %284 = arith.addf %282, %283 : vector<2x768xf32>
    %285 = vector.extract_strided_slice %281 {offsets = [0, 0], sizes = [2, 256], strides = [1, 1]} : vector<2x768xf32> to vector<2x256xf32>
    %286 = vector.extract_strided_slice %284 {offsets = [0, 0], sizes = [2, 256], strides = [1, 1]} : vector<2x768xf32> to vector<2x256xf32>
    %287 = arith.addf %285, %286 : vector<2x256xf32>
    %288 = arith.negf %287 : vector<2x256xf32>
    %289 = math.exp %288 : vector<2x256xf32>
    %cst_121 = arith.constant 1.000000e+00 : f32
    %290 = vector.broadcast %cst_121 : f32 to vector<2x256xf32>
    %291 = arith.addf %290, %289 : vector<2x256xf32>
    %292 = arith.divf %290, %291 : vector<2x256xf32>
    %293 = vector.extract_strided_slice %281 {offsets = [0, 256], sizes = [2, 256], strides = [1, 1]} : vector<2x768xf32> to vector<2x256xf32>
    %294 = vector.extract_strided_slice %284 {offsets = [0, 256], sizes = [2, 256], strides = [1, 1]} : vector<2x768xf32> to vector<2x256xf32>
    %295 = arith.addf %293, %294 : vector<2x256xf32>
    %296 = arith.negf %295 : vector<2x256xf32>
    %297 = math.exp %296 : vector<2x256xf32>
    %cst_122 = arith.constant 1.000000e+00 : f32
    %298 = vector.broadcast %cst_122 : f32 to vector<2x256xf32>
    %299 = arith.addf %298, %297 : vector<2x256xf32>
    %300 = arith.divf %298, %299 : vector<2x256xf32>
    %301 = vector.extract_strided_slice %281 {offsets = [0, 512], sizes = [2, 256], strides = [1, 1]} : vector<2x768xf32> to vector<2x256xf32>
    %302 = vector.extract_strided_slice %284 {offsets = [0, 512], sizes = [2, 256], strides = [1, 1]} : vector<2x768xf32> to vector<2x256xf32>
    %303 = arith.mulf %292, %302 : vector<2x256xf32>
    %304 = arith.addf %301, %303 : vector<2x256xf32>
    %305 = math.tanh %304 : vector<2x256xf32>
    %cst_123 = arith.constant 1.000000e+00 : f32
    %306 = vector.broadcast %cst_123 : f32 to vector<2x256xf32>
    %307 = arith.subf %306, %300 : vector<2x256xf32>
    %308 = arith.mulf %307, %305 : vector<2x256xf32>
    %309 = arith.mulf %300, %257 : vector<2x256xf32>
    %310 = arith.addf %308, %309 : vector<2x256xf32>
    %311 = vector.broadcast %109 : vector<1x256xf32> to vector<2x256xf32>
    %312 = arith.mulf %310, %311 : vector<2x256xf32>
    %cst_124 = arith.constant dense<0.000000e+00> : vector<2xf32>
    %313 = vector.multi_reduction <add>, %312, %cst_124 [1] : vector<2x256xf32> to vector<2xf32>
    %314 = vector.shape_cast %313 : vector<2xf32> to vector<2x1xf32>
    %315 = arith.addf %264, %314 : vector<2x1xf32>
    %316 = vector.broadcast %111 : vector<1x1xf32> to vector<2x1xf32>
    %317 = arith.addf %315, %316 : vector<2x1xf32>
    %318 = vector.broadcast %110 : vector<1x256xf32> to vector<2x256xf32>
    %319 = arith.mulf %310, %318 : vector<2x256xf32>
    %cst_125 = arith.constant dense<0.000000e+00> : vector<2xf32>
    %320 = vector.multi_reduction <add>, %319, %cst_125 [1] : vector<2x256xf32> to vector<2xf32>
    %321 = vector.shape_cast %320 : vector<2xf32> to vector<2x1xf32>
    %322 = arith.addf %271, %321 : vector<2x1xf32>
    %323 = vector.broadcast %112 : vector<1x1xf32> to vector<2x1xf32>
    %324 = arith.addf %322, %323 : vector<2x1xf32>
    %c0_126 = arith.constant 0 : index
    %c6 = arith.constant 6 : index
    %325 = vector.load %arg33[%c0_126, %c6] : memref<2x8xf32, #tpu.memory_space<vmem>>, vector<2x1xf32>
    tpu.vector_store %arg33[%c0_126, %c6], %317 {strides = array<i32>} : memref<2x8xf32, #tpu.memory_space<vmem>>, vector<2x1xf32>,
    %c0_127 = arith.constant 0 : index
    %c7 = arith.constant 7 : index
    %326 = vector.load %arg33[%c0_127, %c7] : memref<2x8xf32, #tpu.memory_space<vmem>>, vector<2x1xf32>
    tpu.vector_store %arg33[%c0_127, %c7], %324 {strides = array<i32>} : memref<2x8xf32, #tpu.memory_space<vmem>>, vector<2x1xf32>,
    return
  }
  func.func @transform_0(%arg0: i32) -> (i32, i32) {
    %c0_i32 = arith.constant 0 : i32
    %c0_i32_0 = arith.constant 0 : i32
    %c0_i32_1 = arith.constant 0 : i32
    return %c0_i32, %c0_i32_0 : i32, i32
  }
  func.func @transform_1(%arg0: i32) -> (i32, i32) {
    %c0_i32 = arith.constant 0 : i32
    %c0_i32_0 = arith.constant 0 : i32
    %c0_i32_1 = arith.constant 0 : i32
    return %c0_i32, %c0_i32_0 : i32, i32
  }
  func.func @transform_2(%arg0: i32) -> (i32, i32) {
    %c0_i32 = arith.constant 0 : i32
    %c0_i32_0 = arith.constant 0 : i32
    %c0_i32_1 = arith.constant 0 : i32
    return %c0_i32, %c0_i32_0 : i32, i32
  }
  func.func @transform_3(%arg0: i32) -> (i32, i32) {
    %c0_i32 = arith.constant 0 : i32
    %c0_i32_0 = arith.constant 0 : i32
    %c0_i32_1 = arith.constant 0 : i32
    return %c0_i32, %c0_i32_0 : i32, i32
  }
  func.func @transform_4(%arg0: i32) -> (i32, i32) {
    %c0_i32 = arith.constant 0 : i32
    %c0_i32_0 = arith.constant 0 : i32
    %c0_i32_1 = arith.constant 0 : i32
    return %c0_i32, %c0_i32_0 : i32, i32
  }
  func.func @transform_5(%arg0: i32) -> (i32, i32) {
    %c0_i32 = arith.constant 0 : i32
    %c0_i32_0 = arith.constant 0 : i32
    %c0_i32_1 = arith.constant 0 : i32
    return %c0_i32, %c0_i32_0 : i32, i32
  }
  func.func @transform_6(%arg0: i32) -> (i32, i32) {
    %c0_i32 = arith.constant 0 : i32
    %c0_i32_0 = arith.constant 0 : i32
    %c0_i32_1 = arith.constant 0 : i32
    return %c0_i32, %c0_i32_0 : i32, i32
  }
  func.func @transform_7(%arg0: i32) -> (i32, i32) {
    %c0_i32 = arith.constant 0 : i32
    %c0_i32_0 = arith.constant 0 : i32
    %c0_i32_1 = arith.constant 0 : i32
    return %c0_i32, %c0_i32_0 : i32, i32
  }
  func.func @transform_8(%arg0: i32) -> (i32, i32) {
    %c0_i32 = arith.constant 0 : i32
    %c0_i32_0 = arith.constant 0 : i32
    %c0_i32_1 = arith.constant 0 : i32
    return %c0_i32, %c0_i32_0 : i32, i32
  }
  func.func @transform_9(%arg0: i32) -> (i32, i32) {
    %c0_i32 = arith.constant 0 : i32
    %c0_i32_0 = arith.constant 0 : i32
    %c0_i32_1 = arith.constant 0 : i32
    return %c0_i32, %c0_i32_0 : i32, i32
  }
  func.func @transform_10(%arg0: i32) -> (i32, i32) {
    %c0_i32 = arith.constant 0 : i32
    %c0_i32_0 = arith.constant 0 : i32
    %c0_i32_1 = arith.constant 0 : i32
    return %c0_i32, %c0_i32_0 : i32, i32
  }
  func.func @transform_11(%arg0: i32) -> (i32, i32) {
    %c0_i32 = arith.constant 0 : i32
    %c0_i32_0 = arith.constant 0 : i32
    %c0_i32_1 = arith.constant 0 : i32
    return %c0_i32, %c0_i32_0 : i32, i32
  }
  func.func @transform_12(%arg0: i32) -> (i32, i32) {
    %c0_i32 = arith.constant 0 : i32
    %c0_i32_0 = arith.constant 0 : i32
    %c0_i32_1 = arith.constant 0 : i32
    return %c0_i32, %c0_i32_0 : i32, i32
  }
  func.func @transform_13(%arg0: i32) -> (i32, i32) {
    %c0_i32 = arith.constant 0 : i32
    %c0_i32_0 = arith.constant 0 : i32
    %c0_i32_1 = arith.constant 0 : i32
    return %c0_i32, %c0_i32_0 : i32, i32
  }
  func.func @transform_14(%arg0: i32) -> (i32, i32) {
    %c0_i32 = arith.constant 0 : i32
    %c0_i32_0 = arith.constant 0 : i32
    %c0_i32_1 = arith.constant 0 : i32
    return %c0_i32, %c0_i32_0 : i32, i32
  }
  func.func @transform_15(%arg0: i32) -> (i32, i32) {
    %c0_i32 = arith.constant 0 : i32
    %c0_i32_0 = arith.constant 0 : i32
    %c0_i32_1 = arith.constant 0 : i32
    return %c0_i32, %c0_i32_0 : i32, i32
  }
  func.func @transform_16(%arg0: i32) -> (i32, i32) {
    %c0_i32 = arith.constant 0 : i32
    %c0_i32_0 = arith.constant 0 : i32
    %c0_i32_1 = arith.constant 0 : i32
    return %c0_i32, %c0_i32_0 : i32, i32
  }
  func.func @transform_17(%arg0: i32) -> (i32, i32) {
    %c0_i32 = arith.constant 0 : i32
    %c0_i32_0 = arith.constant 0 : i32
    %c0_i32_1 = arith.constant 0 : i32
    return %c0_i32, %c0_i32_0 : i32, i32
  }
  func.func @transform_18(%arg0: i32) -> (i32, i32) {
    %c0_i32 = arith.constant 0 : i32
    %c0_i32_0 = arith.constant 0 : i32
    %c0_i32_1 = arith.constant 0 : i32
    return %c0_i32, %c0_i32_0 : i32, i32
  }
  func.func @transform_19(%arg0: i32) -> (i32, i32) {
    %c0_i32 = arith.constant 0 : i32
    %c0_i32_0 = arith.constant 0 : i32
    %c0_i32_1 = arith.constant 0 : i32
    return %c0_i32, %c0_i32_0 : i32, i32
  }
  func.func @transform_20(%arg0: i32) -> (i32, i32) {
    %c0_i32 = arith.constant 0 : i32
    %c0_i32_0 = arith.constant 0 : i32
    %c0_i32_1 = arith.constant 0 : i32
    return %c0_i32, %c0_i32_0 : i32, i32
  }
  func.func @transform_21(%arg0: i32) -> (i32, i32) {
    %c0_i32 = arith.constant 0 : i32
    %c0_i32_0 = arith.constant 0 : i32
    %c0_i32_1 = arith.constant 0 : i32
    return %c0_i32, %c0_i32_0 : i32, i32
  }
  func.func @transform_22(%arg0: i32) -> (i32, i32) {
    %c0_i32 = arith.constant 0 : i32
    %c0_i32_0 = arith.constant 0 : i32
    %c0_i32_1 = arith.constant 0 : i32
    return %c0_i32, %c0_i32_0 : i32, i32
  }
  func.func @transform_23(%arg0: i32) -> (i32, i32) {
    %c0_i32 = arith.constant 0 : i32
    %c0_i32_0 = arith.constant 0 : i32
    %c0_i32_1 = arith.constant 0 : i32
    return %c0_i32, %c0_i32_0 : i32, i32
  }
  func.func @transform_24(%arg0: i32) -> (i32, i32) {
    %c0_i32 = arith.constant 0 : i32
    %c0_i32_0 = arith.constant 0 : i32
    %c0_i32_1 = arith.constant 0 : i32
    return %c0_i32, %c0_i32_0 : i32, i32
  }
  func.func @transform_25(%arg0: i32) -> (i32, i32) {
    %c0_i32 = arith.constant 0 : i32
    %c0_i32_0 = arith.constant 0 : i32
    %c0_i32_1 = arith.constant 0 : i32
    return %c0_i32, %c0_i32_0 : i32, i32
  }
  func.func @transform_26(%arg0: i32) -> (i32, i32) {
    %c0_i32 = arith.constant 0 : i32
    %c0_i32_0 = arith.constant 0 : i32
    %c0_i32_1 = arith.constant 0 : i32
    return %c0_i32, %c0_i32_0 : i32, i32
  }
  func.func @transform_27(%arg0: i32) -> (i32, i32) {
    %c0_i32 = arith.constant 0 : i32
    %c0_i32_0 = arith.constant 0 : i32
    %c0_i32_1 = arith.constant 0 : i32
    return %c0_i32, %c0_i32_0 : i32, i32
  }
  func.func @transform_28(%arg0: i32) -> (i32, i32) {
    %c0_i32 = arith.constant 0 : i32
    %c0_i32_0 = arith.constant 0 : i32
    %c0_i32_1 = arith.constant 0 : i32
    return %c0_i32, %c0_i32_0 : i32, i32
  }
  func.func @transform_29(%arg0: i32) -> (i32, i32) {
    %c0_i32 = arith.constant 0 : i32
    %c0_i32_0 = arith.constant 0 : i32
    %c0_i32_1 = arith.constant 0 : i32
    return %c0_i32, %c0_i32_0 : i32, i32
  }
  func.func @transform_30(%arg0: i32) -> (i32, i32) {
    %c0_i32 = arith.constant 0 : i32
    %c0_i32_0 = arith.constant 0 : i32
    %c0_i32_1 = arith.constant 0 : i32
    return %c0_i32, %c0_i32_0 : i32, i32
  }
  func.func @transform_31(%arg0: i32) -> (i32, i32) {
    %c0_i32 = arith.constant 0 : i32
    %c0_i32_0 = arith.constant 0 : i32
    %c0_i32_1 = arith.constant 0 : i32
    return %c0_i32, %c0_i32_0 : i32, i32
  }
  func.func @transform_32(%arg0: i32) -> (i32, i32) {
    %c0_i32 = arith.constant 0 : i32
    %c0_i32_0 = arith.constant 0 : i32
    %c0_i32_1 = arith.constant 0 : i32
    return %c0_i32, %c0_i32_0 : i32, i32
  }
}

</mosaic_0001>

<llo_original>
// kernel: va_forward.1
$region0: #{va_forward.1}
  #allocation0 [shape = 'u32[]', space=smem, size = 0x4, offset = 0x4, fixed_abs, tag = 'smem constant byte address 0x4 - core index']
  #allocation1 [shape = 'u32[144,128]{1,0:T(1,128)}', space=vmem, size = 0x12000, scoped, tag = 'internal scratch']
  #allocation2 [shape = 'f32[1,1]{1,0:T(1,128)S(1)}', space=vmem, size = 0x200, scoped, tag = 'scoped memory for va_forward.1']
  %s0 = inlined_call_operand.smem [shape: u32[33], index: -1, kind: input, shape index: {}]
  %s1 = sld [smem:[%s0]]
  %s2 = scalar_lea.smem %s0, 1
  %s3 = sld [smem:[%s2]]
  %s4 = scalar_lea.smem %s0, 2
  %s5 = sld [smem:[%s4]]
  %s6 = scalar_lea.smem %s0, 3
  %s7 = sld [smem:[%s6]]
  %s8 = scalar_lea.smem %s0, 4
  %s9 = sld [smem:[%s8]]
  %s10 = scalar_lea.smem %s0, 5
  %s11 = sld [smem:[%s10]]
  %s12 = scalar_lea.smem %s0, 6
  %s13 = sld [smem:[%s12]]
  %s14 = scalar_lea.smem %s0, 7
  %s15 = sld [smem:[%s14]]
  %s16 = scalar_lea.smem %s0, 8
  %s17 = sld [smem:[%s16]]
  %s18 = scalar_lea.smem %s0, 9
  %s19 = sld [smem:[%s18]]
  %s20 = scalar_lea.smem %s0, 10
  %s21 = sld [smem:[%s20]]
  %s22 = scalar_lea.smem %s0, 11
  %s23 = sld [smem:[%s22]]
  %s24 = scalar_lea.smem %s0, 12
  %s25 = sld [smem:[%s24]]
  %s26 = scalar_lea.smem %s0, 13
  %s27 = sld [smem:[%s26]]
  %s28 = scalar_lea.smem %s0, 14
  %s29 = sld [smem:[%s28]]
  %s30 = scalar_lea.smem %s0, 15
  %s31 = sld [smem:[%s30]]
  %s32 = scalar_lea.smem %s0, 16
  %s33 = sld [smem:[%s32]]
  %s34 = scalar_lea.smem %s0, 17
  %s35 = sld [smem:[%s34]]
  %s36 = scalar_lea.smem %s0, 18
  %s37 = sld [smem:[%s36]]
  %s38 = scalar_lea.smem %s0, 19
  %s39 = sld [smem:[%s38]]
  %s40 = scalar_lea.smem %s0, 20
  %s41 = sld [smem:[%s40]]
  %s42 = scalar_lea.smem %s0, 21
  %s43 = sld [smem:[%s42]]
  %s44 = scalar_lea.smem %s0, 22
  %s45 = sld [smem:[%s44]]
  %s46 = scalar_lea.smem %s0, 23
  %s47 = sld [smem:[%s46]]
  %s48 = scalar_lea.smem %s0, 24
  %s49 = sld [smem:[%s48]]
  %s50 = scalar_lea.smem %s0, 25
  %s51 = sld [smem:[%s50]]
  %s52 = scalar_lea.smem %s0, 26
  %s53 = sld [smem:[%s52]]
  %s54 = scalar_lea.smem %s0, 27
  %s55 = sld [smem:[%s54]]
  %s56 = scalar_lea.smem %s0, 28
  %s57 = sld [smem:[%s56]]
  %s58 = scalar_lea.smem %s0, 29
  %s59 = sld [smem:[%s58]]
  %s60 = scalar_lea.smem %s0, 30
  %s61 = sld [smem:[%s60]]
  %s62 = scalar_lea.smem %s0, 31
  %s63 = sld [smem:[%s62]]
  %s64 = scalar_lea.smem %s0, 32
  %s65 = sld [smem:[%s64]]
  %66 = xla_tuple %s63, %s65
  %s67 = sld [smem:[#allocation0]]
  $region242: #{va_forward.1} parent=0
    _
  %s69 = ssub.s32 1, %s67
  %s70 = scalar_select 0, %s69, %s67
  %v71 = vstv %s33
  %72 = vst [vmem:[#allocation2] sm:$0x1] %v71
  $region1: #{va_forward.1} parent=0
    #allocation3 [shape = 'u8[1024]{0}', space=vmem, size = 0x400, scoped, tag = 'input window, operand 2, single buffered']
    #allocation4 [shape = 's32[1]{0}', space=sflag, size = 0x4, scoped, tag = 'scoped memory for va_forward.1']
    #allocation5 [shape = 'u8[512]{0}', space=vmem, size = 0x400, scoped, tag = 'input window, operand 4, single buffered']
    #allocation6 [shape = 's32[1]{0}', space=sflag, size = 0x4, scoped, tag = 'scoped memory for va_forward.1']
    #allocation7 [shape = 'u8[65536]{0}', space=vmem, size = 0x10000, scoped, tag = 'input window, operand 5, single buffered']
    #allocation8 [shape = 'u8[4096]{0}', space=vmem, size = 0x1000, scoped, tag = 'input window, operand 6, single buffered']
    #allocation9 [shape = 's32[1]{0}', space=sflag, size = 0x4, scoped, tag = 'scoped memory for va_forward.1']
    #allocation10 [shape = 'u8[8192]{0}', space=vmem, size = 0x2000, scoped, tag = 'input window, operand 7, single buffered']
    #allocation11 [shape = 'u8[512]{0}', space=vmem, size = 0x400, scoped, tag = 'input window, operand 8, single buffered']
    #allocation12 [shape = 's32[1]{0}', space=sflag, size = 0x4, scoped, tag = 'scoped memory for va_forward.1']
    #allocation13 [shape = 'u8[65536]{0}', space=vmem, size = 0x10000, scoped, tag = 'input window, operand 9, single buffered']
    #allocation14 [shape = 'u8[512]{0}', space=vmem, size = 0x400, scoped, tag = 'input window, operand 10, single buffered']
    #allocation15 [shape = 's32[1]{0}', space=sflag, size = 0x4, scoped, tag = 'scoped memory for va_forward.1']
    #allocation16 [shape = 'u8[1048576]{0}', space=vmem, size = 0x100000, scoped, tag = 'input window, operand 11, single buffered']
    #allocation17 [shape = 'u8[1024]{0}', space=vmem, size = 0x400, scoped, tag = 'input window, operand 12, single buffered']
    #allocation18 [shape = 's32[1]{0}', space=sflag, size = 0x4, scoped, tag = 'scoped memory for va_forward.1']
    #allocation19 [shape = 'u8[262144]{0}', space=vmem, size = 0x40000, scoped, tag = 'input window, operand 13, single buffered']
    #allocation20 [shape = 'u8[1024]{0}', space=vmem, size = 0x400, scoped, tag = 'input window, operand 14, single buffered']
    #allocation21 [shape = 's32[1]{0}', space=sflag, size = 0x4, scoped, tag = 'scoped memory for va_forward.1']
    #allocation22 [shape = 'u8[1024]{0}', space=vmem, size = 0x400, scoped, tag = 'input window, operand 15, single buffered']
    #allocation23 [shape = 'u8[2097152]{0}', space=vmem, size = 0x200000, scoped, tag = 'input window, operand 17, single buffered']
    #allocation24 [shape = 's32[1]{0}', space=sflag, size = 0x4, scoped, tag = 'scoped memory for va_forward.1']
    #allocation25 [shape = 'u8[262144]{0}', space=vmem, size = 0x40000, scoped, tag = 'input window, operand 18, single buffered']
    #allocation26 [shape = 'u8[2048]{0}', space=vmem, size = 0x800, scoped, tag = 'input window, operand 19, single buffered']
    #allocation27 [shape = 's32[1]{0}', space=sflag, size = 0x4, scoped, tag = 'scoped memory for va_forward.1']
    #allocation28 [shape = 'u8[1048576]{0}', space=vmem, size = 0x100000, scoped, tag = 'input window, operand 20, single buffered']
    #allocation29 [shape = 'u8[2048]{0}', space=vmem, size = 0x800, scoped, tag = 'input window, operand 21, single buffered']
    #allocation30 [shape = 's32[1]{0}', space=sflag, size = 0x4, scoped, tag = 'scoped memory for va_forward.1']
    #allocation31 [shape = 'u8[524288]{0}', space=vmem, size = 0x80000, scoped, tag = 'input window, operand 22, single buffered']
    #allocation32 [shape = 'u8[1024]{0}', space=vmem, size = 0x400, scoped, tag = 'input window, operand 23, single buffered']
    #allocation33 [shape = 's32[1]{0}', space=sflag, size = 0x4, scoped, tag = 'scoped memory for va_forward.1']
    #allocation34 [shape = 'u8[6144]{0}', space=vmem, size = 0x1800, scoped, tag = 'input window, operand 24, single buffered']
    #allocation35 [shape = 'u8[6144]{0}', space=vmem, size = 0x1800, scoped, tag = 'input window, operand 25, single buffered']
    #allocation36 [shape = 's32[1]{0}', space=sflag, size = 0x4, scoped, tag = 'scoped memory for va_forward.1']
    #allocation37 [shape = 'u8[786432]{0}', space=vmem, size = 0xc0000, scoped, tag = 'input window, operand 26, single buffered']
    #allocation38 [shape = 'u8[2048]{0}', space=vmem, size = 0x800, scoped, tag = 'input window, operand 29, single buffered']
    #allocation39 [shape = 's32[1]{0}', space=sflag, size = 0x4, scoped, tag = 'scoped memory for va_forward.1']
    #allocation40 [shape = 'u8[512]{0}', space=vmem, size = 0x400, scoped, tag = 'input window, operand 30, single buffered']
    %73 = vsyncpa [#allocation4], 0
    %74 = vsyncpa [#allocation6], 0
    %75 = vsyncpa [#allocation9], 0
    %76 = vsyncpa [#allocation12], 0
    %77 = vsyncpa [#allocation15], 0
    %78 = vsyncpa [#allocation18], 0
    %79 = vsyncpa [#allocation21], 0
    %80 = vsyncpa [#allocation24], 0
    %81 = vsyncpa [#allocation27], 0
    %82 = vsyncpa [#allocation30], 0
    %83 = vsyncpa [#allocation33], 0
    %84 = vsyncpa [#allocation36], 0
    %85 = vsyncpa [#allocation39], 0
    // Predicated region
    $region2: #{va_forward.1} parent=1 // pred_check
      _
    $region3: #{va_forward.1} parent=1 // pred_check_branch
      %87 = sbr.rel (0) target = $region5
    $region4: #{va_forward.1} parent=1 // pred_region
      _
    $region5: #{va_forward.1} parent=1 // pred_fallthru
      _
    // Predicated region
    $region6: #{va_forward.1} parent=1 // pred_check
      _
    $region7: #{va_forward.1} parent=1 // pred_check_branch
      %89 = sbr.rel (0) target = $region9
    $region8: #{va_forward.1} parent=1 // pred_region
      _
    $region9: #{va_forward.1} parent=1 // pred_fallthru
      _
    // Predicated region
    $region10: #{va_forward.1} parent=1 // pred_check
      _
    $region11: #{va_forward.1} parent=1 // pred_check_branch
      %91 = sbr.rel (0) target = $region13
    $region12: #{va_forward.1} parent=1 // pred_region
      %s93 = ssub.s32 32, 32
      %94 = vsyncadd [#allocation4], %s93
      %s96 = sshll.u32 [#allocation3], 4
      %s97 = int_to_ptr.vmem [resolvable:$true] %s96
      %99 = dma.hbm_to_vmem [thread:$0]  %s5, 32, %s97, [#allocation4]
    $region13: #{va_forward.1} parent=1 // pred_fallthru
      _
    // Predicated region
    $region14: #{va_forward.1} parent=1 // pred_check
      _
    $region15: #{va_forward.1} parent=1 // pred_check_branch
      %101 = sbr.rel (0) target = $region17
    $region16: #{va_forward.1} parent=1 // pred_region
      _
    $region17: #{va_forward.1} parent=1 // pred_fallthru
      _
    // Predicated region
    $region18: #{va_forward.1} parent=1 // pred_check
      _
    $region19: #{va_forward.1} parent=1 // pred_check_branch
      %103 = sbr.rel (0) target = $region21
    $region20: #{va_forward.1} parent=1 // pred_region
      %s105 = ssub.s32 16, 16
      %106 = vsyncadd [#allocation6], %s105
      %s108 = sshll.u32 [#allocation5], 4
      %s109 = int_to_ptr.vmem [resolvable:$true] %s108
      %111 = dma.hbm_to_vmem [thread:$0]  %s9, 16, %s109, [#allocation6]
    $region21: #{va_forward.1} parent=1 // pred_fallthru
      _
    // Predicated region
    $region22: #{va_forward.1} parent=1 // pred_check
      _
    $region23: #{va_forward.1} parent=1 // pred_check_branch
      %113 = sbr.rel (0) target = $region25
    $region24: #{va_forward.1} parent=1 // pred_region
      %s115 = ssub.s32 2048, 2048
      %116 = vsyncadd [#allocation6], %s115
      %s117 = sshll.u32 [#allocation7], 4
      %s118 = int_to_ptr.vmem [resolvable:$true] %s117
      %123 = dma.hbm_to_vmem [thread:$0]  %s11, 2048, %s118, [#allocation6], 1024, 1024, 64
    $region25: #{va_forward.1} parent=1 // pred_fallthru
      _
    // Predicated region
    $region26: #{va_forward.1} parent=1 // pred_check
      _
    $region27: #{va_forward.1} parent=1 // pred_check_branch
      %125 = sbr.rel (0) target = $region29
    $region28: #{va_forward.1} parent=1 // pred_region
      %s127 = ssub.s32 128, 128
      %128 = vsyncadd [#allocation9], %s127
      %s130 = sshll.u32 [#allocation8], 4
      %s131 = int_to_ptr.vmem [resolvable:$true] %s130
      %133 = dma.hbm_to_vmem [thread:$0]  %s13, 128, %s131, [#allocation9]
    $region29: #{va_forward.1} parent=1 // pred_fallthru
      _
    // Predicated region
    $region30: #{va_forward.1} parent=1 // pred_check
      _
    $region31: #{va_forward.1} parent=1 // pred_check_branch
      %135 = sbr.rel (0) target = $region33
    $region32: #{va_forward.1} parent=1 // pred_region
      %s137 = ssub.s32 256, 256
      %138 = vsyncadd [#allocation9], %s137
      %s139 = sshll.u32 [#allocation10], 4
      %s140 = int_to_ptr.vmem [resolvable:$true] %s139
      %145 = dma.hbm_to_vmem [thread:$0]  %s15, 256, %s140, [#allocation9], 128, 128, 8
    $region33: #{va_forward.1} parent=1 // pred_fallthru
      _
    // Predicated region
    $region34: #{va_forward.1} parent=1 // pred_check
      _
    $region35: #{va_forward.1} parent=1 // pred_check_branch
      %147 = sbr.rel (0) target = $region37
    $region36: #{va_forward.1} parent=1 // pred_region
      %s149 = ssub.s32 16, 16
      %150 = vsyncadd [#allocation12], %s149
      %s152 = sshll.u32 [#allocation11], 4
      %s153 = int_to_ptr.vmem [resolvable:$true] %s152
      %155 = dma.hbm_to_vmem [thread:$0]  %s17, 16, %s153, [#allocation12]
    $region37: #{va_forward.1} parent=1 // pred_fallthru
      _
    // Predicated region
    $region38: #{va_forward.1} parent=1 // pred_check
      _
    $region39: #{va_forward.1} parent=1 // pred_check_branch
      %157 = sbr.rel (0) target = $region41
    $region40: #{va_forward.1} parent=1 // pred_region
      %s159 = ssub.s32 2048, 2048
      %160 = vsyncadd [#allocation12], %s159
      %s161 = sshll.u32 [#allocation13], 4
      %s162 = int_to_ptr.vmem [resolvable:$true] %s161
      %167 = dma.hbm_to_vmem [thread:$0]  %s19, 2048, %s162, [#allocation12], 128, 128, 8
    $region41: #{va_forward.1} parent=1 // pred_fallthru
      _
    // Predicated region
    $region42: #{va_forward.1} parent=1 // pred_check
      _
    $region43: #{va_forward.1} parent=1 // pred_check_branch
      %169 = sbr.rel (0) target = $region45
    $region44: #{va_forward.1} parent=1 // pred_region
      %s171 = ssub.s32 16, 16
      %172 = vsyncadd [#allocation15], %s171
      %s174 = sshll.u32 [#allocation14], 4
      %s175 = int_to_ptr.vmem [resolvable:$true] %s174
      %177 = dma.hbm_to_vmem [thread:$0]  %s21, 16, %s175, [#allocation15]
    $region45: #{va_forward.1} parent=1 // pred_fallthru
      _
    // Predicated region
    $region46: #{va_forward.1} parent=1 // pred_check
      _
    $region47: #{va_forward.1} parent=1 // pred_check_branch
      %179 = sbr.rel (0) target = $region49
    $region48: #{va_forward.1} parent=1 // pred_region
      %s181 = ssub.s32 32768, 32768
      %182 = vsyncadd [#allocation15], %s181
      %s183 = sshll.u32 [#allocation16], 4
      %s184 = int_to_ptr.vmem [resolvable:$true] %s183
      %189 = dma.hbm_to_vmem [thread:$0]  %s23, 32768, %s184, [#allocation15], 256, 256, 16
    $region49: #{va_forward.1} parent=1 // pred_fallthru
      _
    // Predicated region
    $region50: #{va_forward.1} parent=1 // pred_check
      _
    $region51: #{va_forward.1} parent=1 // pred_check_branch
      %191 = sbr.rel (0) target = $region53
    $region52: #{va_forward.1} parent=1 // pred_region
      %s193 = ssub.s32 32, 32
      %194 = vsyncadd [#allocation18], %s193
      %s196 = sshll.u32 [#allocation17], 4
      %s197 = int_to_ptr.vmem [resolvable:$true] %s196
      %199 = dma.hbm_to_vmem [thread:$0]  %s25, 32, %s197, [#allocation18]
    $region53: #{va_forward.1} parent=1 // pred_fallthru
      _
    // Predicated region
    $region54: #{va_forward.1} parent=1 // pred_check
      _
    $region55: #{va_forward.1} parent=1 // pred_check_branch
      %201 = sbr.rel (0) target = $region57
    $region56: #{va_forward.1} parent=1 // pred_region
      %s203 = ssub.s32 8192, 8192
      %204 = vsyncadd [#allocation18], %s203
      %s205 = sshll.u32 [#allocation19], 4
      %s206 = int_to_ptr.vmem [resolvable:$true] %s205
      %211 = dma.hbm_to_vmem [thread:$0]  %s27, 8192, %s206, [#allocation18], 256, 256, 16
    $region57: #{va_forward.1} parent=1 // pred_fallthru
      _
    // Predicated region
    $region58: #{va_forward.1} parent=1 // pred_check
      _
    $region59: #{va_forward.1} parent=1 // pred_check_branch
      %213 = sbr.rel (0) target = $region61
    $region60: #{va_forward.1} parent=1 // pred_region
      %s215 = ssub.s32 32, 32
      %216 = vsyncadd [#allocation21], %s215
      %s218 = sshll.u32 [#allocation20], 4
      %s219 = int_to_ptr.vmem [resolvable:$true] %s218
      %221 = dma.hbm_to_vmem [thread:$0]  %s29, 32, %s219, [#allocation21]
    $region61: #{va_forward.1} parent=1 // pred_fallthru
      _
    // Predicated region
    $region62: #{va_forward.1} parent=1 // pred_check
      _
    $region63: #{va_forward.1} parent=1 // pred_check_branch
      %223 = sbr.rel (0) target = $region65
    $region64: #{va_forward.1} parent=1 // pred_region
      %s225 = ssub.s32 32, 32
      %226 = vsyncadd [#allocation21], %s225
      %s228 = sshll.u32 [#allocation22], 4
      %s229 = int_to_ptr.vmem [resolvable:$true] %s228
      %231 = dma.hbm_to_vmem [thread:$0]  %s31, 32, %s229, [#allocation21]
    $region65: #{va_forward.1} parent=1 // pred_fallthru
      _
    // Predicated region
    $region66: #{va_forward.1} parent=1 // pred_check
      _
    $region67: #{va_forward.1} parent=1 // pred_check_branch
      %233 = sbr.rel (0) target = $region69
    $region68: #{va_forward.1} parent=1 // pred_region
      _
    $region69: #{va_forward.1} parent=1 // pred_fallthru
      _
    // Predicated region
    $region70: #{va_forward.1} parent=1 // pred_check
      _
    $region71: #{va_forward.1} parent=1 // pred_check_branch
      %235 = sbr.rel (0) target = $region73
    $region72: #{va_forward.1} parent=1 // pred_region
      %s237 = ssub.s32 65536, 65536
      %238 = vsyncadd [#allocation24], %s237
      %s239 = sshll.u32 [#allocation23], 4
      %s240 = int_to_ptr.vmem [resolvable:$true] %s239
      %245 = dma.hbm_to_vmem [thread:$0]  %s35, 65536, %s240, [#allocation24], 512, 512, 32
    $region73: #{va_forward.1} parent=1 // pred_fallthru
      _
    // Predicated region
    $region74: #{va_forward.1} parent=1 // pred_check
      _
    $region75: #{va_forward.1} parent=1 // pred_check_branch
      %247 = sbr.rel (0) target = $region77
    $region76: #{va_forward.1} parent=1 // pred_region
      %s249 = ssub.s32 8192, 8192
      %250 = vsyncadd [#allocation24], %s249
      %s251 = sshll.u32 [#allocation25], 4
      %s252 = int_to_ptr.vmem [resolvable:$true] %s251
      %257 = dma.hbm_to_vmem [thread:$0]  %s37, 8192, %s252, [#allocation24], 512, 512, 32
    $region77: #{va_forward.1} parent=1 // pred_fallthru
      _
    // Predicated region
    $region78: #{va_forward.1} parent=1 // pred_check
      _
    $region79: #{va_forward.1} parent=1 // pred_check_branch
      %259 = sbr.rel (0) target = $region81
    $region80: #{va_forward.1} parent=1 // pred_region
      %s261 = ssub.s32 64, 64
      %262 = vsyncadd [#allocation27], %s261
      %s264 = sshll.u32 [#allocation26], 4
      %s265 = int_to_ptr.vmem [resolvable:$true] %s264
      %267 = dma.hbm_to_vmem [thread:$0]  %s39, 64, %s265, [#allocation27]
    $region81: #{va_forward.1} parent=1 // pred_fallthru
      _
    // Predicated region
    $region82: #{va_forward.1} parent=1 // pred_check
      _
    $region83: #{va_forward.1} parent=1 // pred_check_branch
      %269 = sbr.rel (0) target = $region85
    $region84: #{va_forward.1} parent=1 // pred_region
      %s271 = ssub.s32 32768, 32768
      %272 = vsyncadd [#allocation27], %s271
      %s273 = sshll.u32 [#allocation28], 4
      %s274 = int_to_ptr.vmem [resolvable:$true] %s273
      %279 = dma.hbm_to_vmem [thread:$0]  %s41, 32768, %s274, [#allocation27], 512, 512, 32
    $region85: #{va_forward.1} parent=1 // pred_fallthru
      _
    // Predicated region
    $region86: #{va_forward.1} parent=1 // pred_check
      _
    $region87: #{va_forward.1} parent=1 // pred_check_branch
      %281 = sbr.rel (0) target = $region89
    $region88: #{va_forward.1} parent=1 // pred_region
      %s283 = ssub.s32 64, 64
      %284 = vsyncadd [#allocation30], %s283
      %s286 = sshll.u32 [#allocation29], 4
      %s287 = int_to_ptr.vmem [resolvable:$true] %s286
      %289 = dma.hbm_to_vmem [thread:$0]  %s43, 64, %s287, [#allocation30]
    $region89: #{va_forward.1} parent=1 // pred_fallthru
      _
    // Predicated region
    $region90: #{va_forward.1} parent=1 // pred_check
      _
    $region91: #{va_forward.1} parent=1 // pred_check_branch
      %291 = sbr.rel (0) target = $region93
    $region92: #{va_forward.1} parent=1 // pred_region
      %s293 = ssub.s32 16384, 16384
      %294 = vsyncadd [#allocation30], %s293
      %s295 = sshll.u32 [#allocation31], 4
      %s296 = int_to_ptr.vmem [resolvable:$true] %s295
      %301 = dma.hbm_to_vmem [thread:$0]  %s45, 16384, %s296, [#allocation30], 256, 256, 16
    $region93: #{va_forward.1} parent=1 // pred_fallthru
      _
    // Predicated region
    $region94: #{va_forward.1} parent=1 // pred_check
      _
    $region95: #{va_forward.1} parent=1 // pred_check_branch
      %303 = sbr.rel (0) target = $region97
    $region96: #{va_forward.1} parent=1 // pred_region
      %s305 = ssub.s32 32, 32
      %306 = vsyncadd [#allocation33], %s305
      %s308 = sshll.u32 [#allocation32], 4
      %s309 = int_to_ptr.vmem [resolvable:$true] %s308
      %311 = dma.hbm_to_vmem [thread:$0]  %s47, 32, %s309, [#allocation33]
    $region97: #{va_forward.1} parent=1 // pred_fallthru
      _
    // Predicated region
    $region98: #{va_forward.1} parent=1 // pred_check
      _
    $region99: #{va_forward.1} parent=1 // pred_check_branch
      %313 = sbr.rel (0) target = $region101
    $region100: #{va_forward.1} parent=1 // pred_region
      %s315 = ssub.s32 192, 192
      %316 = vsyncadd [#allocation33], %s315
      %s318 = sshll.u32 [#allocation34], 4
      %s319 = int_to_ptr.vmem [resolvable:$true] %s318
      %321 = dma.hbm_to_vmem [thread:$0]  %s49, 192, %s319, [#allocation33]
    $region101: #{va_forward.1} parent=1 // pred_fallthru
      _
    // Predicated region
    $region102: #{va_forward.1} parent=1 // pred_check
      _
    $region103: #{va_forward.1} parent=1 // pred_check_branch
      %323 = sbr.rel (0) target = $region105
    $region104: #{va_forward.1} parent=1 // pred_region
      %s325 = ssub.s32 192, 192
      %326 = vsyncadd [#allocation36], %s325
      %s328 = sshll.u32 [#allocation35], 4
      %s329 = int_to_ptr.vmem [resolvable:$true] %s328
      %331 = dma.hbm_to_vmem [thread:$0]  %s51, 192, %s329, [#allocation36]
    $region105: #{va_forward.1} parent=1 // pred_fallthru
      _
    // Predicated region
    $region106: #{va_forward.1} parent=1 // pred_check
      _
    $region107: #{va_forward.1} parent=1 // pred_check_branch
      %333 = sbr.rel (0) target = $region109
    $region108: #{va_forward.1} parent=1 // pred_region
      %s335 = ssub.s32 24576, 24576
      %336 = vsyncadd [#allocation36], %s335
      %s337 = sshll.u32 [#allocation37], 4
      %s338 = int_to_ptr.vmem [resolvable:$true] %s337
      %343 = dma.hbm_to_vmem [thread:$0]  %s53, 24576, %s338, [#allocation36], 768, 768, 48
    $region109: #{va_forward.1} parent=1 // pred_fallthru
      _
    // Predicated region
    $region110: #{va_forward.1} parent=1 // pred_check
      _
    $region111: #{va_forward.1} parent=1 // pred_check_branch
      %345 = sbr.rel (0) target = $region113
    $region112: #{va_forward.1} parent=1 // pred_region
      _
    $region113: #{va_forward.1} parent=1 // pred_fallthru
      _
    // Predicated region
    $region114: #{va_forward.1} parent=1 // pred_check
      _
    $region115: #{va_forward.1} parent=1 // pred_check_branch
      %347 = sbr.rel (0) target = $region117
    $region116: #{va_forward.1} parent=1 // pred_region
      _
    $region117: #{va_forward.1} parent=1 // pred_fallthru
      _
    // Predicated region
    $region118: #{va_forward.1} parent=1 // pred_check
      _
    $region119: #{va_forward.1} parent=1 // pred_check_branch
      %349 = sbr.rel (0) target = $region121
    $region120: #{va_forward.1} parent=1 // pred_region
      %s351 = ssub.s32 64, 64
      %352 = vsyncadd [#allocation39], %s351
      %s354 = sshll.u32 [#allocation38], 4
      %s355 = int_to_ptr.vmem [resolvable:$true] %s354
      %357 = dma.hbm_to_vmem [thread:$0]  %s59, 64, %s355, [#allocation39]
    $region121: #{va_forward.1} parent=1 // pred_fallthru
      _
    // Predicated region
    $region122: #{va_forward.1} parent=1 // pred_check
      _
    $region123: #{va_forward.1} parent=1 // pred_check_branch
      %359 = sbr.rel (0) target = $region125
    $region124: #{va_forward.1} parent=1 // pred_region
      %s361 = ssub.s32 16, 16
      %362 = vsyncadd [#allocation39], %s361
      %s364 = sshll.u32 [#allocation40], 4
      %s365 = int_to_ptr.vmem [resolvable:$true] %s364
      %367 = dma.hbm_to_vmem [thread:$0]  %s61, 16, %s365, [#allocation39]
    $region125: #{va_forward.1} parent=1 // pred_fallthru
      _
    // Predicated region
    $region126: #{va_forward.1} parent=1 // pred_check
      _
    $region127: #{va_forward.1} parent=1 // pred_check_branch
      %369 = sbr.rel (0) target = $region129
    $region128: #{va_forward.1} parent=1 // pred_region
      %370 = dma.done [#allocation4], 32
    $region129: #{va_forward.1} parent=1 // pred_fallthru
      _
    // Predicated region
    $region130: #{va_forward.1} parent=1 // pred_check
      _
    $region131: #{va_forward.1} parent=1 // pred_check_branch
      %372 = sbr.rel (0) target = $region133
    $region132: #{va_forward.1} parent=1 // pred_region
      %373 = dma.done [#allocation6], 16
    $region133: #{va_forward.1} parent=1 // pred_fallthru
      _
    // Predicated region
    $region134: #{va_forward.1} parent=1 // pred_check
      _
    $region135: #{va_forward.1} parent=1 // pred_check_branch
      %375 = sbr.rel (0) target = $region137
    $region136: #{va_forward.1} parent=1 // pred_region
      %376 = dma.done [#allocation6], 2048
    $region137: #{va_forward.1} parent=1 // pred_fallthru
      _
    // Predicated region
    $region138: #{va_forward.1} parent=1 // pred_check
      _
    $region139: #{va_forward.1} parent=1 // pred_check_branch
      %378 = sbr.rel (0) target = $region141
    $region140: #{va_forward.1} parent=1 // pred_region
      %379 = dma.done [#allocation9], 128
    $region141: #{va_forward.1} parent=1 // pred_fallthru
      _
    // Predicated region
    $region142: #{va_forward.1} parent=1 // pred_check
      _
    $region143: #{va_forward.1} parent=1 // pred_check_branch
      %381 = sbr.rel (0) target = $region145
    $region144: #{va_forward.1} parent=1 // pred_region
      %382 = dma.done [#allocation9], 256
    $region145: #{va_forward.1} parent=1 // pred_fallthru
      _
    // Predicated region
    $region146: #{va_forward.1} parent=1 // pred_check
      _
    $region147: #{va_forward.1} parent=1 // pred_check_branch
      %384 = sbr.rel (0) target = $region149
    $region148: #{va_forward.1} parent=1 // pred_region
      %385 = dma.done [#allocation12], 16
    $region149: #{va_forward.1} parent=1 // pred_fallthru
      _
    // Predicated region
    $region150: #{va_forward.1} parent=1 // pred_check
      _
    $region151: #{va_forward.1} parent=1 // pred_check_branch
      %387 = sbr.rel (0) target = $region153
    $region152: #{va_forward.1} parent=1 // pred_region
      %388 = dma.done [#allocation12], 2048
    $region153: #{va_forward.1} parent=1 // pred_fallthru
      _
    // Predicated region
    $region154: #{va_forward.1} parent=1 // pred_check
      _
    $region155: #{va_forward.1} parent=1 // pred_check_branch
      %390 = sbr.rel (0) target = $region157
    $region156: #{va_forward.1} parent=1 // pred_region
      %391 = dma.done [#allocation15], 16
    $region157: #{va_forward.1} parent=1 // pred_fallthru
      _
    // Predicated region
    $region158: #{va_forward.1} parent=1 // pred_check
      _
    $region159: #{va_forward.1} parent=1 // pred_check_branch
      %393 = sbr.rel (0) target = $region161
    $region160: #{va_forward.1} parent=1 // pred_region
      %394 = dma.done [#allocation15], 32768
    $region161: #{va_forward.1} parent=1 // pred_fallthru
      _
    // Predicated region
    $region162: #{va_forward.1} parent=1 // pred_check
      _
    $region163: #{va_forward.1} parent=1 // pred_check_branch
      %396 = sbr.rel (0) target = $region165
    $region164: #{va_forward.1} parent=1 // pred_region
      %397 = dma.done [#allocation18], 32
    $region165: #{va_forward.1} parent=1 // pred_fallthru
      _
    // Predicated region
    $region166: #{va_forward.1} parent=1 // pred_check
      _
    $region167: #{va_forward.1} parent=1 // pred_check_branch
      %399 = sbr.rel (0) target = $region169
    $region168: #{va_forward.1} parent=1 // pred_region
      %400 = dma.done [#allocation18], 8192
    $region169: #{va_forward.1} parent=1 // pred_fallthru
      _
    // Predicated region
    $region170: #{va_forward.1} parent=1 // pred_check
      _
    $region171: #{va_forward.1} parent=1 // pred_check_branch
      %402 = sbr.rel (0) target = $region173
    $region172: #{va_forward.1} parent=1 // pred_region
      %403 = dma.done [#allocation21], 32
    $region173: #{va_forward.1} parent=1 // pred_fallthru
      _
    // Predicated region
    $region174: #{va_forward.1} parent=1 // pred_check
      _
    $region175: #{va_forward.1} parent=1 // pred_check_branch
      %405 = sbr.rel (0) target = $region177
    $region176: #{va_forward.1} parent=1 // pred_region
      %406 = dma.done [#allocation21], 32
    $region177: #{va_forward.1} parent=1 // pred_fallthru
      _
    // Predicated region
    $region178: #{va_forward.1} parent=1 // pred_check
      _
    $region179: #{va_forward.1} parent=1 // pred_check_branch
      %408 = sbr.rel (0) target = $region181
    $region180: #{va_forward.1} parent=1 // pred_region
      %409 = dma.done [#allocation24], 65536
    $region181: #{va_forward.1} parent=1 // pred_fallthru
      _
    // Predicated region
    $region182: #{va_forward.1} parent=1 // pred_check
      _
    $region183: #{va_forward.1} parent=1 // pred_check_branch
      %411 = sbr.rel (0) target = $region185
    $region184: #{va_forward.1} parent=1 // pred_region
      %412 = dma.done [#allocation24], 8192
    $region185: #{va_forward.1} parent=1 // pred_fallthru
      _
    // Predicated region
    $region186: #{va_forward.1} parent=1 // pred_check
      _
    $region187: #{va_forward.1} parent=1 // pred_check_branch
      %414 = sbr.rel (0) target = $region189
    $region188: #{va_forward.1} parent=1 // pred_region
      %415 = dma.done [#allocation27], 64
    $region189: #{va_forward.1} parent=1 // pred_fallthru
      _
    // Predicated region
    $region190: #{va_forward.1} parent=1 // pred_check
      _
    $region191: #{va_forward.1} parent=1 // pred_check_branch
      %417 = sbr.rel (0) target = $region193
    $region192: #{va_forward.1} parent=1 // pred_region
      %418 = dma.done [#allocation27], 32768
    $region193: #{va_forward.1} parent=1 // pred_fallthru
      _
    // Predicated region
    $region194: #{va_forward.1} parent=1 // pred_check
      _
    $region195: #{va_forward.1} parent=1 // pred_check_branch
      %420 = sbr.rel (0) target = $region197
    $region196: #{va_forward.1} parent=1 // pred_region
      %421 = dma.done [#allocation30], 64
    $region197: #{va_forward.1} parent=1 // pred_fallthru
      _
    // Predicated region
    $region198: #{va_forward.1} parent=1 // pred_check
      _
    $region199: #{va_forward.1} parent=1 // pred_check_branch
      %423 = sbr.rel (0) target = $region201
    $region200: #{va_forward.1} parent=1 // pred_region
      %424 = dma.done [#allocation30], 16384
    $region201: #{va_forward.1} parent=1 // pred_fallthru
      _
    // Predicated region
    $region202: #{va_forward.1} parent=1 // pred_check
      _
    $region203: #{va_forward.1} parent=1 // pred_check_branch
      %426 = sbr.rel (0) target = $region205
    $region204: #{va_forward.1} parent=1 // pred_region
      %427 = dma.done [#allocation33], 32
    $region205: #{va_forward.1} parent=1 // pred_fallthru
      _
    // Predicated region
    $region206: #{va_forward.1} parent=1 // pred_check
      _
    $region207: #{va_forward.1} parent=1 // pred_check_branch
      %429 = sbr.rel (0) target = $region209
    $region208: #{va_forward.1} parent=1 // pred_region
      %430 = dma.done [#allocation33], 192
    $region209: #{va_forward.1} parent=1 // pred_fallthru
      _
    // Predicated region
    $region210: #{va_forward.1} parent=1 // pred_check
      _
    $region211: #{va_forward.1} parent=1 // pred_check_branch
      %432 = sbr.rel (0) target = $region213
    $region212: #{va_forward.1} parent=1 // pred_region
      %433 = dma.done [#allocation36], 192
    $region213: #{va_forward.1} parent=1 // pred_fallthru
      _
    // Predicated region
    $region214: #{va_forward.1} parent=1 // pred_check
      _
    $region215: #{va_forward.1} parent=1 // pred_check_branch
      %435 = sbr.rel (0) target = $region217
    $region216: #{va_forward.1} parent=1 // pred_region
      %436 = dma.done [#allocation36], 24576
    $region217: #{va_forward.1} parent=1 // pred_fallthru
      _
    // Predicated region
    $region218: #{va_forward.1} parent=1 // pred_check
      _
    $region219: #{va_forward.1} parent=1 // pred_check_branch
      %438 = sbr.rel (0) target = $region221
    $region220: #{va_forward.1} parent=1 // pred_region
      %439 = dma.done [#allocation39], 64
    $region221: #{va_forward.1} parent=1 // pred_fallthru
      _
    // Predicated region
    $region222: #{va_forward.1} parent=1 // pred_check
      _
    $region223: #{va_forward.1} parent=1 // pred_check_branch
      %441 = sbr.rel (0) target = $region225
    $region224: #{va_forward.1} parent=1 // pred_region
      %442 = dma.done [#allocation39], 16
    $region225: #{va_forward.1} parent=1 // pred_fallthru
      _
    %v443 = vld [vmem:[%s1] sm:$0xff]
    %v444 = vld [vmem:[%s1 + $0x8] sm:$0xff]
    %v445 = vld [vmem:[%s1 + $0x10] sm:$0xff]
    %v446 = vld [vmem:[%s1 + $0x18] sm:$0xff]
    %v447 = vld [vmem:[%s1 + $0x20] sm:$0xff]
    %v448 = vld [vmem:[%s1 + $0x28] sm:$0xff]
    %v449 = vld [vmem:[%s1 + $0x30] sm:$0xff]
    %v450 = vld [vmem:[%s1 + $0x38] sm:$0xff]
    %v451 = vld [vmem:[%s1 + $0x40] sm:$0xff]
    %v452 = vld [vmem:[%s1 + $0x48] sm:$0xff]
    %v453 = vld [vmem:[%s1 + $0x50] sm:$0xff]
    %v454 = vld [vmem:[%s1 + $0x58] sm:$0xff]
    %v455 = vld [vmem:[%s1 + $0x60] sm:$0xff]
    %v456 = vld [vmem:[%s1 + $0x68] sm:$0xff]
    %v457 = vld [vmem:[%s1 + $0x70] sm:$0xff]
    %v458 = vld [vmem:[%s1 + $0x78] sm:$0xff]
    %v459 = vld [vmem:[%s7] sm:$0xff]
    %v460 = vld [vmem:[%s7 + $0x8] sm:$0xff]
    %v461 = vld [vmem:[%s7 + $0x10] sm:$0xff]
    %v462 = vld [vmem:[%s7 + $0x18] sm:$0xff]
    %v463 = vld [vmem:[#allocation5] sm:$0x1]
    %v465 = vlaneseq
    %v466 = vshrl.u32 %v465, 7
    %v467 = vsub.s32 0, %v466
    %v468 = vrot.slane %v463, %v467
    %vm470 = vcmask 261120
    %v472 = vsel %vm470, %v443, 0
    %v475 = vsel %vm470, %v444, 0
    %v478 = vsel %vm470, %v445, 0
    %v481 = vsel %vm470, %v446, 0
    %v484 = vsel %vm470, %v447, 0
    %v487 = vsel %vm470, %v448, 0
    %v490 = vsel %vm470, %v449, 0
    %v493 = vsel %vm470, %v450, 0
    %v496 = vsel %vm470, %v451, 0
    %v499 = vsel %vm470, %v452, 0
    %v502 = vsel %vm470, %v453, 0
    %v505 = vsel %vm470, %v454, 0
    %v508 = vsel %vm470, %v455, 0
    %v511 = vsel %vm470, %v456, 0
    %v514 = vsel %vm470, %v457, 0
    %v517 = vsel %vm470, %v458, 0
    %519 = vmatprep.subr.mxu0 0.0
    %520 = vmatpush1.msra.mxu0 %v459
    %521 = vmatprep.subr.mxu0 0.0
    %522 = vmatpush1.msra.mxu0 %v460
    %523 = vmatprep.subr.mxu0 0.0
    %524 = vmatpush1.msra.mxu0 %v461
    %525 = vmatprep.subr.mxu0 0.0
    %526 = vmatpush1.msra.mxu0 %v462
    %527 = vmatprep.subr.mxu0 0.0
    %528 = vmatpush1.msra.mxu0 0.0
    %529 = vmatprep.subr.mxu0 0.0
    %530 = vmatpush1.msra.mxu0 0.0
    %531 = vmatprep.subr.mxu0 0.0
    %532 = vmatpush1.msra.mxu0 0.0
    %533 = vmatprep.subr.mxu0 0.0
    %534 = vmatpush1.msra.mxu0 0.0
    %535 = vmatprep.subr.mxu0 0.0
    %536 = vmatpush1.msra.mxu0 0.0
    %537 = vmatprep.subr.mxu0 0.0
    %538 = vmatpush1.msra.mxu0 0.0
    %539 = vmatprep.subr.mxu0 0.0
    %540 = vmatpush1.msra.mxu0 0.0
    %541 = vmatprep.subr.mxu0 0.0
    %542 = vmatpush1.msra.mxu0 0.0
    %543 = vmatprep.subr.mxu0 0.0
    %544 = vmatpush1.msra.mxu0 0.0
    %545 = vmatprep.subr.mxu0 0.0
    %546 = vmatpush1.msra.mxu0 0.0
    %547 = vmatprep.subr.mxu0 0.0
    %548 = vmatpush1.msra.mxu0 0.0
    %549 = vmatprep.subr.mxu0 0.0
    %550 = vmatpush1.msra.mxu0 0.0
    %551 = vmatprep.subr.mxu0 0.0
    %552 = vmatpush1.msra.mxu0 0.0
    %553 = vmatprep.subr.mxu0 0.0
    %554 = vmatpush1.msra.mxu0 0.0
    %555 = vmatprep.subr.mxu0 0.0
    %556 = vmatpush1.msra.mxu0 0.0
    %557 = vmatprep.subr.mxu0 0.0
    %558 = vmatpush1.msra.mxu0 0.0
    %559 = vmatprep.subr.mxu0 0.0
    %560 = vmatpush1.msra.mxu0 0.0
    %561 = vmatprep.subr.mxu0 0.0
    %562 = vmatpush1.msra.mxu0 0.0
    %563 = vmatprep.subr.mxu0 0.0
    %564 = vmatpush1.msra.mxu0 0.0
    %565 = vmatprep.subr.mxu0 0.0
    %566 = vmatpush1.msra.mxu0 0.0
    %567 = vmatprep.subr.mxu0 0.0
    %568 = vmatpush1.msra.mxu0 0.0
    %569 = vmatprep.subr.mxu0 0.0
    %570 = vmatpush1.msra.mxu0 0.0
    %571 = vmatprep.subr.mxu0 0.0
    %572 = vmatpush1.msra.mxu0 0.0
    %573 = vmatprep.subr.mxu0 0.0
    %574 = vmatpush1.msra.mxu0 0.0
    %575 = vmatprep.subr.mxu0 0.0
    %576 = vmatpush1.msra.mxu0 0.0
    %577 = vmatprep.subr.mxu0 0.0
    %578 = vmatpush1.msra.mxu0 0.0
    %579 = vmatprep.subr.mxu0 0.0
    %580 = vmatpush1.msra.mxu0 0.0
    %581 = vmatprep.subr.mxu0 0.0
    %582 = vmatpush1.msra.mxu0 0.0
    %583 = vmatprep.mubr.f32.mxu0 0.0
    %584 = vmatmul.mubr.f32.gmra.mrb[0].mxu0 %v472
    %v585 = vpop.f32.mrb[0].mxu0
    %v586 = vadd.f32 %v468, %v585
    %v587 = vpop.f32.mrb[0].mxu0
    %588 = vmatprep.mubr.f32.mxu0 0.0
    %589 = vmatmul.mubr.f32.gmra.mrb[0].mxu0 %v475
    %v590 = vpop.f32.mrb[0].mxu0
    %v591 = vadd.f32 %v468, %v590
    %v592 = vpop.f32.mrb[0].mxu0
    %593 = vmatprep.mubr.f32.mxu0 0.0
    %594 = vmatmul.mubr.f32.gmra.mrb[0].mxu0 %v478
    %v595 = vpop.f32.mrb[0].mxu0
    %v596 = vadd.f32 %v468, %v595
    %v597 = vpop.f32.mrb[0].mxu0
    %598 = vmatprep.mubr.f32.mxu0 0.0
    %599 = vmatmul.mubr.f32.gmra.mrb[0].mxu0 %v481
    %v600 = vpop.f32.mrb[0].mxu0
    %v601 = vadd.f32 %v468, %v600
    %v602 = vpop.f32.mrb[0].mxu0
    %603 = vmatprep.mubr.f32.mxu0 0.0
    %604 = vmatmul.mubr.f32.gmra.mrb[0].mxu0 %v484
    %v605 = vpop.f32.mrb[0].mxu0
    %v606 = vadd.f32 %v468, %v605
    %v607 = vpop.f32.mrb[0].mxu0
    %608 = vmatprep.mubr.f32.mxu0 0.0
    %609 = vmatmul.mubr.f32.gmra.mrb[0].mxu0 %v487
    %v610 = vpop.f32.mrb[0].mxu0
    %v611 = vadd.f32 %v468, %v610
    %v612 = vpop.f32.mrb[0].mxu0
    %613 = vmatprep.mubr.f32.mxu0 0.0
    %614 = vmatmul.mubr.f32.gmra.mrb[0].mxu0 %v490
    %v615 = vpop.f32.mrb[0].mxu0
    %v616 = vadd.f32 %v468, %v615
    %v617 = vpop.f32.mrb[0].mxu0
    %618 = vmatprep.mubr.f32.mxu0 0.0
    %619 = vmatmul.mubr.f32.gmra.mrb[0].mxu0 %v493
    %v620 = vpop.f32.mrb[0].mxu0
    %v621 = vadd.f32 %v468, %v620
    %v622 = vpop.f32.mrb[0].mxu0
    %623 = vmatprep.mubr.f32.mxu0 0.0
    %624 = vmatmul.mubr.f32.gmra.mrb[0].mxu0 %v496
    %v625 = vpop.f32.mrb[0].mxu0
    %v626 = vadd.f32 %v468, %v625
    %v627 = vpop.f32.mrb[0].mxu0
    %628 = vmatprep.mubr.f32.mxu0 0.0
    %629 = vmatmul.mubr.f32.gmra.mrb[0].mxu0 %v499
    %v630 = vpop.f32.mrb[0].mxu0
    %v631 = vadd.f32 %v468, %v630
    %v632 = vpop.f32.mrb[0].mxu0
    %633 = vmatprep.mubr.f32.mxu0 0.0
    %634 = vmatmul.mubr.f32.gmra.mrb[0].mxu0 %v502
    %v635 = vpop.f32.mrb[0].mxu0
    %v636 = vadd.f32 %v468, %v635
    %v637 = vpop.f32.mrb[0].mxu0
    %638 = vmatprep.mubr.f32.mxu0 0.0
    %639 = vmatmul.mubr.f32.gmra.mrb[0].mxu0 %v505
    %v640 = vpop.f32.mrb[0].mxu0
    %v641 = vadd.f32 %v468, %v640
    %v642 = vpop.f32.mrb[0].mxu0
    %643 = vmatprep.mubr.f32.mxu0 0.0
    %644 = vmatmul.mubr.f32.gmra.mrb[0].mxu0 %v508
    %v645 = vpop.f32.mrb[0].mxu0
    %v646 = vadd.f32 %v468, %v645
    %v647 = vpop.f32.mrb[0].mxu0
    %648 = vmatprep.mubr.f32.mxu0 0.0
    %649 = vmatmul.mubr.f32.gmra.mrb[0].mxu0 %v511
    %v650 = vpop.f32.mrb[0].mxu0
    %v651 = vadd.f32 %v468, %v650
    %v652 = vpop.f32.mrb[0].mxu0
    %653 = vmatprep.mubr.f32.mxu0 0.0
    %654 = vmatmul.mubr.f32.gmra.mrb[0].mxu0 %v514
    %v655 = vpop.f32.mrb[0].mxu0
    %v656 = vadd.f32 %v468, %v655
    %v657 = vpop.f32.mrb[0].mxu0
    %658 = vmatprep.mubr.f32.mxu0 0.0
    %659 = vmatmul.mubr.f32.gmra.mrb[0].mxu0 %v517
    %v660 = vpop.f32.mrb[0].mxu0
    %v661 = vadd.f32 %v468, %v660
    %v662 = vpop.f32.mrb[0].mxu0
    %663 = vdwg.mxu0
    %v664 = vmax.f32 %v586, 0.0
    %v665 = vmax.f32 %v591, 0.0
    %v666 = vmax.f32 %v596, 0.0
    %v667 = vmax.f32 %v601, 0.0
    %v668 = vmax.f32 %v606, 0.0
    %v669 = vmax.f32 %v611, 0.0
    %v670 = vmax.f32 %v616, 0.0
    %v671 = vmax.f32 %v621, 0.0
    %v672 = vmax.f32 %v626, 0.0
    %v673 = vmax.f32 %v631, 0.0
    %v674 = vmax.f32 %v636, 0.0
    %v675 = vmax.f32 %v641, 0.0
    %v676 = vmax.f32 %v646, 0.0
    %v677 = vmax.f32 %v651, 0.0
    %v678 = vmax.f32 %v656, 0.0
    %v679 = vmax.f32 %v661, 0.0
    %v680 = vlaneseq
    %v681 = vshrl.u32 %v680, 7
    %v682 = vlaneseq
    %v683 = vand.u32 %v682, 127
    %v684 = vmul.u32 %v681, 64
    %vm685 = vcmp.ge.s32.totalorder %v683, %v684
    %v686 = vadd.s32 %v681, 1
    %v687 = vmul.u32 %v686, 64
    %vm688 = vcmp.lt.s32.totalorder %v683, %v687
    %vm689 = vmand %vm685, %vm688
    %v690 = vsel %vm689, 0.015625, 0.0
    %691 = vmatprep.subr.mxu0 0.0
    %692 = vmatpush1.msra.mxu0 %v664
    %693 = vmatprep.subr.mxu0 0.0
    %694 = vmatpush1.msra.mxu0 %v665
    %695 = vmatprep.subr.mxu0 0.0
    %696 = vmatpush1.msra.mxu0 %v666
    %697 = vmatprep.subr.mxu0 0.0
    %698 = vmatpush1.msra.mxu0 %v667
    %699 = vmatprep.subr.mxu0 0.0
    %700 = vmatpush1.msra.mxu0 %v668
    %701 = vmatprep.subr.mxu0 0.0
    %702 = vmatpush1.msra.mxu0 %v669
    %703 = vmatprep.subr.mxu0 0.0
    %704 = vmatpush1.msra.mxu0 %v670
    %705 = vmatprep.subr.mxu0 0.0
    %706 = vmatpush1.msra.mxu0 %v671
    %707 = vmatprep.subr.mxu0 0.0
    %708 = vmatpush1.msra.mxu0 %v672
    %709 = vmatprep.subr.mxu0 0.0
    %710 = vmatpush1.msra.mxu0 %v673
    %711 = vmatprep.subr.mxu0 0.0
    %712 = vmatpush1.msra.mxu0 %v674
    %713 = vmatprep.subr.mxu0 0.0
    %714 = vmatpush1.msra.mxu0 %v675
    %715 = vmatprep.subr.mxu0 0.0
    %716 = vmatpush1.msra.mxu0 %v676
    %717 = vmatprep.subr.mxu0 0.0
    %718 = vmatpush1.msra.mxu0 %v677
    %719 = vmatprep.subr.mxu0 0.0
    %720 = vmatpush1.msra.mxu0 %v678
    %721 = vmatprep.subr.mxu0 0.0
    %722 = vmatpush1.msra.mxu0 %v679
    %723 = vmatprep.subr.mxu0 0.0
    %724 = vmatpush1.msra.mxu0 0.0
    %725 = vmatprep.subr.mxu0 0.0
    %726 = vmatpush1.msra.mxu0 0.0
    %727 = vmatprep.subr.mxu0 0.0
    %728 = vmatpush1.msra.mxu0 0.0
    %729 = vmatprep.subr.mxu0 0.0
    %730 = vmatpush1.msra.mxu0 0.0
    %731 = vmatprep.subr.mxu0 0.0
    %732 = vmatpush1.msra.mxu0 0.0
    %733 = vmatprep.subr.mxu0 0.0
    %734 = vmatpush1.msra.mxu0 0.0
    %735 = vmatprep.subr.mxu0 0.0
    %736 = vmatpush1.msra.mxu0 0.0
    %737 = vmatprep.subr.mxu0 0.0
    %738 = vmatpush1.msra.mxu0 0.0
    %739 = vmatprep.subr.mxu0 0.0
    %740 = vmatpush1.msra.mxu0 0.0
    %741 = vmatprep.subr.mxu0 0.0
    %742 = vmatpush1.msra.mxu0 0.0
    %743 = vmatprep.subr.mxu0 0.0
    %744 = vmatpush1.msra.mxu0 0.0
    %745 = vmatprep.subr.mxu0 0.0
    %746 = vmatpush1.msra.mxu0 0.0
    %747 = vmatprep.subr.mxu0 0.0
    %748 = vmatpush1.msra.mxu0 0.0
    %749 = vmatprep.subr.mxu0 0.0
    %750 = vmatpush1.msra.mxu0 0.0
    %751 = vmatprep.subr.mxu0 0.0
    %752 = vmatpush1.msra.mxu0 0.0
    %753 = vmatprep.subr.mxu0 0.0
    %754 = vmatpush1.msra.mxu0 0.0
    %755 = vmatprep.mubr.f32.mxu0 0.0
    %756 = vmatmul.mubr.f32.gmra.mrb[0].mxu0 %v690
    %v757 = vpop.f32.mrb[0].mxu0
    %v758 = vadd.f32 0.0, %v757
    %v759 = vpop.f32.mrb[0].mxu0
    %760 = vdwg.mxu0
    %v761 = vld [vmem:[#allocation7] sm:$0xff]
    %v762 = vld [vmem:[#allocation7 + $0x8] sm:$0xff]
    %v763 = vld [vmem:[#allocation7 + $0x10] sm:$0xff]
    %v764 = vld [vmem:[#allocation7 + $0x18] sm:$0xff]
    %v765 = vld [vmem:[#allocation7 + $0x20] sm:$0xff]
    %v766 = vld [vmem:[#allocation7 + $0x28] sm:$0xff]
    %v767 = vld [vmem:[#allocation7 + $0x30] sm:$0xff]
    %v768 = vld [vmem:[#allocation7 + $0x38] sm:$0xff]
    %v769 = vld [vmem:[#allocation7 + $0x40] sm:$0xff]
    %v770 = vld [vmem:[#allocation7 + $0x48] sm:$0xff]
    %v771 = vld [vmem:[#allocation7 + $0x50] sm:$0xff]
    %v772 = vld [vmem:[#allocation7 + $0x58] sm:$0xff]
    %v773 = vld [vmem:[#allocation7 + $0x60] sm:$0xff]
    %v774 = vld [vmem:[#allocation7 + $0x68] sm:$0xff]
    %v775 = vld [vmem:[#allocation7 + $0x70] sm:$0xff]
    %v776 = vld [vmem:[#allocation7 + $0x78] sm:$0xff]
    %v777 = vld [vmem:[#allocation8] sm:$0xff]
    %v779 = vlaneseq
    %v780 = vshrl.u32 %v779, 7
    %v781 = vsub.s32 0, %v780
    %v782 = vrot.slane %v777, %v781
    %v783 = vlaneseq
    %v784 = vshrl.u32 %v783, 7
    %v785 = vsub.s32 1, %v784
    %v786 = vrot.slane %v777, %v785
    %v787 = vlaneseq
    %v788 = vshrl.u32 %v787, 7
    %v789 = vsub.s32 2, %v788
    %v790 = vrot.slane %v777, %v789
    %v791 = vlaneseq
    %v792 = vshrl.u32 %v791, 7
    %v793 = vsub.s32 3, %v792
    %v794 = vrot.slane %v777, %v793
    %v795 = vlaneseq
    %v796 = vshrl.u32 %v795, 7
    %v797 = vsub.s32 4, %v796
    %v798 = vrot.slane %v777, %v797
    %v799 = vlaneseq
    %v800 = vshrl.u32 %v799, 7
    %v801 = vsub.s32 5, %v800
    %v802 = vrot.slane %v777, %v801
    %v803 = vlaneseq
    %v804 = vshrl.u32 %v803, 7
    %v805 = vsub.s32 6, %v804
    %v806 = vrot.slane %v777, %v805
    %v807 = vlaneseq
    %v808 = vshrl.u32 %v807, 7
    %v809 = vsub.s32 7, %v808
    %v810 = vrot.slane %v777, %v809
    %vm819 = vcmask 130048
    %v821 = vsel %vm819, %v758, 0
    %823 = vmatprep.subr.mxu0 %v762
    %824 = vmatpush1.msra.mxu0 %v761
    %825 = vmatprep.subr.mxu0 %v770
    %826 = vmatpush1.msra.mxu0 %v769
    %827 = vmatprep.subr.mxu0 0.0
    %828 = vmatpush1.msra.mxu0 0.0
    %829 = vmatprep.subr.mxu0 0.0
    %830 = vmatpush1.msra.mxu0 0.0
    %831 = vmatprep.subr.mxu0 0.0
    %832 = vmatpush1.msra.mxu0 0.0
    %833 = vmatprep.subr.mxu0 0.0
    %834 = vmatpush1.msra.mxu0 0.0
    %835 = vmatprep.subr.mxu0 0.0
    %836 = vmatpush1.msra.mxu0 0.0
    %837 = vmatprep.subr.mxu0 0.0
    %838 = vmatpush1.msra.mxu0 0.0
    %839 = vmatprep.subr.mxu0 0.0
    %840 = vmatpush1.msra.mxu0 0.0
    %841 = vmatprep.subr.mxu0 0.0
    %842 = vmatpush1.msra.mxu0 0.0
    %843 = vmatprep.subr.mxu0 0.0
    %844 = vmatpush1.msra.mxu0 0.0
    %845 = vmatprep.subr.mxu0 0.0
    %846 = vmatpush1.msra.mxu0 0.0
    %847 = vmatprep.subr.mxu0 0.0
    %848 = vmatpush1.msra.mxu0 0.0
    %849 = vmatprep.subr.mxu0 0.0
    %850 = vmatpush1.msra.mxu0 0.0
    %851 = vmatprep.subr.mxu0 0.0
    %852 = vmatpush1.msra.mxu0 0.0
    %853 = vmatprep.subr.mxu0 0.0
    %854 = vmatpush1.msra.mxu0 0.0
    %855 = vmatprep.subr.mxu0 0.0
    %856 = vmatpush1.msra.mxu0 0.0
    %857 = vmatprep.subr.mxu0 0.0
    %858 = vmatpush1.msra.mxu0 0.0
    %859 = vmatprep.subr.mxu0 0.0
    %860 = vmatpush1.msra.mxu0 0.0
    %861 = vmatprep.subr.mxu0 0.0
    %862 = vmatpush1.msra.mxu0 0.0
    %863 = vmatprep.subr.mxu0 0.0
    %864 = vmatpush1.msra.mxu0 0.0
    %865 = vmatprep.subr.mxu0 0.0
    %866 = vmatpush1.msra.mxu0 0.0
    %867 = vmatprep.subr.mxu0 0.0
    %868 = vmatpush1.msra.mxu0 0.0
    %869 = vmatprep.subr.mxu0 0.0
    %870 = vmatpush1.msra.mxu0 0.0
    %871 = vmatprep.subr.mxu0 0.0
    %872 = vmatpush1.msra.mxu0 0.0
    %873 = vmatprep.subr.mxu0 0.0
    %874 = vmatpush1.msra.mxu0 0.0
    %875 = vmatprep.subr.mxu0 0.0
    %876 = vmatpush1.msra.mxu0 0.0
    %877 = vmatprep.subr.mxu0 0.0
    %878 = vmatpush1.msra.mxu0 0.0
    %879 = vmatprep.subr.mxu0 0.0
    %880 = vmatpush1.msra.mxu0 0.0
    %881 = vmatprep.subr.mxu0 0.0
    %882 = vmatpush1.msra.mxu0 0.0
    %883 = vmatprep.subr.mxu0 0.0
    %884 = vmatpush1.msra.mxu0 0.0
    %885 = vmatprep.subr.mxu0 0.0
    %886 = vmatpush1.msra.mxu0 0.0
    %887 = vmatprep.mubr.f32.mxu0 0.0
    %888 = vmatmul.mubr.f32.gmra.mrb[0].mxu0 %v821
    %v889 = vpop.f32.mrb[0].mxu0
    %v890 = vadd.f32 %v782, %v889
    %v891 = vpop.f32.mrb[0].mxu0
    %v892 = vadd.f32 %v786, %v891
    %893 = vdwg.mxu0
    %894 = vmatprep.subr.mxu0 %v764
    %895 = vmatpush1.msra.mxu0 %v763
    %896 = vmatprep.subr.mxu0 %v772
    %897 = vmatpush1.msra.mxu0 %v771
    %898 = vmatprep.subr.mxu0 0.0
    %899 = vmatpush1.msra.mxu0 0.0
    %900 = vmatprep.subr.mxu0 0.0
    %901 = vmatpush1.msra.mxu0 0.0
    %902 = vmatprep.subr.mxu0 0.0
    %903 = vmatpush1.msra.mxu0 0.0
    %904 = vmatprep.subr.mxu0 0.0
    %905 = vmatpush1.msra.mxu0 0.0
    %906 = vmatprep.subr.mxu0 0.0
    %907 = vmatpush1.msra.mxu0 0.0
    %908 = vmatprep.subr.mxu0 0.0
    %909 = vmatpush1.msra.mxu0 0.0
    %910 = vmatprep.subr.mxu0 0.0
    %911 = vmatpush1.msra.mxu0 0.0
    %912 = vmatprep.subr.mxu0 0.0
    %913 = vmatpush1.msra.mxu0 0.0
    %914 = vmatprep.subr.mxu0 0.0
    %915 = vmatpush1.msra.mxu0 0.0
    %916 = vmatprep.subr.mxu0 0.0
    %917 = vmatpush1.msra.mxu0 0.0
    %918 = vmatprep.subr.mxu0 0.0
    %919 = vmatpush1.msra.mxu0 0.0
    %920 = vmatprep.subr.mxu0 0.0
    %921 = vmatpush1.msra.mxu0 0.0
    %922 = vmatprep.subr.mxu0 0.0
    %923 = vmatpush1.msra.mxu0 0.0
    %924 = vmatprep.subr.mxu0 0.0
    %925 = vmatpush1.msra.mxu0 0.0
    %926 = vmatprep.subr.mxu0 0.0
    %927 = vmatpush1.msra.mxu0 0.0
    %928 = vmatprep.subr.mxu0 0.0
    %929 = vmatpush1.msra.mxu0 0.0
    %930 = vmatprep.subr.mxu0 0.0
    %931 = vmatpush1.msra.mxu0 0.0
    %932 = vmatprep.subr.mxu0 0.0
    %933 = vmatpush1.msra.mxu0 0.0
    %934 = vmatprep.subr.mxu0 0.0
    %935 = vmatpush1.msra.mxu0 0.0
    %936 = vmatprep.subr.mxu0 0.0
    %937 = vmatpush1.msra.mxu0 0.0
    %938 = vmatprep.subr.mxu0 0.0
    %939 = vmatpush1.msra.mxu0 0.0
    %940 = vmatprep.subr.mxu0 0.0
    %941 = vmatpush1.msra.mxu0 0.0
    %942 = vmatprep.subr.mxu0 0.0
    %943 = vmatpush1.msra.mxu0 0.0
    %944 = vmatprep.subr.mxu0 0.0
    %945 = vmatpush1.msra.mxu0 0.0
    %946 = vmatprep.subr.mxu0 0.0
    %947 = vmatpush1.msra.mxu0 0.0
    %948 = vmatprep.subr.mxu0 0.0
    %949 = vmatpush1.msra.mxu0 0.0
    %950 = vmatprep.subr.mxu0 0.0
    %951 = vmatpush1.msra.mxu0 0.0
    %952 = vmatprep.subr.mxu0 0.0
    %953 = vmatpush1.msra.mxu0 0.0
    %954 = vmatprep.subr.mxu0 0.0
    %955 = vmatpush1.msra.mxu0 0.0
    %956 = vmatprep.subr.mxu0 0.0
    %957 = vmatpush1.msra.mxu0 0.0
    %958 = vmatprep.mubr.f32.mxu0 0.0
    %959 = vmatmul.mubr.f32.gmra.mrb[0].mxu0 %v821
    %v960 = vpop.f32.mrb[0].mxu0
    %v961 = vadd.f32 %v790, %v960
    %v962 = vpop.f32.mrb[0].mxu0
    %v963 = vadd.f32 %v794, %v962
    %964 = vdwg.mxu0
    %965 = vmatprep.subr.mxu0 %v766
    %966 = vmatpush1.msra.mxu0 %v765
    %967 = vmatprep.subr.mxu0 %v774
    %968 = vmatpush1.msra.mxu0 %v773
    %969 = vmatprep.subr.mxu0 0.0
    %970 = vmatpush1.msra.mxu0 0.0
    %971 = vmatprep.subr.mxu0 0.0
    %972 = vmatpush1.msra.mxu0 0.0
    %973 = vmatprep.subr.mxu0 0.0
    %974 = vmatpush1.msra.mxu0 0.0
    %975 = vmatprep.subr.mxu0 0.0
    %976 = vmatpush1.msra.mxu0 0.0
    %977 = vmatprep.subr.mxu0 0.0
    %978 = vmatpush1.msra.mxu0 0.0
    %979 = vmatprep.subr.mxu0 0.0
    %980 = vmatpush1.msra.mxu0 0.0
    %981 = vmatprep.subr.mxu0 0.0
    %982 = vmatpush1.msra.mxu0 0.0
    %983 = vmatprep.subr.mxu0 0.0
    %984 = vmatpush1.msra.mxu0 0.0
    %985 = vmatprep.subr.mxu0 0.0
    %986 = vmatpush1.msra.mxu0 0.0
    %987 = vmatprep.subr.mxu0 0.0
    %988 = vmatpush1.msra.mxu0 0.0
    %989 = vmatprep.subr.mxu0 0.0
    %990 = vmatpush1.msra.mxu0 0.0
    %991 = vmatprep.subr.mxu0 0.0
    %992 = vmatpush1.msra.mxu0 0.0
    %993 = vmatprep.subr.mxu0 0.0
    %994 = vmatpush1.msra.mxu0 0.0
    %995 = vmatprep.subr.mxu0 0.0
    %996 = vmatpush1.msra.mxu0 0.0
    %997 = vmatprep.subr.mxu0 0.0
    %998 = vmatpush1.msra.mxu0 0.0
    %999 = vmatprep.subr.mxu0 0.0
    %1000 = vmatpush1.msra.mxu0 0.0
    %1001 = vmatprep.subr.mxu0 0.0
    %1002 = vmatpush1.msra.mxu0 0.0
    %1003 = vmatprep.subr.mxu0 0.0
    %1004 = vmatpush1.msra.mxu0 0.0
    %1005 = vmatprep.subr.mxu0 0.0
    %1006 = vmatpush1.msra.mxu0 0.0
    %1007 = vmatprep.subr.mxu0 0.0
    %1008 = vmatpush1.msra.mxu0 0.0
    %1009 = vmatprep.subr.mxu0 0.0
    %1010 = vmatpush1.msra.mxu0 0.0
    %1011 = vmatprep.subr.mxu0 0.0
    %1012 = vmatpush1.msra.mxu0 0.0
    %1013 = vmatprep.subr.mxu0 0.0
    %1014 = vmatpush1.msra.mxu0 0.0
    %1015 = vmatprep.subr.mxu0 0.0
    %1016 = vmatpush1.msra.mxu0 0.0
    %1017 = vmatprep.subr.mxu0 0.0
    %1018 = vmatpush1.msra.mxu0 0.0
    %1019 = vmatprep.subr.mxu0 0.0
    %1020 = vmatpush1.msra.mxu0 0.0
    %1021 = vmatprep.subr.mxu0 0.0
    %1022 = vmatpush1.msra.mxu0 0.0
    %1023 = vmatprep.subr.mxu0 0.0
    %1024 = vmatpush1.msra.mxu0 0.0
    %1025 = vmatprep.subr.mxu0 0.0
    %1026 = vmatpush1.msra.mxu0 0.0
    %1027 = vmatprep.subr.mxu0 0.0
    %1028 = vmatpush1.msra.mxu0 0.0
    %1029 = vmatprep.mubr.f32.mxu0 0.0
    %1030 = vmatmul.mubr.f32.gmra.mrb[0].mxu0 %v821
    %v1031 = vpop.f32.mrb[0].mxu0
    %v1032 = vadd.f32 %v798, %v1031
    %v1033 = vpop.f32.mrb[0].mxu0
    %v1034 = vadd.f32 %v802, %v1033
    %1035 = vdwg.mxu0
    %1036 = vmatprep.subr.mxu0 %v768
    %1037 = vmatpush1.msra.mxu0 %v767
    %1038 = vmatprep.subr.mxu0 %v776
    %1039 = vmatpush1.msra.mxu0 %v775
    %1040 = vmatprep.subr.mxu0 0.0
    %1041 = vmatpush1.msra.mxu0 0.0
    %1042 = vmatprep.subr.mxu0 0.0
    %1043 = vmatpush1.msra.mxu0 0.0
    %1044 = vmatprep.subr.mxu0 0.0
    %1045 = vmatpush1.msra.mxu0 0.0
    %1046 = vmatprep.subr.mxu0 0.0
    %1047 = vmatpush1.msra.mxu0 0.0
    %1048 = vmatprep.subr.mxu0 0.0
    %1049 = vmatpush1.msra.mxu0 0.0
    %1050 = vmatprep.subr.mxu0 0.0
    %1051 = vmatpush1.msra.mxu0 0.0
    %1052 = vmatprep.subr.mxu0 0.0
    %1053 = vmatpush1.msra.mxu0 0.0
    %1054 = vmatprep.subr.mxu0 0.0
    %1055 = vmatpush1.msra.mxu0 0.0
    %1056 = vmatprep.subr.mxu0 0.0
    %1057 = vmatpush1.msra.mxu0 0.0
    %1058 = vmatprep.subr.mxu0 0.0
    %1059 = vmatpush1.msra.mxu0 0.0
    %1060 = vmatprep.subr.mxu0 0.0
    %1061 = vmatpush1.msra.mxu0 0.0
    %1062 = vmatprep.subr.mxu0 0.0
    %1063 = vmatpush1.msra.mxu0 0.0
    %1064 = vmatprep.subr.mxu0 0.0
    %1065 = vmatpush1.msra.mxu0 0.0
    %1066 = vmatprep.subr.mxu0 0.0
    %1067 = vmatpush1.msra.mxu0 0.0
    %1068 = vmatprep.subr.mxu0 0.0
    %1069 = vmatpush1.msra.mxu0 0.0
    %1070 = vmatprep.subr.mxu0 0.0
    %1071 = vmatpush1.msra.mxu0 0.0
    %1072 = vmatprep.subr.mxu0 0.0
    %1073 = vmatpush1.msra.mxu0 0.0
    %1074 = vmatprep.subr.mxu0 0.0
    %1075 = vmatpush1.msra.mxu0 0.0
    %1076 = vmatprep.subr.mxu0 0.0
    %1077 = vmatpush1.msra.mxu0 0.0
    %1078 = vmatprep.subr.mxu0 0.0
    %1079 = vmatpush1.msra.mxu0 0.0
    %1080 = vmatprep.subr.mxu0 0.0
    %1081 = vmatpush1.msra.mxu0 0.0
    %1082 = vmatprep.subr.mxu0 0.0
    %1083 = vmatpush1.msra.mxu0 0.0
    %1084 = vmatprep.subr.mxu0 0.0
    %1085 = vmatpush1.msra.mxu0 0.0
    %1086 = vmatprep.subr.mxu0 0.0
    %1087 = vmatpush1.msra.mxu0 0.0
    %1088 = vmatprep.subr.mxu0 0.0
    %1089 = vmatpush1.msra.mxu0 0.0
    %1090 = vmatprep.subr.mxu0 0.0
    %1091 = vmatpush1.msra.mxu0 0.0
    %1092 = vmatprep.subr.mxu0 0.0
    %1093 = vmatpush1.msra.mxu0 0.0
    %1094 = vmatprep.subr.mxu0 0.0
    %1095 = vmatpush1.msra.mxu0 0.0
    %1096 = vmatprep.subr.mxu0 0.0
    %1097 = vmatpush1.msra.mxu0 0.0
    %1098 = vmatprep.subr.mxu0 0.0
    %1099 = vmatpush1.msra.mxu0 0.0
    %1100 = vmatprep.mubr.f32.mxu0 0.0
    %1101 = vmatmul.mubr.f32.gmra.mrb[0].mxu0 %v821
    %v1102 = vpop.f32.mrb[0].mxu0
    %v1103 = vadd.f32 %v806, %v1102
    %v1104 = vpop.f32.mrb[0].mxu0
    %v1105 = vadd.f32 %v810, %v1104
    %1106 = vdwg.mxu0
    %v1107 = vld [vmem:[%s3] sm:$0x3]
    %v1108 = vld [vmem:[#allocation10] sm:$0xff]
    %v1109 = vld [vmem:[#allocation10 + $0x8] sm:$0xff]
    %v1110 = vld [vmem:[#allocation11] sm:$0x1]
    %v1112 = vlaneseq
    %v1113 = vshrl.u32 %v1112, 7
    %v1114 = vsub.s32 0, %v1113
    %v1115 = vrot.slane %v1110, %v1114
    %v1118 = vsel %vm819, %v1107, 0
    %1120 = vmatprep.subr.mxu0 0.0
    %1121 = vmatpush1.msra.mxu0 %v1108
    %1122 = vmatprep.subr.mxu0 0.0
    %1123 = vmatpush1.msra.mxu0 %v1109
    %1124 = vmatprep.subr.mxu0 0.0
    %1125 = vmatpush1.msra.mxu0 0.0
    %1126 = vmatprep.subr.mxu0 0.0
    %1127 = vmatpush1.msra.mxu0 0.0
    %1128 = vmatprep.subr.mxu0 0.0
    %1129 = vmatpush1.msra.mxu0 0.0
    %1130 = vmatprep.subr.mxu0 0.0
    %1131 = vmatpush1.msra.mxu0 0.0
    %1132 = vmatprep.subr.mxu0 0.0
    %1133 = vmatpush1.msra.mxu0 0.0
    %1134 = vmatprep.subr.mxu0 0.0
    %1135 = vmatpush1.msra.mxu0 0.0
    %1136 = vmatprep.subr.mxu0 0.0
    %1137 = vmatpush1.msra.mxu0 0.0
    %1138 = vmatprep.subr.mxu0 0.0
    %1139 = vmatpush1.msra.mxu0 0.0
    %1140 = vmatprep.subr.mxu0 0.0
    %1141 = vmatpush1.msra.mxu0 0.0
    %1142 = vmatprep.subr.mxu0 0.0
    %1143 = vmatpush1.msra.mxu0 0.0
    %1144 = vmatprep.subr.mxu0 0.0
    %1145 = vmatpush1.msra.mxu0 0.0
    %1146 = vmatprep.subr.mxu0 0.0
    %1147 = vmatpush1.msra.mxu0 0.0
    %1148 = vmatprep.subr.mxu0 0.0
    %1149 = vmatpush1.msra.mxu0 0.0
    %1150 = vmatprep.subr.mxu0 0.0
    %1151 = vmatpush1.msra.mxu0 0.0
    %1152 = vmatprep.subr.mxu0 0.0
    %1153 = vmatpush1.msra.mxu0 0.0
    %1154 = vmatprep.subr.mxu0 0.0
    %1155 = vmatpush1.msra.mxu0 0.0
    %1156 = vmatprep.subr.mxu0 0.0
    %1157 = vmatpush1.msra.mxu0 0.0
    %1158 = vmatprep.subr.mxu0 0.0
    %1159 = vmatpush1.msra.mxu0 0.0
    %1160 = vmatprep.subr.mxu0 0.0
    %1161 = vmatpush1.msra.mxu0 0.0
    %1162 = vmatprep.subr.mxu0 0.0
    %1163 = vmatpush1.msra.mxu0 0.0
    %1164 = vmatprep.subr.mxu0 0.0
    %1165 = vmatpush1.msra.mxu0 0.0
    %1166 = vmatprep.subr.mxu0 0.0
    %1167 = vmatpush1.msra.mxu0 0.0
    %1168 = vmatprep.subr.mxu0 0.0
    %1169 = vmatpush1.msra.mxu0 0.0
    %1170 = vmatprep.subr.mxu0 0.0
    %1171 = vmatpush1.msra.mxu0 0.0
    %1172 = vmatprep.subr.mxu0 0.0
    %1173 = vmatpush1.msra.mxu0 0.0
    %1174 = vmatprep.subr.mxu0 0.0
    %1175 = vmatpush1.msra.mxu0 0.0
    %1176 = vmatprep.subr.mxu0 0.0
    %1177 = vmatpush1.msra.mxu0 0.0
    %1178 = vmatprep.subr.mxu0 0.0
    %1179 = vmatpush1.msra.mxu0 0.0
    %1180 = vmatprep.subr.mxu0 0.0
    %1181 = vmatpush1.msra.mxu0 0.0
    %1182 = vmatprep.subr.mxu0 0.0
    %1183 = vmatpush1.msra.mxu0 0.0
    %1184 = vmatprep.mubr.f32.mxu0 0.0
    %1185 = vmatmul.mubr.f32.gmra.mrb[0].mxu0 %v1118
    %v1186 = vpop.f32.mrb[0].mxu0
    %v1187 = vadd.f32 %v1115, %v1186
    %v1188 = vpop.f32.mrb[0].mxu0
    %1189 = vdwg.mxu0
    %v1190 = vmax.f32 %v1187, 0.0
    %v1191 = vld [vmem:[#allocation13] sm:$0xff]
    %v1192 = vld [vmem:[#allocation13 + $0x8] sm:$0xff]
    %v1193 = vld [vmem:[#allocation13 + $0x10] sm:$0xff]
    %v1194 = vld [vmem:[#allocation13 + $0x18] sm:$0xff]
    %v1195 = vld [vmem:[#allocation13 + $0x20] sm:$0xff]
    %v1196 = vld [vmem:[#allocation13 + $0x28] sm:$0xff]
    %v1197 = vld [vmem:[#allocation13 + $0x30] sm:$0xff]
    %v1198 = vld [vmem:[#allocation13 + $0x38] sm:$0xff]
    %v1199 = vld [vmem:[#allocation13 + $0x40] sm:$0xff]
    %v1200 = vld [vmem:[#allocation13 + $0x48] sm:$0xff]
    %v1201 = vld [vmem:[#allocation13 + $0x50] sm:$0xff]
    %v1202 = vld [vmem:[#allocation13 + $0x58] sm:$0xff]
    %v1203 = vld [vmem:[#allocation13 + $0x60] sm:$0xff]
    %v1204 = vld [vmem:[#allocation13 + $0x68] sm:$0xff]
    %v1205 = vld [vmem:[#allocation13 + $0x70] sm:$0xff]
    %v1206 = vld [vmem:[#allocation13 + $0x78] sm:$0xff]
    %v1207 = vld [vmem:[#allocation14] sm:$0x1]
    %v1209 = vlaneseq
    %v1210 = vshrl.u32 %v1209, 7
    %v1211 = vsub.s32 0, %v1210
    %v1212 = vrot.slane %v1207, %v1211
    %1214 = vmatprep.subr.mxu0 0.0
    %1215 = vmatpush1.msra.mxu0 %v1191
    %1216 = vmatprep.subr.mxu0 0.0
    %1217 = vmatpush1.msra.mxu0 %v1192
    %1218 = vmatprep.subr.mxu0 0.0
    %1219 = vmatpush1.msra.mxu0 %v1193
    %1220 = vmatprep.subr.mxu0 0.0
    %1221 = vmatpush1.msra.mxu0 %v1194
    %1222 = vmatprep.subr.mxu0 0.0
    %1223 = vmatpush1.msra.mxu0 %v1195
    %1224 = vmatprep.subr.mxu0 0.0
    %1225 = vmatpush1.msra.mxu0 %v1196
    %1226 = vmatprep.subr.mxu0 0.0
    %1227 = vmatpush1.msra.mxu0 %v1197
    %1228 = vmatprep.subr.mxu0 0.0
    %1229 = vmatpush1.msra.mxu0 %v1198
    %1230 = vmatprep.subr.mxu0 0.0
    %1231 = vmatpush1.msra.mxu0 %v1199
    %1232 = vmatprep.subr.mxu0 0.0
    %1233 = vmatpush1.msra.mxu0 %v1200
    %1234 = vmatprep.subr.mxu0 0.0
    %1235 = vmatpush1.msra.mxu0 %v1201
    %1236 = vmatprep.subr.mxu0 0.0
    %1237 = vmatpush1.msra.mxu0 %v1202
    %1238 = vmatprep.subr.mxu0 0.0
    %1239 = vmatpush1.msra.mxu0 %v1203
    %1240 = vmatprep.subr.mxu0 0.0
    %1241 = vmatpush1.msra.mxu0 %v1204
    %1242 = vmatprep.subr.mxu0 0.0
    %1243 = vmatpush1.msra.mxu0 %v1205
    %1244 = vmatprep.subr.mxu0 0.0
    %1245 = vmatpush1.msra.mxu0 %v1206
    %1246 = vmatprep.subr.mxu0 0.0
    %1247 = vmatpush1.msra.mxu0 0.0
    %1248 = vmatprep.subr.mxu0 0.0
    %1249 = vmatpush1.msra.mxu0 0.0
    %1250 = vmatprep.subr.mxu0 0.0
    %1251 = vmatpush1.msra.mxu0 0.0
    %1252 = vmatprep.subr.mxu0 0.0
    %1253 = vmatpush1.msra.mxu0 0.0
    %1254 = vmatprep.subr.mxu0 0.0
    %1255 = vmatpush1.msra.mxu0 0.0
    %1256 = vmatprep.subr.mxu0 0.0
    %1257 = vmatpush1.msra.mxu0 0.0
    %1258 = vmatprep.subr.mxu0 0.0
    %1259 = vmatpush1.msra.mxu0 0.0
    %1260 = vmatprep.subr.mxu0 0.0
    %1261 = vmatpush1.msra.mxu0 0.0
    %1262 = vmatprep.subr.mxu0 0.0
    %1263 = vmatpush1.msra.mxu0 0.0
    %1264 = vmatprep.subr.mxu0 0.0
    %1265 = vmatpush1.msra.mxu0 0.0
    %1266 = vmatprep.subr.mxu0 0.0
    %1267 = vmatpush1.msra.mxu0 0.0
    %1268 = vmatprep.subr.mxu0 0.0
    %1269 = vmatpush1.msra.mxu0 0.0
    %1270 = vmatprep.subr.mxu0 0.0
    %1271 = vmatpush1.msra.mxu0 0.0
    %1272 = vmatprep.subr.mxu0 0.0
    %1273 = vmatpush1.msra.mxu0 0.0
    %1274 = vmatprep.subr.mxu0 0.0
    %1275 = vmatpush1.msra.mxu0 0.0
    %1276 = vmatprep.subr.mxu0 0.0
    %1277 = vmatpush1.msra.mxu0 0.0
    %1278 = vmatprep.mubr.f32.mxu0 0.0
    %1279 = vmatmul.mubr.f32.gmra.mrb[0].mxu0 %v1190
    %v1280 = vpop.f32.mrb[0].mxu0
    %v1281 = vadd.f32 %v1212, %v1280
    %v1282 = vpop.f32.mrb[0].mxu0
    %1283 = vdwg.mxu0
    %v1284 = vmax.f32 %v1281, 0.0
    %v1285 = vld [vmem:[#allocation16] sm:$0xff]
    %v1286 = vld [vmem:[#allocation16 + $0x8] sm:$0xff]
    %v1287 = vld [vmem:[#allocation16 + $0x10] sm:$0xff]
    %v1288 = vld [vmem:[#allocation16 + $0x18] sm:$0xff]
    %v1289 = vld [vmem:[#allocation16 + $0x20] sm:$0xff]
    %v1290 = vld [vmem:[#allocation16 + $0x28] sm:$0xff]
    %v1291 = vld [vmem:[#allocation16 + $0x30] sm:$0xff]
    %v1292 = vld [vmem:[#allocation16 + $0x38] sm:$0xff]
    %v1293 = vld [vmem:[#allocation16 + $0x40] sm:$0xff]
    %v1294 = vld [vmem:[#allocation16 + $0x48] sm:$0xff]
    %v1295 = vld [vmem:[#allocation16 + $0x50] sm:$0xff]
    %v1296 = vld [vmem:[#allocation16 + $0x58] sm:$0xff]
    %v1297 = vld [vmem:[#allocation16 + $0x60] sm:$0xff]
    %v1298 = vld [vmem:[#allocation16 + $0x68] sm:$0xff]
    %v1299 = vld [vmem:[#allocation16 + $0x70] sm:$0xff]
    %v1300 = vld [vmem:[#allocation16 + $0x78] sm:$0xff]
    %v1301 = vld [vmem:[#allocation16 + $0x80] sm:$0xff]
    %v1302 = vld [vmem:[#allocation16 + $0x88] sm:$0xff]
    %v1303 = vld [vmem:[#allocation16 + $0x90] sm:$0xff]
    %v1304 = vld [vmem:[#allocation16 + $0x98] sm:$0xff]
    %v1305 = vld [vmem:[#allocation16 + $0xa0] sm:$0xff]
    %v1306 = vld [vmem:[#allocation16 + $0xa8] sm:$0xff]
    %v1307 = vld [vmem:[#allocation16 + $0xb0] sm:$0xff]
    %v1308 = vld [vmem:[#allocation16 + $0xb8] sm:$0xff]
    %v1309 = vld [vmem:[#allocation16 + $0xc0] sm:$0xff]
    %v1310 = vld [vmem:[#allocation16 + $0xc8] sm:$0xff]
    %v1311 = vld [vmem:[#allocation16 + $0xd0] sm:$0xff]
    %v1312 = vld [vmem:[#allocation16 + $0xd8] sm:$0xff]
    %v1313 = vld [vmem:[#allocation16 + $0xe0] sm:$0xff]
    %v1314 = vld [vmem:[#allocation16 + $0xe8] sm:$0xff]
    %v1315 = vld [vmem:[#allocation16 + $0xf0] sm:$0xff]
    %v1316 = vld [vmem:[#allocation16 + $0xf8] sm:$0xff]
    %v1317 = vld [vmem:[#allocation16 + $0x100] sm:$0xff]
    %v1318 = vld [vmem:[#allocation16 + $0x108] sm:$0xff]
    %v1319 = vld [vmem:[#allocation16 + $0x110] sm:$0xff]
    %v1320 = vld [vmem:[#allocation16 + $0x118] sm:$0xff]
    %v1321 = vld [vmem:[#allocation16 + $0x120] sm:$0xff]
    %v1322 = vld [vmem:[#allocation16 + $0x128] sm:$0xff]
    %v1323 = vld [vmem:[#allocation16 + $0x130] sm:$0xff]
    %v1324 = vld [vmem:[#allocation16 + $0x138] sm:$0xff]
    %v1325 = vld [vmem:[#allocation16 + $0x140] sm:$0xff]
    %v1326 = vld [vmem:[#allocation16 + $0x148] sm:$0xff]
    %v1327 = vld [vmem:[#allocation16 + $0x150] sm:$0xff]
    %v1328 = vld [vmem:[#allocation16 + $0x158] sm:$0xff]
    %v1329 = vld [vmem:[#allocation16 + $0x160] sm:$0xff]
    %v1330 = vld [vmem:[#allocation16 + $0x168] sm:$0xff]
    %v1331 = vld [vmem:[#allocation16 + $0x170] sm:$0xff]
    %v1332 = vld [vmem:[#allocation16 + $0x178] sm:$0xff]
    %v1333 = vld [vmem:[#allocation16 + $0x180] sm:$0xff]
    %v1334 = vld [vmem:[#allocation16 + $0x188] sm:$0xff]
    %v1335 = vld [vmem:[#allocation16 + $0x190] sm:$0xff]
    %v1336 = vld [vmem:[#allocation16 + $0x198] sm:$0xff]
    %v1337 = vld [vmem:[#allocation16 + $0x1a0] sm:$0xff]
    %v1338 = vld [vmem:[#allocation16 + $0x1a8] sm:$0xff]
    %v1339 = vld [vmem:[#allocation16 + $0x1b0] sm:$0xff]
    %v1340 = vld [vmem:[#allocation16 + $0x1b8] sm:$0xff]
    %v1341 = vld [vmem:[#allocation16 + $0x1c0] sm:$0xff]
    %v1342 = vld [vmem:[#allocation16 + $0x1c8] sm:$0xff]
    %v1343 = vld [vmem:[#allocation16 + $0x1d0] sm:$0xff]
    %v1344 = vld [vmem:[#allocation16 + $0x1d8] sm:$0xff]
    %v1345 = vld [vmem:[#allocation16 + $0x1e0] sm:$0xff]
    %v1346 = vld [vmem:[#allocation16 + $0x1e8] sm:$0xff]
    %v1347 = vld [vmem:[#allocation16 + $0x1f0] sm:$0xff]
    %v1348 = vld [vmem:[#allocation16 + $0x1f8] sm:$0xff]
    %v1349 = vld [vmem:[#allocation16 + $0x200] sm:$0xff]
    %v1350 = vld [vmem:[#allocation16 + $0x208] sm:$0xff]
    %v1351 = vld [vmem:[#allocation16 + $0x210] sm:$0xff]
    %v1352 = vld [vmem:[#allocation16 + $0x218] sm:$0xff]
    %v1353 = vld [vmem:[#allocation16 + $0x220] sm:$0xff]
    %v1354 = vld [vmem:[#allocation16 + $0x228] sm:$0xff]
    %v1355 = vld [vmem:[#allocation16 + $0x230] sm:$0xff]
    %v1356 = vld [vmem:[#allocation16 + $0x238] sm:$0xff]
    %v1357 = vld [vmem:[#allocation16 + $0x240] sm:$0xff]
    %v1358 = vld [vmem:[#allocation16 + $0x248] sm:$0xff]
    %v1359 = vld [vmem:[#allocation16 + $0x250] sm:$0xff]
    %v1360 = vld [vmem:[#allocation16 + $0x258] sm:$0xff]
    %v1361 = vld [vmem:[#allocation16 + $0x260] sm:$0xff]
    %v1362 = vld [vmem:[#allocation16 + $0x268] sm:$0xff]
    %v1363 = vld [vmem:[#allocation16 + $0x270] sm:$0xff]
    %v1364 = vld [vmem:[#allocation16 + $0x278] sm:$0xff]
    %v1365 = vld [vmem:[#allocation16 + $0x280] sm:$0xff]
    %v1366 = vld [vmem:[#allocation16 + $0x288] sm:$0xff]
    %v1367 = vld [vmem:[#allocation16 + $0x290] sm:$0xff]
    %v1368 = vld [vmem:[#allocation16 + $0x298] sm:$0xff]
    %v1369 = vld [vmem:[#allocation16 + $0x2a0] sm:$0xff]
    %v1370 = vld [vmem:[#allocation16 + $0x2a8] sm:$0xff]
    %v1371 = vld [vmem:[#allocation16 + $0x2b0] sm:$0xff]
    %v1372 = vld [vmem:[#allocation16 + $0x2b8] sm:$0xff]
    %v1373 = vld [vmem:[#allocation16 + $0x2c0] sm:$0xff]
    %v1374 = vld [vmem:[#allocation16 + $0x2c8] sm:$0xff]
    %v1375 = vld [vmem:[#allocation16 + $0x2d0] sm:$0xff]
    %v1376 = vld [vmem:[#allocation16 + $0x2d8] sm:$0xff]
    %v1377 = vld [vmem:[#allocation16 + $0x2e0] sm:$0xff]
    %v1378 = vld [vmem:[#allocation16 + $0x2e8] sm:$0xff]
    %v1379 = vld [vmem:[#allocation16 + $0x2f0] sm:$0xff]
    %v1380 = vld [vmem:[#allocation16 + $0x2f8] sm:$0xff]
    %v1381 = vld [vmem:[#allocation16 + $0x300] sm:$0xff]
    %v1382 = vld [vmem:[#allocation16 + $0x308] sm:$0xff]
    %v1383 = vld [vmem:[#allocation16 + $0x310] sm:$0xff]
    %v1384 = vld [vmem:[#allocation16 + $0x318] sm:$0xff]
    %v1385 = vld [vmem:[#allocation16 + $0x320] sm:$0xff]
    %v1386 = vld [vmem:[#allocation16 + $0x328] sm:$0xff]
    %v1387 = vld [vmem:[#allocation16 + $0x330] sm:$0xff]
    %v1388 = vld [vmem:[#allocation16 + $0x338] sm:$0xff]
    %v1389 = vld [vmem:[#allocation16 + $0x340] sm:$0xff]
    %v1390 = vld [vmem:[#allocation16 + $0x348] sm:$0xff]
    %v1391 = vld [vmem:[#allocation16 + $0x350] sm:$0xff]
    %v1392 = vld [vmem:[#allocation16 + $0x358] sm:$0xff]
    %v1393 = vld [vmem:[#allocation16 + $0x360] sm:$0xff]
    %v1394 = vld [vmem:[#allocation16 + $0x368] sm:$0xff]
    %v1395 = vld [vmem:[#allocation16 + $0x370] sm:$0xff]
    %v1396 = vld [vmem:[#allocation16 + $0x378] sm:$0xff]
    %v1397 = vld [vmem:[#allocation16 + $0x380] sm:$0xff]
    %v1398 = vld [vmem:[#allocation16 + $0x388] sm:$0xff]
    %v1399 = vld [vmem:[#allocation16 + $0x390] sm:$0xff]
    %v1400 = vld [vmem:[#allocation16 + $0x398] sm:$0xff]
    %v1401 = vld [vmem:[#allocation16 + $0x3a0] sm:$0xff]
    %v1402 = vld [vmem:[#allocation16 + $0x3a8] sm:$0xff]
    %v1403 = vld [vmem:[#allocation16 + $0x3b0] sm:$0xff]
    %v1404 = vld [vmem:[#allocation16 + $0x3b8] sm:$0xff]
    %v1405 = vld [vmem:[#allocation16 + $0x3c0] sm:$0xff]
    %v1406 = vld [vmem:[#allocation16 + $0x3c8] sm:$0xff]
    %v1407 = vld [vmem:[#allocation16 + $0x3d0] sm:$0xff]
    %v1408 = vld [vmem:[#allocation16 + $0x3d8] sm:$0xff]
    %v1409 = vld [vmem:[#allocation16 + $0x3e0] sm:$0xff]
    %v1410 = vld [vmem:[#allocation16 + $0x3e8] sm:$0xff]
    %v1411 = vld [vmem:[#allocation16 + $0x3f0] sm:$0xff]
    %v1412 = vld [vmem:[#allocation16 + $0x3f8] sm:$0xff]
    %v1413 = vld [vmem:[#allocation16 + $0x400] sm:$0xff]
    %v1414 = vld [vmem:[#allocation16 + $0x408] sm:$0xff]
    %v1415 = vld [vmem:[#allocation16 + $0x410] sm:$0xff]
    %v1416 = vld [vmem:[#allocation16 + $0x418] sm:$0xff]
    %v1417 = vld [vmem:[#allocation16 + $0x420] sm:$0xff]
    %v1418 = vld [vmem:[#allocation16 + $0x428] sm:$0xff]
    %v1419 = vld [vmem:[#allocation16 + $0x430] sm:$0xff]
    %v1420 = vld [vmem:[#allocation16 + $0x438] sm:$0xff]
    %v1421 = vld [vmem:[#allocation16 + $0x440] sm:$0xff]
    %v1422 = vld [vmem:[#allocation16 + $0x448] sm:$0xff]
    %v1423 = vld [vmem:[#allocation16 + $0x450] sm:$0xff]
    %v1424 = vld [vmem:[#allocation16 + $0x458] sm:$0xff]
    %v1425 = vld [vmem:[#allocation16 + $0x460] sm:$0xff]
    %v1426 = vld [vmem:[#allocation16 + $0x468] sm:$0xff]
    %v1427 = vld [vmem:[#allocation16 + $0x470] sm:$0xff]
    %v1428 = vld [vmem:[#allocation16 + $0x478] sm:$0xff]
    %v1429 = vld [vmem:[#allocation16 + $0x480] sm:$0xff]
    %v1430 = vld [vmem:[#allocation16 + $0x488] sm:$0xff]
    %v1431 = vld [vmem:[#allocation16 + $0x490] sm:$0xff]
    %v1432 = vld [vmem:[#allocation16 + $0x498] sm:$0xff]
    %v1433 = vld [vmem:[#allocation16 + $0x4a0] sm:$0xff]
    %v1434 = vld [vmem:[#allocation16 + $0x4a8] sm:$0xff]
    %v1435 = vld [vmem:[#allocation16 + $0x4b0] sm:$0xff]
    %v1436 = vld [vmem:[#allocation16 + $0x4b8] sm:$0xff]
    %v1437 = vld [vmem:[#allocation16 + $0x4c0] sm:$0xff]
    %v1438 = vld [vmem:[#allocation16 + $0x4c8] sm:$0xff]
    %v1439 = vld [vmem:[#allocation16 + $0x4d0] sm:$0xff]
    %v1440 = vld [vmem:[#allocation16 + $0x4d8] sm:$0xff]
    %v1441 = vld [vmem:[#allocation16 + $0x4e0] sm:$0xff]
    %v1442 = vld [vmem:[#allocation16 + $0x4e8] sm:$0xff]
    %v1443 = vld [vmem:[#allocation16 + $0x4f0] sm:$0xff]
    %v1444 = vld [vmem:[#allocation16 + $0x4f8] sm:$0xff]
    %v1445 = vld [vmem:[#allocation16 + $0x500] sm:$0xff]
    %v1446 = vld [vmem:[#allocation16 + $0x508] sm:$0xff]
    %v1447 = vld [vmem:[#allocation16 + $0x510] sm:$0xff]
    %v1448 = vld [vmem:[#allocation16 + $0x518] sm:$0xff]
    %v1449 = vld [vmem:[#allocation16 + $0x520] sm:$0xff]
    %v1450 = vld [vmem:[#allocation16 + $0x528] sm:$0xff]
    %v1451 = vld [vmem:[#allocation16 + $0x530] sm:$0xff]
    %v1452 = vld [vmem:[#allocation16 + $0x538] sm:$0xff]
    %v1453 = vld [vmem:[#allocation16 + $0x540] sm:$0xff]
    %v1454 = vld [vmem:[#allocation16 + $0x548] sm:$0xff]
    %v1455 = vld [vmem:[#allocation16 + $0x550] sm:$0xff]
    %v1456 = vld [vmem:[#allocation16 + $0x558] sm:$0xff]
    %v1457 = vld [vmem:[#allocation16 + $0x560] sm:$0xff]
    %v1458 = vld [vmem:[#allocation16 + $0x568] sm:$0xff]
    %v1459 = vld [vmem:[#allocation16 + $0x570] sm:$0xff]
    %v1460 = vld [vmem:[#allocation16 + $0x578] sm:$0xff]
    %v1461 = vld [vmem:[#allocation16 + $0x580] sm:$0xff]
    %v1462 = vld [vmem:[#allocation16 + $0x588] sm:$0xff]
    %v1463 = vld [vmem:[#allocation16 + $0x590] sm:$0xff]
    %v1464 = vld [vmem:[#allocation16 + $0x598] sm:$0xff]
    %v1465 = vld [vmem:[#allocation16 + $0x5a0] sm:$0xff]
    %v1466 = vld [vmem:[#allocation16 + $0x5a8] sm:$0xff]
    %v1467 = vld [vmem:[#allocation16 + $0x5b0] sm:$0xff]
    %v1468 = vld [vmem:[#allocation16 + $0x5b8] sm:$0xff]
    %v1469 = vld [vmem:[#allocation16 + $0x5c0] sm:$0xff]
    %v1470 = vld [vmem:[#allocation16 + $0x5c8] sm:$0xff]
    %v1471 = vld [vmem:[#allocation16 + $0x5d0] sm:$0xff]
    %v1472 = vld [vmem:[#allocation16 + $0x5d8] sm:$0xff]
    %v1473 = vld [vmem:[#allocation16 + $0x5e0] sm:$0xff]
    %v1474 = vld [vmem:[#allocation16 + $0x5e8] sm:$0xff]
    %v1475 = vld [vmem:[#allocation16 + $0x5f0] sm:$0xff]
    %v1476 = vld [vmem:[#allocation16 + $0x5f8] sm:$0xff]
    %v1477 = vld [vmem:[#allocation16 + $0x600] sm:$0xff]
    %v1478 = vld [vmem:[#allocation16 + $0x608] sm:$0xff]
    %v1479 = vld [vmem:[#allocation16 + $0x610] sm:$0xff]
    %v1480 = vld [vmem:[#allocation16 + $0x618] sm:$0xff]
    %v1481 = vld [vmem:[#allocation16 + $0x620] sm:$0xff]
    %v1482 = vld [vmem:[#allocation16 + $0x628] sm:$0xff]
    %v1483 = vld [vmem:[#allocation16 + $0x630] sm:$0xff]
    %v1484 = vld [vmem:[#allocation16 + $0x638] sm:$0xff]
    %v1485 = vld [vmem:[#allocation16 + $0x640] sm:$0xff]
    %v1486 = vld [vmem:[#allocation16 + $0x648] sm:$0xff]
    %v1487 = vld [vmem:[#allocation16 + $0x650] sm:$0xff]
    %v1488 = vld [vmem:[#allocation16 + $0x658] sm:$0xff]
    %v1489 = vld [vmem:[#allocation16 + $0x660] sm:$0xff]
    %v1490 = vld [vmem:[#allocation16 + $0x668] sm:$0xff]
    %v1491 = vld [vmem:[#allocation16 + $0x670] sm:$0xff]
    %v1492 = vld [vmem:[#allocation16 + $0x678] sm:$0xff]
    %v1493 = vld [vmem:[#allocation16 + $0x680] sm:$0xff]
    %v1494 = vld [vmem:[#allocation16 + $0x688] sm:$0xff]
    %v1495 = vld [vmem:[#allocation16 + $0x690] sm:$0xff]
    %v1496 = vld [vmem:[#allocation16 + $0x698] sm:$0xff]
    %v1497 = vld [vmem:[#allocation16 + $0x6a0] sm:$0xff]
    %v1498 = vld [vmem:[#allocation16 + $0x6a8] sm:$0xff]
    %v1499 = vld [vmem:[#allocation16 + $0x6b0] sm:$0xff]
    %v1500 = vld [vmem:[#allocation16 + $0x6b8] sm:$0xff]
    %v1501 = vld [vmem:[#allocation16 + $0x6c0] sm:$0xff]
    %v1502 = vld [vmem:[#allocation16 + $0x6c8] sm:$0xff]
    %v1503 = vld [vmem:[#allocation16 + $0x6d0] sm:$0xff]
    %v1504 = vld [vmem:[#allocation16 + $0x6d8] sm:$0xff]
    %v1505 = vld [vmem:[#allocation16 + $0x6e0] sm:$0xff]
    %v1506 = vld [vmem:[#allocation16 + $0x6e8] sm:$0xff]
    %v1507 = vld [vmem:[#allocation16 + $0x6f0] sm:$0xff]
    %v1508 = vld [vmem:[#allocation16 + $0x6f8] sm:$0xff]
    %v1509 = vld [vmem:[#allocation16 + $0x700] sm:$0xff]
    %v1510 = vld [vmem:[#allocation16 + $0x708] sm:$0xff]
    %v1511 = vld [vmem:[#allocation16 + $0x710] sm:$0xff]
    %v1512 = vld [vmem:[#allocation16 + $0x718] sm:$0xff]
    %v1513 = vld [vmem:[#allocation16 + $0x720] sm:$0xff]
    %v1514 = vld [vmem:[#allocation16 + $0x728] sm:$0xff]
    %v1515 = vld [vmem:[#allocation16 + $0x730] sm:$0xff]
    %v1516 = vld [vmem:[#allocation16 + $0x738] sm:$0xff]
    %v1517 = vld [vmem:[#allocation16 + $0x740] sm:$0xff]
    %v1518 = vld [vmem:[#allocation16 + $0x748] sm:$0xff]
    %v1519 = vld [vmem:[#allocation16 + $0x750] sm:$0xff]
    %v1520 = vld [vmem:[#allocation16 + $0x758] sm:$0xff]
    %v1521 = vld [vmem:[#allocation16 + $0x760] sm:$0xff]
    %v1522 = vld [vmem:[#allocation16 + $0x768] sm:$0xff]
    %v1523 = vld [vmem:[#allocation16 + $0x770] sm:$0xff]
    %v1524 = vld [vmem:[#allocation16 + $0x778] sm:$0xff]
    %v1525 = vld [vmem:[#allocation16 + $0x780] sm:$0xff]
    %v1526 = vld [vmem:[#allocation16 + $0x788] sm:$0xff]
    %v1527 = vld [vmem:[#allocation16 + $0x790] sm:$0xff]
    %v1528 = vld [vmem:[#allocation16 + $0x798] sm:$0xff]
    %v1529 = vld [vmem:[#allocation16 + $0x7a0] sm:$0xff]
    %v1530 = vld [vmem:[#allocation16 + $0x7a8] sm:$0xff]
    %v1531 = vld [vmem:[#allocation16 + $0x7b0] sm:$0xff]
    %v1532 = vld [vmem:[#allocation16 + $0x7b8] sm:$0xff]
    %v1533 = vld [vmem:[#allocation16 + $0x7c0] sm:$0xff]
    %v1534 = vld [vmem:[#allocation16 + $0x7c8] sm:$0xff]
    %v1535 = vld [vmem:[#allocation16 + $0x7d0] sm:$0xff]
    %v1536 = vld [vmem:[#allocation16 + $0x7d8] sm:$0xff]
    %v1537 = vld [vmem:[#allocation16 + $0x7e0] sm:$0xff]
    %v1538 = vld [vmem:[#allocation16 + $0x7e8] sm:$0xff]
    %v1539 = vld [vmem:[#allocation16 + $0x7f0] sm:$0xff]
    %v1540 = vld [vmem:[#allocation16 + $0x7f8] sm:$0xff]
    %v1541 = vld [vmem:[#allocation17] sm:$0x3]
    %v1543 = vlaneseq
    %v1544 = vshrl.u32 %v1543, 7
    %v1545 = vsub.s32 0, %v1544
    %v1546 = vrot.slane %v1541, %v1545
    %v1547 = vlaneseq
    %v1548 = vshrl.u32 %v1547, 7
    %v1549 = vsub.s32 1, %v1548
    %v1550 = vrot.slane %v1541, %v1549
    %1553 = vmatprep.subr.mxu0 %v1286
    %1554 = vmatpush1.msra.mxu0 %v1285
    %1555 = vmatprep.subr.mxu0 %v1288
    %1556 = vmatpush1.msra.mxu0 %v1287
    %1557 = vmatprep.subr.mxu0 %v1290
    %1558 = vmatpush1.msra.mxu0 %v1289
    %1559 = vmatprep.subr.mxu0 %v1292
    %1560 = vmatpush1.msra.mxu0 %v1291
    %1561 = vmatprep.subr.mxu0 %v1294
    %1562 = vmatpush1.msra.mxu0 %v1293
    %1563 = vmatprep.subr.mxu0 %v1296
    %1564 = vmatpush1.msra.mxu0 %v1295
    %1565 = vmatprep.subr.mxu0 %v1298
    %1566 = vmatpush1.msra.mxu0 %v1297
    %1567 = vmatprep.subr.mxu0 %v1300
    %1568 = vmatpush1.msra.mxu0 %v1299
    %1569 = vmatprep.subr.mxu0 %v1302
    %1570 = vmatpush1.msra.mxu0 %v1301
    %1571 = vmatprep.subr.mxu0 %v1304
    %1572 = vmatpush1.msra.mxu0 %v1303
    %1573 = vmatprep.subr.mxu0 %v1306
    %1574 = vmatpush1.msra.mxu0 %v1305
    %1575 = vmatprep.subr.mxu0 %v1308
    %1576 = vmatpush1.msra.mxu0 %v1307
    %1577 = vmatprep.subr.mxu0 %v1310
    %1578 = vmatpush1.msra.mxu0 %v1309
    %1579 = vmatprep.subr.mxu0 %v1312
    %1580 = vmatpush1.msra.mxu0 %v1311
    %1581 = vmatprep.subr.mxu0 %v1314
    %1582 = vmatpush1.msra.mxu0 %v1313
    %1583 = vmatprep.subr.mxu0 %v1316
    %1584 = vmatpush1.msra.mxu0 %v1315
    %1585 = vmatprep.subr.mxu0 %v1318
    %1586 = vmatpush1.msra.mxu0 %v1317
    %1587 = vmatprep.subr.mxu0 %v1320
    %1588 = vmatpush1.msra.mxu0 %v1319
    %1589 = vmatprep.subr.mxu0 %v1322
    %1590 = vmatpush1.msra.mxu0 %v1321
    %1591 = vmatprep.subr.mxu0 %v1324
    %1592 = vmatpush1.msra.mxu0 %v1323
    %1593 = vmatprep.subr.mxu0 %v1326
    %1594 = vmatpush1.msra.mxu0 %v1325
    %1595 = vmatprep.subr.mxu0 %v1328
    %1596 = vmatpush1.msra.mxu0 %v1327
    %1597 = vmatprep.subr.mxu0 %v1330
    %1598 = vmatpush1.msra.mxu0 %v1329
    %1599 = vmatprep.subr.mxu0 %v1332
    %1600 = vmatpush1.msra.mxu0 %v1331
    %1601 = vmatprep.subr.mxu0 %v1334
    %1602 = vmatpush1.msra.mxu0 %v1333
    %1603 = vmatprep.subr.mxu0 %v1336
    %1604 = vmatpush1.msra.mxu0 %v1335
    %1605 = vmatprep.subr.mxu0 %v1338
    %1606 = vmatpush1.msra.mxu0 %v1337
    %1607 = vmatprep.subr.mxu0 %v1340
    %1608 = vmatpush1.msra.mxu0 %v1339
    %1609 = vmatprep.subr.mxu0 %v1342
    %1610 = vmatpush1.msra.mxu0 %v1341
    %1611 = vmatprep.subr.mxu0 %v1344
    %1612 = vmatpush1.msra.mxu0 %v1343
    %1613 = vmatprep.subr.mxu0 %v1346
    %1614 = vmatpush1.msra.mxu0 %v1345
    %1615 = vmatprep.subr.mxu0 %v1348
    %1616 = vmatpush1.msra.mxu0 %v1347
    %1617 = vmatprep.mubr.f32.mxu0 %v892
    %1618 = vmatmul.mubr.f32.gmra.mrb[0].mxu0 %v890
    %v1619 = vpop.f32.mrb[0].mxu0
    %v1620 = vadd.f32 %v1546, %v1619
    %v1621 = vpop.f32.mrb[0].mxu0
    %v1622 = vadd.f32 %v1550, %v1621
    %1623 = vdwg.mxu0
    %1624 = vmatprep.subr.mxu0 %v1350
    %1625 = vmatpush1.msra.mxu0 %v1349
    %1626 = vmatprep.subr.mxu0 %v1352
    %1627 = vmatpush1.msra.mxu0 %v1351
    %1628 = vmatprep.subr.mxu0 %v1354
    %1629 = vmatpush1.msra.mxu0 %v1353
    %1630 = vmatprep.subr.mxu0 %v1356
    %1631 = vmatpush1.msra.mxu0 %v1355
    %1632 = vmatprep.subr.mxu0 %v1358
    %1633 = vmatpush1.msra.mxu0 %v1357
    %1634 = vmatprep.subr.mxu0 %v1360
    %1635 = vmatpush1.msra.mxu0 %v1359
    %1636 = vmatprep.subr.mxu0 %v1362
    %1637 = vmatpush1.msra.mxu0 %v1361
    %1638 = vmatprep.subr.mxu0 %v1364
    %1639 = vmatpush1.msra.mxu0 %v1363
    %1640 = vmatprep.subr.mxu0 %v1366
    %1641 = vmatpush1.msra.mxu0 %v1365
    %1642 = vmatprep.subr.mxu0 %v1368
    %1643 = vmatpush1.msra.mxu0 %v1367
    %1644 = vmatprep.subr.mxu0 %v1370
    %1645 = vmatpush1.msra.mxu0 %v1369
    %1646 = vmatprep.subr.mxu0 %v1372
    %1647 = vmatpush1.msra.mxu0 %v1371
    %1648 = vmatprep.subr.mxu0 %v1374
    %1649 = vmatpush1.msra.mxu0 %v1373
    %1650 = vmatprep.subr.mxu0 %v1376
    %1651 = vmatpush1.msra.mxu0 %v1375
    %1652 = vmatprep.subr.mxu0 %v1378
    %1653 = vmatpush1.msra.mxu0 %v1377
    %1654 = vmatprep.subr.mxu0 %v1380
    %1655 = vmatpush1.msra.mxu0 %v1379
    %1656 = vmatprep.subr.mxu0 %v1382
    %1657 = vmatpush1.msra.mxu0 %v1381
    %1658 = vmatprep.subr.mxu0 %v1384
    %1659 = vmatpush1.msra.mxu0 %v1383
    %1660 = vmatprep.subr.mxu0 %v1386
    %1661 = vmatpush1.msra.mxu0 %v1385
    %1662 = vmatprep.subr.mxu0 %v1388
    %1663 = vmatpush1.msra.mxu0 %v1387
    %1664 = vmatprep.subr.mxu0 %v1390
    %1665 = vmatpush1.msra.mxu0 %v1389
    %1666 = vmatprep.subr.mxu0 %v1392
    %1667 = vmatpush1.msra.mxu0 %v1391
    %1668 = vmatprep.subr.mxu0 %v1394
    %1669 = vmatpush1.msra.mxu0 %v1393
    %1670 = vmatprep.subr.mxu0 %v1396
    %1671 = vmatpush1.msra.mxu0 %v1395
    %1672 = vmatprep.subr.mxu0 %v1398
    %1673 = vmatpush1.msra.mxu0 %v1397
    %1674 = vmatprep.subr.mxu0 %v1400
    %1675 = vmatpush1.msra.mxu0 %v1399
    %1676 = vmatprep.subr.mxu0 %v1402
    %1677 = vmatpush1.msra.mxu0 %v1401
    %1678 = vmatprep.subr.mxu0 %v1404
    %1679 = vmatpush1.msra.mxu0 %v1403
    %1680 = vmatprep.subr.mxu0 %v1406
    %1681 = vmatpush1.msra.mxu0 %v1405
    %1682 = vmatprep.subr.mxu0 %v1408
    %1683 = vmatpush1.msra.mxu0 %v1407
    %1684 = vmatprep.subr.mxu0 %v1410
    %1685 = vmatpush1.msra.mxu0 %v1409
    %1686 = vmatprep.subr.mxu0 %v1412
    %1687 = vmatpush1.msra.mxu0 %v1411
    %1688 = vmatprep.mubr.f32.mxu0 %v963
    %1689 = vmatmul.mubr.f32.gmra.mrb[0].mxu0 %v961
    %v1690 = vpop.f32.mrb[0].mxu0
    %v1691 = vadd.f32 %v1620, %v1690
    %v1692 = vpop.f32.mrb[0].mxu0
    %v1693 = vadd.f32 %v1622, %v1692
    %1694 = vdwg.mxu0
    %1695 = vmatprep.subr.mxu0 %v1414
    %1696 = vmatpush1.msra.mxu0 %v1413
    %1697 = vmatprep.subr.mxu0 %v1416
    %1698 = vmatpush1.msra.mxu0 %v1415
    %1699 = vmatprep.subr.mxu0 %v1418
    %1700 = vmatpush1.msra.mxu0 %v1417
    %1701 = vmatprep.subr.mxu0 %v1420
    %1702 = vmatpush1.msra.mxu0 %v1419
    %1703 = vmatprep.subr.mxu0 %v1422
    %1704 = vmatpush1.msra.mxu0 %v1421
    %1705 = vmatprep.subr.mxu0 %v1424
    %1706 = vmatpush1.msra.mxu0 %v1423
    %1707 = vmatprep.subr.mxu0 %v1426
    %1708 = vmatpush1.msra.mxu0 %v1425
    %1709 = vmatprep.subr.mxu0 %v1428
    %1710 = vmatpush1.msra.mxu0 %v1427
    %1711 = vmatprep.subr.mxu0 %v1430
    %1712 = vmatpush1.msra.mxu0 %v1429
    %1713 = vmatprep.subr.mxu0 %v1432
    %1714 = vmatpush1.msra.mxu0 %v1431
    %1715 = vmatprep.subr.mxu0 %v1434
    %1716 = vmatpush1.msra.mxu0 %v1433
    %1717 = vmatprep.subr.mxu0 %v1436
    %1718 = vmatpush1.msra.mxu0 %v1435
    %1719 = vmatprep.subr.mxu0 %v1438
    %1720 = vmatpush1.msra.mxu0 %v1437
    %1721 = vmatprep.subr.mxu0 %v1440
    %1722 = vmatpush1.msra.mxu0 %v1439
    %1723 = vmatprep.subr.mxu0 %v1442
    %1724 = vmatpush1.msra.mxu0 %v1441
    %1725 = vmatprep.subr.mxu0 %v1444
    %1726 = vmatpush1.msra.mxu0 %v1443
    %1727 = vmatprep.subr.mxu0 %v1446
    %1728 = vmatpush1.msra.mxu0 %v1445
    %1729 = vmatprep.subr.mxu0 %v1448
    %1730 = vmatpush1.msra.mxu0 %v1447
    %1731 = vmatprep.subr.mxu0 %v1450
    %1732 = vmatpush1.msra.mxu0 %v1449
    %1733 = vmatprep.subr.mxu0 %v1452
    %1734 = vmatpush1.msra.mxu0 %v1451
    %1735 = vmatprep.subr.mxu0 %v1454
    %1736 = vmatpush1.msra.mxu0 %v1453
    %1737 = vmatprep.subr.mxu0 %v1456
    %1738 = vmatpush1.msra.mxu0 %v1455
    %1739 = vmatprep.subr.mxu0 %v1458
    %1740 = vmatpush1.msra.mxu0 %v1457
    %1741 = vmatprep.subr.mxu0 %v1460
    %1742 = vmatpush1.msra.mxu0 %v1459
    %1743 = vmatprep.subr.mxu0 %v1462
    %1744 = vmatpush1.msra.mxu0 %v1461
    %1745 = vmatprep.subr.mxu0 %v1464
    %1746 = vmatpush1.msra.mxu0 %v1463
    %1747 = vmatprep.subr.mxu0 %v1466
    %1748 = vmatpush1.msra.mxu0 %v1465
    %1749 = vmatprep.subr.mxu0 %v1468
    %1750 = vmatpush1.msra.mxu0 %v1467
    %1751 = vmatprep.subr.mxu0 %v1470
    %1752 = vmatpush1.msra.mxu0 %v1469
    %1753 = vmatprep.subr.mxu0 %v1472
    %1754 = vmatpush1.msra.mxu0 %v1471
    %1755 = vmatprep.subr.mxu0 %v1474
    %1756 = vmatpush1.msra.mxu0 %v1473
    %1757 = vmatprep.subr.mxu0 %v1476
    %1758 = vmatpush1.msra.mxu0 %v1475
    %1759 = vmatprep.mubr.f32.mxu0 %v1034
    %1760 = vmatmul.mubr.f32.gmra.mrb[0].mxu0 %v1032
    %v1761 = vpop.f32.mrb[0].mxu0
    %v1762 = vadd.f32 %v1691, %v1761
    %v1763 = vpop.f32.mrb[0].mxu0
    %v1764 = vadd.f32 %v1693, %v1763
    %1765 = vdwg.mxu0
    %1766 = vmatprep.subr.mxu0 %v1478
    %1767 = vmatpush1.msra.mxu0 %v1477
    %1768 = vmatprep.subr.mxu0 %v1480
    %1769 = vmatpush1.msra.mxu0 %v1479
    %1770 = vmatprep.subr.mxu0 %v1482
    %1771 = vmatpush1.msra.mxu0 %v1481
    %1772 = vmatprep.subr.mxu0 %v1484
    %1773 = vmatpush1.msra.mxu0 %v1483
    %1774 = vmatprep.subr.mxu0 %v1486
    %1775 = vmatpush1.msra.mxu0 %v1485
    %1776 = vmatprep.subr.mxu0 %v1488
    %1777 = vmatpush1.msra.mxu0 %v1487
    %1778 = vmatprep.subr.mxu0 %v1490
    %1779 = vmatpush1.msra.mxu0 %v1489
    %1780 = vmatprep.subr.mxu0 %v1492
    %1781 = vmatpush1.msra.mxu0 %v1491
    %1782 = vmatprep.subr.mxu0 %v1494
    %1783 = vmatpush1.msra.mxu0 %v1493
    %1784 = vmatprep.subr.mxu0 %v1496
    %1785 = vmatpush1.msra.mxu0 %v1495
    %1786 = vmatprep.subr.mxu0 %v1498
    %1787 = vmatpush1.msra.mxu0 %v1497
    %1788 = vmatprep.subr.mxu0 %v1500
    %1789 = vmatpush1.msra.mxu0 %v1499
    %1790 = vmatprep.subr.mxu0 %v1502
    %1791 = vmatpush1.msra.mxu0 %v1501
    %1792 = vmatprep.subr.mxu0 %v1504
    %1793 = vmatpush1.msra.mxu0 %v1503
    %1794 = vmatprep.subr.mxu0 %v1506
    %1795 = vmatpush1.msra.mxu0 %v1505
    %1796 = vmatprep.subr.mxu0 %v1508
    %1797 = vmatpush1.msra.mxu0 %v1507
    %1798 = vmatprep.subr.mxu0 %v1510
    %1799 = vmatpush1.msra.mxu0 %v1509
    %1800 = vmatprep.subr.mxu0 %v1512
    %1801 = vmatpush1.msra.mxu0 %v1511
    %1802 = vmatprep.subr.mxu0 %v1514
    %1803 = vmatpush1.msra.mxu0 %v1513
    %1804 = vmatprep.subr.mxu0 %v1516
    %1805 = vmatpush1.msra.mxu0 %v1515
    %1806 = vmatprep.subr.mxu0 %v1518
    %1807 = vmatpush1.msra.mxu0 %v1517
    %1808 = vmatprep.subr.mxu0 %v1520
    %1809 = vmatpush1.msra.mxu0 %v1519
    %1810 = vmatprep.subr.mxu0 %v1522
    %1811 = vmatpush1.msra.mxu0 %v1521
    %1812 = vmatprep.subr.mxu0 %v1524
    %1813 = vmatpush1.msra.mxu0 %v1523
    %1814 = vmatprep.subr.mxu0 %v1526
    %1815 = vmatpush1.msra.mxu0 %v1525
    %1816 = vmatprep.subr.mxu0 %v1528
    %1817 = vmatpush1.msra.mxu0 %v1527
    %1818 = vmatprep.subr.mxu0 %v1530
    %1819 = vmatpush1.msra.mxu0 %v1529
    %1820 = vmatprep.subr.mxu0 %v1532
    %1821 = vmatpush1.msra.mxu0 %v1531
    %1822 = vmatprep.subr.mxu0 %v1534
    %1823 = vmatpush1.msra.mxu0 %v1533
    %1824 = vmatprep.subr.mxu0 %v1536
    %1825 = vmatpush1.msra.mxu0 %v1535
    %1826 = vmatprep.subr.mxu0 %v1538
    %1827 = vmatpush1.msra.mxu0 %v1537
    %1828 = vmatprep.subr.mxu0 %v1540
    %1829 = vmatpush1.msra.mxu0 %v1539
    %1830 = vmatprep.mubr.f32.mxu0 %v1105
    %1831 = vmatmul.mubr.f32.gmra.mrb[0].mxu0 %v1103
    %v1832 = vpop.f32.mrb[0].mxu0
    %v1833 = vadd.f32 %v1762, %v1832
    %v1834 = vpop.f32.mrb[0].mxu0
    %v1835 = vadd.f32 %v1764, %v1834
    %1836 = vdwg.mxu0
    %v1837 = vmax.f32 %v1833, 0.0
    %v1838 = vmax.f32 %v1835, 0.0
    %v1839 = vld [vmem:[#allocation19] sm:$0xff]
    %v1840 = vld [vmem:[#allocation19 + $0x8] sm:$0xff]
    %v1841 = vld [vmem:[#allocation19 + $0x10] sm:$0xff]
    %v1842 = vld [vmem:[#allocation19 + $0x18] sm:$0xff]
    %v1843 = vld [vmem:[#allocation19 + $0x20] sm:$0xff]
    %v1844 = vld [vmem:[#allocation19 + $0x28] sm:$0xff]
    %v1845 = vld [vmem:[#allocation19 + $0x30] sm:$0xff]
    %v1846 = vld [vmem:[#allocation19 + $0x38] sm:$0xff]
    %v1847 = vld [vmem:[#allocation19 + $0x40] sm:$0xff]
    %v1848 = vld [vmem:[#allocation19 + $0x48] sm:$0xff]
    %v1849 = vld [vmem:[#allocation19 + $0x50] sm:$0xff]
    %v1850 = vld [vmem:[#allocation19 + $0x58] sm:$0xff]
    %v1851 = vld [vmem:[#allocation19 + $0x60] sm:$0xff]
    %v1852 = vld [vmem:[#allocation19 + $0x68] sm:$0xff]
    %v1853 = vld [vmem:[#allocation19 + $0x70] sm:$0xff]
    %v1854 = vld [vmem:[#allocation19 + $0x78] sm:$0xff]
    %v1855 = vld [vmem:[#allocation19 + $0x80] sm:$0xff]
    %v1856 = vld [vmem:[#allocation19 + $0x88] sm:$0xff]
    %v1857 = vld [vmem:[#allocation19 + $0x90] sm:$0xff]
    %v1858 = vld [vmem:[#allocation19 + $0x98] sm:$0xff]
    %v1859 = vld [vmem:[#allocation19 + $0xa0] sm:$0xff]
    %v1860 = vld [vmem:[#allocation19 + $0xa8] sm:$0xff]
    %v1861 = vld [vmem:[#allocation19 + $0xb0] sm:$0xff]
    %v1862 = vld [vmem:[#allocation19 + $0xb8] sm:$0xff]
    %v1863 = vld [vmem:[#allocation19 + $0xc0] sm:$0xff]
    %v1864 = vld [vmem:[#allocation19 + $0xc8] sm:$0xff]
    %v1865 = vld [vmem:[#allocation19 + $0xd0] sm:$0xff]
    %v1866 = vld [vmem:[#allocation19 + $0xd8] sm:$0xff]
    %v1867 = vld [vmem:[#allocation19 + $0xe0] sm:$0xff]
    %v1868 = vld [vmem:[#allocation19 + $0xe8] sm:$0xff]
    %v1869 = vld [vmem:[#allocation19 + $0xf0] sm:$0xff]
    %v1870 = vld [vmem:[#allocation19 + $0xf8] sm:$0xff]
    %v1871 = vld [vmem:[#allocation19 + $0x100] sm:$0xff]
    %v1872 = vld [vmem:[#allocation19 + $0x108] sm:$0xff]
    %v1873 = vld [vmem:[#allocation19 + $0x110] sm:$0xff]
    %v1874 = vld [vmem:[#allocation19 + $0x118] sm:$0xff]
    %v1875 = vld [vmem:[#allocation19 + $0x120] sm:$0xff]
    %v1876 = vld [vmem:[#allocation19 + $0x128] sm:$0xff]
    %v1877 = vld [vmem:[#allocation19 + $0x130] sm:$0xff]
    %v1878 = vld [vmem:[#allocation19 + $0x138] sm:$0xff]
    %v1879 = vld [vmem:[#allocation19 + $0x140] sm:$0xff]
    %v1880 = vld [vmem:[#allocation19 + $0x148] sm:$0xff]
    %v1881 = vld [vmem:[#allocation19 + $0x150] sm:$0xff]
    %v1882 = vld [vmem:[#allocation19 + $0x158] sm:$0xff]
    %v1883 = vld [vmem:[#allocation19 + $0x160] sm:$0xff]
    %v1884 = vld [vmem:[#allocation19 + $0x168] sm:$0xff]
    %v1885 = vld [vmem:[#allocation19 + $0x170] sm:$0xff]
    %v1886 = vld [vmem:[#allocation19 + $0x178] sm:$0xff]
    %v1887 = vld [vmem:[#allocation19 + $0x180] sm:$0xff]
    %v1888 = vld [vmem:[#allocation19 + $0x188] sm:$0xff]
    %v1889 = vld [vmem:[#allocation19 + $0x190] sm:$0xff]
    %v1890 = vld [vmem:[#allocation19 + $0x198] sm:$0xff]
    %v1891 = vld [vmem:[#allocation19 + $0x1a0] sm:$0xff]
    %v1892 = vld [vmem:[#allocation19 + $0x1a8] sm:$0xff]
    %v1893 = vld [vmem:[#allocation19 + $0x1b0] sm:$0xff]
    %v1894 = vld [vmem:[#allocation19 + $0x1b8] sm:$0xff]
    %v1895 = vld [vmem:[#allocation19 + $0x1c0] sm:$0xff]
    %v1896 = vld [vmem:[#allocation19 + $0x1c8] sm:$0xff]
    %v1897 = vld [vmem:[#allocation19 + $0x1d0] sm:$0xff]
    %v1898 = vld [vmem:[#allocation19 + $0x1d8] sm:$0xff]
    %v1899 = vld [vmem:[#allocation19 + $0x1e0] sm:$0xff]
    %v1900 = vld [vmem:[#allocation19 + $0x1e8] sm:$0xff]
    %v1901 = vld [vmem:[#allocation19 + $0x1f0] sm:$0xff]
    %v1902 = vld [vmem:[#allocation19 + $0x1f8] sm:$0xff]
    %v1903 = vld [vmem:[#allocation20] sm:$0x3]
    %v1905 = vlaneseq
    %v1906 = vshrl.u32 %v1905, 7
    %v1907 = vsub.s32 0, %v1906
    %v1908 = vrot.slane %v1903, %v1907
    %v1909 = vlaneseq
    %v1910 = vshrl.u32 %v1909, 7
    %v1911 = vsub.s32 1, %v1910
    %v1912 = vrot.slane %v1903, %v1911
    %1915 = vmatprep.subr.mxu0 %v1840
    %1916 = vmatpush1.msra.mxu0 %v1839
    %1917 = vmatprep.subr.mxu0 %v1842
    %1918 = vmatpush1.msra.mxu0 %v1841
    %1919 = vmatprep.subr.mxu0 %v1844
    %1920 = vmatpush1.msra.mxu0 %v1843
    %1921 = vmatprep.subr.mxu0 %v1846
    %1922 = vmatpush1.msra.mxu0 %v1845
    %1923 = vmatprep.subr.mxu0 %v1848
    %1924 = vmatpush1.msra.mxu0 %v1847
    %1925 = vmatprep.subr.mxu0 %v1850
    %1926 = vmatpush1.msra.mxu0 %v1849
    %1927 = vmatprep.subr.mxu0 %v1852
    %1928 = vmatpush1.msra.mxu0 %v1851
    %1929 = vmatprep.subr.mxu0 %v1854
    %1930 = vmatpush1.msra.mxu0 %v1853
    %1931 = vmatprep.subr.mxu0 %v1856
    %1932 = vmatpush1.msra.mxu0 %v1855
    %1933 = vmatprep.subr.mxu0 %v1858
    %1934 = vmatpush1.msra.mxu0 %v1857
    %1935 = vmatprep.subr.mxu0 %v1860
    %1936 = vmatpush1.msra.mxu0 %v1859
    %1937 = vmatprep.subr.mxu0 %v1862
    %1938 = vmatpush1.msra.mxu0 %v1861
    %1939 = vmatprep.subr.mxu0 %v1864
    %1940 = vmatpush1.msra.mxu0 %v1863
    %1941 = vmatprep.subr.mxu0 %v1866
    %1942 = vmatpush1.msra.mxu0 %v1865
    %1943 = vmatprep.subr.mxu0 %v1868
    %1944 = vmatpush1.msra.mxu0 %v1867
    %1945 = vmatprep.subr.mxu0 %v1870
    %1946 = vmatpush1.msra.mxu0 %v1869
    %1947 = vmatprep.subr.mxu0 %v1872
    %1948 = vmatpush1.msra.mxu0 %v1871
    %1949 = vmatprep.subr.mxu0 %v1874
    %1950 = vmatpush1.msra.mxu0 %v1873
    %1951 = vmatprep.subr.mxu0 %v1876
    %1952 = vmatpush1.msra.mxu0 %v1875
    %1953 = vmatprep.subr.mxu0 %v1878
    %1954 = vmatpush1.msra.mxu0 %v1877
    %1955 = vmatprep.subr.mxu0 %v1880
    %1956 = vmatpush1.msra.mxu0 %v1879
    %1957 = vmatprep.subr.mxu0 %v1882
    %1958 = vmatpush1.msra.mxu0 %v1881
    %1959 = vmatprep.subr.mxu0 %v1884
    %1960 = vmatpush1.msra.mxu0 %v1883
    %1961 = vmatprep.subr.mxu0 %v1886
    %1962 = vmatpush1.msra.mxu0 %v1885
    %1963 = vmatprep.subr.mxu0 %v1888
    %1964 = vmatpush1.msra.mxu0 %v1887
    %1965 = vmatprep.subr.mxu0 %v1890
    %1966 = vmatpush1.msra.mxu0 %v1889
    %1967 = vmatprep.subr.mxu0 %v1892
    %1968 = vmatpush1.msra.mxu0 %v1891
    %1969 = vmatprep.subr.mxu0 %v1894
    %1970 = vmatpush1.msra.mxu0 %v1893
    %1971 = vmatprep.subr.mxu0 %v1896
    %1972 = vmatpush1.msra.mxu0 %v1895
    %1973 = vmatprep.subr.mxu0 %v1898
    %1974 = vmatpush1.msra.mxu0 %v1897
    %1975 = vmatprep.subr.mxu0 %v1900
    %1976 = vmatpush1.msra.mxu0 %v1899
    %1977 = vmatprep.subr.mxu0 %v1902
    %1978 = vmatpush1.msra.mxu0 %v1901
    %1979 = vmatprep.mubr.f32.mxu0 %v1838
    %1980 = vmatmul.mubr.f32.gmra.mrb[0].mxu0 %v1837
    %v1981 = vpop.f32.mrb[0].mxu0
    %v1982 = vadd.f32 %v1908, %v1981
    %v1983 = vpop.f32.mrb[0].mxu0
    %v1984 = vadd.f32 %v1912, %v1983
    %1985 = vdwg.mxu0
    %v1986 = vmax.f32 %v1982, 0.0
    %v1987 = vmax.f32 %v1984, 0.0
    %v1988 = vld [vmem:[#allocation22] sm:$0x3]
    %v1990 = vlaneseq
    %v1991 = vshrl.u32 %v1990, 7
    %v1992 = vsub.s32 0, %v1991
    %v1993 = vrot.slane %v1988, %v1992
    %v1994 = vlaneseq
    %v1995 = vshrl.u32 %v1994, 7
    %v1996 = vsub.s32 1, %v1995
    %v1997 = vrot.slane %v1988, %v1996
    %v2000 = vmul.f32 %v1986, %v1993
    %v2001 = vmul.f32 %v1987, %v1997
    %vm2002 = vcmask 1041408
    %v2003 = vsel %vm2002, %v2000, 0.0
    %v2004 = vsel %vm2002, %v2001, 0.0
    %v2005 = vadd.f32 %v2003, %v2004
    %2006 = vadd.xlane.f32.xlu0 %v2005
    %v2007 = vpop.xlane.xlu0 %2006
    %v2008 = vld [vmem:[#allocation2] sm:$0x1]
    %v2010 = vlaneseq
    %v2011 = vshrl.u32 %v2010, 7
    %v2012 = vsub.s32 0, %v2011
    %v2013 = vrot.slane %v2008, %v2012
    %v2015 = vadd.f32 %v2007, %v2013
    %vm2016 = vcmask 1024
    %2017 = vst.msk [vmem:[%s63] sm:$0x3] %vm2016, %v2015
    %v2018 = vld [vmem:[#allocation23] sm:$0xff]
    %v2019 = vld [vmem:[#allocation23 + $0x8] sm:$0xff]
    %v2020 = vld [vmem:[#allocation23 + $0x10] sm:$0xff]
    %v2021 = vld [vmem:[#allocation23 + $0x18] sm:$0xff]
    %v2022 = vld [vmem:[#allocation23 + $0x20] sm:$0xff]
    %v2023 = vld [vmem:[#allocation23 + $0x28] sm:$0xff]
    %v2024 = vld [vmem:[#allocation23 + $0x30] sm:$0xff]
    %v2025 = vld [vmem:[#allocation23 + $0x38] sm:$0xff]
    %v2026 = vld [vmem:[#allocation23 + $0x40] sm:$0xff]
    %v2027 = vld [vmem:[#allocation23 + $0x48] sm:$0xff]
    %v2028 = vld [vmem:[#allocation23 + $0x50] sm:$0xff]
    %v2029 = vld [vmem:[#allocation23 + $0x58] sm:$0xff]
    %v2030 = vld [vmem:[#allocation23 + $0x60] sm:$0xff]
    %v2031 = vld [vmem:[#allocation23 + $0x68] sm:$0xff]
    %v2032 = vld [vmem:[#allocation23 + $0x70] sm:$0xff]
    %v2033 = vld [vmem:[#allocation23 + $0x78] sm:$0xff]
    %v2034 = vld [vmem:[#allocation23 + $0x80] sm:$0xff]
    %v2035 = vld [vmem:[#allocation23 + $0x88] sm:$0xff]
    %v2036 = vld [vmem:[#allocation23 + $0x90] sm:$0xff]
    %v2037 = vld [vmem:[#allocation23 + $0x98] sm:$0xff]
    %v2038 = vld [vmem:[#allocation23 + $0xa0] sm:$0xff]
    %v2039 = vld [vmem:[#allocation23 + $0xa8] sm:$0xff]
    %v2040 = vld [vmem:[#allocation23 + $0xb0] sm:$0xff]
    %v2041 = vld [vmem:[#allocation23 + $0xb8] sm:$0xff]
    %v2042 = vld [vmem:[#allocation23 + $0xc0] sm:$0xff]
    %v2043 = vld [vmem:[#allocation23 + $0xc8] sm:$0xff]
    %v2044 = vld [vmem:[#allocation23 + $0xd0] sm:$0xff]
    %v2045 = vld [vmem:[#allocation23 + $0xd8] sm:$0xff]
    %v2046 = vld [vmem:[#allocation23 + $0xe0] sm:$0xff]
    %v2047 = vld [vmem:[#allocation23 + $0xe8] sm:$0xff]
    %v2048 = vld [vmem:[#allocation23 + $0xf0] sm:$0xff]
    %v2049 = vld [vmem:[#allocation23 + $0xf8] sm:$0xff]
    %v2050 = vld [vmem:[#allocation23 + $0x100] sm:$0xff]
    %v2051 = vld [vmem:[#allocation23 + $0x108] sm:$0xff]
    %v2052 = vld [vmem:[#allocation23 + $0x110] sm:$0xff]
    %v2053 = vld [vmem:[#allocation23 + $0x118] sm:$0xff]
    %v2054 = vld [vmem:[#allocation23 + $0x120] sm:$0xff]
    %v2055 = vld [vmem:[#allocation23 + $0x128] sm:$0xff]
    %v2056 = vld [vmem:[#allocation23 + $0x130] sm:$0xff]
    %v2057 = vld [vmem:[#allocation23 + $0x138] sm:$0xff]
    %v2058 = vld [vmem:[#allocation23 + $0x140] sm:$0xff]
    %v2059 = vld [vmem:[#allocation23 + $0x148] sm:$0xff]
    %v2060 = vld [vmem:[#allocation23 + $0x150] sm:$0xff]
    %v2061 = vld [vmem:[#allocation23 + $0x158] sm:$0xff]
    %v2062 = vld [vmem:[#allocation23 + $0x160] sm:$0xff]
    %v2063 = vld [vmem:[#allocation23 + $0x168] sm:$0xff]
    %v2064 = vld [vmem:[#allocation23 + $0x170] sm:$0xff]
    %v2065 = vld [vmem:[#allocation23 + $0x178] sm:$0xff]
    %v2066 = vld [vmem:[#allocation23 + $0x180] sm:$0xff]
    %v2067 = vld [vmem:[#allocation23 + $0x188] sm:$0xff]
    %v2068 = vld [vmem:[#allocation23 + $0x190] sm:$0xff]
    %v2069 = vld [vmem:[#allocation23 + $0x198] sm:$0xff]
    %v2070 = vld [vmem:[#allocation23 + $0x1a0] sm:$0xff]
    %v2071 = vld [vmem:[#allocation23 + $0x1a8] sm:$0xff]
    %v2072 = vld [vmem:[#allocation23 + $0x1b0] sm:$0xff]
    %v2073 = vld [vmem:[#allocation23 + $0x1b8] sm:$0xff]
    %v2074 = vld [vmem:[#allocation23 + $0x1c0] sm:$0xff]
    %v2075 = vld [vmem:[#allocation23 + $0x1c8] sm:$0xff]
    %v2076 = vld [vmem:[#allocation23 + $0x1d0] sm:$0xff]
    %v2077 = vld [vmem:[#allocation23 + $0x1d8] sm:$0xff]
    %v2078 = vld [vmem:[#allocation23 + $0x1e0] sm:$0xff]
    %v2079 = vld [vmem:[#allocation23 + $0x1e8] sm:$0xff]
    %v2080 = vld [vmem:[#allocation23 + $0x1f0] sm:$0xff]
    %v2081 = vld [vmem:[#allocation23 + $0x1f8] sm:$0xff]
    %v2082 = vld [vmem:[#allocation23 + $0x200] sm:$0xff]
    %v2083 = vld [vmem:[#allocation23 + $0x208] sm:$0xff]
    %v2084 = vld [vmem:[#allocation23 + $0x210] sm:$0xff]
    %v2085 = vld [vmem:[#allocation23 + $0x218] sm:$0xff]
    %v2086 = vld [vmem:[#allocation23 + $0x220] sm:$0xff]
    %v2087 = vld [vmem:[#allocation23 + $0x228] sm:$0xff]
    %v2088 = vld [vmem:[#allocation23 + $0x230] sm:$0xff]
    %v2089 = vld [vmem:[#allocation23 + $0x238] sm:$0xff]
    %v2090 = vld [vmem:[#allocation23 + $0x240] sm:$0xff]
    %v2091 = vld [vmem:[#allocation23 + $0x248] sm:$0xff]
    %v2092 = vld [vmem:[#allocation23 + $0x250] sm:$0xff]
    %v2093 = vld [vmem:[#allocation23 + $0x258] sm:$0xff]
    %v2094 = vld [vmem:[#allocation23 + $0x260] sm:$0xff]
    %v2095 = vld [vmem:[#allocation23 + $0x268] sm:$0xff]
    %v2096 = vld [vmem:[#allocation23 + $0x270] sm:$0xff]
    %v2097 = vld [vmem:[#allocation23 + $0x278] sm:$0xff]
    %v2098 = vld [vmem:[#allocation23 + $0x280] sm:$0xff]
    %v2099 = vld [vmem:[#allocation23 + $0x288] sm:$0xff]
    %v2100 = vld [vmem:[#allocation23 + $0x290] sm:$0xff]
    %v2101 = vld [vmem:[#allocation23 + $0x298] sm:$0xff]
    %v2102 = vld [vmem:[#allocation23 + $0x2a0] sm:$0xff]
    %v2103 = vld [vmem:[#allocation23 + $0x2a8] sm:$0xff]
    %v2104 = vld [vmem:[#allocation23 + $0x2b0] sm:$0xff]
    %v2105 = vld [vmem:[#allocation23 + $0x2b8] sm:$0xff]
    %v2106 = vld [vmem:[#allocation23 + $0x2c0] sm:$0xff]
    %v2107 = vld [vmem:[#allocation23 + $0x2c8] sm:$0xff]
    %v2108 = vld [vmem:[#allocation23 + $0x2d0] sm:$0xff]
    %v2109 = vld [vmem:[#allocation23 + $0x2d8] sm:$0xff]
    %v2110 = vld [vmem:[#allocation23 + $0x2e0] sm:$0xff]
    %v2111 = vld [vmem:[#allocation23 + $0x2e8] sm:$0xff]
    %v2112 = vld [vmem:[#allocation23 + $0x2f0] sm:$0xff]
    %v2113 = vld [vmem:[#allocation23 + $0x2f8] sm:$0xff]
    %v2114 = vld [vmem:[#allocation23 + $0x300] sm:$0xff]
    %v2115 = vld [vmem:[#allocation23 + $0x308] sm:$0xff]
    %v2116 = vld [vmem:[#allocation23 + $0x310] sm:$0xff]
    %v2117 = vld [vmem:[#allocation23 + $0x318] sm:$0xff]
    %v2118 = vld [vmem:[#allocation23 + $0x320] sm:$0xff]
    %v2119 = vld [vmem:[#allocation23 + $0x328] sm:$0xff]
    %v2120 = vld [vmem:[#allocation23 + $0x330] sm:$0xff]
    %v2121 = vld [vmem:[#allocation23 + $0x338] sm:$0xff]
    %v2122 = vld [vmem:[#allocation23 + $0x340] sm:$0xff]
    %v2123 = vld [vmem:[#allocation23 + $0x348] sm:$0xff]
    %v2124 = vld [vmem:[#allocation23 + $0x350] sm:$0xff]
    %v2125 = vld [vmem:[#allocation23 + $0x358] sm:$0xff]
    %v2126 = vld [vmem:[#allocation23 + $0x360] sm:$0xff]
    %v2127 = vld [vmem:[#allocation23 + $0x368] sm:$0xff]
    %v2128 = vld [vmem:[#allocation23 + $0x370] sm:$0xff]
    %v2129 = vld [vmem:[#allocation23 + $0x378] sm:$0xff]
    %v2130 = vld [vmem:[#allocation23 + $0x380] sm:$0xff]
    %v2131 = vld [vmem:[#allocation23 + $0x388] sm:$0xff]
    %v2132 = vld [vmem:[#allocation23 + $0x390] sm:$0xff]
    %v2133 = vld [vmem:[#allocation23 + $0x398] sm:$0xff]
    %v2134 = vld [vmem:[#allocation23 + $0x3a0] sm:$0xff]
    %v2135 = vld [vmem:[#allocation23 + $0x3a8] sm:$0xff]
    %v2136 = vld [vmem:[#allocation23 + $0x3b0] sm:$0xff]
    %v2137 = vld [vmem:[#allocation23 + $0x3b8] sm:$0xff]
    %v2138 = vld [vmem:[#allocation23 + $0x3c0] sm:$0xff]
    %v2139 = vld [vmem:[#allocation23 + $0x3c8] sm:$0xff]
    %v2140 = vld [vmem:[#allocation23 + $0x3d0] sm:$0xff]
    %v2141 = vld [vmem:[#allocation23 + $0x3d8] sm:$0xff]
    %v2142 = vld [vmem:[#allocation23 + $0x3e0] sm:$0xff]
    %v2143 = vld [vmem:[#allocation23 + $0x3e8] sm:$0xff]
    %v2144 = vld [vmem:[#allocation23 + $0x3f0] sm:$0xff]
    %v2145 = vld [vmem:[#allocation23 + $0x3f8] sm:$0xff]
    %v2146 = vld [vmem:[#allocation23 + $0x400] sm:$0xff]
    %v2147 = vld [vmem:[#allocation23 + $0x408] sm:$0xff]
    %v2148 = vld [vmem:[#allocation23 + $0x410] sm:$0xff]
    %v2149 = vld [vmem:[#allocation23 + $0x418] sm:$0xff]
    %v2150 = vld [vmem:[#allocation23 + $0x420] sm:$0xff]
    %v2151 = vld [vmem:[#allocation23 + $0x428] sm:$0xff]
    %v2152 = vld [vmem:[#allocation23 + $0x430] sm:$0xff]
    %v2153 = vld [vmem:[#allocation23 + $0x438] sm:$0xff]
    %v2154 = vld [vmem:[#allocation23 + $0x440] sm:$0xff]
    %v2155 = vld [vmem:[#allocation23 + $0x448] sm:$0xff]
    %v2156 = vld [vmem:[#allocation23 + $0x450] sm:$0xff]
    %v2157 = vld [vmem:[#allocation23 + $0x458] sm:$0xff]
    %v2158 = vld [vmem:[#allocation23 + $0x460] sm:$0xff]
    %v2159 = vld [vmem:[#allocation23 + $0x468] sm:$0xff]
    %v2160 = vld [vmem:[#allocation23 + $0x470] sm:$0xff]
    %v2161 = vld [vmem:[#allocation23 + $0x478] sm:$0xff]
    %v2162 = vld [vmem:[#allocation23 + $0x480] sm:$0xff]
    %v2163 = vld [vmem:[#allocation23 + $0x488] sm:$0xff]
    %v2164 = vld [vmem:[#allocation23 + $0x490] sm:$0xff]
    %v2165 = vld [vmem:[#allocation23 + $0x498] sm:$0xff]
    %v2166 = vld [vmem:[#allocation23 + $0x4a0] sm:$0xff]
    %v2167 = vld [vmem:[#allocation23 + $0x4a8] sm:$0xff]
    %v2168 = vld [vmem:[#allocation23 + $0x4b0] sm:$0xff]
    %v2169 = vld [vmem:[#allocation23 + $0x4b8] sm:$0xff]
    %v2170 = vld [vmem:[#allocation23 + $0x4c0] sm:$0xff]
    %v2171 = vld [vmem:[#allocation23 + $0x4c8] sm:$0xff]
    %v2172 = vld [vmem:[#allocation23 + $0x4d0] sm:$0xff]
    %v2173 = vld [vmem:[#allocation23 + $0x4d8] sm:$0xff]
    %v2174 = vld [vmem:[#allocation23 + $0x4e0] sm:$0xff]
    %v2175 = vld [vmem:[#allocation23 + $0x4e8] sm:$0xff]
    %v2176 = vld [vmem:[#allocation23 + $0x4f0] sm:$0xff]
    %v2177 = vld [vmem:[#allocation23 + $0x4f8] sm:$0xff]
    %v2178 = vld [vmem:[#allocation23 + $0x500] sm:$0xff]
    %v2179 = vld [vmem:[#allocation23 + $0x508] sm:$0xff]
    %v2180 = vld [vmem:[#allocation23 + $0x510] sm:$0xff]
    %v2181 = vld [vmem:[#allocation23 + $0x518] sm:$0xff]
    %v2182 = vld [vmem:[#allocation23 + $0x520] sm:$0xff]
    %v2183 = vld [vmem:[#allocation23 + $0x528] sm:$0xff]
    %v2184 = vld [vmem:[#allocation23 + $0x530] sm:$0xff]
    %v2185 = vld [vmem:[#allocation23 + $0x538] sm:$0xff]
    %v2186 = vld [vmem:[#allocation23 + $0x540] sm:$0xff]
    %v2187 = vld [vmem:[#allocation23 + $0x548] sm:$0xff]
    %v2188 = vld [vmem:[#allocation23 + $0x550] sm:$0xff]
    %v2189 = vld [vmem:[#allocation23 + $0x558] sm:$0xff]
    %v2190 = vld [vmem:[#allocation23 + $0x560] sm:$0xff]
    %v2191 = vld [vmem:[#allocation23 + $0x568] sm:$0xff]
    %v2192 = vld [vmem:[#allocation23 + $0x570] sm:$0xff]
    %v2193 = vld [vmem:[#allocation23 + $0x578] sm:$0xff]
    %v2194 = vld [vmem:[#allocation23 + $0x580] sm:$0xff]
    %v2195 = vld [vmem:[#allocation23 + $0x588] sm:$0xff]
    %v2196 = vld [vmem:[#allocation23 + $0x590] sm:$0xff]
    %v2197 = vld [vmem:[#allocation23 + $0x598] sm:$0xff]
    %v2198 = vld [vmem:[#allocation23 + $0x5a0] sm:$0xff]
    %v2199 = vld [vmem:[#allocation23 + $0x5a8] sm:$0xff]
    %v2200 = vld [vmem:[#allocation23 + $0x5b0] sm:$0xff]
    %v2201 = vld [vmem:[#allocation23 + $0x5b8] sm:$0xff]
    %v2202 = vld [vmem:[#allocation23 + $0x5c0] sm:$0xff]
    %v2203 = vld [vmem:[#allocation23 + $0x5c8] sm:$0xff]
    %v2204 = vld [vmem:[#allocation23 + $0x5d0] sm:$0xff]
    %v2205 = vld [vmem:[#allocation23 + $0x5d8] sm:$0xff]
    %v2206 = vld [vmem:[#allocation23 + $0x5e0] sm:$0xff]
    %v2207 = vld [vmem:[#allocation23 + $0x5e8] sm:$0xff]
    %v2208 = vld [vmem:[#allocation23 + $0x5f0] sm:$0xff]
    %v2209 = vld [vmem:[#allocation23 + $0x5f8] sm:$0xff]
    %v2210 = vld [vmem:[#allocation23 + $0x600] sm:$0xff]
    %v2211 = vld [vmem:[#allocation23 + $0x608] sm:$0xff]
    %v2212 = vld [vmem:[#allocation23 + $0x610] sm:$0xff]
    %v2213 = vld [vmem:[#allocation23 + $0x618] sm:$0xff]
    %v2214 = vld [vmem:[#allocation23 + $0x620] sm:$0xff]
    %v2215 = vld [vmem:[#allocation23 + $0x628] sm:$0xff]
    %v2216 = vld [vmem:[#allocation23 + $0x630] sm:$0xff]
    %v2217 = vld [vmem:[#allocation23 + $0x638] sm:$0xff]
    %v2218 = vld [vmem:[#allocation23 + $0x640] sm:$0xff]
    %v2219 = vld [vmem:[#allocation23 + $0x648] sm:$0xff]
    %v2220 = vld [vmem:[#allocation23 + $0x650] sm:$0xff]
    %v2221 = vld [vmem:[#allocation23 + $0x658] sm:$0xff]
    %v2222 = vld [vmem:[#allocation23 + $0x660] sm:$0xff]
    %v2223 = vld [vmem:[#allocation23 + $0x668] sm:$0xff]
    %v2224 = vld [vmem:[#allocation23 + $0x670] sm:$0xff]
    %v2225 = vld [vmem:[#allocation23 + $0x678] sm:$0xff]
    %v2226 = vld [vmem:[#allocation23 + $0x680] sm:$0xff]
    %v2227 = vld [vmem:[#allocation23 + $0x688] sm:$0xff]
    %v2228 = vld [vmem:[#allocation23 + $0x690] sm:$0xff]
    %v2229 = vld [vmem:[#allocation23 + $0x698] sm:$0xff]
    %v2230 = vld [vmem:[#allocation23 + $0x6a0] sm:$0xff]
    %v2231 = vld [vmem:[#allocation23 + $0x6a8] sm:$0xff]
    %v2232 = vld [vmem:[#allocation23 + $0x6b0] sm:$0xff]
    %v2233 = vld [vmem:[#allocation23 + $0x6b8] sm:$0xff]
    %v2234 = vld [vmem:[#allocation23 + $0x6c0] sm:$0xff]
    %v2235 = vld [vmem:[#allocation23 + $0x6c8] sm:$0xff]
    %v2236 = vld [vmem:[#allocation23 + $0x6d0] sm:$0xff]
    %v2237 = vld [vmem:[#allocation23 + $0x6d8] sm:$0xff]
    %v2238 = vld [vmem:[#allocation23 + $0x6e0] sm:$0xff]
    %v2239 = vld [vmem:[#allocation23 + $0x6e8] sm:$0xff]
    %v2240 = vld [vmem:[#allocation23 + $0x6f0] sm:$0xff]
    %v2241 = vld [vmem:[#allocation23 + $0x6f8] sm:$0xff]
    %v2242 = vld [vmem:[#allocation23 + $0x700] sm:$0xff]
    %v2243 = vld [vmem:[#allocation23 + $0x708] sm:$0xff]
    %v2244 = vld [vmem:[#allocation23 + $0x710] sm:$0xff]
    %v2245 = vld [vmem:[#allocation23 + $0x718] sm:$0xff]
    %v2246 = vld [vmem:[#allocation23 + $0x720] sm:$0xff]
    %v2247 = vld [vmem:[#allocation23 + $0x728] sm:$0xff]
    %v2248 = vld [vmem:[#allocation23 + $0x730] sm:$0xff]
    %v2249 = vld [vmem:[#allocation23 + $0x738] sm:$0xff]
    %v2250 = vld [vmem:[#allocation23 + $0x740] sm:$0xff]
    %v2251 = vld [vmem:[#allocation23 + $0x748] sm:$0xff]
    %v2252 = vld [vmem:[#allocation23 + $0x750] sm:$0xff]
    %v2253 = vld [vmem:[#allocation23 + $0x758] sm:$0xff]
    %v2254 = vld [vmem:[#allocation23 + $0x760] sm:$0xff]
    %v2255 = vld [vmem:[#allocation23 + $0x768] sm:$0xff]
    %v2256 = vld [vmem:[#allocation23 + $0x770] sm:$0xff]
    %v2257 = vld [vmem:[#allocation23 + $0x778] sm:$0xff]
    %v2258 = vld [vmem:[#allocation23 + $0x780] sm:$0xff]
    %v2259 = vld [vmem:[#allocation23 + $0x788] sm:$0xff]
    %v2260 = vld [vmem:[#allocation23 + $0x790] sm:$0xff]
    %v2261 = vld [vmem:[#allocation23 + $0x798] sm:$0xff]
    %v2262 = vld [vmem:[#allocation23 + $0x7a0] sm:$0xff]
    %v2263 = vld [vmem:[#allocation23 + $0x7a8] sm:$0xff]
    %v2264 = vld [vmem:[#allocation23 + $0x7b0] sm:$0xff]
    %v2265 = vld [vmem:[#allocation23 + $0x7b8] sm:$0xff]
    %v2266 = vld [vmem:[#allocation23 + $0x7c0] sm:$0xff]
    %v2267 = vld [vmem:[#allocation23 + $0x7c8] sm:$0xff]
    %v2268 = vld [vmem:[#allocation23 + $0x7d0] sm:$0xff]
    %v2269 = vld [vmem:[#allocation23 + $0x7d8] sm:$0xff]
    %v2270 = vld [vmem:[#allocation23 + $0x7e0] sm:$0xff]
    %v2271 = vld [vmem:[#allocation23 + $0x7e8] sm:$0xff]
    %v2272 = vld [vmem:[#allocation23 + $0x7f0] sm:$0xff]
    %v2273 = vld [vmem:[#allocation23 + $0x7f8] sm:$0xff]
    %v2274 = vld [vmem:[#allocation23 + $0x800] sm:$0xff]
    %v2275 = vld [vmem:[#allocation23 + $0x808] sm:$0xff]
    %v2276 = vld [vmem:[#allocation23 + $0x810] sm:$0xff]
    %v2277 = vld [vmem:[#allocation23 + $0x818] sm:$0xff]
    %v2278 = vld [vmem:[#allocation23 + $0x820] sm:$0xff]
    %v2279 = vld [vmem:[#allocation23 + $0x828] sm:$0xff]
    %v2280 = vld [vmem:[#allocation23 + $0x830] sm:$0xff]
    %v2281 = vld [vmem:[#allocation23 + $0x838] sm:$0xff]
    %v2282 = vld [vmem:[#allocation23 + $0x840] sm:$0xff]
    %v2283 = vld [vmem:[#allocation23 + $0x848] sm:$0xff]
    %v2284 = vld [vmem:[#allocation23 + $0x850] sm:$0xff]
    %v2285 = vld [vmem:[#allocation23 + $0x858] sm:$0xff]
    %v2286 = vld [vmem:[#allocation23 + $0x860] sm:$0xff]
    %v2287 = vld [vmem:[#allocation23 + $0x868] sm:$0xff]
    %v2288 = vld [vmem:[#allocation23 + $0x870] sm:$0xff]
    %v2289 = vld [vmem:[#allocation23 + $0x878] sm:$0xff]
    %v2290 = vld [vmem:[#allocation23 + $0x880] sm:$0xff]
    %v2291 = vld [vmem:[#allocation23 + $0x888] sm:$0xff]
    %v2292 = vld [vmem:[#allocation23 + $0x890] sm:$0xff]
    %v2293 = vld [vmem:[#allocation23 + $0x898] sm:$0xff]
    %v2294 = vld [vmem:[#allocation23 + $0x8a0] sm:$0xff]
    %v2295 = vld [vmem:[#allocation23 + $0x8a8] sm:$0xff]
    %v2296 = vld [vmem:[#allocation23 + $0x8b0] sm:$0xff]
    %v2297 = vld [vmem:[#allocation23 + $0x8b8] sm:$0xff]
    %v2298 = vld [vmem:[#allocation23 + $0x8c0] sm:$0xff]
    %v2299 = vld [vmem:[#allocation23 + $0x8c8] sm:$0xff]
    %v2300 = vld [vmem:[#allocation23 + $0x8d0] sm:$0xff]
    %v2301 = vld [vmem:[#allocation23 + $0x8d8] sm:$0xff]
    %v2302 = vld [vmem:[#allocation23 + $0x8e0] sm:$0xff]
    %v2303 = vld [vmem:[#allocation23 + $0x8e8] sm:$0xff]
    %v2304 = vld [vmem:[#allocation23 + $0x8f0] sm:$0xff]
    %v2305 = vld [vmem:[#allocation23 + $0x8f8] sm:$0xff]
    %v2306 = vld [vmem:[#allocation23 + $0x900] sm:$0xff]
    %v2307 = vld [vmem:[#allocation23 + $0x908] sm:$0xff]
    %v2308 = vld [vmem:[#allocation23 + $0x910] sm:$0xff]
    %v2309 = vld [vmem:[#allocation23 + $0x918] sm:$0xff]
    %v2310 = vld [vmem:[#allocation23 + $0x920] sm:$0xff]
    %v2311 = vld [vmem:[#allocation23 + $0x928] sm:$0xff]
    %v2312 = vld [vmem:[#allocation23 + $0x930] sm:$0xff]
    %v2313 = vld [vmem:[#allocation23 + $0x938] sm:$0xff]
    %v2314 = vld [vmem:[#allocation23 + $0x940] sm:$0xff]
    %v2315 = vld [vmem:[#allocation23 + $0x948] sm:$0xff]
    %v2316 = vld [vmem:[#allocation23 + $0x950] sm:$0xff]
    %v2317 = vld [vmem:[#allocation23 + $0x958] sm:$0xff]
    %v2318 = vld [vmem:[#allocation23 + $0x960] sm:$0xff]
    %v2319 = vld [vmem:[#allocation23 + $0x968] sm:$0xff]
    %v2320 = vld [vmem:[#allocation23 + $0x970] sm:$0xff]
    %v2321 = vld [vmem:[#allocation23 + $0x978] sm:$0xff]
    %v2322 = vld [vmem:[#allocation23 + $0x980] sm:$0xff]
    %v2323 = vld [vmem:[#allocation23 + $0x988] sm:$0xff]
    %v2324 = vld [vmem:[#allocation23 + $0x990] sm:$0xff]
    %v2325 = vld [vmem:[#allocation23 + $0x998] sm:$0xff]
    %v2326 = vld [vmem:[#allocation23 + $0x9a0] sm:$0xff]
    %v2327 = vld [vmem:[#allocation23 + $0x9a8] sm:$0xff]
    %v2328 = vld [vmem:[#allocation23 + $0x9b0] sm:$0xff]
    %v2329 = vld [vmem:[#allocation23 + $0x9b8] sm:$0xff]
    %v2330 = vld [vmem:[#allocation23 + $0x9c0] sm:$0xff]
    %v2331 = vld [vmem:[#allocation23 + $0x9c8] sm:$0xff]
    %v2332 = vld [vmem:[#allocation23 + $0x9d0] sm:$0xff]
    %v2333 = vld [vmem:[#allocation23 + $0x9d8] sm:$0xff]
    %v2334 = vld [vmem:[#allocation23 + $0x9e0] sm:$0xff]
    %v2335 = vld [vmem:[#allocation23 + $0x9e8] sm:$0xff]
    %v2336 = vld [vmem:[#allocation23 + $0x9f0] sm:$0xff]
    %v2337 = vld [vmem:[#allocation23 + $0x9f8] sm:$0xff]
    %v2338 = vld [vmem:[#allocation23 + $0xa00] sm:$0xff]
    %v2339 = vld [vmem:[#allocation23 + $0xa08] sm:$0xff]
    %v2340 = vld [vmem:[#allocation23 + $0xa10] sm:$0xff]
    %v2341 = vld [vmem:[#allocation23 + $0xa18] sm:$0xff]
    %v2342 = vld [vmem:[#allocation23 + $0xa20] sm:$0xff]
    %v2343 = vld [vmem:[#allocation23 + $0xa28] sm:$0xff]
    %v2344 = vld [vmem:[#allocation23 + $0xa30] sm:$0xff]
    %v2345 = vld [vmem:[#allocation23 + $0xa38] sm:$0xff]
    %v2346 = vld [vmem:[#allocation23 + $0xa40] sm:$0xff]
    %v2347 = vld [vmem:[#allocation23 + $0xa48] sm:$0xff]
    %v2348 = vld [vmem:[#allocation23 + $0xa50] sm:$0xff]
    %v2349 = vld [vmem:[#allocation23 + $0xa58] sm:$0xff]
    %v2350 = vld [vmem:[#allocation23 + $0xa60] sm:$0xff]
    %v2351 = vld [vmem:[#allocation23 + $0xa68] sm:$0xff]
    %v2352 = vld [vmem:[#allocation23 + $0xa70] sm:$0xff]
    %v2353 = vld [vmem:[#allocation23 + $0xa78] sm:$0xff]
    %v2354 = vld [vmem:[#allocation23 + $0xa80] sm:$0xff]
    %v2355 = vld [vmem:[#allocation23 + $0xa88] sm:$0xff]
    %v2356 = vld [vmem:[#allocation23 + $0xa90] sm:$0xff]
    %v2357 = vld [vmem:[#allocation23 + $0xa98] sm:$0xff]
    %v2358 = vld [vmem:[#allocation23 + $0xaa0] sm:$0xff]
    %v2359 = vld [vmem:[#allocation23 + $0xaa8] sm:$0xff]
    %v2360 = vld [vmem:[#allocation23 + $0xab0] sm:$0xff]
    %v2361 = vld [vmem:[#allocation23 + $0xab8] sm:$0xff]
    %v2362 = vld [vmem:[#allocation23 + $0xac0] sm:$0xff]
    %v2363 = vld [vmem:[#allocation23 + $0xac8] sm:$0xff]
    %v2364 = vld [vmem:[#allocation23 + $0xad0] sm:$0xff]
    %v2365 = vld [vmem:[#allocation23 + $0xad8] sm:$0xff]
    %v2366 = vld [vmem:[#allocation23 + $0xae0] sm:$0xff]
    %v2367 = vld [vmem:[#allocation23 + $0xae8] sm:$0xff]
    %v2368 = vld [vmem:[#allocation23 + $0xaf0] sm:$0xff]
    %v2369 = vld [vmem:[#allocation23 + $0xaf8] sm:$0xff]
    %v2370 = vld [vmem:[#allocation23 + $0xb00] sm:$0xff]
    %v2371 = vld [vmem:[#allocation23 + $0xb08] sm:$0xff]
    %v2372 = vld [vmem:[#allocation23 + $0xb10] sm:$0xff]
    %v2373 = vld [vmem:[#allocation23 + $0xb18] sm:$0xff]
    %v2374 = vld [vmem:[#allocation23 + $0xb20] sm:$0xff]
    %v2375 = vld [vmem:[#allocation23 + $0xb28] sm:$0xff]
    %v2376 = vld [vmem:[#allocation23 + $0xb30] sm:$0xff]
    %v2377 = vld [vmem:[#allocation23 + $0xb38] sm:$0xff]
    %v2378 = vld [vmem:[#allocation23 + $0xb40] sm:$0xff]
    %v2379 = vld [vmem:[#allocation23 + $0xb48] sm:$0xff]
    %v2380 = vld [vmem:[#allocation23 + $0xb50] sm:$0xff]
    %v2381 = vld [vmem:[#allocation23 + $0xb58] sm:$0xff]
    %v2382 = vld [vmem:[#allocation23 + $0xb60] sm:$0xff]
    %v2383 = vld [vmem:[#allocation23 + $0xb68] sm:$0xff]
    %v2384 = vld [vmem:[#allocation23 + $0xb70] sm:$0xff]
    %v2385 = vld [vmem:[#allocation23 + $0xb78] sm:$0xff]
    %v2386 = vld [vmem:[#allocation23 + $0xb80] sm:$0xff]
    %v2387 = vld [vmem:[#allocation23 + $0xb88] sm:$0xff]
    %v2388 = vld [vmem:[#allocation23 + $0xb90] sm:$0xff]
    %v2389 = vld [vmem:[#allocation23 + $0xb98] sm:$0xff]
    %v2390 = vld [vmem:[#allocation23 + $0xba0] sm:$0xff]
    %v2391 = vld [vmem:[#allocation23 + $0xba8] sm:$0xff]
    %v2392 = vld [vmem:[#allocation23 + $0xbb0] sm:$0xff]
    %v2393 = vld [vmem:[#allocation23 + $0xbb8] sm:$0xff]
    %v2394 = vld [vmem:[#allocation23 + $0xbc0] sm:$0xff]
    %v2395 = vld [vmem:[#allocation23 + $0xbc8] sm:$0xff]
    %v2396 = vld [vmem:[#allocation23 + $0xbd0] sm:$0xff]
    %v2397 = vld [vmem:[#allocation23 + $0xbd8] sm:$0xff]
    %v2398 = vld [vmem:[#allocation23 + $0xbe0] sm:$0xff]
    %v2399 = vld [vmem:[#allocation23 + $0xbe8] sm:$0xff]
    %v2400 = vld [vmem:[#allocation23 + $0xbf0] sm:$0xff]
    %v2401 = vld [vmem:[#allocation23 + $0xbf8] sm:$0xff]
    %v2402 = vld [vmem:[#allocation23 + $0xc00] sm:$0xff]
    %v2403 = vld [vmem:[#allocation23 + $0xc08] sm:$0xff]
    %v2404 = vld [vmem:[#allocation23 + $0xc10] sm:$0xff]
    %v2405 = vld [vmem:[#allocation23 + $0xc18] sm:$0xff]
    %v2406 = vld [vmem:[#allocation23 + $0xc20] sm:$0xff]
    %v2407 = vld [vmem:[#allocation23 + $0xc28] sm:$0xff]
    %v2408 = vld [vmem:[#allocation23 + $0xc30] sm:$0xff]
    %v2409 = vld [vmem:[#allocation23 + $0xc38] sm:$0xff]
    %v2410 = vld [vmem:[#allocation23 + $0xc40] sm:$0xff]
    %v2411 = vld [vmem:[#allocation23 + $0xc48] sm:$0xff]
    %v2412 = vld [vmem:[#allocation23 + $0xc50] sm:$0xff]
    %v2413 = vld [vmem:[#allocation23 + $0xc58] sm:$0xff]
    %v2414 = vld [vmem:[#allocation23 + $0xc60] sm:$0xff]
    %v2415 = vld [vmem:[#allocation23 + $0xc68] sm:$0xff]
    %v2416 = vld [vmem:[#allocation23 + $0xc70] sm:$0xff]
    %v2417 = vld [vmem:[#allocation23 + $0xc78] sm:$0xff]
    %v2418 = vld [vmem:[#allocation23 + $0xc80] sm:$0xff]
    %v2419 = vld [vmem:[#allocation23 + $0xc88] sm:$0xff]
    %v2420 = vld [vmem:[#allocation23 + $0xc90] sm:$0xff]
    %v2421 = vld [vmem:[#allocation23 + $0xc98] sm:$0xff]
    %v2422 = vld [vmem:[#allocation23 + $0xca0] sm:$0xff]
    %v2423 = vld [vmem:[#allocation23 + $0xca8] sm:$0xff]
    %v2424 = vld [vmem:[#allocation23 + $0xcb0] sm:$0xff]
    %v2425 = vld [vmem:[#allocation23 + $0xcb8] sm:$0xff]
    %v2426 = vld [vmem:[#allocation23 + $0xcc0] sm:$0xff]
    %v2427 = vld [vmem:[#allocation23 + $0xcc8] sm:$0xff]
    %v2428 = vld [vmem:[#allocation23 + $0xcd0] sm:$0xff]
    %v2429 = vld [vmem:[#allocation23 + $0xcd8] sm:$0xff]
    %v2430 = vld [vmem:[#allocation23 + $0xce0] sm:$0xff]
    %v2431 = vld [vmem:[#allocation23 + $0xce8] sm:$0xff]
    %v2432 = vld [vmem:[#allocation23 + $0xcf0] sm:$0xff]
    %v2433 = vld [vmem:[#allocation23 + $0xcf8] sm:$0xff]
    %v2434 = vld [vmem:[#allocation23 + $0xd00] sm:$0xff]
    %v2435 = vld [vmem:[#allocation23 + $0xd08] sm:$0xff]
    %v2436 = vld [vmem:[#allocation23 + $0xd10] sm:$0xff]
    %v2437 = vld [vmem:[#allocation23 + $0xd18] sm:$0xff]
    %v2438 = vld [vmem:[#allocation23 + $0xd20] sm:$0xff]
    %v2439 = vld [vmem:[#allocation23 + $0xd28] sm:$0xff]
    %v2440 = vld [vmem:[#allocation23 + $0xd30] sm:$0xff]
    %v2441 = vld [vmem:[#allocation23 + $0xd38] sm:$0xff]
    %v2442 = vld [vmem:[#allocation23 + $0xd40] sm:$0xff]
    %v2443 = vld [vmem:[#allocation23 + $0xd48] sm:$0xff]
    %v2444 = vld [vmem:[#allocation23 + $0xd50] sm:$0xff]
    %v2445 = vld [vmem:[#allocation23 + $0xd58] sm:$0xff]
    %v2446 = vld [vmem:[#allocation23 + $0xd60] sm:$0xff]
    %v2447 = vld [vmem:[#allocation23 + $0xd68] sm:$0xff]
    %v2448 = vld [vmem:[#allocation23 + $0xd70] sm:$0xff]
    %v2449 = vld [vmem:[#allocation23 + $0xd78] sm:$0xff]
    %v2450 = vld [vmem:[#allocation23 + $0xd80] sm:$0xff]
    %v2451 = vld [vmem:[#allocation23 + $0xd88] sm:$0xff]
    %v2452 = vld [vmem:[#allocation23 + $0xd90] sm:$0xff]
    %v2453 = vld [vmem:[#allocation23 + $0xd98] sm:$0xff]
    %v2454 = vld [vmem:[#allocation23 + $0xda0] sm:$0xff]
    %v2455 = vld [vmem:[#allocation23 + $0xda8] sm:$0xff]
    %v2456 = vld [vmem:[#allocation23 + $0xdb0] sm:$0xff]
    %v2457 = vld [vmem:[#allocation23 + $0xdb8] sm:$0xff]
    %v2458 = vld [vmem:[#allocation23 + $0xdc0] sm:$0xff]
    %v2459 = vld [vmem:[#allocation23 + $0xdc8] sm:$0xff]
    %v2460 = vld [vmem:[#allocation23 + $0xdd0] sm:$0xff]
    %v2461 = vld [vmem:[#allocation23 + $0xdd8] sm:$0xff]
    %v2462 = vld [vmem:[#allocation23 + $0xde0] sm:$0xff]
    %v2463 = vld [vmem:[#allocation23 + $0xde8] sm:$0xff]
    %v2464 = vld [vmem:[#allocation23 + $0xdf0] sm:$0xff]
    %v2465 = vld [vmem:[#allocation23 + $0xdf8] sm:$0xff]
    %v2466 = vld [vmem:[#allocation23 + $0xe00] sm:$0xff]
    %v2467 = vld [vmem:[#allocation23 + $0xe08] sm:$0xff]
    %v2468 = vld [vmem:[#allocation23 + $0xe10] sm:$0xff]
    %v2469 = vld [vmem:[#allocation23 + $0xe18] sm:$0xff]
    %v2470 = vld [vmem:[#allocation23 + $0xe20] sm:$0xff]
    %v2471 = vld [vmem:[#allocation23 + $0xe28] sm:$0xff]
    %v2472 = vld [vmem:[#allocation23 + $0xe30] sm:$0xff]
    %v2473 = vld [vmem:[#allocation23 + $0xe38] sm:$0xff]
    %v2474 = vld [vmem:[#allocation23 + $0xe40] sm:$0xff]
    %v2475 = vld [vmem:[#allocation23 + $0xe48] sm:$0xff]
    %v2476 = vld [vmem:[#allocation23 + $0xe50] sm:$0xff]
    %v2477 = vld [vmem:[#allocation23 + $0xe58] sm:$0xff]
    %v2478 = vld [vmem:[#allocation23 + $0xe60] sm:$0xff]
    %v2479 = vld [vmem:[#allocation23 + $0xe68] sm:$0xff]
    %v2480 = vld [vmem:[#allocation23 + $0xe70] sm:$0xff]
    %v2481 = vld [vmem:[#allocation23 + $0xe78] sm:$0xff]
    %v2482 = vld [vmem:[#allocation23 + $0xe80] sm:$0xff]
    %v2483 = vld [vmem:[#allocation23 + $0xe88] sm:$0xff]
    %v2484 = vld [vmem:[#allocation23 + $0xe90] sm:$0xff]
    %v2485 = vld [vmem:[#allocation23 + $0xe98] sm:$0xff]
    %v2486 = vld [vmem:[#allocation23 + $0xea0] sm:$0xff]
    %v2487 = vld [vmem:[#allocation23 + $0xea8] sm:$0xff]
    %v2488 = vld [vmem:[#allocation23 + $0xeb0] sm:$0xff]
    %v2489 = vld [vmem:[#allocation23 + $0xeb8] sm:$0xff]
    %v2490 = vld [vmem:[#allocation23 + $0xec0] sm:$0xff]
    %v2491 = vld [vmem:[#allocation23 + $0xec8] sm:$0xff]
    %v2492 = vld [vmem:[#allocation23 + $0xed0] sm:$0xff]
    %v2493 = vld [vmem:[#allocation23 + $0xed8] sm:$0xff]
    %v2494 = vld [vmem:[#allocation23 + $0xee0] sm:$0xff]
    %v2495 = vld [vmem:[#allocation23 + $0xee8] sm:$0xff]
    %v2496 = vld [vmem:[#allocation23 + $0xef0] sm:$0xff]
    %v2497 = vld [vmem:[#allocation23 + $0xef8] sm:$0xff]
    %v2498 = vld [vmem:[#allocation23 + $0xf00] sm:$0xff]
    %v2499 = vld [vmem:[#allocation23 + $0xf08] sm:$0xff]
    %v2500 = vld [vmem:[#allocation23 + $0xf10] sm:$0xff]
    %v2501 = vld [vmem:[#allocation23 + $0xf18] sm:$0xff]
    %v2502 = vld [vmem:[#allocation23 + $0xf20] sm:$0xff]
    %v2503 = vld [vmem:[#allocation23 + $0xf28] sm:$0xff]
    %v2504 = vld [vmem:[#allocation23 + $0xf30] sm:$0xff]
    %v2505 = vld [vmem:[#allocation23 + $0xf38] sm:$0xff]
    %v2506 = vld [vmem:[#allocation23 + $0xf40] sm:$0xff]
    %v2507 = vld [vmem:[#allocation23 + $0xf48] sm:$0xff]
    %v2508 = vld [vmem:[#allocation23 + $0xf50] sm:$0xff]
    %v2509 = vld [vmem:[#allocation23 + $0xf58] sm:$0xff]
    %v2510 = vld [vmem:[#allocation23 + $0xf60] sm:$0xff]
    %v2511 = vld [vmem:[#allocation23 + $0xf68] sm:$0xff]
    %v2512 = vld [vmem:[#allocation23 + $0xf70] sm:$0xff]
    %v2513 = vld [vmem:[#allocation23 + $0xf78] sm:$0xff]
    %v2514 = vld [vmem:[#allocation23 + $0xf80] sm:$0xff]
    %v2515 = vld [vmem:[#allocation23 + $0xf88] sm:$0xff]
    %v2516 = vld [vmem:[#allocation23 + $0xf90] sm:$0xff]
    %v2517 = vld [vmem:[#allocation23 + $0xf98] sm:$0xff]
    %v2518 = vld [vmem:[#allocation23 + $0xfa0] sm:$0xff]
    %v2519 = vld [vmem:[#allocation23 + $0xfa8] sm:$0xff]
    %v2520 = vld [vmem:[#allocation23 + $0xfb0] sm:$0xff]
    %v2521 = vld [vmem:[#allocation23 + $0xfb8] sm:$0xff]
    %v2522 = vld [vmem:[#allocation23 + $0xfc0] sm:$0xff]
    %v2523 = vld [vmem:[#allocation23 + $0xfc8] sm:$0xff]
    %v2524 = vld [vmem:[#allocation23 + $0xfd0] sm:$0xff]
    %v2525 = vld [vmem:[#allocation23 + $0xfd8] sm:$0xff]
    %v2526 = vld [vmem:[#allocation23 + $0xfe0] sm:$0xff]
    %v2527 = vld [vmem:[#allocation23 + $0xfe8] sm:$0xff]
    %v2528 = vld [vmem:[#allocation23 + $0xff0] sm:$0xff]
    %v2529 = vld [vmem:[#allocation23 + $0xff8] sm:$0xff]
    %v2530 = vld [vmem:[#allocation25] sm:$0xff]
    %v2531 = vld [vmem:[#allocation25 + $0x8] sm:$0xff]
    %v2532 = vld [vmem:[#allocation25 + $0x10] sm:$0xff]
    %v2533 = vld [vmem:[#allocation25 + $0x18] sm:$0xff]
    %v2534 = vld [vmem:[#allocation25 + $0x20] sm:$0xff]
    %v2535 = vld [vmem:[#allocation25 + $0x28] sm:$0xff]
    %v2536 = vld [vmem:[#allocation25 + $0x30] sm:$0xff]
    %v2537 = vld [vmem:[#allocation25 + $0x38] sm:$0xff]
    %v2538 = vld [vmem:[#allocation25 + $0x40] sm:$0xff]
    %v2539 = vld [vmem:[#allocation25 + $0x48] sm:$0xff]
    %v2540 = vld [vmem:[#allocation25 + $0x50] sm:$0xff]
    %v2541 = vld [vmem:[#allocation25 + $0x58] sm:$0xff]
    %v2542 = vld [vmem:[#allocation25 + $0x60] sm:$0xff]
    %v2543 = vld [vmem:[#allocation25 + $0x68] sm:$0xff]
    %v2544 = vld [vmem:[#allocation25 + $0x70] sm:$0xff]
    %v2545 = vld [vmem:[#allocation25 + $0x78] sm:$0xff]
    %v2546 = vld [vmem:[#allocation25 + $0x80] sm:$0xff]
    %v2547 = vld [vmem:[#allocation25 + $0x88] sm:$0xff]
    %v2548 = vld [vmem:[#allocation25 + $0x90] sm:$0xff]
    %v2549 = vld [vmem:[#allocation25 + $0x98] sm:$0xff]
    %v2550 = vld [vmem:[#allocation25 + $0xa0] sm:$0xff]
    %v2551 = vld [vmem:[#allocation25 + $0xa8] sm:$0xff]
    %v2552 = vld [vmem:[#allocation25 + $0xb0] sm:$0xff]
    %v2553 = vld [vmem:[#allocation25 + $0xb8] sm:$0xff]
    %v2554 = vld [vmem:[#allocation25 + $0xc0] sm:$0xff]
    %v2555 = vld [vmem:[#allocation25 + $0xc8] sm:$0xff]
    %v2556 = vld [vmem:[#allocation25 + $0xd0] sm:$0xff]
    %v2557 = vld [vmem:[#allocation25 + $0xd8] sm:$0xff]
    %v2558 = vld [vmem:[#allocation25 + $0xe0] sm:$0xff]
    %v2559 = vld [vmem:[#allocation25 + $0xe8] sm:$0xff]
    %v2560 = vld [vmem:[#allocation25 + $0xf0] sm:$0xff]
    %v2561 = vld [vmem:[#allocation25 + $0xf8] sm:$0xff]
    %v2562 = vld [vmem:[#allocation25 + $0x100] sm:$0xff]
    %v2563 = vld [vmem:[#allocation25 + $0x108] sm:$0xff]
    %v2564 = vld [vmem:[#allocation25 + $0x110] sm:$0xff]
    %v2565 = vld [vmem:[#allocation25 + $0x118] sm:$0xff]
    %v2566 = vld [vmem:[#allocation25 + $0x120] sm:$0xff]
    %v2567 = vld [vmem:[#allocation25 + $0x128] sm:$0xff]
    %v2568 = vld [vmem:[#allocation25 + $0x130] sm:$0xff]
    %v2569 = vld [vmem:[#allocation25 + $0x138] sm:$0xff]
    %v2570 = vld [vmem:[#allocation25 + $0x140] sm:$0xff]
    %v2571 = vld [vmem:[#allocation25 + $0x148] sm:$0xff]
    %v2572 = vld [vmem:[#allocation25 + $0x150] sm:$0xff]
    %v2573 = vld [vmem:[#allocation25 + $0x158] sm:$0xff]
    %v2574 = vld [vmem:[#allocation25 + $0x160] sm:$0xff]
    %v2575 = vld [vmem:[#allocation25 + $0x168] sm:$0xff]
    %v2576 = vld [vmem:[#allocation25 + $0x170] sm:$0xff]
    %v2577 = vld [vmem:[#allocation25 + $0x178] sm:$0xff]
    %v2578 = vld [vmem:[#allocation25 + $0x180] sm:$0xff]
    %v2579 = vld [vmem:[#allocation25 + $0x188] sm:$0xff]
    %v2580 = vld [vmem:[#allocation25 + $0x190] sm:$0xff]
    %v2581 = vld [vmem:[#allocation25 + $0x198] sm:$0xff]
    %v2582 = vld [vmem:[#allocation25 + $0x1a0] sm:$0xff]
    %v2583 = vld [vmem:[#allocation25 + $0x1a8] sm:$0xff]
    %v2584 = vld [vmem:[#allocation25 + $0x1b0] sm:$0xff]
    %v2585 = vld [vmem:[#allocation25 + $0x1b8] sm:$0xff]
    %v2586 = vld [vmem:[#allocation25 + $0x1c0] sm:$0xff]
    %v2587 = vld [vmem:[#allocation25 + $0x1c8] sm:$0xff]
    %v2588 = vld [vmem:[#allocation25 + $0x1d0] sm:$0xff]
    %v2589 = vld [vmem:[#allocation25 + $0x1d8] sm:$0xff]
    %v2590 = vld [vmem:[#allocation25 + $0x1e0] sm:$0xff]
    %v2591 = vld [vmem:[#allocation25 + $0x1e8] sm:$0xff]
    %v2592 = vld [vmem:[#allocation25 + $0x1f0] sm:$0xff]
    %v2593 = vld [vmem:[#allocation25 + $0x1f8] sm:$0xff]
    %2594 = vmatprep.subr.mxu0 %v2531
    %2595 = vmatpush1.msra.mxu0 %v2530
    %2596 = vmatprep.subr.mxu0 %v2535
    %2597 = vmatpush1.msra.mxu0 %v2534
    %2598 = vmatprep.subr.mxu0 %v2539
    %2599 = vmatpush1.msra.mxu0 %v2538
    %2600 = vmatprep.subr.mxu0 %v2543
    %2601 = vmatpush1.msra.mxu0 %v2542
    %2602 = vmatprep.subr.mxu0 %v2547
    %2603 = vmatpush1.msra.mxu0 %v2546
    %2604 = vmatprep.subr.mxu0 %v2551
    %2605 = vmatpush1.msra.mxu0 %v2550
    %2606 = vmatprep.subr.mxu0 %v2555
    %2607 = vmatpush1.msra.mxu0 %v2554
    %2608 = vmatprep.subr.mxu0 %v2559
    %2609 = vmatpush1.msra.mxu0 %v2558
    %2610 = vmatprep.subr.mxu0 %v2563
    %2611 = vmatpush1.msra.mxu0 %v2562
    %2612 = vmatprep.subr.mxu0 %v2567
    %2613 = vmatpush1.msra.mxu0 %v2566
    %2614 = vmatprep.subr.mxu0 %v2571
    %2615 = vmatpush1.msra.mxu0 %v2570
    %2616 = vmatprep.subr.mxu0 %v2575
    %2617 = vmatpush1.msra.mxu0 %v2574
    %2618 = vmatprep.subr.mxu0 %v2579
    %2619 = vmatpush1.msra.mxu0 %v2578
    %2620 = vmatprep.subr.mxu0 %v2583
    %2621 = vmatpush1.msra.mxu0 %v2582
    %2622 = vmatprep.subr.mxu0 %v2587
    %2623 = vmatpush1.msra.mxu0 %v2586
    %2624 = vmatprep.subr.mxu0 %v2591
    %2625 = vmatpush1.msra.mxu0 %v2590
    %2626 = vmatprep.subr.mxu0 0.0
    %2627 = vmatpush1.msra.mxu0 0.0
    %2628 = vmatprep.subr.mxu0 0.0
    %2629 = vmatpush1.msra.mxu0 0.0
    %2630 = vmatprep.subr.mxu0 0.0
    %2631 = vmatpush1.msra.mxu0 0.0
    %2632 = vmatprep.subr.mxu0 0.0
    %2633 = vmatpush1.msra.mxu0 0.0
    %2634 = vmatprep.subr.mxu0 0.0
    %2635 = vmatpush1.msra.mxu0 0.0
    %2636 = vmatprep.subr.mxu0 0.0
    %2637 = vmatpush1.msra.mxu0 0.0
    %2638 = vmatprep.subr.mxu0 0.0
    %2639 = vmatpush1.msra.mxu0 0.0
    %2640 = vmatprep.subr.mxu0 0.0
    %2641 = vmatpush1.msra.mxu0 0.0
    %2642 = vmatprep.subr.mxu0 0.0
    %2643 = vmatpush1.msra.mxu0 0.0
    %2644 = vmatprep.subr.mxu0 0.0
    %2645 = vmatpush1.msra.mxu0 0.0
    %2646 = vmatprep.subr.mxu0 0.0
    %2647 = vmatpush1.msra.mxu0 0.0
    %2648 = vmatprep.subr.mxu0 0.0
    %2649 = vmatpush1.msra.mxu0 0.0
    %2650 = vmatprep.subr.mxu0 0.0
    %2651 = vmatpush1.msra.mxu0 0.0
    %2652 = vmatprep.subr.mxu0 0.0
    %2653 = vmatpush1.msra.mxu0 0.0
    %2654 = vmatprep.subr.mxu0 0.0
    %2655 = vmatpush1.msra.mxu0 0.0
    %2656 = vmatprep.subr.mxu0 0.0
    %2657 = vmatpush1.msra.mxu0 0.0
    %2658 = vmatprep.mubr.f32.mxu0 0.0
    %2659 = vmatmul.mubr.f32.gmra.mrb[0].mxu0 %v1284
    %v2660 = vpop.f32.mrb[0].mxu0
    %v2661 = vadd.f32 0.0, %v2660
    %v2662 = vpop.f32.mrb[0].mxu0
    %v2663 = vadd.f32 0.0, %v2662
    %2664 = vdwg.mxu0
    %2665 = vmatprep.subr.mxu0 %v2533
    %2666 = vmatpush1.msra.mxu0 %v2532
    %2667 = vmatprep.subr.mxu0 %v2537
    %2668 = vmatpush1.msra.mxu0 %v2536
    %2669 = vmatprep.subr.mxu0 %v2541
    %2670 = vmatpush1.msra.mxu0 %v2540
    %2671 = vmatprep.subr.mxu0 %v2545
    %2672 = vmatpush1.msra.mxu0 %v2544
    %2673 = vmatprep.subr.mxu0 %v2549
    %2674 = vmatpush1.msra.mxu0 %v2548
    %2675 = vmatprep.subr.mxu0 %v2553
    %2676 = vmatpush1.msra.mxu0 %v2552
    %2677 = vmatprep.subr.mxu0 %v2557
    %2678 = vmatpush1.msra.mxu0 %v2556
    %2679 = vmatprep.subr.mxu0 %v2561
    %2680 = vmatpush1.msra.mxu0 %v2560
    %2681 = vmatprep.subr.mxu0 %v2565
    %2682 = vmatpush1.msra.mxu0 %v2564
    %2683 = vmatprep.subr.mxu0 %v2569
    %2684 = vmatpush1.msra.mxu0 %v2568
    %2685 = vmatprep.subr.mxu0 %v2573
    %2686 = vmatpush1.msra.mxu0 %v2572
    %2687 = vmatprep.subr.mxu0 %v2577
    %2688 = vmatpush1.msra.mxu0 %v2576
    %2689 = vmatprep.subr.mxu0 %v2581
    %2690 = vmatpush1.msra.mxu0 %v2580
    %2691 = vmatprep.subr.mxu0 %v2585
    %2692 = vmatpush1.msra.mxu0 %v2584
    %2693 = vmatprep.subr.mxu0 %v2589
    %2694 = vmatpush1.msra.mxu0 %v2588
    %2695 = vmatprep.subr.mxu0 %v2593
    %2696 = vmatpush1.msra.mxu0 %v2592
    %2697 = vmatprep.subr.mxu0 0.0
    %2698 = vmatpush1.msra.mxu0 0.0
    %2699 = vmatprep.subr.mxu0 0.0
    %2700 = vmatpush1.msra.mxu0 0.0
    %2701 = vmatprep.subr.mxu0 0.0
    %2702 = vmatpush1.msra.mxu0 0.0
    %2703 = vmatprep.subr.mxu0 0.0
    %2704 = vmatpush1.msra.mxu0 0.0
    %2705 = vmatprep.subr.mxu0 0.0
    %2706 = vmatpush1.msra.mxu0 0.0
    %2707 = vmatprep.subr.mxu0 0.0
    %2708 = vmatpush1.msra.mxu0 0.0
    %2709 = vmatprep.subr.mxu0 0.0
    %2710 = vmatpush1.msra.mxu0 0.0
    %2711 = vmatprep.subr.mxu0 0.0
    %2712 = vmatpush1.msra.mxu0 0.0
    %2713 = vmatprep.subr.mxu0 0.0
    %2714 = vmatpush1.msra.mxu0 0.0
    %2715 = vmatprep.subr.mxu0 0.0
    %2716 = vmatpush1.msra.mxu0 0.0
    %2717 = vmatprep.subr.mxu0 0.0
    %2718 = vmatpush1.msra.mxu0 0.0
    %2719 = vmatprep.subr.mxu0 0.0
    %2720 = vmatpush1.msra.mxu0 0.0
    %2721 = vmatprep.subr.mxu0 0.0
    %2722 = vmatpush1.msra.mxu0 0.0
    %2723 = vmatprep.subr.mxu0 0.0
    %2724 = vmatpush1.msra.mxu0 0.0
    %2725 = vmatprep.subr.mxu0 0.0
    %2726 = vmatpush1.msra.mxu0 0.0
    %2727 = vmatprep.subr.mxu0 0.0
    %2728 = vmatpush1.msra.mxu0 0.0
    %2729 = vmatprep.mubr.f32.mxu0 0.0
    %2730 = vmatmul.mubr.f32.gmra.mrb[0].mxu0 %v1284
    %v2731 = vpop.f32.mrb[0].mxu0
    %v2732 = vadd.f32 0.0, %v2731
    %v2733 = vpop.f32.mrb[0].mxu0
    %v2734 = vadd.f32 0.0, %v2733
    %2735 = vdwg.mxu0
    %2736 = vmatprep.subr.mxu0 %v2019
    %2737 = vmatpush1.msra.mxu0 %v2018
    %2738 = vmatprep.subr.mxu0 %v2023
    %2739 = vmatpush1.msra.mxu0 %v2022
    %2740 = vmatprep.subr.mxu0 %v2027
    %2741 = vmatpush1.msra.mxu0 %v2026
    %2742 = vmatprep.subr.mxu0 %v2031
    %2743 = vmatpush1.msra.mxu0 %v2030
    %2744 = vmatprep.subr.mxu0 %v2035
    %2745 = vmatpush1.msra.mxu0 %v2034
    %2746 = vmatprep.subr.mxu0 %v2039
    %2747 = vmatpush1.msra.mxu0 %v2038
    %2748 = vmatprep.subr.mxu0 %v2043
    %2749 = vmatpush1.msra.mxu0 %v2042
    %2750 = vmatprep.subr.mxu0 %v2047
    %2751 = vmatpush1.msra.mxu0 %v2046
    %2752 = vmatprep.subr.mxu0 %v2051
    %2753 = vmatpush1.msra.mxu0 %v2050
    %2754 = vmatprep.subr.mxu0 %v2055
    %2755 = vmatpush1.msra.mxu0 %v2054
    %2756 = vmatprep.subr.mxu0 %v2059
    %2757 = vmatpush1.msra.mxu0 %v2058
    %2758 = vmatprep.subr.mxu0 %v2063
    %2759 = vmatpush1.msra.mxu0 %v2062
    %2760 = vmatprep.subr.mxu0 %v2067
    %2761 = vmatpush1.msra.mxu0 %v2066
    %2762 = vmatprep.subr.mxu0 %v2071
    %2763 = vmatpush1.msra.mxu0 %v2070
    %2764 = vmatprep.subr.mxu0 %v2075
    %2765 = vmatpush1.msra.mxu0 %v2074
    %2766 = vmatprep.subr.mxu0 %v2079
    %2767 = vmatpush1.msra.mxu0 %v2078
    %2768 = vmatprep.subr.mxu0 %v2083
    %2769 = vmatpush1.msra.mxu0 %v2082
    %2770 = vmatprep.subr.mxu0 %v2087
    %2771 = vmatpush1.msra.mxu0 %v2086
    %2772 = vmatprep.subr.mxu0 %v2091
    %2773 = vmatpush1.msra.mxu0 %v2090
    %2774 = vmatprep.subr.mxu0 %v2095
    %2775 = vmatpush1.msra.mxu0 %v2094
    %2776 = vmatprep.subr.mxu0 %v2099
    %2777 = vmatpush1.msra.mxu0 %v2098
    %2778 = vmatprep.subr.mxu0 %v2103
    %2779 = vmatpush1.msra.mxu0 %v2102
    %2780 = vmatprep.subr.mxu0 %v2107
    %2781 = vmatpush1.msra.mxu0 %v2106
    %2782 = vmatprep.subr.mxu0 %v2111
    %2783 = vmatpush1.msra.mxu0 %v2110
    %2784 = vmatprep.subr.mxu0 %v2115
    %2785 = vmatpush1.msra.mxu0 %v2114
    %2786 = vmatprep.subr.mxu0 %v2119
    %2787 = vmatpush1.msra.mxu0 %v2118
    %2788 = vmatprep.subr.mxu0 %v2123
    %2789 = vmatpush1.msra.mxu0 %v2122
    %2790 = vmatprep.subr.mxu0 %v2127
    %2791 = vmatpush1.msra.mxu0 %v2126
    %2792 = vmatprep.subr.mxu0 %v2131
    %2793 = vmatpush1.msra.mxu0 %v2130
    %2794 = vmatprep.subr.mxu0 %v2135
    %2795 = vmatpush1.msra.mxu0 %v2134
    %2796 = vmatprep.subr.mxu0 %v2139
    %2797 = vmatpush1.msra.mxu0 %v2138
    %2798 = vmatprep.subr.mxu0 %v2143
    %2799 = vmatpush1.msra.mxu0 %v2142
    %2800 = vmatprep.mubr.f32.mxu0 %v892
    %2801 = vmatmul.mubr.f32.gmra.mrb[0].mxu0 %v890
    %v2802 = vpop.f32.mrb[0].mxu0
    %v2803 = vadd.f32 %v2661, %v2802
    %v2804 = vpop.f32.mrb[0].mxu0
    %v2805 = vadd.f32 %v2663, %v2804
    %2806 = vdwg.mxu0
    %2807 = vmatprep.subr.mxu0 %v2147
    %2808 = vmatpush1.msra.mxu0 %v2146
    %2809 = vmatprep.subr.mxu0 %v2151
    %2810 = vmatpush1.msra.mxu0 %v2150
    %2811 = vmatprep.subr.mxu0 %v2155
    %2812 = vmatpush1.msra.mxu0 %v2154
    %2813 = vmatprep.subr.mxu0 %v2159
    %2814 = vmatpush1.msra.mxu0 %v2158
    %2815 = vmatprep.subr.mxu0 %v2163
    %2816 = vmatpush1.msra.mxu0 %v2162
    %2817 = vmatprep.subr.mxu0 %v2167
    %2818 = vmatpush1.msra.mxu0 %v2166
    %2819 = vmatprep.subr.mxu0 %v2171
    %2820 = vmatpush1.msra.mxu0 %v2170
    %2821 = vmatprep.subr.mxu0 %v2175
    %2822 = vmatpush1.msra.mxu0 %v2174
    %2823 = vmatprep.subr.mxu0 %v2179
    %2824 = vmatpush1.msra.mxu0 %v2178
    %2825 = vmatprep.subr.mxu0 %v2183
    %2826 = vmatpush1.msra.mxu0 %v2182
    %2827 = vmatprep.subr.mxu0 %v2187
    %2828 = vmatpush1.msra.mxu0 %v2186
    %2829 = vmatprep.subr.mxu0 %v2191
    %2830 = vmatpush1.msra.mxu0 %v2190
    %2831 = vmatprep.subr.mxu0 %v2195
    %2832 = vmatpush1.msra.mxu0 %v2194
    %2833 = vmatprep.subr.mxu0 %v2199
    %2834 = vmatpush1.msra.mxu0 %v2198
    %2835 = vmatprep.subr.mxu0 %v2203
    %2836 = vmatpush1.msra.mxu0 %v2202
    %2837 = vmatprep.subr.mxu0 %v2207
    %2838 = vmatpush1.msra.mxu0 %v2206
    %2839 = vmatprep.subr.mxu0 %v2211
    %2840 = vmatpush1.msra.mxu0 %v2210
    %2841 = vmatprep.subr.mxu0 %v2215
    %2842 = vmatpush1.msra.mxu0 %v2214
    %2843 = vmatprep.subr.mxu0 %v2219
    %2844 = vmatpush1.msra.mxu0 %v2218
    %2845 = vmatprep.subr.mxu0 %v2223
    %2846 = vmatpush1.msra.mxu0 %v2222
    %2847 = vmatprep.subr.mxu0 %v2227
    %2848 = vmatpush1.msra.mxu0 %v2226
    %2849 = vmatprep.subr.mxu0 %v2231
    %2850 = vmatpush1.msra.mxu0 %v2230
    %2851 = vmatprep.subr.mxu0 %v2235
    %2852 = vmatpush1.msra.mxu0 %v2234
    %2853 = vmatprep.subr.mxu0 %v2239
    %2854 = vmatpush1.msra.mxu0 %v2238
    %2855 = vmatprep.subr.mxu0 %v2243
    %2856 = vmatpush1.msra.mxu0 %v2242
    %2857 = vmatprep.subr.mxu0 %v2247
    %2858 = vmatpush1.msra.mxu0 %v2246
    %2859 = vmatprep.subr.mxu0 %v2251
    %2860 = vmatpush1.msra.mxu0 %v2250
    %2861 = vmatprep.subr.mxu0 %v2255
    %2862 = vmatpush1.msra.mxu0 %v2254
    %2863 = vmatprep.subr.mxu0 %v2259
    %2864 = vmatpush1.msra.mxu0 %v2258
    %2865 = vmatprep.subr.mxu0 %v2263
    %2866 = vmatpush1.msra.mxu0 %v2262
    %2867 = vmatprep.subr.mxu0 %v2267
    %2868 = vmatpush1.msra.mxu0 %v2266
    %2869 = vmatprep.subr.mxu0 %v2271
    %2870 = vmatpush1.msra.mxu0 %v2270
    %2871 = vmatprep.mubr.f32.mxu0 %v963
    %2872 = vmatmul.mubr.f32.gmra.mrb[0].mxu0 %v961
    %v2873 = vpop.f32.mrb[0].mxu0
    %v2874 = vadd.f32 %v2803, %v2873
    %v2875 = vpop.f32.mrb[0].mxu0
    %v2876 = vadd.f32 %v2805, %v2875
    %2877 = vdwg.mxu0
    %2878 = vmatprep.subr.mxu0 %v2275
    %2879 = vmatpush1.msra.mxu0 %v2274
    %2880 = vmatprep.subr.mxu0 %v2279
    %2881 = vmatpush1.msra.mxu0 %v2278
    %2882 = vmatprep.subr.mxu0 %v2283
    %2883 = vmatpush1.msra.mxu0 %v2282
    %2884 = vmatprep.subr.mxu0 %v2287
    %2885 = vmatpush1.msra.mxu0 %v2286
    %2886 = vmatprep.subr.mxu0 %v2291
    %2887 = vmatpush1.msra.mxu0 %v2290
    %2888 = vmatprep.subr.mxu0 %v2295
    %2889 = vmatpush1.msra.mxu0 %v2294
    %2890 = vmatprep.subr.mxu0 %v2299
    %2891 = vmatpush1.msra.mxu0 %v2298
    %2892 = vmatprep.subr.mxu0 %v2303
    %2893 = vmatpush1.msra.mxu0 %v2302
    %2894 = vmatprep.subr.mxu0 %v2307
    %2895 = vmatpush1.msra.mxu0 %v2306
    %2896 = vmatprep.subr.mxu0 %v2311
    %2897 = vmatpush1.msra.mxu0 %v2310
    %2898 = vmatprep.subr.mxu0 %v2315
    %2899 = vmatpush1.msra.mxu0 %v2314
    %2900 = vmatprep.subr.mxu0 %v2319
    %2901 = vmatpush1.msra.mxu0 %v2318
    %2902 = vmatprep.subr.mxu0 %v2323
    %2903 = vmatpush1.msra.mxu0 %v2322
    %2904 = vmatprep.subr.mxu0 %v2327
    %2905 = vmatpush1.msra.mxu0 %v2326
    %2906 = vmatprep.subr.mxu0 %v2331
    %2907 = vmatpush1.msra.mxu0 %v2330
    %2908 = vmatprep.subr.mxu0 %v2335
    %2909 = vmatpush1.msra.mxu0 %v2334
    %2910 = vmatprep.subr.mxu0 %v2339
    %2911 = vmatpush1.msra.mxu0 %v2338
    %2912 = vmatprep.subr.mxu0 %v2343
    %2913 = vmatpush1.msra.mxu0 %v2342
    %2914 = vmatprep.subr.mxu0 %v2347
    %2915 = vmatpush1.msra.mxu0 %v2346
    %2916 = vmatprep.subr.mxu0 %v2351
    %2917 = vmatpush1.msra.mxu0 %v2350
    %2918 = vmatprep.subr.mxu0 %v2355
    %2919 = vmatpush1.msra.mxu0 %v2354
    %2920 = vmatprep.subr.mxu0 %v2359
    %2921 = vmatpush1.msra.mxu0 %v2358
    %2922 = vmatprep.subr.mxu0 %v2363
    %2923 = vmatpush1.msra.mxu0 %v2362
    %2924 = vmatprep.subr.mxu0 %v2367
    %2925 = vmatpush1.msra.mxu0 %v2366
    %2926 = vmatprep.subr.mxu0 %v2371
    %2927 = vmatpush1.msra.mxu0 %v2370
    %2928 = vmatprep.subr.mxu0 %v2375
    %2929 = vmatpush1.msra.mxu0 %v2374
    %2930 = vmatprep.subr.mxu0 %v2379
    %2931 = vmatpush1.msra.mxu0 %v2378
    %2932 = vmatprep.subr.mxu0 %v2383
    %2933 = vmatpush1.msra.mxu0 %v2382
    %2934 = vmatprep.subr.mxu0 %v2387
    %2935 = vmatpush1.msra.mxu0 %v2386
    %2936 = vmatprep.subr.mxu0 %v2391
    %2937 = vmatpush1.msra.mxu0 %v2390
    %2938 = vmatprep.subr.mxu0 %v2395
    %2939 = vmatpush1.msra.mxu0 %v2394
    %2940 = vmatprep.subr.mxu0 %v2399
    %2941 = vmatpush1.msra.mxu0 %v2398
    %2942 = vmatprep.mubr.f32.mxu0 %v1034
    %2943 = vmatmul.mubr.f32.gmra.mrb[0].mxu0 %v1032
    %v2944 = vpop.f32.mrb[0].mxu0
    %v2945 = vadd.f32 %v2874, %v2944
    %v2946 = vpop.f32.mrb[0].mxu0
    %v2947 = vadd.f32 %v2876, %v2946
    %2948 = vdwg.mxu0
    %2949 = vmatprep.subr.mxu0 %v2403
    %2950 = vmatpush1.msra.mxu0 %v2402
    %2951 = vmatprep.subr.mxu0 %v2407
    %2952 = vmatpush1.msra.mxu0 %v2406
    %2953 = vmatprep.subr.mxu0 %v2411
    %2954 = vmatpush1.msra.mxu0 %v2410
    %2955 = vmatprep.subr.mxu0 %v2415
    %2956 = vmatpush1.msra.mxu0 %v2414
    %2957 = vmatprep.subr.mxu0 %v2419
    %2958 = vmatpush1.msra.mxu0 %v2418
    %2959 = vmatprep.subr.mxu0 %v2423
    %2960 = vmatpush1.msra.mxu0 %v2422
    %2961 = vmatprep.subr.mxu0 %v2427
    %2962 = vmatpush1.msra.mxu0 %v2426
    %2963 = vmatprep.subr.mxu0 %v2431
    %2964 = vmatpush1.msra.mxu0 %v2430
    %2965 = vmatprep.subr.mxu0 %v2435
    %2966 = vmatpush1.msra.mxu0 %v2434
    %2967 = vmatprep.subr.mxu0 %v2439
    %2968 = vmatpush1.msra.mxu0 %v2438
    %2969 = vmatprep.subr.mxu0 %v2443
    %2970 = vmatpush1.msra.mxu0 %v2442
    %2971 = vmatprep.subr.mxu0 %v2447
    %2972 = vmatpush1.msra.mxu0 %v2446
    %2973 = vmatprep.subr.mxu0 %v2451
    %2974 = vmatpush1.msra.mxu0 %v2450
    %2975 = vmatprep.subr.mxu0 %v2455
    %2976 = vmatpush1.msra.mxu0 %v2454
    %2977 = vmatprep.subr.mxu0 %v2459
    %2978 = vmatpush1.msra.mxu0 %v2458
    %2979 = vmatprep.subr.mxu0 %v2463
    %2980 = vmatpush1.msra.mxu0 %v2462
    %2981 = vmatprep.subr.mxu0 %v2467
    %2982 = vmatpush1.msra.mxu0 %v2466
    %2983 = vmatprep.subr.mxu0 %v2471
    %2984 = vmatpush1.msra.mxu0 %v2470
    %2985 = vmatprep.subr.mxu0 %v2475
    %2986 = vmatpush1.msra.mxu0 %v2474
    %2987 = vmatprep.subr.mxu0 %v2479
    %2988 = vmatpush1.msra.mxu0 %v2478
    %2989 = vmatprep.subr.mxu0 %v2483
    %2990 = vmatpush1.msra.mxu0 %v2482
    %2991 = vmatprep.subr.mxu0 %v2487
    %2992 = vmatpush1.msra.mxu0 %v2486
    %2993 = vmatprep.subr.mxu0 %v2491
    %2994 = vmatpush1.msra.mxu0 %v2490
    %2995 = vmatprep.subr.mxu0 %v2495
    %2996 = vmatpush1.msra.mxu0 %v2494
    %2997 = vmatprep.subr.mxu0 %v2499
    %2998 = vmatpush1.msra.mxu0 %v2498
    %2999 = vmatprep.subr.mxu0 %v2503
    %3000 = vmatpush1.msra.mxu0 %v2502
    %3001 = vmatprep.subr.mxu0 %v2507
    %3002 = vmatpush1.msra.mxu0 %v2506
    %3003 = vmatprep.subr.mxu0 %v2511
    %3004 = vmatpush1.msra.mxu0 %v2510
    %3005 = vmatprep.subr.mxu0 %v2515
    %3006 = vmatpush1.msra.mxu0 %v2514
    %3007 = vmatprep.subr.mxu0 %v2519
    %3008 = vmatpush1.msra.mxu0 %v2518
    %3009 = vmatprep.subr.mxu0 %v2523
    %3010 = vmatpush1.msra.mxu0 %v2522
    %3011 = vmatprep.subr.mxu0 %v2527
    %3012 = vmatpush1.msra.mxu0 %v2526
    %3013 = vmatprep.mubr.f32.mxu0 %v1105
    %3014 = vmatmul.mubr.f32.gmra.mrb[0].mxu0 %v1103
    %v3015 = vpop.f32.mrb[0].mxu0
    %v3016 = vadd.f32 %v2945, %v3015
    %v3017 = vpop.f32.mrb[0].mxu0
    %v3018 = vadd.f32 %v2947, %v3017
    %3019 = vdwg.mxu0
    %3020 = vmatprep.subr.mxu0 %v2021
    %3021 = vmatpush1.msra.mxu0 %v2020
    %3022 = vmatprep.subr.mxu0 %v2025
    %3023 = vmatpush1.msra.mxu0 %v2024
    %3024 = vmatprep.subr.mxu0 %v2029
    %3025 = vmatpush1.msra.mxu0 %v2028
    %3026 = vmatprep.subr.mxu0 %v2033
    %3027 = vmatpush1.msra.mxu0 %v2032
    %3028 = vmatprep.subr.mxu0 %v2037
    %3029 = vmatpush1.msra.mxu0 %v2036
    %3030 = vmatprep.subr.mxu0 %v2041
    %3031 = vmatpush1.msra.mxu0 %v2040
    %3032 = vmatprep.subr.mxu0 %v2045
    %3033 = vmatpush1.msra.mxu0 %v2044
    %3034 = vmatprep.subr.mxu0 %v2049
    %3035 = vmatpush1.msra.mxu0 %v2048
    %3036 = vmatprep.subr.mxu0 %v2053
    %3037 = vmatpush1.msra.mxu0 %v2052
    %3038 = vmatprep.subr.mxu0 %v2057
    %3039 = vmatpush1.msra.mxu0 %v2056
    %3040 = vmatprep.subr.mxu0 %v2061
    %3041 = vmatpush1.msra.mxu0 %v2060
    %3042 = vmatprep.subr.mxu0 %v2065
    %3043 = vmatpush1.msra.mxu0 %v2064
    %3044 = vmatprep.subr.mxu0 %v2069
    %3045 = vmatpush1.msra.mxu0 %v2068
    %3046 = vmatprep.subr.mxu0 %v2073
    %3047 = vmatpush1.msra.mxu0 %v2072
    %3048 = vmatprep.subr.mxu0 %v2077
    %3049 = vmatpush1.msra.mxu0 %v2076
    %3050 = vmatprep.subr.mxu0 %v2081
    %3051 = vmatpush1.msra.mxu0 %v2080
    %3052 = vmatprep.subr.mxu0 %v2085
    %3053 = vmatpush1.msra.mxu0 %v2084
    %3054 = vmatprep.subr.mxu0 %v2089
    %3055 = vmatpush1.msra.mxu0 %v2088
    %3056 = vmatprep.subr.mxu0 %v2093
    %3057 = vmatpush1.msra.mxu0 %v2092
    %3058 = vmatprep.subr.mxu0 %v2097
    %3059 = vmatpush1.msra.mxu0 %v2096
    %3060 = vmatprep.subr.mxu0 %v2101
    %3061 = vmatpush1.msra.mxu0 %v2100
    %3062 = vmatprep.subr.mxu0 %v2105
    %3063 = vmatpush1.msra.mxu0 %v2104
    %3064 = vmatprep.subr.mxu0 %v2109
    %3065 = vmatpush1.msra.mxu0 %v2108
    %3066 = vmatprep.subr.mxu0 %v2113
    %3067 = vmatpush1.msra.mxu0 %v2112
    %3068 = vmatprep.subr.mxu0 %v2117
    %3069 = vmatpush1.msra.mxu0 %v2116
    %3070 = vmatprep.subr.mxu0 %v2121
    %3071 = vmatpush1.msra.mxu0 %v2120
    %3072 = vmatprep.subr.mxu0 %v2125
    %3073 = vmatpush1.msra.mxu0 %v2124
    %3074 = vmatprep.subr.mxu0 %v2129
    %3075 = vmatpush1.msra.mxu0 %v2128
    %3076 = vmatprep.subr.mxu0 %v2133
    %3077 = vmatpush1.msra.mxu0 %v2132
    %3078 = vmatprep.subr.mxu0 %v2137
    %3079 = vmatpush1.msra.mxu0 %v2136
    %3080 = vmatprep.subr.mxu0 %v2141
    %3081 = vmatpush1.msra.mxu0 %v2140
    %3082 = vmatprep.subr.mxu0 %v2145
    %3083 = vmatpush1.msra.mxu0 %v2144
    %3084 = vmatprep.mubr.f32.mxu0 %v892
    %3085 = vmatmul.mubr.f32.gmra.mrb[0].mxu0 %v890
    %v3086 = vpop.f32.mrb[0].mxu0
    %v3087 = vadd.f32 %v2732, %v3086
    %v3088 = vpop.f32.mrb[0].mxu0
    %v3089 = vadd.f32 %v2734, %v3088
    %3090 = vdwg.mxu0
    %3091 = vmatprep.subr.mxu0 %v2149
    %3092 = vmatpush1.msra.mxu0 %v2148
    %3093 = vmatprep.subr.mxu0 %v2153
    %3094 = vmatpush1.msra.mxu0 %v2152
    %3095 = vmatprep.subr.mxu0 %v2157
    %3096 = vmatpush1.msra.mxu0 %v2156
    %3097 = vmatprep.subr.mxu0 %v2161
    %3098 = vmatpush1.msra.mxu0 %v2160
    %3099 = vmatprep.subr.mxu0 %v2165
    %3100 = vmatpush1.msra.mxu0 %v2164
    %3101 = vmatprep.subr.mxu0 %v2169
    %3102 = vmatpush1.msra.mxu0 %v2168
    %3103 = vmatprep.subr.mxu0 %v2173
    %3104 = vmatpush1.msra.mxu0 %v2172
    %3105 = vmatprep.subr.mxu0 %v2177
    %3106 = vmatpush1.msra.mxu0 %v2176
    %3107 = vmatprep.subr.mxu0 %v2181
    %3108 = vmatpush1.msra.mxu0 %v2180
    %3109 = vmatprep.subr.mxu0 %v2185
    %3110 = vmatpush1.msra.mxu0 %v2184
    %3111 = vmatprep.subr.mxu0 %v2189
    %3112 = vmatpush1.msra.mxu0 %v2188
    %3113 = vmatprep.subr.mxu0 %v2193
    %3114 = vmatpush1.msra.mxu0 %v2192
    %3115 = vmatprep.subr.mxu0 %v2197
    %3116 = vmatpush1.msra.mxu0 %v2196
    %3117 = vmatprep.subr.mxu0 %v2201
    %3118 = vmatpush1.msra.mxu0 %v2200
    %3119 = vmatprep.subr.mxu0 %v2205
    %3120 = vmatpush1.msra.mxu0 %v2204
    %3121 = vmatprep.subr.mxu0 %v2209
    %3122 = vmatpush1.msra.mxu0 %v2208
    %3123 = vmatprep.subr.mxu0 %v2213
    %3124 = vmatpush1.msra.mxu0 %v2212
    %3125 = vmatprep.subr.mxu0 %v2217
    %3126 = vmatpush1.msra.mxu0 %v2216
    %3127 = vmatprep.subr.mxu0 %v2221
    %3128 = vmatpush1.msra.mxu0 %v2220
    %3129 = vmatprep.subr.mxu0 %v2225
    %3130 = vmatpush1.msra.mxu0 %v2224
    %3131 = vmatprep.subr.mxu0 %v2229
    %3132 = vmatpush1.msra.mxu0 %v2228
    %3133 = vmatprep.subr.mxu0 %v2233
    %3134 = vmatpush1.msra.mxu0 %v2232
    %3135 = vmatprep.subr.mxu0 %v2237
    %3136 = vmatpush1.msra.mxu0 %v2236
    %3137 = vmatprep.subr.mxu0 %v2241
    %3138 = vmatpush1.msra.mxu0 %v2240
    %3139 = vmatprep.subr.mxu0 %v2245
    %3140 = vmatpush1.msra.mxu0 %v2244
    %3141 = vmatprep.subr.mxu0 %v2249
    %3142 = vmatpush1.msra.mxu0 %v2248
    %3143 = vmatprep.subr.mxu0 %v2253
    %3144 = vmatpush1.msra.mxu0 %v2252
    %3145 = vmatprep.subr.mxu0 %v2257
    %3146 = vmatpush1.msra.mxu0 %v2256
    %3147 = vmatprep.subr.mxu0 %v2261
    %3148 = vmatpush1.msra.mxu0 %v2260
    %3149 = vmatprep.subr.mxu0 %v2265
    %3150 = vmatpush1.msra.mxu0 %v2264
    %3151 = vmatprep.subr.mxu0 %v2269
    %3152 = vmatpush1.msra.mxu0 %v2268
    %3153 = vmatprep.subr.mxu0 %v2273
    %3154 = vmatpush1.msra.mxu0 %v2272
    %3155 = vmatprep.mubr.f32.mxu0 %v963
    %3156 = vmatmul.mubr.f32.gmra.mrb[0].mxu0 %v961
    %v3157 = vpop.f32.mrb[0].mxu0
    %v3158 = vadd.f32 %v3087, %v3157
    %v3159 = vpop.f32.mrb[0].mxu0
    %v3160 = vadd.f32 %v3089, %v3159
    %3161 = vdwg.mxu0
    %3162 = vmatprep.subr.mxu0 %v2277
    %3163 = vmatpush1.msra.mxu0 %v2276
    %3164 = vmatprep.subr.mxu0 %v2281
    %3165 = vmatpush1.msra.mxu0 %v2280
    %3166 = vmatprep.subr.mxu0 %v2285
    %3167 = vmatpush1.msra.mxu0 %v2284
    %3168 = vmatprep.subr.mxu0 %v2289
    %3169 = vmatpush1.msra.mxu0 %v2288
    %3170 = vmatprep.subr.mxu0 %v2293
    %3171 = vmatpush1.msra.mxu0 %v2292
    %3172 = vmatprep.subr.mxu0 %v2297
    %3173 = vmatpush1.msra.mxu0 %v2296
    %3174 = vmatprep.subr.mxu0 %v2301
    %3175 = vmatpush1.msra.mxu0 %v2300
    %3176 = vmatprep.subr.mxu0 %v2305
    %3177 = vmatpush1.msra.mxu0 %v2304
    %3178 = vmatprep.subr.mxu0 %v2309
    %3179 = vmatpush1.msra.mxu0 %v2308
    %3180 = vmatprep.subr.mxu0 %v2313
    %3181 = vmatpush1.msra.mxu0 %v2312
    %3182 = vmatprep.subr.mxu0 %v2317
    %3183 = vmatpush1.msra.mxu0 %v2316
    %3184 = vmatprep.subr.mxu0 %v2321
    %3185 = vmatpush1.msra.mxu0 %v2320
    %3186 = vmatprep.subr.mxu0 %v2325
    %3187 = vmatpush1.msra.mxu0 %v2324
    %3188 = vmatprep.subr.mxu0 %v2329
    %3189 = vmatpush1.msra.mxu0 %v2328
    %3190 = vmatprep.subr.mxu0 %v2333
    %3191 = vmatpush1.msra.mxu0 %v2332
    %3192 = vmatprep.subr.mxu0 %v2337
    %3193 = vmatpush1.msra.mxu0 %v2336
    %3194 = vmatprep.subr.mxu0 %v2341
    %3195 = vmatpush1.msra.mxu0 %v2340
    %3196 = vmatprep.subr.mxu0 %v2345
    %3197 = vmatpush1.msra.mxu0 %v2344
    %3198 = vmatprep.subr.mxu0 %v2349
    %3199 = vmatpush1.msra.mxu0 %v2348
    %3200 = vmatprep.subr.mxu0 %v2353
    %3201 = vmatpush1.msra.mxu0 %v2352
    %3202 = vmatprep.subr.mxu0 %v2357
    %3203 = vmatpush1.msra.mxu0 %v2356
    %3204 = vmatprep.subr.mxu0 %v2361
    %3205 = vmatpush1.msra.mxu0 %v2360
    %3206 = vmatprep.subr.mxu0 %v2365
    %3207 = vmatpush1.msra.mxu0 %v2364
    %3208 = vmatprep.subr.mxu0 %v2369
    %3209 = vmatpush1.msra.mxu0 %v2368
    %3210 = vmatprep.subr.mxu0 %v2373
    %3211 = vmatpush1.msra.mxu0 %v2372
    %3212 = vmatprep.subr.mxu0 %v2377
    %3213 = vmatpush1.msra.mxu0 %v2376
    %3214 = vmatprep.subr.mxu0 %v2381
    %3215 = vmatpush1.msra.mxu0 %v2380
    %3216 = vmatprep.subr.mxu0 %v2385
    %3217 = vmatpush1.msra.mxu0 %v2384
    %3218 = vmatprep.subr.mxu0 %v2389
    %3219 = vmatpush1.msra.mxu0 %v2388
    %3220 = vmatprep.subr.mxu0 %v2393
    %3221 = vmatpush1.msra.mxu0 %v2392
    %3222 = vmatprep.subr.mxu0 %v2397
    %3223 = vmatpush1.msra.mxu0 %v2396
    %3224 = vmatprep.subr.mxu0 %v2401
    %3225 = vmatpush1.msra.mxu0 %v2400
    %3226 = vmatprep.mubr.f32.mxu0 %v1034
    %3227 = vmatmul.mubr.f32.gmra.mrb[0].mxu0 %v1032
    %v3228 = vpop.f32.mrb[0].mxu0
    %v3229 = vadd.f32 %v3158, %v3228
    %v3230 = vpop.f32.mrb[0].mxu0
    %v3231 = vadd.f32 %v3160, %v3230
    %3232 = vdwg.mxu0
    %3233 = vmatprep.subr.mxu0 %v2405
    %3234 = vmatpush1.msra.mxu0 %v2404
    %3235 = vmatprep.subr.mxu0 %v2409
    %3236 = vmatpush1.msra.mxu0 %v2408
    %3237 = vmatprep.subr.mxu0 %v2413
    %3238 = vmatpush1.msra.mxu0 %v2412
    %3239 = vmatprep.subr.mxu0 %v2417
    %3240 = vmatpush1.msra.mxu0 %v2416
    %3241 = vmatprep.subr.mxu0 %v2421
    %3242 = vmatpush1.msra.mxu0 %v2420
    %3243 = vmatprep.subr.mxu0 %v2425
    %3244 = vmatpush1.msra.mxu0 %v2424
    %3245 = vmatprep.subr.mxu0 %v2429
    %3246 = vmatpush1.msra.mxu0 %v2428
    %3247 = vmatprep.subr.mxu0 %v2433
    %3248 = vmatpush1.msra.mxu0 %v2432
    %3249 = vmatprep.subr.mxu0 %v2437
    %3250 = vmatpush1.msra.mxu0 %v2436
    %3251 = vmatprep.subr.mxu0 %v2441
    %3252 = vmatpush1.msra.mxu0 %v2440
    %3253 = vmatprep.subr.mxu0 %v2445
    %3254 = vmatpush1.msra.mxu0 %v2444
    %3255 = vmatprep.subr.mxu0 %v2449
    %3256 = vmatpush1.msra.mxu0 %v2448
    %3257 = vmatprep.subr.mxu0 %v2453
    %3258 = vmatpush1.msra.mxu0 %v2452
    %3259 = vmatprep.subr.mxu0 %v2457
    %3260 = vmatpush1.msra.mxu0 %v2456
    %3261 = vmatprep.subr.mxu0 %v2461
    %3262 = vmatpush1.msra.mxu0 %v2460
    %3263 = vmatprep.subr.mxu0 %v2465
    %3264 = vmatpush1.msra.mxu0 %v2464
    %3265 = vmatprep.subr.mxu0 %v2469
    %3266 = vmatpush1.msra.mxu0 %v2468
    %3267 = vmatprep.subr.mxu0 %v2473
    %3268 = vmatpush1.msra.mxu0 %v2472
    %3269 = vmatprep.subr.mxu0 %v2477
    %3270 = vmatpush1.msra.mxu0 %v2476
    %3271 = vmatprep.subr.mxu0 %v2481
    %3272 = vmatpush1.msra.mxu0 %v2480
    %3273 = vmatprep.subr.mxu0 %v2485
    %3274 = vmatpush1.msra.mxu0 %v2484
    %3275 = vmatprep.subr.mxu0 %v2489
    %3276 = vmatpush1.msra.mxu0 %v2488
    %3277 = vmatprep.subr.mxu0 %v2493
    %3278 = vmatpush1.msra.mxu0 %v2492
    %3279 = vmatprep.subr.mxu0 %v2497
    %3280 = vmatpush1.msra.mxu0 %v2496
    %3281 = vmatprep.subr.mxu0 %v2501
    %3282 = vmatpush1.msra.mxu0 %v2500
    %3283 = vmatprep.subr.mxu0 %v2505
    %3284 = vmatpush1.msra.mxu0 %v2504
    %3285 = vmatprep.subr.mxu0 %v2509
    %3286 = vmatpush1.msra.mxu0 %v2508
    %3287 = vmatprep.subr.mxu0 %v2513
    %3288 = vmatpush1.msra.mxu0 %v2512
    %3289 = vmatprep.subr.mxu0 %v2517
    %3290 = vmatpush1.msra.mxu0 %v2516
    %3291 = vmatprep.subr.mxu0 %v2521
    %3292 = vmatpush1.msra.mxu0 %v2520
    %3293 = vmatprep.subr.mxu0 %v2525
    %3294 = vmatpush1.msra.mxu0 %v2524
    %3295 = vmatprep.subr.mxu0 %v2529
    %3296 = vmatpush1.msra.mxu0 %v2528
    %3297 = vmatprep.mubr.f32.mxu0 %v1105
    %3298 = vmatmul.mubr.f32.gmra.mrb[0].mxu0 %v1103
    %v3299 = vpop.f32.mrb[0].mxu0
    %v3300 = vadd.f32 %v3229, %v3299
    %v3301 = vpop.f32.mrb[0].mxu0
    %v3302 = vadd.f32 %v3231, %v3301
    %3303 = vdwg.mxu0
    %v3304 = vld [vmem:[#allocation26] sm:$0xf]
    %v3306 = vlaneseq
    %v3307 = vshrl.u32 %v3306, 7
    %v3308 = vsub.s32 0, %v3307
    %v3309 = vrot.slane %v3304, %v3308
    %v3310 = vlaneseq
    %v3311 = vshrl.u32 %v3310, 7
    %v3312 = vsub.s32 1, %v3311
    %v3313 = vrot.slane %v3304, %v3312
    %v3314 = vlaneseq
    %v3315 = vshrl.u32 %v3314, 7
    %v3316 = vsub.s32 2, %v3315
    %v3317 = vrot.slane %v3304, %v3316
    %v3318 = vlaneseq
    %v3319 = vshrl.u32 %v3318, 7
    %v3320 = vsub.s32 3, %v3319
    %v3321 = vrot.slane %v3304, %v3320
    %v3326 = vadd.f32 %v3016, %v3309
    %v3327 = vadd.f32 %v3018, %v3313
    %v3328 = vadd.f32 %v3300, %v3317
    %v3329 = vadd.f32 %v3302, %v3321
    %v3330 = vmax.f32 %v3326, 0.0
    %v3331 = vmax.f32 %v3327, 0.0
    %v3332 = vmax.f32 %v3328, 0.0
    %v3333 = vmax.f32 %v3329, 0.0
    %v3334 = vld [vmem:[#allocation28] sm:$0xff]
    %v3335 = vld [vmem:[#allocation28 + $0x8] sm:$0xff]
    %v3336 = vld [vmem:[#allocation28 + $0x10] sm:$0xff]
    %v3337 = vld [vmem:[#allocation28 + $0x18] sm:$0xff]
    %v3338 = vld [vmem:[#allocation28 + $0x20] sm:$0xff]
    %v3339 = vld [vmem:[#allocation28 + $0x28] sm:$0xff]
    %v3340 = vld [vmem:[#allocation28 + $0x30] sm:$0xff]
    %v3341 = vld [vmem:[#allocation28 + $0x38] sm:$0xff]
    %v3342 = vld [vmem:[#allocation28 + $0x40] sm:$0xff]
    %v3343 = vld [vmem:[#allocation28 + $0x48] sm:$0xff]
    %v3344 = vld [vmem:[#allocation28 + $0x50] sm:$0xff]
    %v3345 = vld [vmem:[#allocation28 + $0x58] sm:$0xff]
    %v3346 = vld [vmem:[#allocation28 + $0x60] sm:$0xff]
    %v3347 = vld [vmem:[#allocation28 + $0x68] sm:$0xff]
    %v3348 = vld [vmem:[#allocation28 + $0x70] sm:$0xff]
    %v3349 = vld [vmem:[#allocation28 + $0x78] sm:$0xff]
    %v3350 = vld [vmem:[#allocation28 + $0x80] sm:$0xff]
    %v3351 = vld [vmem:[#allocation28 + $0x88] sm:$0xff]
    %v3352 = vld [vmem:[#allocation28 + $0x90] sm:$0xff]
    %v3353 = vld [vmem:[#allocation28 + $0x98] sm:$0xff]
    %v3354 = vld [vmem:[#allocation28 + $0xa0] sm:$0xff]
    %v3355 = vld [vmem:[#allocation28 + $0xa8] sm:$0xff]
    %v3356 = vld [vmem:[#allocation28 + $0xb0] sm:$0xff]
    %v3357 = vld [vmem:[#allocation28 + $0xb8] sm:$0xff]
    %v3358 = vld [vmem:[#allocation28 + $0xc0] sm:$0xff]
    %v3359 = vld [vmem:[#allocation28 + $0xc8] sm:$0xff]
    %v3360 = vld [vmem:[#allocation28 + $0xd0] sm:$0xff]
    %v3361 = vld [vmem:[#allocation28 + $0xd8] sm:$0xff]
    %v3362 = vld [vmem:[#allocation28 + $0xe0] sm:$0xff]
    %v3363 = vld [vmem:[#allocation28 + $0xe8] sm:$0xff]
    %v3364 = vld [vmem:[#allocation28 + $0xf0] sm:$0xff]
    %v3365 = vld [vmem:[#allocation28 + $0xf8] sm:$0xff]
    %v3366 = vld [vmem:[#allocation28 + $0x100] sm:$0xff]
    %v3367 = vld [vmem:[#allocation28 + $0x108] sm:$0xff]
    %v3368 = vld [vmem:[#allocation28 + $0x110] sm:$0xff]
    %v3369 = vld [vmem:[#allocation28 + $0x118] sm:$0xff]
    %v3370 = vld [vmem:[#allocation28 + $0x120] sm:$0xff]
    %v3371 = vld [vmem:[#allocation28 + $0x128] sm:$0xff]
    %v3372 = vld [vmem:[#allocation28 + $0x130] sm:$0xff]
    %v3373 = vld [vmem:[#allocation28 + $0x138] sm:$0xff]
    %v3374 = vld [vmem:[#allocation28 + $0x140] sm:$0xff]
    %v3375 = vld [vmem:[#allocation28 + $0x148] sm:$0xff]
    %v3376 = vld [vmem:[#allocation28 + $0x150] sm:$0xff]
    %v3377 = vld [vmem:[#allocation28 + $0x158] sm:$0xff]
    %v3378 = vld [vmem:[#allocation28 + $0x160] sm:$0xff]
    %v3379 = vld [vmem:[#allocation28 + $0x168] sm:$0xff]
    %v3380 = vld [vmem:[#allocation28 + $0x170] sm:$0xff]
    %v3381 = vld [vmem:[#allocation28 + $0x178] sm:$0xff]
    %v3382 = vld [vmem:[#allocation28 + $0x180] sm:$0xff]
    %v3383 = vld [vmem:[#allocation28 + $0x188] sm:$0xff]
    %v3384 = vld [vmem:[#allocation28 + $0x190] sm:$0xff]
    %v3385 = vld [vmem:[#allocation28 + $0x198] sm:$0xff]
    %v3386 = vld [vmem:[#allocation28 + $0x1a0] sm:$0xff]
    %v3387 = vld [vmem:[#allocation28 + $0x1a8] sm:$0xff]
    %v3388 = vld [vmem:[#allocation28 + $0x1b0] sm:$0xff]
    %v3389 = vld [vmem:[#allocation28 + $0x1b8] sm:$0xff]
    %v3390 = vld [vmem:[#allocation28 + $0x1c0] sm:$0xff]
    %v3391 = vld [vmem:[#allocation28 + $0x1c8] sm:$0xff]
    %v3392 = vld [vmem:[#allocation28 + $0x1d0] sm:$0xff]
    %v3393 = vld [vmem:[#allocation28 + $0x1d8] sm:$0xff]
    %v3394 = vld [vmem:[#allocation28 + $0x1e0] sm:$0xff]
    %v3395 = vld [vmem:[#allocation28 + $0x1e8] sm:$0xff]
    %v3396 = vld [vmem:[#allocation28 + $0x1f0] sm:$0xff]
    %v3397 = vld [vmem:[#allocation28 + $0x1f8] sm:$0xff]
    %v3398 = vld [vmem:[#allocation28 + $0x200] sm:$0xff]
    %v3399 = vld [vmem:[#allocation28 + $0x208] sm:$0xff]
    %v3400 = vld [vmem:[#allocation28 + $0x210] sm:$0xff]
    %v3401 = vld [vmem:[#allocation28 + $0x218] sm:$0xff]
    %v3402 = vld [vmem:[#allocation28 + $0x220] sm:$0xff]
    %v3403 = vld [vmem:[#allocation28 + $0x228] sm:$0xff]
    %v3404 = vld [vmem:[#allocation28 + $0x230] sm:$0xff]
    %v3405 = vld [vmem:[#allocation28 + $0x238] sm:$0xff]
    %v3406 = vld [vmem:[#allocation28 + $0x240] sm:$0xff]
    %v3407 = vld [vmem:[#allocation28 + $0x248] sm:$0xff]
    %v3408 = vld [vmem:[#allocation28 + $0x250] sm:$0xff]
    %v3409 = vld [vmem:[#allocation28 + $0x258] sm:$0xff]
    %v3410 = vld [vmem:[#allocation28 + $0x260] sm:$0xff]
    %v3411 = vld [vmem:[#allocation28 + $0x268] sm:$0xff]
    %v3412 = vld [vmem:[#allocation28 + $0x270] sm:$0xff]
    %v3413 = vld [vmem:[#allocation28 + $0x278] sm:$0xff]
    %v3414 = vld [vmem:[#allocation28 + $0x280] sm:$0xff]
    %v3415 = vld [vmem:[#allocation28 + $0x288] sm:$0xff]
    %v3416 = vld [vmem:[#allocation28 + $0x290] sm:$0xff]
    %v3417 = vld [vmem:[#allocation28 + $0x298] sm:$0xff]
    %v3418 = vld [vmem:[#allocation28 + $0x2a0] sm:$0xff]
    %v3419 = vld [vmem:[#allocation28 + $0x2a8] sm:$0xff]
    %v3420 = vld [vmem:[#allocation28 + $0x2b0] sm:$0xff]
    %v3421 = vld [vmem:[#allocation28 + $0x2b8] sm:$0xff]
    %v3422 = vld [vmem:[#allocation28 + $0x2c0] sm:$0xff]
    %v3423 = vld [vmem:[#allocation28 + $0x2c8] sm:$0xff]
    %v3424 = vld [vmem:[#allocation28 + $0x2d0] sm:$0xff]
    %v3425 = vld [vmem:[#allocation28 + $0x2d8] sm:$0xff]
    %v3426 = vld [vmem:[#allocation28 + $0x2e0] sm:$0xff]
    %v3427 = vld [vmem:[#allocation28 + $0x2e8] sm:$0xff]
    %v3428 = vld [vmem:[#allocation28 + $0x2f0] sm:$0xff]
    %v3429 = vld [vmem:[#allocation28 + $0x2f8] sm:$0xff]
    %v3430 = vld [vmem:[#allocation28 + $0x300] sm:$0xff]
    %v3431 = vld [vmem:[#allocation28 + $0x308] sm:$0xff]
    %v3432 = vld [vmem:[#allocation28 + $0x310] sm:$0xff]
    %v3433 = vld [vmem:[#allocation28 + $0x318] sm:$0xff]
    %v3434 = vld [vmem:[#allocation28 + $0x320] sm:$0xff]
    %v3435 = vld [vmem:[#allocation28 + $0x328] sm:$0xff]
    %v3436 = vld [vmem:[#allocation28 + $0x330] sm:$0xff]
    %v3437 = vld [vmem:[#allocation28 + $0x338] sm:$0xff]
    %v3438 = vld [vmem:[#allocation28 + $0x340] sm:$0xff]
    %v3439 = vld [vmem:[#allocation28 + $0x348] sm:$0xff]
    %v3440 = vld [vmem:[#allocation28 + $0x350] sm:$0xff]
    %v3441 = vld [vmem:[#allocation28 + $0x358] sm:$0xff]
    %v3442 = vld [vmem:[#allocation28 + $0x360] sm:$0xff]
    %v3443 = vld [vmem:[#allocation28 + $0x368] sm:$0xff]
    %v3444 = vld [vmem:[#allocation28 + $0x370] sm:$0xff]
    %v3445 = vld [vmem:[#allocation28 + $0x378] sm:$0xff]
    %v3446 = vld [vmem:[#allocation28 + $0x380] sm:$0xff]
    %v3447 = vld [vmem:[#allocation28 + $0x388] sm:$0xff]
    %v3448 = vld [vmem:[#allocation28 + $0x390] sm:$0xff]
    %v3449 = vld [vmem:[#allocation28 + $0x398] sm:$0xff]
    %v3450 = vld [vmem:[#allocation28 + $0x3a0] sm:$0xff]
    %v3451 = vld [vmem:[#allocation28 + $0x3a8] sm:$0xff]
    %v3452 = vld [vmem:[#allocation28 + $0x3b0] sm:$0xff]
    %v3453 = vld [vmem:[#allocation28 + $0x3b8] sm:$0xff]
    %v3454 = vld [vmem:[#allocation28 + $0x3c0] sm:$0xff]
    %v3455 = vld [vmem:[#allocation28 + $0x3c8] sm:$0xff]
    %v3456 = vld [vmem:[#allocation28 + $0x3d0] sm:$0xff]
    %v3457 = vld [vmem:[#allocation28 + $0x3d8] sm:$0xff]
    %v3458 = vld [vmem:[#allocation28 + $0x3e0] sm:$0xff]
    %v3459 = vld [vmem:[#allocation28 + $0x3e8] sm:$0xff]
    %v3460 = vld [vmem:[#allocation28 + $0x3f0] sm:$0xff]
    %v3461 = vld [vmem:[#allocation28 + $0x3f8] sm:$0xff]
    %v3462 = vld [vmem:[#allocation28 + $0x400] sm:$0xff]
    %v3463 = vld [vmem:[#allocation28 + $0x408] sm:$0xff]
    %v3464 = vld [vmem:[#allocation28 + $0x410] sm:$0xff]
    %v3465 = vld [vmem:[#allocation28 + $0x418] sm:$0xff]
    %v3466 = vld [vmem:[#allocation28 + $0x420] sm:$0xff]
    %v3467 = vld [vmem:[#allocation28 + $0x428] sm:$0xff]
    %v3468 = vld [vmem:[#allocation28 + $0x430] sm:$0xff]
    %v3469 = vld [vmem:[#allocation28 + $0x438] sm:$0xff]
    %v3470 = vld [vmem:[#allocation28 + $0x440] sm:$0xff]
    %v3471 = vld [vmem:[#allocation28 + $0x448] sm:$0xff]
    %v3472 = vld [vmem:[#allocation28 + $0x450] sm:$0xff]
    %v3473 = vld [vmem:[#allocation28 + $0x458] sm:$0xff]
    %v3474 = vld [vmem:[#allocation28 + $0x460] sm:$0xff]
    %v3475 = vld [vmem:[#allocation28 + $0x468] sm:$0xff]
    %v3476 = vld [vmem:[#allocation28 + $0x470] sm:$0xff]
    %v3477 = vld [vmem:[#allocation28 + $0x478] sm:$0xff]
    %v3478 = vld [vmem:[#allocation28 + $0x480] sm:$0xff]
    %v3479 = vld [vmem:[#allocation28 + $0x488] sm:$0xff]
    %v3480 = vld [vmem:[#allocation28 + $0x490] sm:$0xff]
    %v3481 = vld [vmem:[#allocation28 + $0x498] sm:$0xff]
    %v3482 = vld [vmem:[#allocation28 + $0x4a0] sm:$0xff]
    %v3483 = vld [vmem:[#allocation28 + $0x4a8] sm:$0xff]
    %v3484 = vld [vmem:[#allocation28 + $0x4b0] sm:$0xff]
    %v3485 = vld [vmem:[#allocation28 + $0x4b8] sm:$0xff]
    %v3486 = vld [vmem:[#allocation28 + $0x4c0] sm:$0xff]
    %v3487 = vld [vmem:[#allocation28 + $0x4c8] sm:$0xff]
    %v3488 = vld [vmem:[#allocation28 + $0x4d0] sm:$0xff]
    %v3489 = vld [vmem:[#allocation28 + $0x4d8] sm:$0xff]
    %v3490 = vld [vmem:[#allocation28 + $0x4e0] sm:$0xff]
    %v3491 = vld [vmem:[#allocation28 + $0x4e8] sm:$0xff]
    %v3492 = vld [vmem:[#allocation28 + $0x4f0] sm:$0xff]
    %v3493 = vld [vmem:[#allocation28 + $0x4f8] sm:$0xff]
    %v3494 = vld [vmem:[#allocation28 + $0x500] sm:$0xff]
    %v3495 = vld [vmem:[#allocation28 + $0x508] sm:$0xff]
    %v3496 = vld [vmem:[#allocation28 + $0x510] sm:$0xff]
    %v3497 = vld [vmem:[#allocation28 + $0x518] sm:$0xff]
    %v3498 = vld [vmem:[#allocation28 + $0x520] sm:$0xff]
    %v3499 = vld [vmem:[#allocation28 + $0x528] sm:$0xff]
    %v3500 = vld [vmem:[#allocation28 + $0x530] sm:$0xff]
    %v3501 = vld [vmem:[#allocation28 + $0x538] sm:$0xff]
    %v3502 = vld [vmem:[#allocation28 + $0x540] sm:$0xff]
    %v3503 = vld [vmem:[#allocation28 + $0x548] sm:$0xff]
    %v3504 = vld [vmem:[#allocation28 + $0x550] sm:$0xff]
    %v3505 = vld [vmem:[#allocation28 + $0x558] sm:$0xff]
    %v3506 = vld [vmem:[#allocation28 + $0x560] sm:$0xff]
    %v3507 = vld [vmem:[#allocation28 + $0x568] sm:$0xff]
    %v3508 = vld [vmem:[#allocation28 + $0x570] sm:$0xff]
    %v3509 = vld [vmem:[#allocation28 + $0x578] sm:$0xff]
    %v3510 = vld [vmem:[#allocation28 + $0x580] sm:$0xff]
    %v3511 = vld [vmem:[#allocation28 + $0x588] sm:$0xff]
    %v3512 = vld [vmem:[#allocation28 + $0x590] sm:$0xff]
    %v3513 = vld [vmem:[#allocation28 + $0x598] sm:$0xff]
    %v3514 = vld [vmem:[#allocation28 + $0x5a0] sm:$0xff]
    %v3515 = vld [vmem:[#allocation28 + $0x5a8] sm:$0xff]
    %v3516 = vld [vmem:[#allocation28 + $0x5b0] sm:$0xff]
    %v3517 = vld [vmem:[#allocation28 + $0x5b8] sm:$0xff]
    %v3518 = vld [vmem:[#allocation28 + $0x5c0] sm:$0xff]
    %v3519 = vld [vmem:[#allocation28 + $0x5c8] sm:$0xff]
    %v3520 = vld [vmem:[#allocation28 + $0x5d0] sm:$0xff]
    %v3521 = vld [vmem:[#allocation28 + $0x5d8] sm:$0xff]
    %v3522 = vld [vmem:[#allocation28 + $0x5e0] sm:$0xff]
    %v3523 = vld [vmem:[#allocation28 + $0x5e8] sm:$0xff]
    %v3524 = vld [vmem:[#allocation28 + $0x5f0] sm:$0xff]
    %v3525 = vld [vmem:[#allocation28 + $0x5f8] sm:$0xff]
    %v3526 = vld [vmem:[#allocation28 + $0x600] sm:$0xff]
    %v3527 = vld [vmem:[#allocation28 + $0x608] sm:$0xff]
    %v3528 = vld [vmem:[#allocation28 + $0x610] sm:$0xff]
    %v3529 = vld [vmem:[#allocation28 + $0x618] sm:$0xff]
    %v3530 = vld [vmem:[#allocation28 + $0x620] sm:$0xff]
    %v3531 = vld [vmem:[#allocation28 + $0x628] sm:$0xff]
    %v3532 = vld [vmem:[#allocation28 + $0x630] sm:$0xff]
    %v3533 = vld [vmem:[#allocation28 + $0x638] sm:$0xff]
    %v3534 = vld [vmem:[#allocation28 + $0x640] sm:$0xff]
    %v3535 = vld [vmem:[#allocation28 + $0x648] sm:$0xff]
    %v3536 = vld [vmem:[#allocation28 + $0x650] sm:$0xff]
    %v3537 = vld [vmem:[#allocation28 + $0x658] sm:$0xff]
    %v3538 = vld [vmem:[#allocation28 + $0x660] sm:$0xff]
    %v3539 = vld [vmem:[#allocation28 + $0x668] sm:$0xff]
    %v3540 = vld [vmem:[#allocation28 + $0x670] sm:$0xff]
    %v3541 = vld [vmem:[#allocation28 + $0x678] sm:$0xff]
    %v3542 = vld [vmem:[#allocation28 + $0x680] sm:$0xff]
    %v3543 = vld [vmem:[#allocation28 + $0x688] sm:$0xff]
    %v3544 = vld [vmem:[#allocation28 + $0x690] sm:$0xff]
    %v3545 = vld [vmem:[#allocation28 + $0x698] sm:$0xff]
    %v3546 = vld [vmem:[#allocation28 + $0x6a0] sm:$0xff]
    %v3547 = vld [vmem:[#allocation28 + $0x6a8] sm:$0xff]
    %v3548 = vld [vmem:[#allocation28 + $0x6b0] sm:$0xff]
    %v3549 = vld [vmem:[#allocation28 + $0x6b8] sm:$0xff]
    %v3550 = vld [vmem:[#allocation28 + $0x6c0] sm:$0xff]
    %v3551 = vld [vmem:[#allocation28 + $0x6c8] sm:$0xff]
    %v3552 = vld [vmem:[#allocation28 + $0x6d0] sm:$0xff]
    %v3553 = vld [vmem:[#allocation28 + $0x6d8] sm:$0xff]
    %v3554 = vld [vmem:[#allocation28 + $0x6e0] sm:$0xff]
    %v3555 = vld [vmem:[#allocation28 + $0x6e8] sm:$0xff]
    %v3556 = vld [vmem:[#allocation28 + $0x6f0] sm:$0xff]
    %v3557 = vld [vmem:[#allocation28 + $0x6f8] sm:$0xff]
    %v3558 = vld [vmem:[#allocation28 + $0x700] sm:$0xff]
    %v3559 = vld [vmem:[#allocation28 + $0x708] sm:$0xff]
    %v3560 = vld [vmem:[#allocation28 + $0x710] sm:$0xff]
    %v3561 = vld [vmem:[#allocation28 + $0x718] sm:$0xff]
    %v3562 = vld [vmem:[#allocation28 + $0x720] sm:$0xff]
    %v3563 = vld [vmem:[#allocation28 + $0x728] sm:$0xff]
    %v3564 = vld [vmem:[#allocation28 + $0x730] sm:$0xff]
    %v3565 = vld [vmem:[#allocation28 + $0x738] sm:$0xff]
    %v3566 = vld [vmem:[#allocation28 + $0x740] sm:$0xff]
    %v3567 = vld [vmem:[#allocation28 + $0x748] sm:$0xff]
    %v3568 = vld [vmem:[#allocation28 + $0x750] sm:$0xff]
    %v3569 = vld [vmem:[#allocation28 + $0x758] sm:$0xff]
    %v3570 = vld [vmem:[#allocation28 + $0x760] sm:$0xff]
    %v3571 = vld [vmem:[#allocation28 + $0x768] sm:$0xff]
    %v3572 = vld [vmem:[#allocation28 + $0x770] sm:$0xff]
    %v3573 = vld [vmem:[#allocation28 + $0x778] sm:$0xff]
    %v3574 = vld [vmem:[#allocation28 + $0x780] sm:$0xff]
    %v3575 = vld [vmem:[#allocation28 + $0x788] sm:$0xff]
    %v3576 = vld [vmem:[#allocation28 + $0x790] sm:$0xff]
    %v3577 = vld [vmem:[#allocation28 + $0x798] sm:$0xff]
    %v3578 = vld [vmem:[#allocation28 + $0x7a0] sm:$0xff]
    %v3579 = vld [vmem:[#allocation28 + $0x7a8] sm:$0xff]
    %v3580 = vld [vmem:[#allocation28 + $0x7b0] sm:$0xff]
    %v3581 = vld [vmem:[#allocation28 + $0x7b8] sm:$0xff]
    %v3582 = vld [vmem:[#allocation28 + $0x7c0] sm:$0xff]
    %v3583 = vld [vmem:[#allocation28 + $0x7c8] sm:$0xff]
    %v3584 = vld [vmem:[#allocation28 + $0x7d0] sm:$0xff]
    %v3585 = vld [vmem:[#allocation28 + $0x7d8] sm:$0xff]
    %v3586 = vld [vmem:[#allocation28 + $0x7e0] sm:$0xff]
    %v3587 = vld [vmem:[#allocation28 + $0x7e8] sm:$0xff]
    %v3588 = vld [vmem:[#allocation28 + $0x7f0] sm:$0xff]
    %v3589 = vld [vmem:[#allocation28 + $0x7f8] sm:$0xff]
    %v3590 = vld [vmem:[#allocation29] sm:$0xf]
    %v3592 = vlaneseq
    %v3593 = vshrl.u32 %v3592, 7
    %v3594 = vsub.s32 0, %v3593
    %v3595 = vrot.slane %v3590, %v3594
    %v3596 = vlaneseq
    %v3597 = vshrl.u32 %v3596, 7
    %v3598 = vsub.s32 1, %v3597
    %v3599 = vrot.slane %v3590, %v3598
    %v3600 = vlaneseq
    %v3601 = vshrl.u32 %v3600, 7
    %v3602 = vsub.s32 2, %v3601
    %v3603 = vrot.slane %v3590, %v3602
    %v3604 = vlaneseq
    %v3605 = vshrl.u32 %v3604, 7
    %v3606 = vsub.s32 3, %v3605
    %v3607 = vrot.slane %v3590, %v3606
    %3612 = vmatprep.subr.mxu0 %v3335
    %3613 = vmatpush1.msra.mxu0 %v3334
    %3614 = vmatprep.subr.mxu0 %v3339
    %3615 = vmatpush1.msra.mxu0 %v3338
    %3616 = vmatprep.subr.mxu0 %v3343
    %3617 = vmatpush1.msra.mxu0 %v3342
    %3618 = vmatprep.subr.mxu0 %v3347
    %3619 = vmatpush1.msra.mxu0 %v3346
    %3620 = vmatprep.subr.mxu0 %v3351
    %3621 = vmatpush1.msra.mxu0 %v3350
    %3622 = vmatprep.subr.mxu0 %v3355
    %3623 = vmatpush1.msra.mxu0 %v3354
    %3624 = vmatprep.subr.mxu0 %v3359
    %3625 = vmatpush1.msra.mxu0 %v3358
    %3626 = vmatprep.subr.mxu0 %v3363
    %3627 = vmatpush1.msra.mxu0 %v3362
    %3628 = vmatprep.subr.mxu0 %v3367
    %3629 = vmatpush1.msra.mxu0 %v3366
    %3630 = vmatprep.subr.mxu0 %v3371
    %3631 = vmatpush1.msra.mxu0 %v3370
    %3632 = vmatprep.subr.mxu0 %v3375
    %3633 = vmatpush1.msra.mxu0 %v3374
    %3634 = vmatprep.subr.mxu0 %v3379
    %3635 = vmatpush1.msra.mxu0 %v3378
    %3636 = vmatprep.subr.mxu0 %v3383
    %3637 = vmatpush1.msra.mxu0 %v3382
    %3638 = vmatprep.subr.mxu0 %v3387
    %3639 = vmatpush1.msra.mxu0 %v3386
    %3640 = vmatprep.subr.mxu0 %v3391
    %3641 = vmatpush1.msra.mxu0 %v3390
    %3642 = vmatprep.subr.mxu0 %v3395
    %3643 = vmatpush1.msra.mxu0 %v3394
    %3644 = vmatprep.subr.mxu0 %v3399
    %3645 = vmatpush1.msra.mxu0 %v3398
    %3646 = vmatprep.subr.mxu0 %v3403
    %3647 = vmatpush1.msra.mxu0 %v3402
    %3648 = vmatprep.subr.mxu0 %v3407
    %3649 = vmatpush1.msra.mxu0 %v3406
    %3650 = vmatprep.subr.mxu0 %v3411
    %3651 = vmatpush1.msra.mxu0 %v3410
    %3652 = vmatprep.subr.mxu0 %v3415
    %3653 = vmatpush1.msra.mxu0 %v3414
    %3654 = vmatprep.subr.mxu0 %v3419
    %3655 = vmatpush1.msra.mxu0 %v3418
    %3656 = vmatprep.subr.mxu0 %v3423
    %3657 = vmatpush1.msra.mxu0 %v3422
    %3658 = vmatprep.subr.mxu0 %v3427
    %3659 = vmatpush1.msra.mxu0 %v3426
    %3660 = vmatprep.subr.mxu0 %v3431
    %3661 = vmatpush1.msra.mxu0 %v3430
    %3662 = vmatprep.subr.mxu0 %v3435
    %3663 = vmatpush1.msra.mxu0 %v3434
    %3664 = vmatprep.subr.mxu0 %v3439
    %3665 = vmatpush1.msra.mxu0 %v3438
    %3666 = vmatprep.subr.mxu0 %v3443
    %3667 = vmatpush1.msra.mxu0 %v3442
    %3668 = vmatprep.subr.mxu0 %v3447
    %3669 = vmatpush1.msra.mxu0 %v3446
    %3670 = vmatprep.subr.mxu0 %v3451
    %3671 = vmatpush1.msra.mxu0 %v3450
    %3672 = vmatprep.subr.mxu0 %v3455
    %3673 = vmatpush1.msra.mxu0 %v3454
    %3674 = vmatprep.subr.mxu0 %v3459
    %3675 = vmatpush1.msra.mxu0 %v3458
    %3676 = vmatprep.mubr.f32.mxu0 %v3331
    %3677 = vmatmul.mubr.f32.gmra.mrb[0].mxu0 %v3330
    %v3678 = vpop.f32.mrb[0].mxu0
    %v3679 = vadd.f32 %v3595, %v3678
    %v3680 = vpop.f32.mrb[0].mxu0
    %v3681 = vadd.f32 %v3599, %v3680
    %3682 = vdwg.mxu0
    %3683 = vmatprep.subr.mxu0 %v3463
    %3684 = vmatpush1.msra.mxu0 %v3462
    %3685 = vmatprep.subr.mxu0 %v3467
    %3686 = vmatpush1.msra.mxu0 %v3466
    %3687 = vmatprep.subr.mxu0 %v3471
    %3688 = vmatpush1.msra.mxu0 %v3470
    %3689 = vmatprep.subr.mxu0 %v3475
    %3690 = vmatpush1.msra.mxu0 %v3474
    %3691 = vmatprep.subr.mxu0 %v3479
    %3692 = vmatpush1.msra.mxu0 %v3478
    %3693 = vmatprep.subr.mxu0 %v3483
    %3694 = vmatpush1.msra.mxu0 %v3482
    %3695 = vmatprep.subr.mxu0 %v3487
    %3696 = vmatpush1.msra.mxu0 %v3486
    %3697 = vmatprep.subr.mxu0 %v3491
    %3698 = vmatpush1.msra.mxu0 %v3490
    %3699 = vmatprep.subr.mxu0 %v3495
    %3700 = vmatpush1.msra.mxu0 %v3494
    %3701 = vmatprep.subr.mxu0 %v3499
    %3702 = vmatpush1.msra.mxu0 %v3498
    %3703 = vmatprep.subr.mxu0 %v3503
    %3704 = vmatpush1.msra.mxu0 %v3502
    %3705 = vmatprep.subr.mxu0 %v3507
    %3706 = vmatpush1.msra.mxu0 %v3506
    %3707 = vmatprep.subr.mxu0 %v3511
    %3708 = vmatpush1.msra.mxu0 %v3510
    %3709 = vmatprep.subr.mxu0 %v3515
    %3710 = vmatpush1.msra.mxu0 %v3514
    %3711 = vmatprep.subr.mxu0 %v3519
    %3712 = vmatpush1.msra.mxu0 %v3518
    %3713 = vmatprep.subr.mxu0 %v3523
    %3714 = vmatpush1.msra.mxu0 %v3522
    %3715 = vmatprep.subr.mxu0 %v3527
    %3716 = vmatpush1.msra.mxu0 %v3526
    %3717 = vmatprep.subr.mxu0 %v3531
    %3718 = vmatpush1.msra.mxu0 %v3530
    %3719 = vmatprep.subr.mxu0 %v3535
    %3720 = vmatpush1.msra.mxu0 %v3534
    %3721 = vmatprep.subr.mxu0 %v3539
    %3722 = vmatpush1.msra.mxu0 %v3538
    %3723 = vmatprep.subr.mxu0 %v3543
    %3724 = vmatpush1.msra.mxu0 %v3542
    %3725 = vmatprep.subr.mxu0 %v3547
    %3726 = vmatpush1.msra.mxu0 %v3546
    %3727 = vmatprep.subr.mxu0 %v3551
    %3728 = vmatpush1.msra.mxu0 %v3550
    %3729 = vmatprep.subr.mxu0 %v3555
    %3730 = vmatpush1.msra.mxu0 %v3554
    %3731 = vmatprep.subr.mxu0 %v3559
    %3732 = vmatpush1.msra.mxu0 %v3558
    %3733 = vmatprep.subr.mxu0 %v3563
    %3734 = vmatpush1.msra.mxu0 %v3562
    %3735 = vmatprep.subr.mxu0 %v3567
    %3736 = vmatpush1.msra.mxu0 %v3566
    %3737 = vmatprep.subr.mxu0 %v3571
    %3738 = vmatpush1.msra.mxu0 %v3570
    %3739 = vmatprep.subr.mxu0 %v3575
    %3740 = vmatpush1.msra.mxu0 %v3574
    %3741 = vmatprep.subr.mxu0 %v3579
    %3742 = vmatpush1.msra.mxu0 %v3578
    %3743 = vmatprep.subr.mxu0 %v3583
    %3744 = vmatpush1.msra.mxu0 %v3582
    %3745 = vmatprep.subr.mxu0 %v3587
    %3746 = vmatpush1.msra.mxu0 %v3586
    %3747 = vmatprep.mubr.f32.mxu0 %v3333
    %3748 = vmatmul.mubr.f32.gmra.mrb[0].mxu0 %v3332
    %v3749 = vpop.f32.mrb[0].mxu0
    %v3750 = vadd.f32 %v3679, %v3749
    %v3751 = vpop.f32.mrb[0].mxu0
    %v3752 = vadd.f32 %v3681, %v3751
    %3753 = vdwg.mxu0
    %3754 = vmatprep.subr.mxu0 %v3337
    %3755 = vmatpush1.msra.mxu0 %v3336
    %3756 = vmatprep.subr.mxu0 %v3341
    %3757 = vmatpush1.msra.mxu0 %v3340
    %3758 = vmatprep.subr.mxu0 %v3345
    %3759 = vmatpush1.msra.mxu0 %v3344
    %3760 = vmatprep.subr.mxu0 %v3349
    %3761 = vmatpush1.msra.mxu0 %v3348
    %3762 = vmatprep.subr.mxu0 %v3353
    %3763 = vmatpush1.msra.mxu0 %v3352
    %3764 = vmatprep.subr.mxu0 %v3357
    %3765 = vmatpush1.msra.mxu0 %v3356
    %3766 = vmatprep.subr.mxu0 %v3361
    %3767 = vmatpush1.msra.mxu0 %v3360
    %3768 = vmatprep.subr.mxu0 %v3365
    %3769 = vmatpush1.msra.mxu0 %v3364
    %3770 = vmatprep.subr.mxu0 %v3369
    %3771 = vmatpush1.msra.mxu0 %v3368
    %3772 = vmatprep.subr.mxu0 %v3373
    %3773 = vmatpush1.msra.mxu0 %v3372
    %3774 = vmatprep.subr.mxu0 %v3377
    %3775 = vmatpush1.msra.mxu0 %v3376
    %3776 = vmatprep.subr.mxu0 %v3381
    %3777 = vmatpush1.msra.mxu0 %v3380
    %3778 = vmatprep.subr.mxu0 %v3385
    %3779 = vmatpush1.msra.mxu0 %v3384
    %3780 = vmatprep.subr.mxu0 %v3389
    %3781 = vmatpush1.msra.mxu0 %v3388
    %3782 = vmatprep.subr.mxu0 %v3393
    %3783 = vmatpush1.msra.mxu0 %v3392
    %3784 = vmatprep.subr.mxu0 %v3397
    %3785 = vmatpush1.msra.mxu0 %v3396
    %3786 = vmatprep.subr.mxu0 %v3401
    %3787 = vmatpush1.msra.mxu0 %v3400
    %3788 = vmatprep.subr.mxu0 %v3405
    %3789 = vmatpush1.msra.mxu0 %v3404
    %3790 = vmatprep.subr.mxu0 %v3409
    %3791 = vmatpush1.msra.mxu0 %v3408
    %3792 = vmatprep.subr.mxu0 %v3413
    %3793 = vmatpush1.msra.mxu0 %v3412
    %3794 = vmatprep.subr.mxu0 %v3417
    %3795 = vmatpush1.msra.mxu0 %v3416
    %3796 = vmatprep.subr.mxu0 %v3421
    %3797 = vmatpush1.msra.mxu0 %v3420
    %3798 = vmatprep.subr.mxu0 %v3425
    %3799 = vmatpush1.msra.mxu0 %v3424
    %3800 = vmatprep.subr.mxu0 %v3429
    %3801 = vmatpush1.msra.mxu0 %v3428
    %3802 = vmatprep.subr.mxu0 %v3433
    %3803 = vmatpush1.msra.mxu0 %v3432
    %3804 = vmatprep.subr.mxu0 %v3437
    %3805 = vmatpush1.msra.mxu0 %v3436
    %3806 = vmatprep.subr.mxu0 %v3441
    %3807 = vmatpush1.msra.mxu0 %v3440
    %3808 = vmatprep.subr.mxu0 %v3445
    %3809 = vmatpush1.msra.mxu0 %v3444
    %3810 = vmatprep.subr.mxu0 %v3449
    %3811 = vmatpush1.msra.mxu0 %v3448
    %3812 = vmatprep.subr.mxu0 %v3453
    %3813 = vmatpush1.msra.mxu0 %v3452
    %3814 = vmatprep.subr.mxu0 %v3457
    %3815 = vmatpush1.msra.mxu0 %v3456
    %3816 = vmatprep.subr.mxu0 %v3461
    %3817 = vmatpush1.msra.mxu0 %v3460
    %3818 = vmatprep.mubr.f32.mxu0 %v3331
    %3819 = vmatmul.mubr.f32.gmra.mrb[0].mxu0 %v3330
    %v3820 = vpop.f32.mrb[0].mxu0
    %v3821 = vadd.f32 %v3603, %v3820
    %v3822 = vpop.f32.mrb[0].mxu0
    %v3823 = vadd.f32 %v3607, %v3822
    %3824 = vdwg.mxu0
    %3825 = vmatprep.subr.mxu0 %v3465
    %3826 = vmatpush1.msra.mxu0 %v3464
    %3827 = vmatprep.subr.mxu0 %v3469
    %3828 = vmatpush1.msra.mxu0 %v3468
    %3829 = vmatprep.subr.mxu0 %v3473
    %3830 = vmatpush1.msra.mxu0 %v3472
    %3831 = vmatprep.subr.mxu0 %v3477
    %3832 = vmatpush1.msra.mxu0 %v3476
    %3833 = vmatprep.subr.mxu0 %v3481
    %3834 = vmatpush1.msra.mxu0 %v3480
    %3835 = vmatprep.subr.mxu0 %v3485
    %3836 = vmatpush1.msra.mxu0 %v3484
    %3837 = vmatprep.subr.mxu0 %v3489
    %3838 = vmatpush1.msra.mxu0 %v3488
    %3839 = vmatprep.subr.mxu0 %v3493
    %3840 = vmatpush1.msra.mxu0 %v3492
    %3841 = vmatprep.subr.mxu0 %v3497
    %3842 = vmatpush1.msra.mxu0 %v3496
    %3843 = vmatprep.subr.mxu0 %v3501
    %3844 = vmatpush1.msra.mxu0 %v3500
    %3845 = vmatprep.subr.mxu0 %v3505
    %3846 = vmatpush1.msra.mxu0 %v3504
    %3847 = vmatprep.subr.mxu0 %v3509
    %3848 = vmatpush1.msra.mxu0 %v3508
    %3849 = vmatprep.subr.mxu0 %v3513
    %3850 = vmatpush1.msra.mxu0 %v3512
    %3851 = vmatprep.subr.mxu0 %v3517
    %3852 = vmatpush1.msra.mxu0 %v3516
    %3853 = vmatprep.subr.mxu0 %v3521
    %3854 = vmatpush1.msra.mxu0 %v3520
    %3855 = vmatprep.subr.mxu0 %v3525
    %3856 = vmatpush1.msra.mxu0 %v3524
    %3857 = vmatprep.subr.mxu0 %v3529
    %3858 = vmatpush1.msra.mxu0 %v3528
    %3859 = vmatprep.subr.mxu0 %v3533
    %3860 = vmatpush1.msra.mxu0 %v3532
    %3861 = vmatprep.subr.mxu0 %v3537
    %3862 = vmatpush1.msra.mxu0 %v3536
    %3863 = vmatprep.subr.mxu0 %v3541
    %3864 = vmatpush1.msra.mxu0 %v3540
    %3865 = vmatprep.subr.mxu0 %v3545
    %3866 = vmatpush1.msra.mxu0 %v3544
    %3867 = vmatprep.subr.mxu0 %v3549
    %3868 = vmatpush1.msra.mxu0 %v3548
    %3869 = vmatprep.subr.mxu0 %v3553
    %3870 = vmatpush1.msra.mxu0 %v3552
    %3871 = vmatprep.subr.mxu0 %v3557
    %3872 = vmatpush1.msra.mxu0 %v3556
    %3873 = vmatprep.subr.mxu0 %v3561
    %3874 = vmatpush1.msra.mxu0 %v3560
    %3875 = vmatprep.subr.mxu0 %v3565
    %3876 = vmatpush1.msra.mxu0 %v3564
    %3877 = vmatprep.subr.mxu0 %v3569
    %3878 = vmatpush1.msra.mxu0 %v3568
    %3879 = vmatprep.subr.mxu0 %v3573
    %3880 = vmatpush1.msra.mxu0 %v3572
    %3881 = vmatprep.subr.mxu0 %v3577
    %3882 = vmatpush1.msra.mxu0 %v3576
    %3883 = vmatprep.subr.mxu0 %v3581
    %3884 = vmatpush1.msra.mxu0 %v3580
    %3885 = vmatprep.subr.mxu0 %v3585
    %3886 = vmatpush1.msra.mxu0 %v3584
    %3887 = vmatprep.subr.mxu0 %v3589
    %3888 = vmatpush1.msra.mxu0 %v3588
    %3889 = vmatprep.mubr.f32.mxu0 %v3333
    %3890 = vmatmul.mubr.f32.gmra.mrb[0].mxu0 %v3332
    %v3891 = vpop.f32.mrb[0].mxu0
    %v3892 = vadd.f32 %v3821, %v3891
    %v3893 = vpop.f32.mrb[0].mxu0
    %v3894 = vadd.f32 %v3823, %v3893
    %3895 = vdwg.mxu0
    %v3896 = vmax.f32 %v3750, 0.0
    %v3897 = vmax.f32 %v3752, 0.0
    %v3898 = vmax.f32 %v3892, 0.0
    %v3899 = vmax.f32 %v3894, 0.0
    %v3900 = vld [vmem:[#allocation31] sm:$0xff]
    %v3901 = vld [vmem:[#allocation31 + $0x8] sm:$0xff]
    %v3902 = vld [vmem:[#allocation31 + $0x10] sm:$0xff]
    %v3903 = vld [vmem:[#allocation31 + $0x18] sm:$0xff]
    %v3904 = vld [vmem:[#allocation31 + $0x20] sm:$0xff]
    %v3905 = vld [vmem:[#allocation31 + $0x28] sm:$0xff]
    %v3906 = vld [vmem:[#allocation31 + $0x30] sm:$0xff]
    %v3907 = vld [vmem:[#allocation31 + $0x38] sm:$0xff]
    %v3908 = vld [vmem:[#allocation31 + $0x40] sm:$0xff]
    %v3909 = vld [vmem:[#allocation31 + $0x48] sm:$0xff]
    %v3910 = vld [vmem:[#allocation31 + $0x50] sm:$0xff]
    %v3911 = vld [vmem:[#allocation31 + $0x58] sm:$0xff]
    %v3912 = vld [vmem:[#allocation31 + $0x60] sm:$0xff]
    %v3913 = vld [vmem:[#allocation31 + $0x68] sm:$0xff]
    %v3914 = vld [vmem:[#allocation31 + $0x70] sm:$0xff]
    %v3915 = vld [vmem:[#allocation31 + $0x78] sm:$0xff]
    %v3916 = vld [vmem:[#allocation31 + $0x80] sm:$0xff]
    %v3917 = vld [vmem:[#allocation31 + $0x88] sm:$0xff]
    %v3918 = vld [vmem:[#allocation31 + $0x90] sm:$0xff]
    %v3919 = vld [vmem:[#allocation31 + $0x98] sm:$0xff]
    %v3920 = vld [vmem:[#allocation31 + $0xa0] sm:$0xff]
    %v3921 = vld [vmem:[#allocation31 + $0xa8] sm:$0xff]
    %v3922 = vld [vmem:[#allocation31 + $0xb0] sm:$0xff]
    %v3923 = vld [vmem:[#allocation31 + $0xb8] sm:$0xff]
    %v3924 = vld [vmem:[#allocation31 + $0xc0] sm:$0xff]
    %v3925 = vld [vmem:[#allocation31 + $0xc8] sm:$0xff]
    %v3926 = vld [vmem:[#allocation31 + $0xd0] sm:$0xff]
    %v3927 = vld [vmem:[#allocation31 + $0xd8] sm:$0xff]
    %v3928 = vld [vmem:[#allocation31 + $0xe0] sm:$0xff]
    %v3929 = vld [vmem:[#allocation31 + $0xe8] sm:$0xff]
    %v3930 = vld [vmem:[#allocation31 + $0xf0] sm:$0xff]
    %v3931 = vld [vmem:[#allocation31 + $0xf8] sm:$0xff]
    %v3932 = vld [vmem:[#allocation31 + $0x100] sm:$0xff]
    %v3933 = vld [vmem:[#allocation31 + $0x108] sm:$0xff]
    %v3934 = vld [vmem:[#allocation31 + $0x110] sm:$0xff]
    %v3935 = vld [vmem:[#allocation31 + $0x118] sm:$0xff]
    %v3936 = vld [vmem:[#allocation31 + $0x120] sm:$0xff]
    %v3937 = vld [vmem:[#allocation31 + $0x128] sm:$0xff]
    %v3938 = vld [vmem:[#allocation31 + $0x130] sm:$0xff]
    %v3939 = vld [vmem:[#allocation31 + $0x138] sm:$0xff]
    %v3940 = vld [vmem:[#allocation31 + $0x140] sm:$0xff]
    %v3941 = vld [vmem:[#allocation31 + $0x148] sm:$0xff]
    %v3942 = vld [vmem:[#allocation31 + $0x150] sm:$0xff]
    %v3943 = vld [vmem:[#allocation31 + $0x158] sm:$0xff]
    %v3944 = vld [vmem:[#allocation31 + $0x160] sm:$0xff]
    %v3945 = vld [vmem:[#allocation31 + $0x168] sm:$0xff]
    %v3946 = vld [vmem:[#allocation31 + $0x170] sm:$0xff]
    %v3947 = vld [vmem:[#allocation31 + $0x178] sm:$0xff]
    %v3948 = vld [vmem:[#allocation31 + $0x180] sm:$0xff]
    %v3949 = vld [vmem:[#allocation31 + $0x188] sm:$0xff]
    %v3950 = vld [vmem:[#allocation31 + $0x190] sm:$0xff]
    %v3951 = vld [vmem:[#allocation31 + $0x198] sm:$0xff]
    %v3952 = vld [vmem:[#allocation31 + $0x1a0] sm:$0xff]
    %v3953 = vld [vmem:[#allocation31 + $0x1a8] sm:$0xff]
    %v3954 = vld [vmem:[#allocation31 + $0x1b0] sm:$0xff]
    %v3955 = vld [vmem:[#allocation31 + $0x1b8] sm:$0xff]
    %v3956 = vld [vmem:[#allocation31 + $0x1c0] sm:$0xff]
    %v3957 = vld [vmem:[#allocation31 + $0x1c8] sm:$0xff]
    %v3958 = vld [vmem:[#allocation31 + $0x1d0] sm:$0xff]
    %v3959 = vld [vmem:[#allocation31 + $0x1d8] sm:$0xff]
    %v3960 = vld [vmem:[#allocation31 + $0x1e0] sm:$0xff]
    %v3961 = vld [vmem:[#allocation31 + $0x1e8] sm:$0xff]
    %v3962 = vld [vmem:[#allocation31 + $0x1f0] sm:$0xff]
    %v3963 = vld [vmem:[#allocation31 + $0x1f8] sm:$0xff]
    %v3964 = vld [vmem:[#allocation31 + $0x200] sm:$0xff]
    %v3965 = vld [vmem:[#allocation31 + $0x208] sm:$0xff]
    %v3966 = vld [vmem:[#allocation31 + $0x210] sm:$0xff]
    %v3967 = vld [vmem:[#allocation31 + $0x218] sm:$0xff]
    %v3968 = vld [vmem:[#allocation31 + $0x220] sm:$0xff]
    %v3969 = vld [vmem:[#allocation31 + $0x228] sm:$0xff]
    %v3970 = vld [vmem:[#allocation31 + $0x230] sm:$0xff]
    %v3971 = vld [vmem:[#allocation31 + $0x238] sm:$0xff]
    %v3972 = vld [vmem:[#allocation31 + $0x240] sm:$0xff]
    %v3973 = vld [vmem:[#allocation31 + $0x248] sm:$0xff]
    %v3974 = vld [vmem:[#allocation31 + $0x250] sm:$0xff]
    %v3975 = vld [vmem:[#allocation31 + $0x258] sm:$0xff]
    %v3976 = vld [vmem:[#allocation31 + $0x260] sm:$0xff]
    %v3977 = vld [vmem:[#allocation31 + $0x268] sm:$0xff]
    %v3978 = vld [vmem:[#allocation31 + $0x270] sm:$0xff]
    %v3979 = vld [vmem:[#allocation31 + $0x278] sm:$0xff]
    %v3980 = vld [vmem:[#allocation31 + $0x280] sm:$0xff]
    %v3981 = vld [vmem:[#allocation31 + $0x288] sm:$0xff]
    %v3982 = vld [vmem:[#allocation31 + $0x290] sm:$0xff]
    %v3983 = vld [vmem:[#allocation31 + $0x298] sm:$0xff]
    %v3984 = vld [vmem:[#allocation31 + $0x2a0] sm:$0xff]
    %v3985 = vld [vmem:[#allocation31 + $0x2a8] sm:$0xff]
    %v3986 = vld [vmem:[#allocation31 + $0x2b0] sm:$0xff]
    %v3987 = vld [vmem:[#allocation31 + $0x2b8] sm:$0xff]
    %v3988 = vld [vmem:[#allocation31 + $0x2c0] sm:$0xff]
    %v3989 = vld [vmem:[#allocation31 + $0x2c8] sm:$0xff]
    %v3990 = vld [vmem:[#allocation31 + $0x2d0] sm:$0xff]
    %v3991 = vld [vmem:[#allocation31 + $0x2d8] sm:$0xff]
    %v3992 = vld [vmem:[#allocation31 + $0x2e0] sm:$0xff]
    %v3993 = vld [vmem:[#allocation31 + $0x2e8] sm:$0xff]
    %v3994 = vld [vmem:[#allocation31 + $0x2f0] sm:$0xff]
    %v3995 = vld [vmem:[#allocation31 + $0x2f8] sm:$0xff]
    %v3996 = vld [vmem:[#allocation31 + $0x300] sm:$0xff]
    %v3997 = vld [vmem:[#allocation31 + $0x308] sm:$0xff]
    %v3998 = vld [vmem:[#allocation31 + $0x310] sm:$0xff]
    %v3999 = vld [vmem:[#allocation31 + $0x318] sm:$0xff]
    %v4000 = vld [vmem:[#allocation31 + $0x320] sm:$0xff]
    %v4001 = vld [vmem:[#allocation31 + $0x328] sm:$0xff]
    %v4002 = vld [vmem:[#allocation31 + $0x330] sm:$0xff]
    %v4003 = vld [vmem:[#allocation31 + $0x338] sm:$0xff]
    %v4004 = vld [vmem:[#allocation31 + $0x340] sm:$0xff]
    %v4005 = vld [vmem:[#allocation31 + $0x348] sm:$0xff]
    %v4006 = vld [vmem:[#allocation31 + $0x350] sm:$0xff]
    %v4007 = vld [vmem:[#allocation31 + $0x358] sm:$0xff]
    %v4008 = vld [vmem:[#allocation31 + $0x360] sm:$0xff]
    %v4009 = vld [vmem:[#allocation31 + $0x368] sm:$0xff]
    %v4010 = vld [vmem:[#allocation31 + $0x370] sm:$0xff]
    %v4011 = vld [vmem:[#allocation31 + $0x378] sm:$0xff]
    %v4012 = vld [vmem:[#allocation31 + $0x380] sm:$0xff]
    %v4013 = vld [vmem:[#allocation31 + $0x388] sm:$0xff]
    %v4014 = vld [vmem:[#allocation31 + $0x390] sm:$0xff]
    %v4015 = vld [vmem:[#allocation31 + $0x398] sm:$0xff]
    %v4016 = vld [vmem:[#allocation31 + $0x3a0] sm:$0xff]
    %v4017 = vld [vmem:[#allocation31 + $0x3a8] sm:$0xff]
    %v4018 = vld [vmem:[#allocation31 + $0x3b0] sm:$0xff]
    %v4019 = vld [vmem:[#allocation31 + $0x3b8] sm:$0xff]
    %v4020 = vld [vmem:[#allocation31 + $0x3c0] sm:$0xff]
    %v4021 = vld [vmem:[#allocation31 + $0x3c8] sm:$0xff]
    %v4022 = vld [vmem:[#allocation31 + $0x3d0] sm:$0xff]
    %v4023 = vld [vmem:[#allocation31 + $0x3d8] sm:$0xff]
    %v4024 = vld [vmem:[#allocation31 + $0x3e0] sm:$0xff]
    %v4025 = vld [vmem:[#allocation31 + $0x3e8] sm:$0xff]
    %v4026 = vld [vmem:[#allocation31 + $0x3f0] sm:$0xff]
    %v4027 = vld [vmem:[#allocation31 + $0x3f8] sm:$0xff]
    %v4028 = vld [vmem:[#allocation32] sm:$0x3]
    %v4030 = vlaneseq
    %v4031 = vshrl.u32 %v4030, 7
    %v4032 = vsub.s32 0, %v4031
    %v4033 = vrot.slane %v4028, %v4032
    %v4034 = vlaneseq
    %v4035 = vshrl.u32 %v4034, 7
    %v4036 = vsub.s32 1, %v4035
    %v4037 = vrot.slane %v4028, %v4036
    %4040 = vmatprep.subr.mxu0 %v3901
    %4041 = vmatpush1.msra.mxu0 %v3900
    %4042 = vmatprep.subr.mxu0 %v3903
    %4043 = vmatpush1.msra.mxu0 %v3902
    %4044 = vmatprep.subr.mxu0 %v3905
    %4045 = vmatpush1.msra.mxu0 %v3904
    %4046 = vmatprep.subr.mxu0 %v3907
    %4047 = vmatpush1.msra.mxu0 %v3906
    %4048 = vmatprep.subr.mxu0 %v3909
    %4049 = vmatpush1.msra.mxu0 %v3908
    %4050 = vmatprep.subr.mxu0 %v3911
    %4051 = vmatpush1.msra.mxu0 %v3910
    %4052 = vmatprep.subr.mxu0 %v3913
    %4053 = vmatpush1.msra.mxu0 %v3912
    %4054 = vmatprep.subr.mxu0 %v3915
    %4055 = vmatpush1.msra.mxu0 %v3914
    %4056 = vmatprep.subr.mxu0 %v3917
    %4057 = vmatpush1.msra.mxu0 %v3916
    %4058 = vmatprep.subr.mxu0 %v3919
    %4059 = vmatpush1.msra.mxu0 %v3918
    %4060 = vmatprep.subr.mxu0 %v3921
    %4061 = vmatpush1.msra.mxu0 %v3920
    %4062 = vmatprep.subr.mxu0 %v3923
    %4063 = vmatpush1.msra.mxu0 %v3922
    %4064 = vmatprep.subr.mxu0 %v3925
    %4065 = vmatpush1.msra.mxu0 %v3924
    %4066 = vmatprep.subr.mxu0 %v3927
    %4067 = vmatpush1.msra.mxu0 %v3926
    %4068 = vmatprep.subr.mxu0 %v3929
    %4069 = vmatpush1.msra.mxu0 %v3928
    %4070 = vmatprep.subr.mxu0 %v3931
    %4071 = vmatpush1.msra.mxu0 %v3930
    %4072 = vmatprep.subr.mxu0 %v3933
    %4073 = vmatpush1.msra.mxu0 %v3932
    %4074 = vmatprep.subr.mxu0 %v3935
    %4075 = vmatpush1.msra.mxu0 %v3934
    %4076 = vmatprep.subr.mxu0 %v3937
    %4077 = vmatpush1.msra.mxu0 %v3936
    %4078 = vmatprep.subr.mxu0 %v3939
    %4079 = vmatpush1.msra.mxu0 %v3938
    %4080 = vmatprep.subr.mxu0 %v3941
    %4081 = vmatpush1.msra.mxu0 %v3940
    %4082 = vmatprep.subr.mxu0 %v3943
    %4083 = vmatpush1.msra.mxu0 %v3942
    %4084 = vmatprep.subr.mxu0 %v3945
    %4085 = vmatpush1.msra.mxu0 %v3944
    %4086 = vmatprep.subr.mxu0 %v3947
    %4087 = vmatpush1.msra.mxu0 %v3946
    %4088 = vmatprep.subr.mxu0 %v3949
    %4089 = vmatpush1.msra.mxu0 %v3948
    %4090 = vmatprep.subr.mxu0 %v3951
    %4091 = vmatpush1.msra.mxu0 %v3950
    %4092 = vmatprep.subr.mxu0 %v3953
    %4093 = vmatpush1.msra.mxu0 %v3952
    %4094 = vmatprep.subr.mxu0 %v3955
    %4095 = vmatpush1.msra.mxu0 %v3954
    %4096 = vmatprep.subr.mxu0 %v3957
    %4097 = vmatpush1.msra.mxu0 %v3956
    %4098 = vmatprep.subr.mxu0 %v3959
    %4099 = vmatpush1.msra.mxu0 %v3958
    %4100 = vmatprep.subr.mxu0 %v3961
    %4101 = vmatpush1.msra.mxu0 %v3960
    %4102 = vmatprep.subr.mxu0 %v3963
    %4103 = vmatpush1.msra.mxu0 %v3962
    %4104 = vmatprep.mubr.f32.mxu0 %v3897
    %4105 = vmatmul.mubr.f32.gmra.mrb[0].mxu0 %v3896
    %v4106 = vpop.f32.mrb[0].mxu0
    %v4107 = vadd.f32 %v4033, %v4106
    %v4108 = vpop.f32.mrb[0].mxu0
    %v4109 = vadd.f32 %v4037, %v4108
    %4110 = vdwg.mxu0
    %4111 = vmatprep.subr.mxu0 %v3965
    %4112 = vmatpush1.msra.mxu0 %v3964
    %4113 = vmatprep.subr.mxu0 %v3967
    %4114 = vmatpush1.msra.mxu0 %v3966
    %4115 = vmatprep.subr.mxu0 %v3969
    %4116 = vmatpush1.msra.mxu0 %v3968
    %4117 = vmatprep.subr.mxu0 %v3971
    %4118 = vmatpush1.msra.mxu0 %v3970
    %4119 = vmatprep.subr.mxu0 %v3973
    %4120 = vmatpush1.msra.mxu0 %v3972
    %4121 = vmatprep.subr.mxu0 %v3975
    %4122 = vmatpush1.msra.mxu0 %v3974
    %4123 = vmatprep.subr.mxu0 %v3977
    %4124 = vmatpush1.msra.mxu0 %v3976
    %4125 = vmatprep.subr.mxu0 %v3979
    %4126 = vmatpush1.msra.mxu0 %v3978
    %4127 = vmatprep.subr.mxu0 %v3981
    %4128 = vmatpush1.msra.mxu0 %v3980
    %4129 = vmatprep.subr.mxu0 %v3983
    %4130 = vmatpush1.msra.mxu0 %v3982
    %4131 = vmatprep.subr.mxu0 %v3985
    %4132 = vmatpush1.msra.mxu0 %v3984
    %4133 = vmatprep.subr.mxu0 %v3987
    %4134 = vmatpush1.msra.mxu0 %v3986
    %4135 = vmatprep.subr.mxu0 %v3989
    %4136 = vmatpush1.msra.mxu0 %v3988
    %4137 = vmatprep.subr.mxu0 %v3991
    %4138 = vmatpush1.msra.mxu0 %v3990
    %4139 = vmatprep.subr.mxu0 %v3993
    %4140 = vmatpush1.msra.mxu0 %v3992
    %4141 = vmatprep.subr.mxu0 %v3995
    %4142 = vmatpush1.msra.mxu0 %v3994
    %4143 = vmatprep.subr.mxu0 %v3997
    %4144 = vmatpush1.msra.mxu0 %v3996
    %4145 = vmatprep.subr.mxu0 %v3999
    %4146 = vmatpush1.msra.mxu0 %v3998
    %4147 = vmatprep.subr.mxu0 %v4001
    %4148 = vmatpush1.msra.mxu0 %v4000
    %4149 = vmatprep.subr.mxu0 %v4003
    %4150 = vmatpush1.msra.mxu0 %v4002
    %4151 = vmatprep.subr.mxu0 %v4005
    %4152 = vmatpush1.msra.mxu0 %v4004
    %4153 = vmatprep.subr.mxu0 %v4007
    %4154 = vmatpush1.msra.mxu0 %v4006
    %4155 = vmatprep.subr.mxu0 %v4009
    %4156 = vmatpush1.msra.mxu0 %v4008
    %4157 = vmatprep.subr.mxu0 %v4011
    %4158 = vmatpush1.msra.mxu0 %v4010
    %4159 = vmatprep.subr.mxu0 %v4013
    %4160 = vmatpush1.msra.mxu0 %v4012
    %4161 = vmatprep.subr.mxu0 %v4015
    %4162 = vmatpush1.msra.mxu0 %v4014
    %4163 = vmatprep.subr.mxu0 %v4017
    %4164 = vmatpush1.msra.mxu0 %v4016
    %4165 = vmatprep.subr.mxu0 %v4019
    %4166 = vmatpush1.msra.mxu0 %v4018
    %4167 = vmatprep.subr.mxu0 %v4021
    %4168 = vmatpush1.msra.mxu0 %v4020
    %4169 = vmatprep.subr.mxu0 %v4023
    %4170 = vmatpush1.msra.mxu0 %v4022
    %4171 = vmatprep.subr.mxu0 %v4025
    %4172 = vmatpush1.msra.mxu0 %v4024
    %4173 = vmatprep.subr.mxu0 %v4027
    %4174 = vmatpush1.msra.mxu0 %v4026
    %4175 = vmatprep.mubr.f32.mxu0 %v3899
    %4176 = vmatmul.mubr.f32.gmra.mrb[0].mxu0 %v3898
    %v4177 = vpop.f32.mrb[0].mxu0
    %v4178 = vadd.f32 %v4107, %v4177
    %v4179 = vpop.f32.mrb[0].mxu0
    %v4180 = vadd.f32 %v4109, %v4179
    %4181 = vdwg.mxu0
    %v4182 = vmax.f32 %v4178, 0.0
    %v4183 = vmax.f32 %v4180, 0.0
    %v4184 = vld [vmem:[#allocation3] sm:$0x3]
    %v4185 = vld [vmem:[#allocation34] ss:$2 sm:$0x3f]
    %s4186 = scalar_lea.vmem [#allocation34], 1
    %v4187 = vld [vmem:[%s4186] ss:$2 sm:$0x3f]
    %v4188 = vld [vmem:[#allocation35] ss:$2 sm:$0x3f]
    %4190 = vset.pattern.permute.xlu0 0
    %4191 = vperm.xlu0 %4190, %v4184
    %v4192 = vpop.permute.xlu0 %4191
    %v4195 = vlaneseq
    %v4196 = vshrl.u32 %v4195, 7
    %v4197 = vsub.s32 0, %v4196
    %v4198 = vrot.slane %v4188, %v4197
    %v4199 = vlaneseq
    %v4200 = vshrl.u32 %v4199, 7
    %v4201 = vsub.s32 1, %v4200
    %v4202 = vrot.slane %v4188, %v4201
    %v4203 = vlaneseq
    %v4204 = vshrl.u32 %v4203, 7
    %v4205 = vsub.s32 2, %v4204
    %v4206 = vrot.slane %v4188, %v4205
    %v4207 = vlaneseq
    %v4208 = vshrl.u32 %v4207, 7
    %v4209 = vsub.s32 3, %v4208
    %v4210 = vrot.slane %v4188, %v4209
    %v4211 = vlaneseq
    %v4212 = vshrl.u32 %v4211, 7
    %v4213 = vsub.s32 4, %v4212
    %v4214 = vrot.slane %v4188, %v4213
    %v4215 = vlaneseq
    %v4216 = vshrl.u32 %v4215, 7
    %v4217 = vsub.s32 5, %v4216
    %v4218 = vrot.slane %v4188, %v4217
    %v4225 = vmul.f32 %v4192, %v4198
    %v4226 = vmul.f32 %v4192, %v4202
    %v4227 = vmul.f32 %v4192, %v4206
    %v4228 = vmul.f32 %v4192, %v4210
    %v4229 = vmul.f32 %v4192, %v4214
    %v4230 = vmul.f32 %v4192, %v4218
    %s4231 = scalar_lea.vmem [#allocation35], 1
    %v4232 = vld [vmem:[%s4231] ss:$2 sm:$0x3f]
    %4233 = vset.pattern.permute.xlu0 1
    %4234 = vperm.xlu0 %4233, %v4184
    %v4235 = vpop.permute.xlu0 %4234
    %v4238 = vlaneseq
    %v4239 = vshrl.u32 %v4238, 7
    %v4240 = vsub.s32 0, %v4239
    %v4241 = vrot.slane %v4232, %v4240
    %v4242 = vlaneseq
    %v4243 = vshrl.u32 %v4242, 7
    %v4244 = vsub.s32 1, %v4243
    %v4245 = vrot.slane %v4232, %v4244
    %v4246 = vlaneseq
    %v4247 = vshrl.u32 %v4246, 7
    %v4248 = vsub.s32 2, %v4247
    %v4249 = vrot.slane %v4232, %v4248
    %v4250 = vlaneseq
    %v4251 = vshrl.u32 %v4250, 7
    %v4252 = vsub.s32 3, %v4251
    %v4253 = vrot.slane %v4232, %v4252
    %v4254 = vlaneseq
    %v4255 = vshrl.u32 %v4254, 7
    %v4256 = vsub.s32 4, %v4255
    %v4257 = vrot.slane %v4232, %v4256
    %v4258 = vlaneseq
    %v4259 = vshrl.u32 %v4258, 7
    %v4260 = vsub.s32 5, %v4259
    %v4261 = vrot.slane %v4232, %v4260
    %v4268 = vmul.f32 %v4235, %v4241
    %v4269 = vmul.f32 %v4235, %v4245
    %v4270 = vmul.f32 %v4235, %v4249
    %v4271 = vmul.f32 %v4235, %v4253
    %v4272 = vmul.f32 %v4235, %v4257
    %v4273 = vmul.f32 %v4235, %v4261
    %v4274 = vadd.f32 %v4225, %v4268
    %v4275 = vadd.f32 %v4226, %v4269
    %v4276 = vadd.f32 %v4227, %v4270
    %v4277 = vadd.f32 %v4228, %v4271
    %v4278 = vadd.f32 %v4229, %v4272
    %v4279 = vadd.f32 %v4230, %v4273
    %v4280 = vld [vmem:[%s55] sm:$0x3f]
    %v4282 = vlaneseq
    %v4283 = vshrl.u32 %v4282, 7
    %v4284 = vsub.s32 0, %v4283
    %v4285 = vrot.slane %v4280, %v4284
    %v4286 = vlaneseq
    %v4287 = vshrl.u32 %v4286, 7
    %v4288 = vsub.s32 1, %v4287
    %v4289 = vrot.slane %v4280, %v4288
    %v4290 = vlaneseq
    %v4291 = vshrl.u32 %v4290, 7
    %v4292 = vsub.s32 2, %v4291
    %v4293 = vrot.slane %v4280, %v4292
    %v4294 = vlaneseq
    %v4295 = vshrl.u32 %v4294, 7
    %v4296 = vsub.s32 3, %v4295
    %v4297 = vrot.slane %v4280, %v4296
    %v4298 = vlaneseq
    %v4299 = vshrl.u32 %v4298, 7
    %v4300 = vsub.s32 4, %v4299
    %v4301 = vrot.slane %v4280, %v4300
    %v4302 = vlaneseq
    %v4303 = vshrl.u32 %v4302, 7
    %v4304 = vsub.s32 5, %v4303
    %v4305 = vrot.slane %v4280, %v4304
    %v4312 = vadd.f32 %v4274, %v4285
    %v4313 = vadd.f32 %v4275, %v4289
    %v4314 = vadd.f32 %v4276, %v4293
    %v4315 = vadd.f32 %v4277, %v4297
    %v4316 = vadd.f32 %v4278, %v4301
    %v4317 = vadd.f32 %v4279, %v4305
    %v4318 = vld [vmem:[#allocation37] sm:$0xff]
    %v4319 = vld [vmem:[#allocation37 + $0x8] sm:$0xff]
    %v4320 = vld [vmem:[#allocation37 + $0x10] sm:$0xff]
    %v4321 = vld [vmem:[#allocation37 + $0x18] sm:$0xff]
    %v4322 = vld [vmem:[#allocation37 + $0x20] sm:$0xff]
    %v4323 = vld [vmem:[#allocation37 + $0x28] sm:$0xff]
    %v4324 = vld [vmem:[#allocation37 + $0x30] sm:$0xff]
    %v4325 = vld [vmem:[#allocation37 + $0x38] sm:$0xff]
    %v4326 = vld [vmem:[#allocation37 + $0x40] sm:$0xff]
    %v4327 = vld [vmem:[#allocation37 + $0x48] sm:$0xff]
    %v4328 = vld [vmem:[#allocation37 + $0x50] sm:$0xff]
    %v4329 = vld [vmem:[#allocation37 + $0x58] sm:$0xff]
    %v4330 = vld [vmem:[#allocation37 + $0x60] sm:$0xff]
    %v4331 = vld [vmem:[#allocation37 + $0x68] sm:$0xff]
    %v4332 = vld [vmem:[#allocation37 + $0x70] sm:$0xff]
    %v4333 = vld [vmem:[#allocation37 + $0x78] sm:$0xff]
    %v4334 = vld [vmem:[#allocation37 + $0x80] sm:$0xff]
    %v4335 = vld [vmem:[#allocation37 + $0x88] sm:$0xff]
    %v4336 = vld [vmem:[#allocation37 + $0x90] sm:$0xff]
    %v4337 = vld [vmem:[#allocation37 + $0x98] sm:$0xff]
    %v4338 = vld [vmem:[#allocation37 + $0xa0] sm:$0xff]
    %v4339 = vld [vmem:[#allocation37 + $0xa8] sm:$0xff]
    %v4340 = vld [vmem:[#allocation37 + $0xb0] sm:$0xff]
    %v4341 = vld [vmem:[#allocation37 + $0xb8] sm:$0xff]
    %v4342 = vld [vmem:[#allocation37 + $0xc0] sm:$0xff]
    %v4343 = vld [vmem:[#allocation37 + $0xc8] sm:$0xff]
    %v4344 = vld [vmem:[#allocation37 + $0xd0] sm:$0xff]
    %v4345 = vld [vmem:[#allocation37 + $0xd8] sm:$0xff]
    %v4346 = vld [vmem:[#allocation37 + $0xe0] sm:$0xff]
    %v4347 = vld [vmem:[#allocation37 + $0xe8] sm:$0xff]
    %v4348 = vld [vmem:[#allocation37 + $0xf0] sm:$0xff]
    %v4349 = vld [vmem:[#allocation37 + $0xf8] sm:$0xff]
    %v4350 = vld [vmem:[#allocation37 + $0x100] sm:$0xff]
    %v4351 = vld [vmem:[#allocation37 + $0x108] sm:$0xff]
    %v4352 = vld [vmem:[#allocation37 + $0x110] sm:$0xff]
    %v4353 = vld [vmem:[#allocation37 + $0x118] sm:$0xff]
    %v4354 = vld [vmem:[#allocation37 + $0x120] sm:$0xff]
    %v4355 = vld [vmem:[#allocation37 + $0x128] sm:$0xff]
    %v4356 = vld [vmem:[#allocation37 + $0x130] sm:$0xff]
    %v4357 = vld [vmem:[#allocation37 + $0x138] sm:$0xff]
    %v4358 = vld [vmem:[#allocation37 + $0x140] sm:$0xff]
    %v4359 = vld [vmem:[#allocation37 + $0x148] sm:$0xff]
    %v4360 = vld [vmem:[#allocation37 + $0x150] sm:$0xff]
    %v4361 = vld [vmem:[#allocation37 + $0x158] sm:$0xff]
    %v4362 = vld [vmem:[#allocation37 + $0x160] sm:$0xff]
    %v4363 = vld [vmem:[#allocation37 + $0x168] sm:$0xff]
    %v4364 = vld [vmem:[#allocation37 + $0x170] sm:$0xff]
    %v4365 = vld [vmem:[#allocation37 + $0x178] sm:$0xff]
    %v4366 = vld [vmem:[#allocation37 + $0x180] sm:$0xff]
    %v4367 = vld [vmem:[#allocation37 + $0x188] sm:$0xff]
    %v4368 = vld [vmem:[#allocation37 + $0x190] sm:$0xff]
    %v4369 = vld [vmem:[#allocation37 + $0x198] sm:$0xff]
    %v4370 = vld [vmem:[#allocation37 + $0x1a0] sm:$0xff]
    %v4371 = vld [vmem:[#allocation37 + $0x1a8] sm:$0xff]
    %v4372 = vld [vmem:[#allocation37 + $0x1b0] sm:$0xff]
    %v4373 = vld [vmem:[#allocation37 + $0x1b8] sm:$0xff]
    %v4374 = vld [vmem:[#allocation37 + $0x1c0] sm:$0xff]
    %v4375 = vld [vmem:[#allocation37 + $0x1c8] sm:$0xff]
    %v4376 = vld [vmem:[#allocation37 + $0x1d0] sm:$0xff]
    %v4377 = vld [vmem:[#allocation37 + $0x1d8] sm:$0xff]
    %v4378 = vld [vmem:[#allocation37 + $0x1e0] sm:$0xff]
    %v4379 = vld [vmem:[#allocation37 + $0x1e8] sm:$0xff]
    %v4380 = vld [vmem:[#allocation37 + $0x1f0] sm:$0xff]
    %v4381 = vld [vmem:[#allocation37 + $0x1f8] sm:$0xff]
    %v4382 = vld [vmem:[#allocation37 + $0x200] sm:$0xff]
    %v4383 = vld [vmem:[#allocation37 + $0x208] sm:$0xff]
    %v4384 = vld [vmem:[#allocation37 + $0x210] sm:$0xff]
    %v4385 = vld [vmem:[#allocation37 + $0x218] sm:$0xff]
    %v4386 = vld [vmem:[#allocation37 + $0x220] sm:$0xff]
    %v4387 = vld [vmem:[#allocation37 + $0x228] sm:$0xff]
    %v4388 = vld [vmem:[#allocation37 + $0x230] sm:$0xff]
    %v4389 = vld [vmem:[#allocation37 + $0x238] sm:$0xff]
    %v4390 = vld [vmem:[#allocation37 + $0x240] sm:$0xff]
    %v4391 = vld [vmem:[#allocation37 + $0x248] sm:$0xff]
    %v4392 = vld [vmem:[#allocation37 + $0x250] sm:$0xff]
    %v4393 = vld [vmem:[#allocation37 + $0x258] sm:$0xff]
    %v4394 = vld [vmem:[#allocation37 + $0x260] sm:$0xff]
    %v4395 = vld [vmem:[#allocation37 + $0x268] sm:$0xff]
    %v4396 = vld [vmem:[#allocation37 + $0x270] sm:$0xff]
    %v4397 = vld [vmem:[#allocation37 + $0x278] sm:$0xff]
    %v4398 = vld [vmem:[#allocation37 + $0x280] sm:$0xff]
    %v4399 = vld [vmem:[#allocation37 + $0x288] sm:$0xff]
    %v4400 = vld [vmem:[#allocation37 + $0x290] sm:$0xff]
    %v4401 = vld [vmem:[#allocation37 + $0x298] sm:$0xff]
    %v4402 = vld [vmem:[#allocation37 + $0x2a0] sm:$0xff]
    %v4403 = vld [vmem:[#allocation37 + $0x2a8] sm:$0xff]
    %v4404 = vld [vmem:[#allocation37 + $0x2b0] sm:$0xff]
    %v4405 = vld [vmem:[#allocation37 + $0x2b8] sm:$0xff]
    %v4406 = vld [vmem:[#allocation37 + $0x2c0] sm:$0xff]
    %v4407 = vld [vmem:[#allocation37 + $0x2c8] sm:$0xff]
    %v4408 = vld [vmem:[#allocation37 + $0x2d0] sm:$0xff]
    %v4409 = vld [vmem:[#allocation37 + $0x2d8] sm:$0xff]
    %v4410 = vld [vmem:[#allocation37 + $0x2e0] sm:$0xff]
    %v4411 = vld [vmem:[#allocation37 + $0x2e8] sm:$0xff]
    %v4412 = vld [vmem:[#allocation37 + $0x2f0] sm:$0xff]
    %v4413 = vld [vmem:[#allocation37 + $0x2f8] sm:$0xff]
    %v4414 = vld [vmem:[#allocation37 + $0x300] sm:$0xff]
    %v4415 = vld [vmem:[#allocation37 + $0x308] sm:$0xff]
    %v4416 = vld [vmem:[#allocation37 + $0x310] sm:$0xff]
    %v4417 = vld [vmem:[#allocation37 + $0x318] sm:$0xff]
    %v4418 = vld [vmem:[#allocation37 + $0x320] sm:$0xff]
    %v4419 = vld [vmem:[#allocation37 + $0x328] sm:$0xff]
    %v4420 = vld [vmem:[#allocation37 + $0x330] sm:$0xff]
    %v4421 = vld [vmem:[#allocation37 + $0x338] sm:$0xff]
    %v4422 = vld [vmem:[#allocation37 + $0x340] sm:$0xff]
    %v4423 = vld [vmem:[#allocation37 + $0x348] sm:$0xff]
    %v4424 = vld [vmem:[#allocation37 + $0x350] sm:$0xff]
    %v4425 = vld [vmem:[#allocation37 + $0x358] sm:$0xff]
    %v4426 = vld [vmem:[#allocation37 + $0x360] sm:$0xff]
    %v4427 = vld [vmem:[#allocation37 + $0x368] sm:$0xff]
    %v4428 = vld [vmem:[#allocation37 + $0x370] sm:$0xff]
    %v4429 = vld [vmem:[#allocation37 + $0x378] sm:$0xff]
    %v4430 = vld [vmem:[#allocation37 + $0x380] sm:$0xff]
    %v4431 = vld [vmem:[#allocation37 + $0x388] sm:$0xff]
    %v4432 = vld [vmem:[#allocation37 + $0x390] sm:$0xff]
    %v4433 = vld [vmem:[#allocation37 + $0x398] sm:$0xff]
    %v4434 = vld [vmem:[#allocation37 + $0x3a0] sm:$0xff]
    %v4435 = vld [vmem:[#allocation37 + $0x3a8] sm:$0xff]
    %v4436 = vld [vmem:[#allocation37 + $0x3b0] sm:$0xff]
    %v4437 = vld [vmem:[#allocation37 + $0x3b8] sm:$0xff]
    %v4438 = vld [vmem:[#allocation37 + $0x3c0] sm:$0xff]
    %v4439 = vld [vmem:[#allocation37 + $0x3c8] sm:$0xff]
    %v4440 = vld [vmem:[#allocation37 + $0x3d0] sm:$0xff]
    %v4441 = vld [vmem:[#allocation37 + $0x3d8] sm:$0xff]
    %v4442 = vld [vmem:[#allocation37 + $0x3e0] sm:$0xff]
    %v4443 = vld [vmem:[#allocation37 + $0x3e8] sm:$0xff]
    %v4444 = vld [vmem:[#allocation37 + $0x3f0] sm:$0xff]
    %v4445 = vld [vmem:[#allocation37 + $0x3f8] sm:$0xff]
    %v4446 = vld [vmem:[#allocation37 + $0x400] sm:$0xff]
    %v4447 = vld [vmem:[#allocation37 + $0x408] sm:$0xff]
    %v4448 = vld [vmem:[#allocation37 + $0x410] sm:$0xff]
    %v4449 = vld [vmem:[#allocation37 + $0x418] sm:$0xff]
    %v4450 = vld [vmem:[#allocation37 + $0x420] sm:$0xff]
    %v4451 = vld [vmem:[#allocation37 + $0x428] sm:$0xff]
    %v4452 = vld [vmem:[#allocation37 + $0x430] sm:$0xff]
    %v4453 = vld [vmem:[#allocation37 + $0x438] sm:$0xff]
    %v4454 = vld [vmem:[#allocation37 + $0x440] sm:$0xff]
    %v4455 = vld [vmem:[#allocation37 + $0x448] sm:$0xff]
    %v4456 = vld [vmem:[#allocation37 + $0x450] sm:$0xff]
    %v4457 = vld [vmem:[#allocation37 + $0x458] sm:$0xff]
    %v4458 = vld [vmem:[#allocation37 + $0x460] sm:$0xff]
    %v4459 = vld [vmem:[#allocation37 + $0x468] sm:$0xff]
    %v4460 = vld [vmem:[#allocation37 + $0x470] sm:$0xff]
    %v4461 = vld [vmem:[#allocation37 + $0x478] sm:$0xff]
    %v4462 = vld [vmem:[#allocation37 + $0x480] sm:$0xff]
    %v4463 = vld [vmem:[#allocation37 + $0x488] sm:$0xff]
    %v4464 = vld [vmem:[#allocation37 + $0x490] sm:$0xff]
    %v4465 = vld [vmem:[#allocation37 + $0x498] sm:$0xff]
    %v4466 = vld [vmem:[#allocation37 + $0x4a0] sm:$0xff]
    %v4467 = vld [vmem:[#allocation37 + $0x4a8] sm:$0xff]
    %v4468 = vld [vmem:[#allocation37 + $0x4b0] sm:$0xff]
    %v4469 = vld [vmem:[#allocation37 + $0x4b8] sm:$0xff]
    %v4470 = vld [vmem:[#allocation37 + $0x4c0] sm:$0xff]
    %v4471 = vld [vmem:[#allocation37 + $0x4c8] sm:$0xff]
    %v4472 = vld [vmem:[#allocation37 + $0x4d0] sm:$0xff]
    %v4473 = vld [vmem:[#allocation37 + $0x4d8] sm:$0xff]
    %v4474 = vld [vmem:[#allocation37 + $0x4e0] sm:$0xff]
    %v4475 = vld [vmem:[#allocation37 + $0x4e8] sm:$0xff]
    %v4476 = vld [vmem:[#allocation37 + $0x4f0] sm:$0xff]
    %v4477 = vld [vmem:[#allocation37 + $0x4f8] sm:$0xff]
    %v4478 = vld [vmem:[#allocation37 + $0x500] sm:$0xff]
    %v4479 = vld [vmem:[#allocation37 + $0x508] sm:$0xff]
    %v4480 = vld [vmem:[#allocation37 + $0x510] sm:$0xff]
    %v4481 = vld [vmem:[#allocation37 + $0x518] sm:$0xff]
    %v4482 = vld [vmem:[#allocation37 + $0x520] sm:$0xff]
    %v4483 = vld [vmem:[#allocation37 + $0x528] sm:$0xff]
    %v4484 = vld [vmem:[#allocation37 + $0x530] sm:$0xff]
    %v4485 = vld [vmem:[#allocation37 + $0x538] sm:$0xff]
    %v4486 = vld [vmem:[#allocation37 + $0x540] sm:$0xff]
    %v4487 = vld [vmem:[#allocation37 + $0x548] sm:$0xff]
    %v4488 = vld [vmem:[#allocation37 + $0x550] sm:$0xff]
    %v4489 = vld [vmem:[#allocation37 + $0x558] sm:$0xff]
    %v4490 = vld [vmem:[#allocation37 + $0x560] sm:$0xff]
    %v4491 = vld [vmem:[#allocation37 + $0x568] sm:$0xff]
    %v4492 = vld [vmem:[#allocation37 + $0x570] sm:$0xff]
    %v4493 = vld [vmem:[#allocation37 + $0x578] sm:$0xff]
    %v4494 = vld [vmem:[#allocation37 + $0x580] sm:$0xff]
    %v4495 = vld [vmem:[#allocation37 + $0x588] sm:$0xff]
    %v4496 = vld [vmem:[#allocation37 + $0x590] sm:$0xff]
    %v4497 = vld [vmem:[#allocation37 + $0x598] sm:$0xff]
    %v4498 = vld [vmem:[#allocation37 + $0x5a0] sm:$0xff]
    %v4499 = vld [vmem:[#allocation37 + $0x5a8] sm:$0xff]
    %v4500 = vld [vmem:[#allocation37 + $0x5b0] sm:$0xff]
    %v4501 = vld [vmem:[#allocation37 + $0x5b8] sm:$0xff]
    %v4502 = vld [vmem:[#allocation37 + $0x5c0] sm:$0xff]
    %v4503 = vld [vmem:[#allocation37 + $0x5c8] sm:$0xff]
    %v4504 = vld [vmem:[#allocation37 + $0x5d0] sm:$0xff]
    %v4505 = vld [vmem:[#allocation37 + $0x5d8] sm:$0xff]
    %v4506 = vld [vmem:[#allocation37 + $0x5e0] sm:$0xff]
    %v4507 = vld [vmem:[#allocation37 + $0x5e8] sm:$0xff]
    %v4508 = vld [vmem:[#allocation37 + $0x5f0] sm:$0xff]
    %v4509 = vld [vmem:[#allocation37 + $0x5f8] sm:$0xff]
    %v4510 = vld [vmem:[%s57] sm:$0x3f]
    %v4511 = vld [vmem:[#allocation38] ss:$2 sm:$0x3]
    %s4512 = scalar_lea.vmem [#allocation38], 1
    %v4513 = vld [vmem:[%s4512] ss:$2 sm:$0x3]
    %v4514 = vld [vmem:[#allocation40] sm:$0x1]
    %v4516 = vlaneseq
    %v4517 = vshrl.u32 %v4516, 7
    %v4518 = vsub.s32 0, %v4517
    %v4519 = vrot.slane %v4185, %v4518
    %v4520 = vlaneseq
    %v4521 = vshrl.u32 %v4520, 7
    %v4522 = vsub.s32 1, %v4521
    %v4523 = vrot.slane %v4185, %v4522
    %v4524 = vlaneseq
    %v4525 = vshrl.u32 %v4524, 7
    %v4526 = vsub.s32 2, %v4525
    %v4527 = vrot.slane %v4185, %v4526
    %v4528 = vlaneseq
    %v4529 = vshrl.u32 %v4528, 7
    %v4530 = vsub.s32 3, %v4529
    %v4531 = vrot.slane %v4185, %v4530
    %v4532 = vlaneseq
    %v4533 = vshrl.u32 %v4532, 7
    %v4534 = vsub.s32 4, %v4533
    %v4535 = vrot.slane %v4185, %v4534
    %v4536 = vlaneseq
    %v4537 = vshrl.u32 %v4536, 7
    %v4538 = vsub.s32 5, %v4537
    %v4539 = vrot.slane %v4185, %v4538
    %v4546 = vmul.f32 %v4519, 0.0
    %v4547 = vmul.f32 %v4523, 0.0
    %v4548 = vmul.f32 %v4527, 0.0
    %v4549 = vmul.f32 %v4531, 0.0
    %v4550 = vmul.f32 %v4535, 0.0
    %v4551 = vmul.f32 %v4539, 0.0
    %v4553 = vlaneseq
    %v4554 = vshrl.u32 %v4553, 7
    %v4555 = vsub.s32 0, %v4554
    %v4556 = vrot.slane %v4187, %v4555
    %v4557 = vlaneseq
    %v4558 = vshrl.u32 %v4557, 7
    %v4559 = vsub.s32 1, %v4558
    %v4560 = vrot.slane %v4187, %v4559
    %v4561 = vlaneseq
    %v4562 = vshrl.u32 %v4561, 7
    %v4563 = vsub.s32 2, %v4562
    %v4564 = vrot.slane %v4187, %v4563
    %v4565 = vlaneseq
    %v4566 = vshrl.u32 %v4565, 7
    %v4567 = vsub.s32 3, %v4566
    %v4568 = vrot.slane %v4187, %v4567
    %v4569 = vlaneseq
    %v4570 = vshrl.u32 %v4569, 7
    %v4571 = vsub.s32 4, %v4570
    %v4572 = vrot.slane %v4187, %v4571
    %v4573 = vlaneseq
    %v4574 = vshrl.u32 %v4573, 7
    %v4575 = vsub.s32 5, %v4574
    %v4576 = vrot.slane %v4187, %v4575
    %v4583 = vmul.f32 %v4556, 0.0
    %v4584 = vmul.f32 %v4560, 0.0
    %v4585 = vmul.f32 %v4564, 0.0
    %v4586 = vmul.f32 %v4568, 0.0
    %v4587 = vmul.f32 %v4572, 0.0
    %v4588 = vmul.f32 %v4576, 0.0
    %v4589 = vadd.f32 %v4546, %v4583
    %v4590 = vadd.f32 %v4547, %v4584
    %v4591 = vadd.f32 %v4548, %v4585
    %v4592 = vadd.f32 %v4549, %v4586
    %v4593 = vadd.f32 %v4550, %v4587
    %v4594 = vadd.f32 %v4551, %v4588
    %v4595 = vadd.f32 %v4589, %v4312
    %v4596 = vadd.f32 %v4590, %v4313
    %v4597 = vadd.f32 %v4591, %v4314
    %v4598 = vadd.f32 %v4592, %v4315
    %v4599 = vadd.f32 %v4593, %v4316
    %v4600 = vadd.f32 %v4594, %v4317
    %v4602 = vlaneseq
    %v4603 = vshrl.u32 %v4602, 7
    %v4604 = vsub.s32 0, %v4603
    %v4605 = vrot.slane %v4510, %v4604
    %v4606 = vlaneseq
    %v4607 = vshrl.u32 %v4606, 7
    %v4608 = vsub.s32 1, %v4607
    %v4609 = vrot.slane %v4510, %v4608
    %v4610 = vlaneseq
    %v4611 = vshrl.u32 %v4610, 7
    %v4612 = vsub.s32 2, %v4611
    %v4613 = vrot.slane %v4510, %v4612
    %v4614 = vlaneseq
    %v4615 = vshrl.u32 %v4614, 7
    %v4616 = vsub.s32 3, %v4615
    %v4617 = vrot.slane %v4510, %v4616
    %v4618 = vlaneseq
    %v4619 = vshrl.u32 %v4618, 7
    %v4620 = vsub.s32 4, %v4619
    %v4621 = vrot.slane %v4510, %v4620
    %v4622 = vlaneseq
    %v4623 = vshrl.u32 %v4622, 7
    %v4624 = vsub.s32 5, %v4623
    %v4625 = vrot.slane %v4510, %v4624
    %4632 = vmatprep.subr.mxu0 %v4319
    %4633 = vmatpush1.msra.mxu0 %v4318
    %4634 = vmatprep.subr.mxu0 %v4325
    %4635 = vmatpush1.msra.mxu0 %v4324
    %4636 = vmatprep.subr.mxu0 %v4331
    %4637 = vmatpush1.msra.mxu0 %v4330
    %4638 = vmatprep.subr.mxu0 %v4337
    %4639 = vmatpush1.msra.mxu0 %v4336
    %4640 = vmatprep.subr.mxu0 %v4343
    %4641 = vmatpush1.msra.mxu0 %v4342
    %4642 = vmatprep.subr.mxu0 %v4349
    %4643 = vmatpush1.msra.mxu0 %v4348
    %4644 = vmatprep.subr.mxu0 %v4355
    %4645 = vmatpush1.msra.mxu0 %v4354
    %4646 = vmatprep.subr.mxu0 %v4361
    %4647 = vmatpush1.msra.mxu0 %v4360
    %4648 = vmatprep.subr.mxu0 %v4367
    %4649 = vmatpush1.msra.mxu0 %v4366
    %4650 = vmatprep.subr.mxu0 %v4373
    %4651 = vmatpush1.msra.mxu0 %v4372
    %4652 = vmatprep.subr.mxu0 %v4379
    %4653 = vmatpush1.msra.mxu0 %v4378
    %4654 = vmatprep.subr.mxu0 %v4385
    %4655 = vmatpush1.msra.mxu0 %v4384
    %4656 = vmatprep.subr.mxu0 %v4391
    %4657 = vmatpush1.msra.mxu0 %v4390
    %4658 = vmatprep.subr.mxu0 %v4397
    %4659 = vmatpush1.msra.mxu0 %v4396
    %4660 = vmatprep.subr.mxu0 %v4403
    %4661 = vmatpush1.msra.mxu0 %v4402
    %4662 = vmatprep.subr.mxu0 %v4409
    %4663 = vmatpush1.msra.mxu0 %v4408
    %4664 = vmatprep.subr.mxu0 %v4415
    %4665 = vmatpush1.msra.mxu0 %v4414
    %4666 = vmatprep.subr.mxu0 %v4421
    %4667 = vmatpush1.msra.mxu0 %v4420
    %4668 = vmatprep.subr.mxu0 %v4427
    %4669 = vmatpush1.msra.mxu0 %v4426
    %4670 = vmatprep.subr.mxu0 %v4433
    %4671 = vmatpush1.msra.mxu0 %v4432
    %4672 = vmatprep.subr.mxu0 %v4439
    %4673 = vmatpush1.msra.mxu0 %v4438
    %4674 = vmatprep.subr.mxu0 %v4445
    %4675 = vmatpush1.msra.mxu0 %v4444
    %4676 = vmatprep.subr.mxu0 %v4451
    %4677 = vmatpush1.msra.mxu0 %v4450
    %4678 = vmatprep.subr.mxu0 %v4457
    %4679 = vmatpush1.msra.mxu0 %v4456
    %4680 = vmatprep.subr.mxu0 %v4463
    %4681 = vmatpush1.msra.mxu0 %v4462
    %4682 = vmatprep.subr.mxu0 %v4469
    %4683 = vmatpush1.msra.mxu0 %v4468
    %4684 = vmatprep.subr.mxu0 %v4475
    %4685 = vmatpush1.msra.mxu0 %v4474
    %4686 = vmatprep.subr.mxu0 %v4481
    %4687 = vmatpush1.msra.mxu0 %v4480
    %4688 = vmatprep.subr.mxu0 %v4487
    %4689 = vmatpush1.msra.mxu0 %v4486
    %4690 = vmatprep.subr.mxu0 %v4493
    %4691 = vmatpush1.msra.mxu0 %v4492
    %4692 = vmatprep.subr.mxu0 %v4499
    %4693 = vmatpush1.msra.mxu0 %v4498
    %4694 = vmatprep.subr.mxu0 %v4505
    %4695 = vmatpush1.msra.mxu0 %v4504
    %4696 = vmatprep.mubr.f32.mxu0 %v4183
    %4697 = vmatmul.mubr.f32.gmra.mrb[0].mxu0 %v4182
    %v4698 = vpop.f32.mrb[0].mxu0
    %v4699 = vadd.f32 %v4605, %v4698
    %v4700 = vpop.f32.mrb[0].mxu0
    %v4701 = vadd.f32 %v4609, %v4700
    %4702 = vdwg.mxu0
    %4703 = vmatprep.subr.mxu0 %v4321
    %4704 = vmatpush1.msra.mxu0 %v4320
    %4705 = vmatprep.subr.mxu0 %v4327
    %4706 = vmatpush1.msra.mxu0 %v4326
    %4707 = vmatprep.subr.mxu0 %v4333
    %4708 = vmatpush1.msra.mxu0 %v4332
    %4709 = vmatprep.subr.mxu0 %v4339
    %4710 = vmatpush1.msra.mxu0 %v4338
    %4711 = vmatprep.subr.mxu0 %v4345
    %4712 = vmatpush1.msra.mxu0 %v4344
    %4713 = vmatprep.subr.mxu0 %v4351
    %4714 = vmatpush1.msra.mxu0 %v4350
    %4715 = vmatprep.subr.mxu0 %v4357
    %4716 = vmatpush1.msra.mxu0 %v4356
    %4717 = vmatprep.subr.mxu0 %v4363
    %4718 = vmatpush1.msra.mxu0 %v4362
    %4719 = vmatprep.subr.mxu0 %v4369
    %4720 = vmatpush1.msra.mxu0 %v4368
    %4721 = vmatprep.subr.mxu0 %v4375
    %4722 = vmatpush1.msra.mxu0 %v4374
    %4723 = vmatprep.subr.mxu0 %v4381
    %4724 = vmatpush1.msra.mxu0 %v4380
    %4725 = vmatprep.subr.mxu0 %v4387
    %4726 = vmatpush1.msra.mxu0 %v4386
    %4727 = vmatprep.subr.mxu0 %v4393
    %4728 = vmatpush1.msra.mxu0 %v4392
    %4729 = vmatprep.subr.mxu0 %v4399
    %4730 = vmatpush1.msra.mxu0 %v4398
    %4731 = vmatprep.subr.mxu0 %v4405
    %4732 = vmatpush1.msra.mxu0 %v4404
    %4733 = vmatprep.subr.mxu0 %v4411
    %4734 = vmatpush1.msra.mxu0 %v4410
    %4735 = vmatprep.subr.mxu0 %v4417
    %4736 = vmatpush1.msra.mxu0 %v4416
    %4737 = vmatprep.subr.mxu0 %v4423
    %4738 = vmatpush1.msra.mxu0 %v4422
    %4739 = vmatprep.subr.mxu0 %v4429
    %4740 = vmatpush1.msra.mxu0 %v4428
    %4741 = vmatprep.subr.mxu0 %v4435
    %4742 = vmatpush1.msra.mxu0 %v4434
    %4743 = vmatprep.subr.mxu0 %v4441
    %4744 = vmatpush1.msra.mxu0 %v4440
    %4745 = vmatprep.subr.mxu0 %v4447
    %4746 = vmatpush1.msra.mxu0 %v4446
    %4747 = vmatprep.subr.mxu0 %v4453
    %4748 = vmatpush1.msra.mxu0 %v4452
    %4749 = vmatprep.subr.mxu0 %v4459
    %4750 = vmatpush1.msra.mxu0 %v4458
    %4751 = vmatprep.subr.mxu0 %v4465
    %4752 = vmatpush1.msra.mxu0 %v4464
    %4753 = vmatprep.subr.mxu0 %v4471
    %4754 = vmatpush1.msra.mxu0 %v4470
    %4755 = vmatprep.subr.mxu0 %v4477
    %4756 = vmatpush1.msra.mxu0 %v4476
    %4757 = vmatprep.subr.mxu0 %v4483
    %4758 = vmatpush1.msra.mxu0 %v4482
    %4759 = vmatprep.subr.mxu0 %v4489
    %4760 = vmatpush1.msra.mxu0 %v4488
    %4761 = vmatprep.subr.mxu0 %v4495
    %4762 = vmatpush1.msra.mxu0 %v4494
    %4763 = vmatprep.subr.mxu0 %v4501
    %4764 = vmatpush1.msra.mxu0 %v4500
    %4765 = vmatprep.subr.mxu0 %v4507
    %4766 = vmatpush1.msra.mxu0 %v4506
    %4767 = vmatprep.mubr.f32.mxu0 %v4183
    %4768 = vmatmul.mubr.f32.gmra.mrb[0].mxu0 %v4182
    %v4769 = vpop.f32.mrb[0].mxu0
    %v4770 = vadd.f32 %v4613, %v4769
    %v4771 = vpop.f32.mrb[0].mxu0
    %v4772 = vadd.f32 %v4617, %v4771
    %4773 = vdwg.mxu0
    %4774 = vmatprep.subr.mxu0 %v4323
    %4775 = vmatpush1.msra.mxu0 %v4322
    %4776 = vmatprep.subr.mxu0 %v4329
    %4777 = vmatpush1.msra.mxu0 %v4328
    %4778 = vmatprep.subr.mxu0 %v4335
    %4779 = vmatpush1.msra.mxu0 %v4334
    %4780 = vmatprep.subr.mxu0 %v4341
    %4781 = vmatpush1.msra.mxu0 %v4340
    %4782 = vmatprep.subr.mxu0 %v4347
    %4783 = vmatpush1.msra.mxu0 %v4346
    %4784 = vmatprep.subr.mxu0 %v4353
    %4785 = vmatpush1.msra.mxu0 %v4352
    %4786 = vmatprep.subr.mxu0 %v4359
    %4787 = vmatpush1.msra.mxu0 %v4358
    %4788 = vmatprep.subr.mxu0 %v4365
    %4789 = vmatpush1.msra.mxu0 %v4364
    %4790 = vmatprep.subr.mxu0 %v4371
    %4791 = vmatpush1.msra.mxu0 %v4370
    %4792 = vmatprep.subr.mxu0 %v4377
    %4793 = vmatpush1.msra.mxu0 %v4376
    %4794 = vmatprep.subr.mxu0 %v4383
    %4795 = vmatpush1.msra.mxu0 %v4382
    %4796 = vmatprep.subr.mxu0 %v4389
    %4797 = vmatpush1.msra.mxu0 %v4388
    %4798 = vmatprep.subr.mxu0 %v4395
    %4799 = vmatpush1.msra.mxu0 %v4394
    %4800 = vmatprep.subr.mxu0 %v4401
    %4801 = vmatpush1.msra.mxu0 %v4400
    %4802 = vmatprep.subr.mxu0 %v4407
    %4803 = vmatpush1.msra.mxu0 %v4406
    %4804 = vmatprep.subr.mxu0 %v4413
    %4805 = vmatpush1.msra.mxu0 %v4412
    %4806 = vmatprep.subr.mxu0 %v4419
    %4807 = vmatpush1.msra.mxu0 %v4418
    %4808 = vmatprep.subr.mxu0 %v4425
    %4809 = vmatpush1.msra.mxu0 %v4424
    %4810 = vmatprep.subr.mxu0 %v4431
    %4811 = vmatpush1.msra.mxu0 %v4430
    %4812 = vmatprep.subr.mxu0 %v4437
    %4813 = vmatpush1.msra.mxu0 %v4436
    %4814 = vmatprep.subr.mxu0 %v4443
    %4815 = vmatpush1.msra.mxu0 %v4442
    %4816 = vmatprep.subr.mxu0 %v4449
    %4817 = vmatpush1.msra.mxu0 %v4448
    %4818 = vmatprep.subr.mxu0 %v4455
    %4819 = vmatpush1.msra.mxu0 %v4454
    %4820 = vmatprep.subr.mxu0 %v4461
    %4821 = vmatpush1.msra.mxu0 %v4460
    %4822 = vmatprep.subr.mxu0 %v4467
    %4823 = vmatpush1.msra.mxu0 %v4466
    %4824 = vmatprep.subr.mxu0 %v4473
    %4825 = vmatpush1.msra.mxu0 %v4472
    %4826 = vmatprep.subr.mxu0 %v4479
    %4827 = vmatpush1.msra.mxu0 %v4478
    %4828 = vmatprep.subr.mxu0 %v4485
    %4829 = vmatpush1.msra.mxu0 %v4484
    %4830 = vmatprep.subr.mxu0 %v4491
    %4831 = vmatpush1.msra.mxu0 %v4490
    %4832 = vmatprep.subr.mxu0 %v4497
    %4833 = vmatpush1.msra.mxu0 %v4496
    %4834 = vmatprep.subr.mxu0 %v4503
    %4835 = vmatpush1.msra.mxu0 %v4502
    %4836 = vmatprep.subr.mxu0 %v4509
    %4837 = vmatpush1.msra.mxu0 %v4508
    %4838 = vmatprep.mubr.f32.mxu0 %v4183
    %4839 = vmatmul.mubr.f32.gmra.mrb[0].mxu0 %v4182
    %v4840 = vpop.f32.mrb[0].mxu0
    %v4841 = vadd.f32 %v4621, %v4840
    %v4842 = vpop.f32.mrb[0].mxu0
    %v4843 = vadd.f32 %v4625, %v4842
    %4844 = vdwg.mxu0
    %v4845 = vadd.f32 %v4595, %v4699
    %v4846 = vadd.f32 %v4596, %v4701
    %v4847 = vxor.u32 %v4845, 2147483648
    %v4848 = vxor.u32 %v4846, 2147483648
    %v4849 = vmul.f32 %v4847, 1.442695
    %v4850 = vpow.pop %v4849
    %v4851 = vmul.f32 %v4848, 1.442695
    %v4852 = vpow.pop %v4851
    %v4853 = vadd.f32 %v4850, 1.0
    %v4854 = vadd.f32 %v4852, 1.0
    %v4855 = vrcp.pop %v4853
    %v4856 = vmul.f32 1.0, %v4855
    %v4857 = vrcp.pop %v4854
    %v4858 = vmul.f32 1.0, %v4857
    %v4859 = vadd.f32 %v4597, %v4770
    %v4860 = vadd.f32 %v4598, %v4772
    %v4861 = vxor.u32 %v4859, 2147483648
    %v4862 = vxor.u32 %v4860, 2147483648
    %v4863 = vmul.f32 %v4861, 1.442695
    %v4864 = vpow.pop %v4863
    %v4865 = vmul.f32 %v4862, 1.442695
    %v4866 = vpow.pop %v4865
    %v4867 = vadd.f32 %v4864, 1.0
    %v4868 = vadd.f32 %v4866, 1.0
    %v4869 = vrcp.pop %v4867
    %v4870 = vmul.f32 1.0, %v4869
    %v4871 = vrcp.pop %v4868
    %v4872 = vmul.f32 1.0, %v4871
    %v4873 = vmul.f32 %v4856, %v4841
    %v4874 = vmul.f32 %v4858, %v4843
    %v4875 = vadd.f32 %v4599, %v4873
    %v4876 = vadd.f32 %v4600, %v4874
    %v4877 = vtanh.pop %v4875
    %v4878 = vtanh.pop %v4876
    %v4879 = vsub.f32 1.0, %v4870
    %v4880 = vsub.f32 1.0, %v4872
    %v4881 = vmul.f32 %v4879, %v4877
    %v4882 = vmul.f32 %v4880, %v4878
    %v4883 = vmul.f32 %v4870, %v4182
    %v4884 = vmul.f32 %v4872, %v4183
    %v4885 = vadd.f32 %v4881, %v4883
    %v4886 = vadd.f32 %v4882, %v4884
    %v4888 = vlaneseq
    %v4889 = vshrl.u32 %v4888, 7
    %v4890 = vsub.s32 0, %v4889
    %v4891 = vrot.slane %v4511, %v4890
    %v4892 = vlaneseq
    %v4893 = vshrl.u32 %v4892, 7
    %v4894 = vsub.s32 1, %v4893
    %v4895 = vrot.slane %v4511, %v4894
    %v4898 = vmul.f32 %v4885, %v4891
    %v4899 = vmul.f32 %v4886, %v4895
    %v4900 = vsel %vm2002, %v4898, 0.0
    %v4901 = vsel %vm2002, %v4899, 0.0
    %v4902 = vadd.f32 %v4900, %v4901
    %4903 = vadd.xlane.f32.xlu0 %v4902
    %v4904 = vpop.xlane.xlu0 %4903
    %v4905 = vadd.f32 %v4904, 0.0
    %v4907 = vlaneseq
    %v4908 = vshrl.u32 %v4907, 7
    %v4909 = vsub.s32 0, %v4908
    %v4910 = vrot.slane %v4514, %v4909
    %v4912 = vadd.f32 %v4905, %v4910
    %v4914 = vlaneseq
    %v4915 = vshrl.u32 %v4914, 7
    %v4916 = vsub.s32 0, %v4915
    %v4917 = vrot.slane %v4513, %v4916
    %v4918 = vlaneseq
    %v4919 = vshrl.u32 %v4918, 7
    %v4920 = vsub.s32 1, %v4919
    %v4921 = vrot.slane %v4513, %v4920
    %v4924 = vmul.f32 %v4885, %v4917
    %v4925 = vmul.f32 %v4886, %v4921
    %v4926 = vsel %vm2002, %v4924, 0.0
    %v4927 = vsel %vm2002, %v4925, 0.0
    %v4928 = vadd.f32 %v4926, %v4927
    %4929 = vadd.xlane.f32.xlu0 %v4928
    %v4930 = vpop.xlane.xlu0 %4929
    %v4931 = vadd.f32 %v4930, 0.0
    %v4932 = vadd.f32 %v4931, %v4910
    %4933 = vst.msk [vmem:[%s65] sm:$0x3] %vm2016, %v4912
    %vm4934 = vcmask 9224
    %4935 = vst.msk [vmem:[%s65] sm:$0x3] %vm4934, %v4932
    %4937 = vset.pattern.permute.xlu0 0
    %4938 = vperm.xlu0 %4937, %v4912
    %v4939 = vpop.permute.xlu0 %4938
    %v4941 = vmul.f32 %v4939, %v4519
    %v4942 = vmul.f32 %v4939, %v4523
    %v4943 = vmul.f32 %v4939, %v4527
    %v4944 = vmul.f32 %v4939, %v4531
    %v4945 = vmul.f32 %v4939, %v4535
    %v4946 = vmul.f32 %v4939, %v4539
    %4948 = vset.pattern.permute.xlu0 1
    %4949 = vperm.xlu0 %4948, %v4932
    %v4950 = vpop.permute.xlu0 %4949
    %v4952 = vmul.f32 %v4950, %v4556
    %v4953 = vmul.f32 %v4950, %v4560
    %v4954 = vmul.f32 %v4950, %v4564
    %v4955 = vmul.f32 %v4950, %v4568
    %v4956 = vmul.f32 %v4950, %v4572
    %v4957 = vmul.f32 %v4950, %v4576
    %v4958 = vadd.f32 %v4941, %v4952
    %v4959 = vadd.f32 %v4942, %v4953
    %v4960 = vadd.f32 %v4943, %v4954
    %v4961 = vadd.f32 %v4944, %v4955
    %v4962 = vadd.f32 %v4945, %v4956
    %v4963 = vadd.f32 %v4946, %v4957
    %v4964 = vadd.f32 %v4958, %v4312
    %v4965 = vadd.f32 %v4959, %v4313
    %v4966 = vadd.f32 %v4960, %v4314
    %v4967 = vadd.f32 %v4961, %v4315
    %v4968 = vadd.f32 %v4962, %v4316
    %v4969 = vadd.f32 %v4963, %v4317
    %4970 = vmatprep.subr.mxu0 %v4319
    %4971 = vmatpush1.msra.mxu0 %v4318
    %4972 = vmatprep.subr.mxu0 %v4325
    %4973 = vmatpush1.msra.mxu0 %v4324
    %4974 = vmatprep.subr.mxu0 %v4331
    %4975 = vmatpush1.msra.mxu0 %v4330
    %4976 = vmatprep.subr.mxu0 %v4337
    %4977 = vmatpush1.msra.mxu0 %v4336
    %4978 = vmatprep.subr.mxu0 %v4343
    %4979 = vmatpush1.msra.mxu0 %v4342
    %4980 = vmatprep.subr.mxu0 %v4349
    %4981 = vmatpush1.msra.mxu0 %v4348
    %4982 = vmatprep.subr.mxu0 %v4355
    %4983 = vmatpush1.msra.mxu0 %v4354
    %4984 = vmatprep.subr.mxu0 %v4361
    %4985 = vmatpush1.msra.mxu0 %v4360
    %4986 = vmatprep.subr.mxu0 %v4367
    %4987 = vmatpush1.msra.mxu0 %v4366
    %4988 = vmatprep.subr.mxu0 %v4373
    %4989 = vmatpush1.msra.mxu0 %v4372
    %4990 = vmatprep.subr.mxu0 %v4379
    %4991 = vmatpush1.msra.mxu0 %v4378
    %4992 = vmatprep.subr.mxu0 %v4385
    %4993 = vmatpush1.msra.mxu0 %v4384
    %4994 = vmatprep.subr.mxu0 %v4391
    %4995 = vmatpush1.msra.mxu0 %v4390
    %4996 = vmatprep.subr.mxu0 %v4397
    %4997 = vmatpush1.msra.mxu0 %v4396
    %4998 = vmatprep.subr.mxu0 %v4403
    %4999 = vmatpush1.msra.mxu0 %v4402
    %5000 = vmatprep.subr.mxu0 %v4409
    %5001 = vmatpush1.msra.mxu0 %v4408
    %5002 = vmatprep.subr.mxu0 %v4415
    %5003 = vmatpush1.msra.mxu0 %v4414
    %5004 = vmatprep.subr.mxu0 %v4421
    %5005 = vmatpush1.msra.mxu0 %v4420
    %5006 = vmatprep.subr.mxu0 %v4427
    %5007 = vmatpush1.msra.mxu0 %v4426
    %5008 = vmatprep.subr.mxu0 %v4433
    %5009 = vmatpush1.msra.mxu0 %v4432
    %5010 = vmatprep.subr.mxu0 %v4439
    %5011 = vmatpush1.msra.mxu0 %v4438
    %5012 = vmatprep.subr.mxu0 %v4445
    %5013 = vmatpush1.msra.mxu0 %v4444
    %5014 = vmatprep.subr.mxu0 %v4451
    %5015 = vmatpush1.msra.mxu0 %v4450
    %5016 = vmatprep.subr.mxu0 %v4457
    %5017 = vmatpush1.msra.mxu0 %v4456
    %5018 = vmatprep.subr.mxu0 %v4463
    %5019 = vmatpush1.msra.mxu0 %v4462
    %5020 = vmatprep.subr.mxu0 %v4469
    %5021 = vmatpush1.msra.mxu0 %v4468
    %5022 = vmatprep.subr.mxu0 %v4475
    %5023 = vmatpush1.msra.mxu0 %v4474
    %5024 = vmatprep.subr.mxu0 %v4481
    %5025 = vmatpush1.msra.mxu0 %v4480
    %5026 = vmatprep.subr.mxu0 %v4487
    %5027 = vmatpush1.msra.mxu0 %v4486
    %5028 = vmatprep.subr.mxu0 %v4493
    %5029 = vmatpush1.msra.mxu0 %v4492
    %5030 = vmatprep.subr.mxu0 %v4499
    %5031 = vmatpush1.msra.mxu0 %v4498
    %5032 = vmatprep.subr.mxu0 %v4505
    %5033 = vmatpush1.msra.mxu0 %v4504
    %5034 = vmatprep.mubr.f32.mxu0 %v4886
    %5035 = vmatmul.mubr.f32.gmra.mrb[0].mxu0 %v4885
    %v5036 = vpop.f32.mrb[0].mxu0
    %v5037 = vadd.f32 %v4605, %v5036
    %v5038 = vpop.f32.mrb[0].mxu0
    %v5039 = vadd.f32 %v4609, %v5038
    %5040 = vdwg.mxu0
    %5041 = vmatprep.subr.mxu0 %v4321
    %5042 = vmatpush1.msra.mxu0 %v4320
    %5043 = vmatprep.subr.mxu0 %v4327
    %5044 = vmatpush1.msra.mxu0 %v4326
    %5045 = vmatprep.subr.mxu0 %v4333
    %5046 = vmatpush1.msra.mxu0 %v4332
    %5047 = vmatprep.subr.mxu0 %v4339
    %5048 = vmatpush1.msra.mxu0 %v4338
    %5049 = vmatprep.subr.mxu0 %v4345
    %5050 = vmatpush1.msra.mxu0 %v4344
    %5051 = vmatprep.subr.mxu0 %v4351
    %5052 = vmatpush1.msra.mxu0 %v4350
    %5053 = vmatprep.subr.mxu0 %v4357
    %5054 = vmatpush1.msra.mxu0 %v4356
    %5055 = vmatprep.subr.mxu0 %v4363
    %5056 = vmatpush1.msra.mxu0 %v4362
    %5057 = vmatprep.subr.mxu0 %v4369
    %5058 = vmatpush1.msra.mxu0 %v4368
    %5059 = vmatprep.subr.mxu0 %v4375
    %5060 = vmatpush1.msra.mxu0 %v4374
    %5061 = vmatprep.subr.mxu0 %v4381
    %5062 = vmatpush1.msra.mxu0 %v4380
    %5063 = vmatprep.subr.mxu0 %v4387
    %5064 = vmatpush1.msra.mxu0 %v4386
    %5065 = vmatprep.subr.mxu0 %v4393
    %5066 = vmatpush1.msra.mxu0 %v4392
    %5067 = vmatprep.subr.mxu0 %v4399
    %5068 = vmatpush1.msra.mxu0 %v4398
    %5069 = vmatprep.subr.mxu0 %v4405
    %5070 = vmatpush1.msra.mxu0 %v4404
    %5071 = vmatprep.subr.mxu0 %v4411
    %5072 = vmatpush1.msra.mxu0 %v4410
    %5073 = vmatprep.subr.mxu0 %v4417
    %5074 = vmatpush1.msra.mxu0 %v4416
    %5075 = vmatprep.subr.mxu0 %v4423
    %5076 = vmatpush1.msra.mxu0 %v4422
    %5077 = vmatprep.subr.mxu0 %v4429
    %5078 = vmatpush1.msra.mxu0 %v4428
    %5079 = vmatprep.subr.mxu0 %v4435
    %5080 = vmatpush1.msra.mxu0 %v4434
    %5081 = vmatprep.subr.mxu0 %v4441
    %5082 = vmatpush1.msra.mxu0 %v4440
    %5083 = vmatprep.subr.mxu0 %v4447
    %5084 = vmatpush1.msra.mxu0 %v4446
    %5085 = vmatprep.subr.mxu0 %v4453
    %5086 = vmatpush1.msra.mxu0 %v4452
    %5087 = vmatprep.subr.mxu0 %v4459
    %5088 = vmatpush1.msra.mxu0 %v4458
    %5089 = vmatprep.subr.mxu0 %v4465
    %5090 = vmatpush1.msra.mxu0 %v4464
    %5091 = vmatprep.subr.mxu0 %v4471
    %5092 = vmatpush1.msra.mxu0 %v4470
    %5093 = vmatprep.subr.mxu0 %v4477
    %5094 = vmatpush1.msra.mxu0 %v4476
    %5095 = vmatprep.subr.mxu0 %v4483
    %5096 = vmatpush1.msra.mxu0 %v4482
    %5097 = vmatprep.subr.mxu0 %v4489
    %5098 = vmatpush1.msra.mxu0 %v4488
    %5099 = vmatprep.subr.mxu0 %v4495
    %5100 = vmatpush1.msra.mxu0 %v4494
    %5101 = vmatprep.subr.mxu0 %v4501
    %5102 = vmatpush1.msra.mxu0 %v4500
    %5103 = vmatprep.subr.mxu0 %v4507
    %5104 = vmatpush1.msra.mxu0 %v4506
    %5105 = vmatprep.mubr.f32.mxu0 %v4886
    %5106 = vmatmul.mubr.f32.gmra.mrb[0].mxu0 %v4885
    %v5107 = vpop.f32.mrb[0].mxu0
    %v5108 = vadd.f32 %v4613, %v5107
    %v5109 = vpop.f32.mrb[0].mxu0
    %v5110 = vadd.f32 %v4617, %v5109
    %5111 = vdwg.mxu0
    %5112 = vmatprep.subr.mxu0 %v4323
    %5113 = vmatpush1.msra.mxu0 %v4322
    %5114 = vmatprep.subr.mxu0 %v4329
    %5115 = vmatpush1.msra.mxu0 %v4328
    %5116 = vmatprep.subr.mxu0 %v4335
    %5117 = vmatpush1.msra.mxu0 %v4334
    %5118 = vmatprep.subr.mxu0 %v4341
    %5119 = vmatpush1.msra.mxu0 %v4340
    %5120 = vmatprep.subr.mxu0 %v4347
    %5121 = vmatpush1.msra.mxu0 %v4346
    %5122 = vmatprep.subr.mxu0 %v4353
    %5123 = vmatpush1.msra.mxu0 %v4352
    %5124 = vmatprep.subr.mxu0 %v4359
    %5125 = vmatpush1.msra.mxu0 %v4358
    %5126 = vmatprep.subr.mxu0 %v4365
    %5127 = vmatpush1.msra.mxu0 %v4364
    %5128 = vmatprep.subr.mxu0 %v4371
    %5129 = vmatpush1.msra.mxu0 %v4370
    %5130 = vmatprep.subr.mxu0 %v4377
    %5131 = vmatpush1.msra.mxu0 %v4376
    %5132 = vmatprep.subr.mxu0 %v4383
    %5133 = vmatpush1.msra.mxu0 %v4382
    %5134 = vmatprep.subr.mxu0 %v4389
    %5135 = vmatpush1.msra.mxu0 %v4388
    %5136 = vmatprep.subr.mxu0 %v4395
    %5137 = vmatpush1.msra.mxu0 %v4394
    %5138 = vmatprep.subr.mxu0 %v4401
    %5139 = vmatpush1.msra.mxu0 %v4400
    %5140 = vmatprep.subr.mxu0 %v4407
    %5141 = vmatpush1.msra.mxu0 %v4406
    %5142 = vmatprep.subr.mxu0 %v4413
    %5143 = vmatpush1.msra.mxu0 %v4412
    %5144 = vmatprep.subr.mxu0 %v4419
    %5145 = vmatpush1.msra.mxu0 %v4418
    %5146 = vmatprep.subr.mxu0 %v4425
    %5147 = vmatpush1.msra.mxu0 %v4424
    %5148 = vmatprep.subr.mxu0 %v4431
    %5149 = vmatpush1.msra.mxu0 %v4430
    %5150 = vmatprep.subr.mxu0 %v4437
    %5151 = vmatpush1.msra.mxu0 %v4436
    %5152 = vmatprep.subr.mxu0 %v4443
    %5153 = vmatpush1.msra.mxu0 %v4442
    %5154 = vmatprep.subr.mxu0 %v4449
    %5155 = vmatpush1.msra.mxu0 %v4448
    %5156 = vmatprep.subr.mxu0 %v4455
    %5157 = vmatpush1.msra.mxu0 %v4454
    %5158 = vmatprep.subr.mxu0 %v4461
    %5159 = vmatpush1.msra.mxu0 %v4460
    %5160 = vmatprep.subr.mxu0 %v4467
    %5161 = vmatpush1.msra.mxu0 %v4466
    %5162 = vmatprep.subr.mxu0 %v4473
    %5163 = vmatpush1.msra.mxu0 %v4472
    %5164 = vmatprep.subr.mxu0 %v4479
    %5165 = vmatpush1.msra.mxu0 %v4478
    %5166 = vmatprep.subr.mxu0 %v4485
    %5167 = vmatpush1.msra.mxu0 %v4484
    %5168 = vmatprep.subr.mxu0 %v4491
    %5169 = vmatpush1.msra.mxu0 %v4490
    %5170 = vmatprep.subr.mxu0 %v4497
    %5171 = vmatpush1.msra.mxu0 %v4496
    %5172 = vmatprep.subr.mxu0 %v4503
    %5173 = vmatpush1.msra.mxu0 %v4502
    %5174 = vmatprep.subr.mxu0 %v4509
    %5175 = vmatpush1.msra.mxu0 %v4508
    %5176 = vmatprep.mubr.f32.mxu0 %v4886
    %5177 = vmatmul.mubr.f32.gmra.mrb[0].mxu0 %v4885
    %v5178 = vpop.f32.mrb[0].mxu0
    %v5179 = vadd.f32 %v4621, %v5178
    %v5180 = vpop.f32.mrb[0].mxu0
    %v5181 = vadd.f32 %v4625, %v5180
    %5182 = vdwg.mxu0
    %v5183 = vadd.f32 %v4964, %v5037
    %v5184 = vadd.f32 %v4965, %v5039
    %v5185 = vxor.u32 %v5183, 2147483648
    %v5186 = vxor.u32 %v5184, 2147483648
    %v5187 = vmul.f32 %v5185, 1.442695
    %v5188 = vpow.pop %v5187
    %v5189 = vmul.f32 %v5186, 1.442695
    %v5190 = vpow.pop %v5189
    %v5191 = vadd.f32 %v5188, 1.0
    %v5192 = vadd.f32 %v5190, 1.0
    %v5193 = vrcp.pop %v5191
    %v5194 = vmul.f32 1.0, %v5193
    %v5195 = vrcp.pop %v5192
    %v5196 = vmul.f32 1.0, %v5195
    %v5197 = vadd.f32 %v4966, %v5108
    %v5198 = vadd.f32 %v4967, %v5110
    %v5199 = vxor.u32 %v5197, 2147483648
    %v5200 = vxor.u32 %v5198, 2147483648
    %v5201 = vmul.f32 %v5199, 1.442695
    %v5202 = vpow.pop %v5201
    %v5203 = vmul.f32 %v5200, 1.442695
    %v5204 = vpow.pop %v5203
    %v5205 = vadd.f32 %v5202, 1.0
    %v5206 = vadd.f32 %v5204, 1.0
    %v5207 = vrcp.pop %v5205
    %v5208 = vmul.f32 1.0, %v5207
    %v5209 = vrcp.pop %v5206
    %v5210 = vmul.f32 1.0, %v5209
    %v5211 = vmul.f32 %v5194, %v5179
    %v5212 = vmul.f32 %v5196, %v5181
    %v5213 = vadd.f32 %v4968, %v5211
    %v5214 = vadd.f32 %v4969, %v5212
    %v5215 = vtanh.pop %v5213
    %v5216 = vtanh.pop %v5214
    %v5217 = vsub.f32 1.0, %v5208
    %v5218 = vsub.f32 1.0, %v5210
    %v5219 = vmul.f32 %v5217, %v5215
    %v5220 = vmul.f32 %v5218, %v5216
    %v5221 = vmul.f32 %v5208, %v4885
    %v5222 = vmul.f32 %v5210, %v4886
    %v5223 = vadd.f32 %v5219, %v5221
    %v5224 = vadd.f32 %v5220, %v5222
    %v5225 = vmul.f32 %v5223, %v4891
    %v5226 = vmul.f32 %v5224, %v4895
    %v5227 = vsel %vm2002, %v5225, 0.0
    %v5228 = vsel %vm2002, %v5226, 0.0
    %v5229 = vadd.f32 %v5227, %v5228
    %5230 = vadd.xlane.f32.xlu0 %v5229
    %v5231 = vpop.xlane.xlu0 %5230
    %v5232 = vadd.f32 %v4912, %v5231
    %v5233 = vadd.f32 %v5232, %v4910
    %v5234 = vmul.f32 %v5223, %v4917
    %v5235 = vmul.f32 %v5224, %v4921
    %v5236 = vsel %vm2002, %v5234, 0.0
    %v5237 = vsel %vm2002, %v5235, 0.0
    %v5238 = vadd.f32 %v5236, %v5237
    %5239 = vadd.xlane.f32.xlu0 %v5238
    %v5240 = vpop.xlane.xlu0 %5239
    %v5241 = vadd.f32 %v4932, %v5240
    %v5242 = vadd.f32 %v5241, %v4910
    %5244 = vrot.lane.b32.xlu0 %v5233, 2
    %v5245 = vpop.permute.xlu0 %5244
    %vm5247 = vcmask 17424
    %5248 = vst.msk [vmem:[%s65] sm:$0x3] %vm5247, %v5245
    %5250 = vrot.lane.b32.xlu0 %v5242, 2
    %v5251 = vpop.permute.xlu0 %5250
    %vm5253 = vcmask 25624
    %5254 = vst.msk [vmem:[%s65] sm:$0x3] %vm5253, %v5251
    %5255 = vset.pattern.permute.xlu0 0
    %5256 = vperm.xlu0 %5255, %v5233
    %v5257 = vpop.permute.xlu0 %5256
    %v5259 = vmul.f32 %v5257, %v4519
    %v5260 = vmul.f32 %v5257, %v4523
    %v5261 = vmul.f32 %v5257, %v4527
    %v5262 = vmul.f32 %v5257, %v4531
    %v5263 = vmul.f32 %v5257, %v4535
    %v5264 = vmul.f32 %v5257, %v4539
    %5265 = vset.pattern.permute.xlu0 1
    %5266 = vperm.xlu0 %5265, %v5242
    %v5267 = vpop.permute.xlu0 %5266
    %v5269 = vmul.f32 %v5267, %v4556
    %v5270 = vmul.f32 %v5267, %v4560
    %v5271 = vmul.f32 %v5267, %v4564
    %v5272 = vmul.f32 %v5267, %v4568
    %v5273 = vmul.f32 %v5267, %v4572
    %v5274 = vmul.f32 %v5267, %v4576
    %v5275 = vadd.f32 %v5259, %v5269
    %v5276 = vadd.f32 %v5260, %v5270
    %v5277 = vadd.f32 %v5261, %v5271
    %v5278 = vadd.f32 %v5262, %v5272
    %v5279 = vadd.f32 %v5263, %v5273
    %v5280 = vadd.f32 %v5264, %v5274
    %v5281 = vadd.f32 %v5275, %v4312
    %v5282 = vadd.f32 %v5276, %v4313
    %v5283 = vadd.f32 %v5277, %v4314
    %v5284 = vadd.f32 %v5278, %v4315
    %v5285 = vadd.f32 %v5279, %v4316
    %v5286 = vadd.f32 %v5280, %v4317
    %5287 = vmatprep.subr.mxu0 %v4319
    %5288 = vmatpush1.msra.mxu0 %v4318
    %5289 = vmatprep.subr.mxu0 %v4325
    %5290 = vmatpush1.msra.mxu0 %v4324
    %5291 = vmatprep.subr.mxu0 %v4331
    %5292 = vmatpush1.msra.mxu0 %v4330
    %5293 = vmatprep.subr.mxu0 %v4337
    %5294 = vmatpush1.msra.mxu0 %v4336
    %5295 = vmatprep.subr.mxu0 %v4343
    %5296 = vmatpush1.msra.mxu0 %v4342
    %5297 = vmatprep.subr.mxu0 %v4349
    %5298 = vmatpush1.msra.mxu0 %v4348
    %5299 = vmatprep.subr.mxu0 %v4355
    %5300 = vmatpush1.msra.mxu0 %v4354
    %5301 = vmatprep.subr.mxu0 %v4361
    %5302 = vmatpush1.msra.mxu0 %v4360
    %5303 = vmatprep.subr.mxu0 %v4367
    %5304 = vmatpush1.msra.mxu0 %v4366
    %5305 = vmatprep.subr.mxu0 %v4373
    %5306 = vmatpush1.msra.mxu0 %v4372
    %5307 = vmatprep.subr.mxu0 %v4379
    %5308 = vmatpush1.msra.mxu0 %v4378
    %5309 = vmatprep.subr.mxu0 %v4385
    %5310 = vmatpush1.msra.mxu0 %v4384
    %5311 = vmatprep.subr.mxu0 %v4391
    %5312 = vmatpush1.msra.mxu0 %v4390
    %5313 = vmatprep.subr.mxu0 %v4397
    %5314 = vmatpush1.msra.mxu0 %v4396
    %5315 = vmatprep.subr.mxu0 %v4403
    %5316 = vmatpush1.msra.mxu0 %v4402
    %5317 = vmatprep.subr.mxu0 %v4409
    %5318 = vmatpush1.msra.mxu0 %v4408
    %5319 = vmatprep.subr.mxu0 %v4415
    %5320 = vmatpush1.msra.mxu0 %v4414
    %5321 = vmatprep.subr.mxu0 %v4421
    %5322 = vmatpush1.msra.mxu0 %v4420
    %5323 = vmatprep.subr.mxu0 %v4427
    %5324 = vmatpush1.msra.mxu0 %v4426
    %5325 = vmatprep.subr.mxu0 %v4433
    %5326 = vmatpush1.msra.mxu0 %v4432
    %5327 = vmatprep.subr.mxu0 %v4439
    %5328 = vmatpush1.msra.mxu0 %v4438
    %5329 = vmatprep.subr.mxu0 %v4445
    %5330 = vmatpush1.msra.mxu0 %v4444
    %5331 = vmatprep.subr.mxu0 %v4451
    %5332 = vmatpush1.msra.mxu0 %v4450
    %5333 = vmatprep.subr.mxu0 %v4457
    %5334 = vmatpush1.msra.mxu0 %v4456
    %5335 = vmatprep.subr.mxu0 %v4463
    %5336 = vmatpush1.msra.mxu0 %v4462
    %5337 = vmatprep.subr.mxu0 %v4469
    %5338 = vmatpush1.msra.mxu0 %v4468
    %5339 = vmatprep.subr.mxu0 %v4475
    %5340 = vmatpush1.msra.mxu0 %v4474
    %5341 = vmatprep.subr.mxu0 %v4481
    %5342 = vmatpush1.msra.mxu0 %v4480
    %5343 = vmatprep.subr.mxu0 %v4487
    %5344 = vmatpush1.msra.mxu0 %v4486
    %5345 = vmatprep.subr.mxu0 %v4493
    %5346 = vmatpush1.msra.mxu0 %v4492
    %5347 = vmatprep.subr.mxu0 %v4499
    %5348 = vmatpush1.msra.mxu0 %v4498
    %5349 = vmatprep.subr.mxu0 %v4505
    %5350 = vmatpush1.msra.mxu0 %v4504
    %5351 = vmatprep.mubr.f32.mxu0 %v5224
    %5352 = vmatmul.mubr.f32.gmra.mrb[0].mxu0 %v5223
    %v5353 = vpop.f32.mrb[0].mxu0
    %v5354 = vadd.f32 %v4605, %v5353
    %v5355 = vpop.f32.mrb[0].mxu0
    %v5356 = vadd.f32 %v4609, %v5355
    %5357 = vdwg.mxu0
    %5358 = vmatprep.subr.mxu0 %v4321
    %5359 = vmatpush1.msra.mxu0 %v4320
    %5360 = vmatprep.subr.mxu0 %v4327
    %5361 = vmatpush1.msra.mxu0 %v4326
    %5362 = vmatprep.subr.mxu0 %v4333
    %5363 = vmatpush1.msra.mxu0 %v4332
    %5364 = vmatprep.subr.mxu0 %v4339
    %5365 = vmatpush1.msra.mxu0 %v4338
    %5366 = vmatprep.subr.mxu0 %v4345
    %5367 = vmatpush1.msra.mxu0 %v4344
    %5368 = vmatprep.subr.mxu0 %v4351
    %5369 = vmatpush1.msra.mxu0 %v4350
    %5370 = vmatprep.subr.mxu0 %v4357
    %5371 = vmatpush1.msra.mxu0 %v4356
    %5372 = vmatprep.subr.mxu0 %v4363
    %5373 = vmatpush1.msra.mxu0 %v4362
    %5374 = vmatprep.subr.mxu0 %v4369
    %5375 = vmatpush1.msra.mxu0 %v4368
    %5376 = vmatprep.subr.mxu0 %v4375
    %5377 = vmatpush1.msra.mxu0 %v4374
    %5378 = vmatprep.subr.mxu0 %v4381
    %5379 = vmatpush1.msra.mxu0 %v4380
    %5380 = vmatprep.subr.mxu0 %v4387
    %5381 = vmatpush1.msra.mxu0 %v4386
    %5382 = vmatprep.subr.mxu0 %v4393
    %5383 = vmatpush1.msra.mxu0 %v4392
    %5384 = vmatprep.subr.mxu0 %v4399
    %5385 = vmatpush1.msra.mxu0 %v4398
    %5386 = vmatprep.subr.mxu0 %v4405
    %5387 = vmatpush1.msra.mxu0 %v4404
    %5388 = vmatprep.subr.mxu0 %v4411
    %5389 = vmatpush1.msra.mxu0 %v4410
    %5390 = vmatprep.subr.mxu0 %v4417
    %5391 = vmatpush1.msra.mxu0 %v4416
    %5392 = vmatprep.subr.mxu0 %v4423
    %5393 = vmatpush1.msra.mxu0 %v4422
    %5394 = vmatprep.subr.mxu0 %v4429
    %5395 = vmatpush1.msra.mxu0 %v4428
    %5396 = vmatprep.subr.mxu0 %v4435
    %5397 = vmatpush1.msra.mxu0 %v4434
    %5398 = vmatprep.subr.mxu0 %v4441
    %5399 = vmatpush1.msra.mxu0 %v4440
    %5400 = vmatprep.subr.mxu0 %v4447
    %5401 = vmatpush1.msra.mxu0 %v4446
    %5402 = vmatprep.subr.mxu0 %v4453
    %5403 = vmatpush1.msra.mxu0 %v4452
    %5404 = vmatprep.subr.mxu0 %v4459
    %5405 = vmatpush1.msra.mxu0 %v4458
    %5406 = vmatprep.subr.mxu0 %v4465
    %5407 = vmatpush1.msra.mxu0 %v4464
    %5408 = vmatprep.subr.mxu0 %v4471
    %5409 = vmatpush1.msra.mxu0 %v4470
    %5410 = vmatprep.subr.mxu0 %v4477
    %5411 = vmatpush1.msra.mxu0 %v4476
    %5412 = vmatprep.subr.mxu0 %v4483
    %5413 = vmatpush1.msra.mxu0 %v4482
    %5414 = vmatprep.subr.mxu0 %v4489
    %5415 = vmatpush1.msra.mxu0 %v4488
    %5416 = vmatprep.subr.mxu0 %v4495
    %5417 = vmatpush1.msra.mxu0 %v4494
    %5418 = vmatprep.subr.mxu0 %v4501
    %5419 = vmatpush1.msra.mxu0 %v4500
    %5420 = vmatprep.subr.mxu0 %v4507
    %5421 = vmatpush1.msra.mxu0 %v4506
    %5422 = vmatprep.mubr.f32.mxu0 %v5224
    %5423 = vmatmul.mubr.f32.gmra.mrb[0].mxu0 %v5223
    %v5424 = vpop.f32.mrb[0].mxu0
    %v5425 = vadd.f32 %v4613, %v5424
    %v5426 = vpop.f32.mrb[0].mxu0
    %v5427 = vadd.f32 %v4617, %v5426
    %5428 = vdwg.mxu0
    %5429 = vmatprep.subr.mxu0 %v4323
    %5430 = vmatpush1.msra.mxu0 %v4322
    %5431 = vmatprep.subr.mxu0 %v4329
    %5432 = vmatpush1.msra.mxu0 %v4328
    %5433 = vmatprep.subr.mxu0 %v4335
    %5434 = vmatpush1.msra.mxu0 %v4334
    %5435 = vmatprep.subr.mxu0 %v4341
    %5436 = vmatpush1.msra.mxu0 %v4340
    %5437 = vmatprep.subr.mxu0 %v4347
    %5438 = vmatpush1.msra.mxu0 %v4346
    %5439 = vmatprep.subr.mxu0 %v4353
    %5440 = vmatpush1.msra.mxu0 %v4352
    %5441 = vmatprep.subr.mxu0 %v4359
    %5442 = vmatpush1.msra.mxu0 %v4358
    %5443 = vmatprep.subr.mxu0 %v4365
    %5444 = vmatpush1.msra.mxu0 %v4364
    %5445 = vmatprep.subr.mxu0 %v4371
    %5446 = vmatpush1.msra.mxu0 %v4370
    %5447 = vmatprep.subr.mxu0 %v4377
    %5448 = vmatpush1.msra.mxu0 %v4376
    %5449 = vmatprep.subr.mxu0 %v4383
    %5450 = vmatpush1.msra.mxu0 %v4382
    %5451 = vmatprep.subr.mxu0 %v4389
    %5452 = vmatpush1.msra.mxu0 %v4388
    %5453 = vmatprep.subr.mxu0 %v4395
    %5454 = vmatpush1.msra.mxu0 %v4394
    %5455 = vmatprep.subr.mxu0 %v4401
    %5456 = vmatpush1.msra.mxu0 %v4400
    %5457 = vmatprep.subr.mxu0 %v4407
    %5458 = vmatpush1.msra.mxu0 %v4406
    %5459 = vmatprep.subr.mxu0 %v4413
    %5460 = vmatpush1.msra.mxu0 %v4412
    %5461 = vmatprep.subr.mxu0 %v4419
    %5462 = vmatpush1.msra.mxu0 %v4418
    %5463 = vmatprep.subr.mxu0 %v4425
    %5464 = vmatpush1.msra.mxu0 %v4424
    %5465 = vmatprep.subr.mxu0 %v4431
    %5466 = vmatpush1.msra.mxu0 %v4430
    %5467 = vmatprep.subr.mxu0 %v4437
    %5468 = vmatpush1.msra.mxu0 %v4436
    %5469 = vmatprep.subr.mxu0 %v4443
    %5470 = vmatpush1.msra.mxu0 %v4442
    %5471 = vmatprep.subr.mxu0 %v4449
    %5472 = vmatpush1.msra.mxu0 %v4448
    %5473 = vmatprep.subr.mxu0 %v4455
    %5474 = vmatpush1.msra.mxu0 %v4454
    %5475 = vmatprep.subr.mxu0 %v4461
    %5476 = vmatpush1.msra.mxu0 %v4460
    %5477 = vmatprep.subr.mxu0 %v4467
    %5478 = vmatpush1.msra.mxu0 %v4466
    %5479 = vmatprep.subr.mxu0 %v4473
    %5480 = vmatpush1.msra.mxu0 %v4472
    %5481 = vmatprep.subr.mxu0 %v4479
    %5482 = vmatpush1.msra.mxu0 %v4478
    %5483 = vmatprep.subr.mxu0 %v4485
    %5484 = vmatpush1.msra.mxu0 %v4484
    %5485 = vmatprep.subr.mxu0 %v4491
    %5486 = vmatpush1.msra.mxu0 %v4490
    %5487 = vmatprep.subr.mxu0 %v4497
    %5488 = vmatpush1.msra.mxu0 %v4496
    %5489 = vmatprep.subr.mxu0 %v4503
    %5490 = vmatpush1.msra.mxu0 %v4502
    %5491 = vmatprep.subr.mxu0 %v4509
    %5492 = vmatpush1.msra.mxu0 %v4508
    %5493 = vmatprep.mubr.f32.mxu0 %v5224
    %5494 = vmatmul.mubr.f32.gmra.mrb[0].mxu0 %v5223
    %v5495 = vpop.f32.mrb[0].mxu0
    %v5496 = vadd.f32 %v4621, %v5495
    %v5497 = vpop.f32.mrb[0].mxu0
    %v5498 = vadd.f32 %v4625, %v5497
    %5499 = vdwg.mxu0
    %v5500 = vadd.f32 %v5281, %v5354
    %v5501 = vadd.f32 %v5282, %v5356
    %v5502 = vxor.u32 %v5500, 2147483648
    %v5503 = vxor.u32 %v5501, 2147483648
    %v5504 = vmul.f32 %v5502, 1.442695
    %v5505 = vpow.pop %v5504
    %v5506 = vmul.f32 %v5503, 1.442695
    %v5507 = vpow.pop %v5506
    %v5508 = vadd.f32 %v5505, 1.0
    %v5509 = vadd.f32 %v5507, 1.0
    %v5510 = vrcp.pop %v5508
    %v5511 = vmul.f32 1.0, %v5510
    %v5512 = vrcp.pop %v5509
    %v5513 = vmul.f32 1.0, %v5512
    %v5514 = vadd.f32 %v5283, %v5425
    %v5515 = vadd.f32 %v5284, %v5427
    %v5516 = vxor.u32 %v5514, 2147483648
    %v5517 = vxor.u32 %v5515, 2147483648
    %v5518 = vmul.f32 %v5516, 1.442695
    %v5519 = vpow.pop %v5518
    %v5520 = vmul.f32 %v5517, 1.442695
    %v5521 = vpow.pop %v5520
    %v5522 = vadd.f32 %v5519, 1.0
    %v5523 = vadd.f32 %v5521, 1.0
    %v5524 = vrcp.pop %v5522
    %v5525 = vmul.f32 1.0, %v5524
    %v5526 = vrcp.pop %v5523
    %v5527 = vmul.f32 1.0, %v5526
    %v5528 = vmul.f32 %v5511, %v5496
    %v5529 = vmul.f32 %v5513, %v5498
    %v5530 = vadd.f32 %v5285, %v5528
    %v5531 = vadd.f32 %v5286, %v5529
    %v5532 = vtanh.pop %v5530
    %v5533 = vtanh.pop %v5531
    %v5534 = vsub.f32 1.0, %v5525
    %v5535 = vsub.f32 1.0, %v5527
    %v5536 = vmul.f32 %v5534, %v5532
    %v5537 = vmul.f32 %v5535, %v5533
    %v5538 = vmul.f32 %v5525, %v5223
    %v5539 = vmul.f32 %v5527, %v5224
    %v5540 = vadd.f32 %v5536, %v5538
    %v5541 = vadd.f32 %v5537, %v5539
    %v5542 = vmul.f32 %v5540, %v4891
    %v5543 = vmul.f32 %v5541, %v4895
    %v5544 = vsel %vm2002, %v5542, 0.0
    %v5545 = vsel %vm2002, %v5543, 0.0
    %v5546 = vadd.f32 %v5544, %v5545
    %5547 = vadd.xlane.f32.xlu0 %v5546
    %v5548 = vpop.xlane.xlu0 %5547
    %v5549 = vadd.f32 %v5233, %v5548
    %v5550 = vadd.f32 %v5549, %v4910
    %v5551 = vmul.f32 %v5540, %v4917
    %v5552 = vmul.f32 %v5541, %v4921
    %v5553 = vsel %vm2002, %v5551, 0.0
    %v5554 = vsel %vm2002, %v5552, 0.0
    %v5555 = vadd.f32 %v5553, %v5554
    %5556 = vadd.xlane.f32.xlu0 %v5555
    %v5557 = vpop.xlane.xlu0 %5556
    %v5558 = vadd.f32 %v5242, %v5557
    %v5559 = vadd.f32 %v5558, %v4910
    %5561 = vrot.lane.b32.xlu0 %v5550, 4
    %v5562 = vpop.permute.xlu0 %5561
    %vm5564 = vcmask 33824
    %5565 = vst.msk [vmem:[%s65] sm:$0x3] %vm5564, %v5562
    %5567 = vrot.lane.b32.xlu0 %v5559, 4
    %v5568 = vpop.permute.xlu0 %5567
    %vm5570 = vcmask 42024
    %5571 = vst.msk [vmem:[%s65] sm:$0x3] %vm5570, %v5568
    %5572 = vset.pattern.permute.xlu0 0
    %5573 = vperm.xlu0 %5572, %v5550
    %v5574 = vpop.permute.xlu0 %5573
    %v5576 = vmul.f32 %v5574, %v4519
    %v5577 = vmul.f32 %v5574, %v4523
    %v5578 = vmul.f32 %v5574, %v4527
    %v5579 = vmul.f32 %v5574, %v4531
    %v5580 = vmul.f32 %v5574, %v4535
    %v5581 = vmul.f32 %v5574, %v4539
    %5582 = vset.pattern.permute.xlu0 1
    %5583 = vperm.xlu0 %5582, %v5559
    %v5584 = vpop.permute.xlu0 %5583
    %v5586 = vmul.f32 %v5584, %v4556
    %v5587 = vmul.f32 %v5584, %v4560
    %v5588 = vmul.f32 %v5584, %v4564
    %v5589 = vmul.f32 %v5584, %v4568
    %v5590 = vmul.f32 %v5584, %v4572
    %v5591 = vmul.f32 %v5584, %v4576
    %v5592 = vadd.f32 %v5576, %v5586
    %v5593 = vadd.f32 %v5577, %v5587
    %v5594 = vadd.f32 %v5578, %v5588
    %v5595 = vadd.f32 %v5579, %v5589
    %v5596 = vadd.f32 %v5580, %v5590
    %v5597 = vadd.f32 %v5581, %v5591
    %v5598 = vadd.f32 %v5592, %v4312
    %v5599 = vadd.f32 %v5593, %v4313
    %v5600 = vadd.f32 %v5594, %v4314
    %v5601 = vadd.f32 %v5595, %v4315
    %v5602 = vadd.f32 %v5596, %v4316
    %v5603 = vadd.f32 %v5597, %v4317
    %5604 = vmatprep.subr.mxu0 %v4319
    %5605 = vmatpush1.msra.mxu0 %v4318
    %5606 = vmatprep.subr.mxu0 %v4325
    %5607 = vmatpush1.msra.mxu0 %v4324
    %5608 = vmatprep.subr.mxu0 %v4331
    %5609 = vmatpush1.msra.mxu0 %v4330
    %5610 = vmatprep.subr.mxu0 %v4337
    %5611 = vmatpush1.msra.mxu0 %v4336
    %5612 = vmatprep.subr.mxu0 %v4343
    %5613 = vmatpush1.msra.mxu0 %v4342
    %5614 = vmatprep.subr.mxu0 %v4349
    %5615 = vmatpush1.msra.mxu0 %v4348
    %5616 = vmatprep.subr.mxu0 %v4355
    %5617 = vmatpush1.msra.mxu0 %v4354
    %5618 = vmatprep.subr.mxu0 %v4361
    %5619 = vmatpush1.msra.mxu0 %v4360
    %5620 = vmatprep.subr.mxu0 %v4367
    %5621 = vmatpush1.msra.mxu0 %v4366
    %5622 = vmatprep.subr.mxu0 %v4373
    %5623 = vmatpush1.msra.mxu0 %v4372
    %5624 = vmatprep.subr.mxu0 %v4379
    %5625 = vmatpush1.msra.mxu0 %v4378
    %5626 = vmatprep.subr.mxu0 %v4385
    %5627 = vmatpush1.msra.mxu0 %v4384
    %5628 = vmatprep.subr.mxu0 %v4391
    %5629 = vmatpush1.msra.mxu0 %v4390
    %5630 = vmatprep.subr.mxu0 %v4397
    %5631 = vmatpush1.msra.mxu0 %v4396
    %5632 = vmatprep.subr.mxu0 %v4403
    %5633 = vmatpush1.msra.mxu0 %v4402
    %5634 = vmatprep.subr.mxu0 %v4409
    %5635 = vmatpush1.msra.mxu0 %v4408
    %5636 = vmatprep.subr.mxu0 %v4415
    %5637 = vmatpush1.msra.mxu0 %v4414
    %5638 = vmatprep.subr.mxu0 %v4421
    %5639 = vmatpush1.msra.mxu0 %v4420
    %5640 = vmatprep.subr.mxu0 %v4427
    %5641 = vmatpush1.msra.mxu0 %v4426
    %5642 = vmatprep.subr.mxu0 %v4433
    %5643 = vmatpush1.msra.mxu0 %v4432
    %5644 = vmatprep.subr.mxu0 %v4439
    %5645 = vmatpush1.msra.mxu0 %v4438
    %5646 = vmatprep.subr.mxu0 %v4445
    %5647 = vmatpush1.msra.mxu0 %v4444
    %5648 = vmatprep.subr.mxu0 %v4451
    %5649 = vmatpush1.msra.mxu0 %v4450
    %5650 = vmatprep.subr.mxu0 %v4457
    %5651 = vmatpush1.msra.mxu0 %v4456
    %5652 = vmatprep.subr.mxu0 %v4463
    %5653 = vmatpush1.msra.mxu0 %v4462
    %5654 = vmatprep.subr.mxu0 %v4469
    %5655 = vmatpush1.msra.mxu0 %v4468
    %5656 = vmatprep.subr.mxu0 %v4475
    %5657 = vmatpush1.msra.mxu0 %v4474
    %5658 = vmatprep.subr.mxu0 %v4481
    %5659 = vmatpush1.msra.mxu0 %v4480
    %5660 = vmatprep.subr.mxu0 %v4487
    %5661 = vmatpush1.msra.mxu0 %v4486
    %5662 = vmatprep.subr.mxu0 %v4493
    %5663 = vmatpush1.msra.mxu0 %v4492
    %5664 = vmatprep.subr.mxu0 %v4499
    %5665 = vmatpush1.msra.mxu0 %v4498
    %5666 = vmatprep.subr.mxu0 %v4505
    %5667 = vmatpush1.msra.mxu0 %v4504
    %5668 = vmatprep.mubr.f32.mxu0 %v5541
    %5669 = vmatmul.mubr.f32.gmra.mrb[0].mxu0 %v5540
    %v5670 = vpop.f32.mrb[0].mxu0
    %v5671 = vadd.f32 %v4605, %v5670
    %v5672 = vpop.f32.mrb[0].mxu0
    %v5673 = vadd.f32 %v4609, %v5672
    %5674 = vdwg.mxu0
    %5675 = vmatprep.subr.mxu0 %v4321
    %5676 = vmatpush1.msra.mxu0 %v4320
    %5677 = vmatprep.subr.mxu0 %v4327
    %5678 = vmatpush1.msra.mxu0 %v4326
    %5679 = vmatprep.subr.mxu0 %v4333
    %5680 = vmatpush1.msra.mxu0 %v4332
    %5681 = vmatprep.subr.mxu0 %v4339
    %5682 = vmatpush1.msra.mxu0 %v4338
    %5683 = vmatprep.subr.mxu0 %v4345
    %5684 = vmatpush1.msra.mxu0 %v4344
    %5685 = vmatprep.subr.mxu0 %v4351
    %5686 = vmatpush1.msra.mxu0 %v4350
    %5687 = vmatprep.subr.mxu0 %v4357
    %5688 = vmatpush1.msra.mxu0 %v4356
    %5689 = vmatprep.subr.mxu0 %v4363
    %5690 = vmatpush1.msra.mxu0 %v4362
    %5691 = vmatprep.subr.mxu0 %v4369
    %5692 = vmatpush1.msra.mxu0 %v4368
    %5693 = vmatprep.subr.mxu0 %v4375
    %5694 = vmatpush1.msra.mxu0 %v4374
    %5695 = vmatprep.subr.mxu0 %v4381
    %5696 = vmatpush1.msra.mxu0 %v4380
    %5697 = vmatprep.subr.mxu0 %v4387
    %5698 = vmatpush1.msra.mxu0 %v4386
    %5699 = vmatprep.subr.mxu0 %v4393
    %5700 = vmatpush1.msra.mxu0 %v4392
    %5701 = vmatprep.subr.mxu0 %v4399
    %5702 = vmatpush1.msra.mxu0 %v4398
    %5703 = vmatprep.subr.mxu0 %v4405
    %5704 = vmatpush1.msra.mxu0 %v4404
    %5705 = vmatprep.subr.mxu0 %v4411
    %5706 = vmatpush1.msra.mxu0 %v4410
    %5707 = vmatprep.subr.mxu0 %v4417
    %5708 = vmatpush1.msra.mxu0 %v4416
    %5709 = vmatprep.subr.mxu0 %v4423
    %5710 = vmatpush1.msra.mxu0 %v4422
    %5711 = vmatprep.subr.mxu0 %v4429
    %5712 = vmatpush1.msra.mxu0 %v4428
    %5713 = vmatprep.subr.mxu0 %v4435
    %5714 = vmatpush1.msra.mxu0 %v4434
    %5715 = vmatprep.subr.mxu0 %v4441
    %5716 = vmatpush1.msra.mxu0 %v4440
    %5717 = vmatprep.subr.mxu0 %v4447
    %5718 = vmatpush1.msra.mxu0 %v4446
    %5719 = vmatprep.subr.mxu0 %v4453
    %5720 = vmatpush1.msra.mxu0 %v4452
    %5721 = vmatprep.subr.mxu0 %v4459
    %5722 = vmatpush1.msra.mxu0 %v4458
    %5723 = vmatprep.subr.mxu0 %v4465
    %5724 = vmatpush1.msra.mxu0 %v4464
    %5725 = vmatprep.subr.mxu0 %v4471
    %5726 = vmatpush1.msra.mxu0 %v4470
    %5727 = vmatprep.subr.mxu0 %v4477
    %5728 = vmatpush1.msra.mxu0 %v4476
    %5729 = vmatprep.subr.mxu0 %v4483
    %5730 = vmatpush1.msra.mxu0 %v4482
    %5731 = vmatprep.subr.mxu0 %v4489
    %5732 = vmatpush1.msra.mxu0 %v4488
    %5733 = vmatprep.subr.mxu0 %v4495
    %5734 = vmatpush1.msra.mxu0 %v4494
    %5735 = vmatprep.subr.mxu0 %v4501
    %5736 = vmatpush1.msra.mxu0 %v4500
    %5737 = vmatprep.subr.mxu0 %v4507
    %5738 = vmatpush1.msra.mxu0 %v4506
    %5739 = vmatprep.mubr.f32.mxu0 %v5541
    %5740 = vmatmul.mubr.f32.gmra.mrb[0].mxu0 %v5540
    %v5741 = vpop.f32.mrb[0].mxu0
    %v5742 = vadd.f32 %v4613, %v5741
    %v5743 = vpop.f32.mrb[0].mxu0
    %v5744 = vadd.f32 %v4617, %v5743
    %5745 = vdwg.mxu0
    %5746 = vmatprep.subr.mxu0 %v4323
    %5747 = vmatpush1.msra.mxu0 %v4322
    %5748 = vmatprep.subr.mxu0 %v4329
    %5749 = vmatpush1.msra.mxu0 %v4328
    %5750 = vmatprep.subr.mxu0 %v4335
    %5751 = vmatpush1.msra.mxu0 %v4334
    %5752 = vmatprep.subr.mxu0 %v4341
    %5753 = vmatpush1.msra.mxu0 %v4340
    %5754 = vmatprep.subr.mxu0 %v4347
    %5755 = vmatpush1.msra.mxu0 %v4346
    %5756 = vmatprep.subr.mxu0 %v4353
    %5757 = vmatpush1.msra.mxu0 %v4352
    %5758 = vmatprep.subr.mxu0 %v4359
    %5759 = vmatpush1.msra.mxu0 %v4358
    %5760 = vmatprep.subr.mxu0 %v4365
    %5761 = vmatpush1.msra.mxu0 %v4364
    %5762 = vmatprep.subr.mxu0 %v4371
    %5763 = vmatpush1.msra.mxu0 %v4370
    %5764 = vmatprep.subr.mxu0 %v4377
    %5765 = vmatpush1.msra.mxu0 %v4376
    %5766 = vmatprep.subr.mxu0 %v4383
    %5767 = vmatpush1.msra.mxu0 %v4382
    %5768 = vmatprep.subr.mxu0 %v4389
    %5769 = vmatpush1.msra.mxu0 %v4388
    %5770 = vmatprep.subr.mxu0 %v4395
    %5771 = vmatpush1.msra.mxu0 %v4394
    %5772 = vmatprep.subr.mxu0 %v4401
    %5773 = vmatpush1.msra.mxu0 %v4400
    %5774 = vmatprep.subr.mxu0 %v4407
    %5775 = vmatpush1.msra.mxu0 %v4406
    %5776 = vmatprep.subr.mxu0 %v4413
    %5777 = vmatpush1.msra.mxu0 %v4412
    %5778 = vmatprep.subr.mxu0 %v4419
    %5779 = vmatpush1.msra.mxu0 %v4418
    %5780 = vmatprep.subr.mxu0 %v4425
    %5781 = vmatpush1.msra.mxu0 %v4424
    %5782 = vmatprep.subr.mxu0 %v4431
    %5783 = vmatpush1.msra.mxu0 %v4430
    %5784 = vmatprep.subr.mxu0 %v4437
    %5785 = vmatpush1.msra.mxu0 %v4436
    %5786 = vmatprep.subr.mxu0 %v4443
    %5787 = vmatpush1.msra.mxu0 %v4442
    %5788 = vmatprep.subr.mxu0 %v4449
    %5789 = vmatpush1.msra.mxu0 %v4448
    %5790 = vmatprep.subr.mxu0 %v4455
    %5791 = vmatpush1.msra.mxu0 %v4454
    %5792 = vmatprep.subr.mxu0 %v4461
    %5793 = vmatpush1.msra.mxu0 %v4460
    %5794 = vmatprep.subr.mxu0 %v4467
    %5795 = vmatpush1.msra.mxu0 %v4466
    %5796 = vmatprep.subr.mxu0 %v4473
    %5797 = vmatpush1.msra.mxu0 %v4472
    %5798 = vmatprep.subr.mxu0 %v4479
    %5799 = vmatpush1.msra.mxu0 %v4478
    %5800 = vmatprep.subr.mxu0 %v4485
    %5801 = vmatpush1.msra.mxu0 %v4484
    %5802 = vmatprep.subr.mxu0 %v4491
    %5803 = vmatpush1.msra.mxu0 %v4490
    %5804 = vmatprep.subr.mxu0 %v4497
    %5805 = vmatpush1.msra.mxu0 %v4496
    %5806 = vmatprep.subr.mxu0 %v4503
    %5807 = vmatpush1.msra.mxu0 %v4502
    %5808 = vmatprep.subr.mxu0 %v4509
    %5809 = vmatpush1.msra.mxu0 %v4508
    %5810 = vmatprep.mubr.f32.mxu0 %v5541
    %5811 = vmatmul.mubr.f32.gmra.mrb[0].mxu0 %v5540
    %v5812 = vpop.f32.mrb[0].mxu0
    %v5813 = vadd.f32 %v4621, %v5812
    %v5814 = vpop.f32.mrb[0].mxu0
    %v5815 = vadd.f32 %v4625, %v5814
    %5816 = vdwg.mxu0
    %v5817 = vadd.f32 %v5598, %v5671
    %v5818 = vadd.f32 %v5599, %v5673
    %v5819 = vxor.u32 %v5817, 2147483648
    %v5820 = vxor.u32 %v5818, 2147483648
    %v5821 = vmul.f32 %v5819, 1.442695
    %v5822 = vpow.pop %v5821
    %v5823 = vmul.f32 %v5820, 1.442695
    %v5824 = vpow.pop %v5823
    %v5825 = vadd.f32 %v5822, 1.0
    %v5826 = vadd.f32 %v5824, 1.0
    %v5827 = vrcp.pop %v5825
    %v5828 = vmul.f32 1.0, %v5827
    %v5829 = vrcp.pop %v5826
    %v5830 = vmul.f32 1.0, %v5829
    %v5831 = vadd.f32 %v5600, %v5742
    %v5832 = vadd.f32 %v5601, %v5744
    %v5833 = vxor.u32 %v5831, 2147483648
    %v5834 = vxor.u32 %v5832, 2147483648
    %v5835 = vmul.f32 %v5833, 1.442695
    %v5836 = vpow.pop %v5835
    %v5837 = vmul.f32 %v5834, 1.442695
    %v5838 = vpow.pop %v5837
    %v5839 = vadd.f32 %v5836, 1.0
    %v5840 = vadd.f32 %v5838, 1.0
    %v5841 = vrcp.pop %v5839
    %v5842 = vmul.f32 1.0, %v5841
    %v5843 = vrcp.pop %v5840
    %v5844 = vmul.f32 1.0, %v5843
    %v5845 = vmul.f32 %v5828, %v5813
    %v5846 = vmul.f32 %v5830, %v5815
    %v5847 = vadd.f32 %v5602, %v5845
    %v5848 = vadd.f32 %v5603, %v5846
    %v5849 = vtanh.pop %v5847
    %v5850 = vtanh.pop %v5848
    %v5851 = vsub.f32 1.0, %v5842
    %v5852 = vsub.f32 1.0, %v5844
    %v5853 = vmul.f32 %v5851, %v5849
    %v5854 = vmul.f32 %v5852, %v5850
    %v5855 = vmul.f32 %v5842, %v5540
    %v5856 = vmul.f32 %v5844, %v5541
    %v5857 = vadd.f32 %v5853, %v5855
    %v5858 = vadd.f32 %v5854, %v5856
    %v5859 = vmul.f32 %v5857, %v4891
    %v5860 = vmul.f32 %v5858, %v4895
    %v5861 = vsel %vm2002, %v5859, 0.0
    %v5862 = vsel %vm2002, %v5860, 0.0
    %v5863 = vadd.f32 %v5861, %v5862
    %5864 = vadd.xlane.f32.xlu0 %v5863
    %v5865 = vpop.xlane.xlu0 %5864
    %v5866 = vadd.f32 %v5550, %v5865
    %v5867 = vadd.f32 %v5866, %v4910
    %v5868 = vmul.f32 %v5857, %v4917
    %v5869 = vmul.f32 %v5858, %v4921
    %v5870 = vsel %vm2002, %v5868, 0.0
    %v5871 = vsel %vm2002, %v5869, 0.0
    %v5872 = vadd.f32 %v5870, %v5871
    %5873 = vadd.xlane.f32.xlu0 %v5872
    %v5874 = vpop.xlane.xlu0 %5873
    %v5875 = vadd.f32 %v5559, %v5874
    %v5876 = vadd.f32 %v5875, %v4910
    %5878 = vrot.lane.b32.xlu0 %v5867, 6
    %v5879 = vpop.permute.xlu0 %5878
    %vm5881 = vcmask 50224
    %5882 = vst.msk [vmem:[%s65] sm:$0x3] %vm5881, %v5879
    %5884 = vrot.lane.b32.xlu0 %v5876, 6
    %v5885 = vpop.permute.xlu0 %5884
    %vm5887 = vcmask 58424
    %5888 = vst.msk [vmem:[%s65] sm:$0x3] %vm5887, %v5885
    // Predicated region
    $region226: #{va_forward.1} parent=1 // pred_check
      _
    $region227: #{va_forward.1} parent=1 // pred_check_branch
      %5890 = sbr.rel (0) target = $region229
    $region228: #{va_forward.1} parent=1 // pred_region
      _
    $region229: #{va_forward.1} parent=1 // pred_fallthru
      _
    // Predicated region
    $region230: #{va_forward.1} parent=1 // pred_check
      _
    $region231: #{va_forward.1} parent=1 // pred_check_branch
      %5892 = sbr.rel (0) target = $region233
    $region232: #{va_forward.1} parent=1 // pred_region
      _
    $region233: #{va_forward.1} parent=1 // pred_fallthru
      _
    // Predicated region
    $region234: #{va_forward.1} parent=1 // pred_check
      _
    $region235: #{va_forward.1} parent=1 // pred_check_branch
      %5894 = sbr.rel (0) target = $region237
    $region236: #{va_forward.1} parent=1 // pred_region
      _
    $region237: #{va_forward.1} parent=1 // pred_fallthru
      _
    // Predicated region
    $region238: #{va_forward.1} parent=1 // pred_check
      _
    $region239: #{va_forward.1} parent=1 // pred_check_branch
      %5896 = sbr.rel (0) target = $region241
    $region240: #{va_forward.1} parent=1 // pred_region
      _
    $region241: #{va_forward.1} parent=1 // pred_fallthru
      _
    %5897 = vsyncpa [#allocation4], 1
    %5898 = vsyncpa [#allocation6], 1
    %5899 = vsyncpa [#allocation9], 1
    %5900 = vsyncpa [#allocation12], 1
    %5901 = vsyncpa [#allocation15], 1
    %5902 = vsyncpa [#allocation18], 1
    %5903 = vsyncpa [#allocation21], 1
    %5904 = vsyncpa [#allocation24], 1
    %5905 = vsyncpa [#allocation27], 1
    %5906 = vsyncpa [#allocation30], 1
    %5907 = vsyncpa [#allocation33], 1
    %5908 = vsyncpa [#allocation36], 1
    %5909 = vsyncpa [#allocation39], 1

</llo_original>
